<compile_context>
chip_gen: v5e
topology: v5e:2x2
jax: 0.10.0
libtpu: 0.0.40
codegen_flags: <defaults>
</compile_context>

<pallas_src>
from functools import partial

import jax
import jax.numpy as jnp
from jax.experimental import pallas as pl
from jax.experimental.pallas import tpu as pltpu

BN_EPS = 1e-5


# ----------------------------------------------------------------------------
# Fused DenseBlock kernel: all layers for one batch element per grid step.
# ----------------------------------------------------------------------------
def _dense_block_kernel(x_ref, w1_ref, s1_ref, b1_ref, w2p_ref, b2_ref, out_ref,
                        *, num_layers, c0, growth, H, W):
    """
    x_ref  : (HW, C0)        f32   block input (init_features), flattened spatially
    w1_ref : (L, Cp, K)      bf16  1x1 conv weights, BN2 scale folded in, zero-padded rows
    s1_ref : (L, Cp)         f32   folded BN1 scale (zero past C_i)
    b1_ref : (L, Cp)         f32   folded BN1 bias
    w2p_ref: (L, K, 9*G)     bf16  3x3 conv weights packed tap-major (col = tap*G + g)
    b2_ref : (L, K)          f32   folded BN2 bias
    out_ref: (HW, Cp)        f32   lane-dense output slab == growing concat buffer
    """
    HW = H * W
    Cp = out_ref.shape[-1]
    G = growth

    # Column-validity masks for the 3x3 taps (dx=0 needs x>=1, dx=2 needs x<=W-2).
    idx = jax.lax.broadcasted_iota(jnp.int32, (HW, 1), 0)
    col = (idx & (W - 1)) if (W & (W - 1)) == 0 else (idx % W)
    col_masks = [(col > 0).astype(jnp.float32), None, (col < W - 1).astype(jnp.float32)]

    # Zero-init the whole slab so pad lanes / not-yet-written channels are exact
    # zeros (never stale VMEM -> no NaN propagation), then place the block input.
    out_ref[...] = jnp.zeros_like(out_ref)
    out_ref[:, :c0] = x_ref[...]

    for i in range(num_layers):                      # static unrolled layer loop
        ci = c0 + i * G                              # channels populated so far
        cw = min(((ci + 127) // 128) * 128, Cp)      # per-layer width, rounded to lanes

        # ---- norm1 + relu1 + conv1 (1x1) on the populated (rounded) width only ----
        a = jnp.maximum(out_ref[:, :cw] * s1_ref[i:i + 1, :cw] + b1_ref[i:i + 1, :cw], 0.0)
        bott = jnp.dot(a.astype(jnp.bfloat16), w1_ref[i, :cw, :],
                       preferred_element_type=jnp.float32)          # (HW, K); BN2 scale folded

        # ---- norm2 (bias only, scale folded) + relu2 ----
        h = jnp.maximum(bott + b2_ref[i:i + 1, :], 0.0)

        # ---- conv2: 3x3, padding=1 -> ONE packed matmul, then shift+mask accumulate ----
        P = jnp.dot(h.astype(jnp.bfloat16), w2p_ref[i],
                    preferred_element_type=jnp.float32)              # (HW, 9*G)
        acc = P[:, 4 * G:5 * G]                                      # center tap, no shift
        for t in range(9):
            if t == 4:
                continue
            dy, dx = divmod(t, 3)
            off = (dy - 1) * W + (dx - 1)            # flat-index shift for this tap
            lo, hi = max(off, 0), HW + min(off, 0)
            part = P[lo:hi, t * G:(t + 1) * G]       # (HW-|off|, G) tap partial
            pad = jnp.zeros((abs(off), G), jnp.float32)
            part = jnp.concatenate([part, pad] if off > 0 else [pad, part], axis=0)
            m = col_masks[dx]                        # zero-fill already handles row edges
            if m is not None:
                part = part * m
            acc = acc + part

        # ---- dense concatenation: append the new `growth` channels ----
        out_ref[:, ci:ci + G] = acc


# ----------------------------------------------------------------------------
# Wrappers
# ----------------------------------------------------------------------------
def dense_block_forward_nhwc(params, x_nhwc):
    """NHWC in -> NHWC out (no layout transposes; preferred entry point)."""
    B, H, W, C0 = x_nhwc.shape
    L = params["num_layers"]
    G = params["growth_rate"]
    Cp = params["w1"].shape[1]
    K = params["w1"].shape[2]
    Ctot = C0 + L * G
    HW = H * W

    # Padding invariants the kernel silently relies on.
    assert C0 == params["num_input_features"]
    assert Cp % 128 == 0 and Cp >= Ctot
    assert params["w1"].shape == (L, Cp, K)
    assert params["s1"].shape == (L, Cp) and params["b1"].shape == (L, Cp)
    assert params["w2p"].shape == (L, K, 9 * G)
    assert params["b2"].shape == (L, K)

    x_flat = x_nhwc.reshape(B, HW, C0).astype(jnp.float32)

    kernel = partial(_dense_block_kernel, num_layers=L, c0=C0, growth=G, H=H, W=W)
    out = pl.pallas_call(
        kernel,
        out_shape=jax.ShapeDtypeStruct((B, HW, Cp), jnp.float32),
        grid_spec=pltpu.PrefetchScalarGridSpec(
            num_scalar_prefetch=0,
            grid=(B,),
            in_specs=[
                pl.BlockSpec((None, HW, C0), lambda b: (b, 0, 0)),
                pl.BlockSpec((L, Cp, K), lambda b: (0, 0, 0)),
                pl.BlockSpec((L, Cp), lambda b: (0, 0)),
                pl.BlockSpec((L, Cp), lambda b: (0, 0)),
                pl.BlockSpec((L, K, 9 * G), lambda b: (0, 0, 0)),
                pl.BlockSpec((L, K), lambda b: (0, 0)),
            ],
            out_specs=pl.BlockSpec((None, HW, Cp), lambda b: (b, 0, 0)),
        ),
        compiler_params=pltpu.CompilerParams(
            dimension_semantics=("parallel",)),              # shard batch across TCs
    )(x_flat, params["w1"], params["s1"], params["b1"], params["w2p"], params["b2"])

    # Drop the pad lanes [Ctot:Cp) and restore the spatial dims (cheap XLA plumbing).
    return out[:, :, :Ctot].reshape(B, H, W, Ctot)


def dense_block_forward(params, x_nchw):
    """NCHW in / NCHW out, matching the PyTorch module's interface."""
    y = dense_block_forward_nhwc(params, jnp.transpose(x_nchw, (0, 2, 3, 1)))
    return jnp.transpose(y, (0, 3, 1, 2))


# ----------------------------------------------------------------------------
# Pure-JAX f32 reference (same folded parameterization) for validation.
# ----------------------------------------------------------------------------
def dense_block_reference(params, x_nhwc):
    B, H, W, C0 = x_nhwc.shape
    L = params["num_layers"]
    G = params["growth_rate"]
    Cp = params["s1"].shape[1]
    K = params["b2"].shape[1]
    w1 = params["w1"].astype(jnp.float32)                       # (L, Cp, K), BN2-scale folded
    w2 = params["w2p"].astype(jnp.float32).reshape(L, K, 9, G)  # unpack taps
    feat = jnp.zeros((B, H, W, Cp), jnp.float32).at[..., :C0].set(x_nhwc)
    for i in range(L):
        ci = C0 + i * G
        a = jnp.maximum(feat * params["s1"][i] + params["b1"][i], 0.0)
        bott = jnp.einsum("bhwc,ck->bhwk", a, w1[i])
        h = jnp.maximum(bott + params["b2"][i], 0.0)
        hp = jnp.pad(h, ((0, 0), (1, 1), (1, 1), (0, 0)))
        new = sum(jnp.einsum("bhwk,kg->bhwg",
                             hp[:, dy:dy + H, dx:dx + W, :], w2[i, :, dy * 3 + dx, :])
                  for dy in range(3) for dx in range(3))
        feat = feat.at[..., ci:ci + G].set(new)
    return feat[..., :C0 + L * G]


# ----------------------------------------------------------------------------
# Deterministic synthetic parameters (eval-mode BN folded; BN2 scale folded into
# conv1 columns; concat width zero-padded to a 128 multiple; 3x3 weights packed).
# ----------------------------------------------------------------------------
def _fold_bn(key, c):
    kg, kb, km, kv = jax.random.split(key, 4)
    gamma = jax.random.uniform(kg, (c,), jnp.float32, 0.5, 1.5)
    beta = jax.random.normal(kb, (c,), jnp.float32) * 0.1
    running_mean = jax.random.normal(km, (c,), jnp.float32) * 0.1
    running_var = jax.random.uniform(kv, (c,), jnp.float32, 0.5, 1.5)
    scale = gamma / jnp.sqrt(running_var + BN_EPS)
    bias = beta - running_mean * scale
    return scale, bias


def init_dense_block(key, num_input_features, growth_rate, bn_size, num_layers):
    C0, G, L = num_input_features, growth_rate, num_layers
    K = bn_size * G
    Ctot = C0 + L * G
    Cp = ((Ctot + 127) // 128) * 128          # lane-pad the concat width
    w1s, s1s, b1s, w2ps, b2s = [], [], [], [], []
    for i, lkey in enumerate(jax.random.split(key, L)):
        ci = C0 + i * G
        k1, k2, k3, k4 = jax.random.split(lkey, 4)
        s1, b1 = _fold_bn(k1, ci)
        s1s.append(jnp.pad(s1, (0, Cp - ci)))
        b1s.append(jnp.pad(b1, (0, Cp - ci)))
        s2, b2 = _fold_bn(k3, K)
        b2s.append(b2)
        w1 = jax.random.normal(k2, (ci, K), jnp.float32) * jnp.sqrt(2.0 / ci)
        w1 = w1 * s2[None, :]                                   # fold BN2 scale (exact)
        w1s.append(jnp.pad(w1, ((0, Cp - ci), (0, 0))))         # zero rows for future channels
        w2 = jax.random.normal(k4, (9, K, G), jnp.float32) * jnp.sqrt(2.0 / (9 * K))
        w2ps.append(jnp.transpose(w2, (1, 0, 2)).reshape(K, 9 * G))   # tap-major packing
    return {
        "num_layers": L, "growth_rate": G, "num_input_features": C0,
        "w1": jnp.stack(w1s).astype(jnp.bfloat16),    # (L, Cp, K)
        "s1": jnp.stack(s1s),                         # (L, Cp)
        "b1": jnp.stack(b1s),                         # (L, Cp)
        "w2p": jnp.stack(w2ps).astype(jnp.bfloat16),  # (L, K, 9*G)
        "b2": jnp.stack(b2s),                         # (L, K)
    }


# ----------------------------------------------------------------------------
if __name__ == "__main__":
    # DenseBlock(num_layers=4, num_input_features=64, bn_size=4, growth_rate=32, drop_rate=0)
    num_layers, num_input_features, bn_size, growth_rate = 4, 64, 4, 32
    B, H, W = 2, 16, 16

    key = jax.random.PRNGKey(0)
    k_params, k_x = jax.random.split(key)
    params = init_dense_block(k_params, num_input_features, growth_rate, bn_size, num_layers)

    x = jax.random.normal(k_x, (B, num_input_features, H, W), jnp.float32)   # NCHW like torch

    out = jax.block_until_ready(dense_block_forward(params, x))
    expected_c = num_input_features + num_layers * growth_rate
    assert out.shape == (B, expected_c, H, W), out.shape
    assert bool(jnp.all(jnp.isfinite(out)))

    # Validate against the f32 reference (kernel uses bf16 MXU inputs -> loose tol).
    ref = jnp.transpose(dense_block_reference(params, jnp.transpose(x, (0, 2, 3, 1))),
                        (0, 3, 1, 2))
    rel_err = float(jnp.max(jnp.abs(out - ref)) / (jnp.max(jnp.abs(ref)) + 1e-6))
    assert rel_err < 5e-2, rel_err

    print("KERNEL_OK")
</pallas_src>

<mosaic_0001>
module attributes {stable_mosaic.version = 11 : i64} {
  func.func @_dense_block_kernel(%arg0: i32, %arg1: memref<1x256x64xf32, #tpu.memory_space<vmem>>, %arg2: memref<4x256x128xbf16, #tpu.memory_space<vmem>>, %arg3: memref<4x256xf32, #tpu.memory_space<vmem>>, %arg4: memref<4x256xf32, #tpu.memory_space<vmem>>, %arg5: memref<4x128x288xbf16, #tpu.memory_space<vmem>>, %arg6: memref<4x128xf32, #tpu.memory_space<vmem>>, %arg7: memref<1x256x256xf32, #tpu.memory_space<vmem>>) attributes {dimension_semantics = [#tpu.dimension_semantics<parallel>], iteration_bounds = array<i64: 2>, scalar_prefetch = 0 : i64, scratch_operands = 0 : i64, tpu.core_type = #tpu.core_type<tc>, window_params = [{transform_indices = @transform_0, window_bounds = array<i64: 1, 256, 64>}, {pipeline_mode = #tpu.pipeline_mode<synchronous>, transform_indices = @transform_1, window_bounds = array<i64: 4, 256, 128>}, {pipeline_mode = #tpu.pipeline_mode<synchronous>, transform_indices = @transform_2, window_bounds = array<i64: 4, 256>}, {pipeline_mode = #tpu.pipeline_mode<synchronous>, transform_indices = @transform_3, window_bounds = array<i64: 4, 256>}, {pipeline_mode = #tpu.pipeline_mode<synchronous>, transform_indices = @transform_4, window_bounds = array<i64: 4, 128, 288>}, {pipeline_mode = #tpu.pipeline_mode<synchronous>, transform_indices = @transform_5, window_bounds = array<i64: 4, 128>}, {transform_indices = @transform_6, window_bounds = array<i64: 1, 256, 256>}]} {
    %0 = tpu.iota {dimensions = array<i32: 0>} : vector<256x1xi32>
    %c15_i32 = arith.constant 15 : i32
    %1 = vector.broadcast %c15_i32 : i32 to vector<256x1xi32>
    %2 = arith.andi %0, %1 : vector<256x1xi32>
    %c0_i32 = arith.constant 0 : i32
    %3 = vector.broadcast %c0_i32 : i32 to vector<256x1xi32>
    %4 = arith.cmpi sgt, %2, %3 : vector<256x1xi32>
    %5 = arith.extui %4 : vector<256x1xi1> to vector<256x1xi32>
    %6 = arith.sitofp %5 : vector<256x1xi32> to vector<256x1xf32>
    %c15_i32_0 = arith.constant 15 : i32
    %7 = vector.broadcast %c15_i32_0 : i32 to vector<256x1xi32>
    %8 = arith.cmpi slt, %2, %7 : vector<256x1xi32>
    %9 = arith.extui %8 : vector<256x1xi1> to vector<256x1xi32>
    %10 = arith.sitofp %9 : vector<256x1xi32> to vector<256x1xf32>
    %cst = arith.constant 0.000000e+00 : f32
    %11 = vector.broadcast %cst : f32 to vector<256x256xf32>
    %c0 = arith.constant 0 : index
    %c0_1 = arith.constant 0 : index
    %c0_2 = arith.constant 0 : index
    %12 = vector.load %arg7[%c0, %c0_1, %c0_2] : memref<1x256x256xf32, #tpu.memory_space<vmem>>, vector<1x256x256xf32>
    %13 = vector.shape_cast %12 : vector<1x256x256xf32> to vector<256x256xf32>
    %14 = vector.shape_cast %11 : vector<256x256xf32> to vector<1x256x256xf32>
    tpu.vector_store %arg7[%c0, %c0_1, %c0_2], %14 {strides = array<i32>} : memref<1x256x256xf32, #tpu.memory_space<vmem>>, vector<1x256x256xf32>,
    %c0_3 = arith.constant 0 : index
    %c0_4 = arith.constant 0 : index
    %c0_5 = arith.constant 0 : index
    %15 = vector.load %arg1[%c0_3, %c0_4, %c0_5] : memref<1x256x64xf32, #tpu.memory_space<vmem>>, vector<1x256x64xf32>
    %16 = vector.shape_cast %15 : vector<1x256x64xf32> to vector<256x64xf32>
    %c0_6 = arith.constant 0 : index
    %c0_7 = arith.constant 0 : index
    %c0_8 = arith.constant 0 : index
    %17 = vector.load %arg7[%c0_6, %c0_7, %c0_8] : memref<1x256x256xf32, #tpu.memory_space<vmem>>, vector<1x256x64xf32>
    %18 = vector.shape_cast %17 : vector<1x256x64xf32> to vector<256x64xf32>
    %19 = vector.shape_cast %16 : vector<256x64xf32> to vector<1x256x64xf32>
    tpu.vector_store %arg7[%c0_6, %c0_7, %c0_8], %19 {strides = array<i32>} : memref<1x256x256xf32, #tpu.memory_space<vmem>>, vector<1x256x64xf32>,
    %c0_9 = arith.constant 0 : index
    %c0_10 = arith.constant 0 : index
    %c0_11 = arith.constant 0 : index
    %20 = vector.load %arg7[%c0_9, %c0_10, %c0_11] : memref<1x256x256xf32, #tpu.memory_space<vmem>>, vector<1x256x128xf32>
    %21 = vector.shape_cast %20 : vector<1x256x128xf32> to vector<256x128xf32>
    %c0_12 = arith.constant 0 : index
    %c0_13 = arith.constant 0 : index
    %22 = vector.load %arg3[%c0_12, %c0_13] : memref<4x256xf32, #tpu.memory_space<vmem>>, vector<1x128xf32>
    %23 = vector.broadcast %22 : vector<1x128xf32> to vector<256x128xf32>
    %24 = arith.mulf %21, %23 : vector<256x128xf32>
    %c0_14 = arith.constant 0 : index
    %c0_15 = arith.constant 0 : index
    %25 = vector.load %arg4[%c0_14, %c0_15] : memref<4x256xf32, #tpu.memory_space<vmem>>, vector<1x128xf32>
    %26 = vector.broadcast %25 : vector<1x128xf32> to vector<256x128xf32>
    %27 = arith.addf %24, %26 : vector<256x128xf32>
    %cst_16 = arith.constant 0.000000e+00 : f32
    %28 = vector.broadcast %cst_16 : f32 to vector<256x128xf32>
    %29 = arith.maximumf %27, %28 : vector<256x128xf32>
    %30 = arith.truncf %29 : vector<256x128xf32> to vector<256x128xbf16>
    %c0_17 = arith.constant 0 : index
    %c0_18 = arith.constant 0 : index
    %c0_19 = arith.constant 0 : index
    %31 = vector.load %arg2[%c0_17, %c0_18, %c0_19] : memref<4x256x128xbf16, #tpu.memory_space<vmem>>, vector<1x128x128xbf16>
    %32 = vector.shape_cast %31 : vector<1x128x128xbf16> to vector<128x128xbf16>
    %cst_20 = arith.constant dense<0.000000e+00> : vector<256x128xf32>
    %33 = tpu.matmul %30, %32, %cst_20 {dimension_numbers = #tpu.dot_dimension_numbers<[1], [0], [0], [1], [0, 0, 1, 1], [], []>} : vector<256x128xbf16>, vector<128x128xbf16>, vector<256x128xf32> -> vector<256x128xf32>
    %c0_21 = arith.constant 0 : index
    %c0_22 = arith.constant 0 : index
    %34 = vector.load %arg6[%c0_21, %c0_22] : memref<4x128xf32, #tpu.memory_space<vmem>>, vector<1x128xf32>
    %35 = vector.broadcast %34 : vector<1x128xf32> to vector<256x128xf32>
    %36 = arith.addf %33, %35 : vector<256x128xf32>
    %cst_23 = arith.constant 0.000000e+00 : f32
    %37 = vector.broadcast %cst_23 : f32 to vector<256x128xf32>
    %38 = arith.maximumf %36, %37 : vector<256x128xf32>
    %39 = arith.truncf %38 : vector<256x128xf32> to vector<256x128xbf16>
    %c0_24 = arith.constant 0 : index
    %c0_25 = arith.constant 0 : index
    %c0_26 = arith.constant 0 : index
    %40 = vector.load %arg5[%c0_24, %c0_25, %c0_26] : memref<4x128x288xbf16, #tpu.memory_space<vmem>>, vector<1x128x288xbf16>
    %41 = vector.shape_cast %40 : vector<1x128x288xbf16> to vector<128x288xbf16>
    %cst_27 = arith.constant dense<0.000000e+00> : vector<256x288xf32>
    %42 = tpu.matmul %39, %41, %cst_27 {dimension_numbers = #tpu.dot_dimension_numbers<[1], [0], [0], [1], [0, 0, 1, 1], [], []>} : vector<256x128xbf16>, vector<128x288xbf16>, vector<256x288xf32> -> vector<256x288xf32>
    %43 = vector.extract_strided_slice %42 {offsets = [0, 128], sizes = [256, 32], strides = [1, 1]} : vector<256x288xf32> to vector<256x32xf32>
    %44 = vector.extract_strided_slice %42 {offsets = [0, 0], sizes = [239, 32], strides = [1, 1]} : vector<256x288xf32> to vector<239x32xf32>
    %cst_28 = arith.constant 0.000000e+00 : f32
    %45 = vector.broadcast %cst_28 : f32 to vector<17x32xf32>
    %46 = tpu.concatenate %45, %44 in 0 : vector<17x32xf32>, vector<239x32xf32> -> vector<256x32xf32>
    %47 = vector.broadcast %6 : vector<256x1xf32> to vector<256x32xf32>
    %48 = arith.mulf %46, %47 : vector<256x32xf32>
    %49 = arith.addf %43, %48 : vector<256x32xf32>
    %50 = vector.extract_strided_slice %42 {offsets = [0, 32], sizes = [240, 32], strides = [1, 1]} : vector<256x288xf32> to vector<240x32xf32>
    %cst_29 = arith.constant 0.000000e+00 : f32
    %51 = vector.broadcast %cst_29 : f32 to vector<16x32xf32>
    %52 = tpu.concatenate %51, %50 in 0 : vector<16x32xf32>, vector<240x32xf32> -> vector<256x32xf32>
    %53 = arith.addf %49, %52 : vector<256x32xf32>
    %54 = vector.extract_strided_slice %42 {offsets = [0, 64], sizes = [241, 32], strides = [1, 1]} : vector<256x288xf32> to vector<241x32xf32>
    %cst_30 = arith.constant 0.000000e+00 : f32
    %55 = vector.broadcast %cst_30 : f32 to vector<15x32xf32>
    %56 = tpu.concatenate %55, %54 in 0 : vector<15x32xf32>, vector<241x32xf32> -> vector<256x32xf32>
    %57 = vector.broadcast %10 : vector<256x1xf32> to vector<256x32xf32>
    %58 = arith.mulf %56, %57 : vector<256x32xf32>
    %59 = arith.addf %53, %58 : vector<256x32xf32>
    %60 = vector.extract_strided_slice %42 {offsets = [0, 96], sizes = [255, 32], strides = [1, 1]} : vector<256x288xf32> to vector<255x32xf32>
    %cst_31 = arith.constant 0.000000e+00 : f32
    %61 = vector.broadcast %cst_31 : f32 to vector<1x32xf32>
    %62 = tpu.concatenate %61, %60 in 0 : vector<1x32xf32>, vector<255x32xf32> -> vector<256x32xf32>
    %63 = vector.broadcast %6 : vector<256x1xf32> to vector<256x32xf32>
    %64 = arith.mulf %62, %63 : vector<256x32xf32>
    %65 = arith.addf %59, %64 : vector<256x32xf32>
    %66 = vector.extract_strided_slice %42 {offsets = [1, 160], sizes = [255, 32], strides = [1, 1]} : vector<256x288xf32> to vector<255x32xf32>
    %cst_32 = arith.constant 0.000000e+00 : f32
    %67 = vector.broadcast %cst_32 : f32 to vector<1x32xf32>
    %68 = tpu.concatenate %66, %67 in 0 : vector<255x32xf32>, vector<1x32xf32> -> vector<256x32xf32>
    %69 = vector.broadcast %10 : vector<256x1xf32> to vector<256x32xf32>
    %70 = arith.mulf %68, %69 : vector<256x32xf32>
    %71 = arith.addf %65, %70 : vector<256x32xf32>
    %72 = vector.extract_strided_slice %42 {offsets = [15, 192], sizes = [241, 32], strides = [1, 1]} : vector<256x288xf32> to vector<241x32xf32>
    %cst_33 = arith.constant 0.000000e+00 : f32
    %73 = vector.broadcast %cst_33 : f32 to vector<15x32xf32>
    %74 = tpu.concatenate %72, %73 in 0 : vector<241x32xf32>, vector<15x32xf32> -> vector<256x32xf32>
    %75 = vector.broadcast %6 : vector<256x1xf32> to vector<256x32xf32>
    %76 = arith.mulf %74, %75 : vector<256x32xf32>
    %77 = arith.addf %71, %76 : vector<256x32xf32>
    %78 = vector.extract_strided_slice %42 {offsets = [16, 224], sizes = [240, 32], strides = [1, 1]} : vector<256x288xf32> to vector<240x32xf32>
    %cst_34 = arith.constant 0.000000e+00 : f32
    %79 = vector.broadcast %cst_34 : f32 to vector<16x32xf32>
    %80 = tpu.concatenate %78, %79 in 0 : vector<240x32xf32>, vector<16x32xf32> -> vector<256x32xf32>
    %81 = arith.addf %77, %80 : vector<256x32xf32>
    %82 = vector.extract_strided_slice %42 {offsets = [17, 256], sizes = [239, 32], strides = [1, 1]} : vector<256x288xf32> to vector<239x32xf32>
    %cst_35 = arith.constant 0.000000e+00 : f32
    %83 = vector.broadcast %cst_35 : f32 to vector<17x32xf32>
    %84 = tpu.concatenate %82, %83 in 0 : vector<239x32xf32>, vector<17x32xf32> -> vector<256x32xf32>
    %85 = vector.broadcast %10 : vector<256x1xf32> to vector<256x32xf32>
    %86 = arith.mulf %84, %85 : vector<256x32xf32>
    %87 = arith.addf %81, %86 : vector<256x32xf32>
    %c0_36 = arith.constant 0 : index
    %c0_37 = arith.constant 0 : index
    %c64 = arith.constant 64 : index
    %88 = vector.load %arg7[%c0_36, %c0_37, %c64] : memref<1x256x256xf32, #tpu.memory_space<vmem>>, vector<1x256x32xf32>
    %89 = vector.shape_cast %88 : vector<1x256x32xf32> to vector<256x32xf32>
    %90 = vector.shape_cast %87 : vector<256x32xf32> to vector<1x256x32xf32>
    tpu.vector_store %arg7[%c0_36, %c0_37, %c64], %90 {strides = array<i32>} : memref<1x256x256xf32, #tpu.memory_space<vmem>>, vector<1x256x32xf32>,
    %c0_38 = arith.constant 0 : index
    %c0_39 = arith.constant 0 : index
    %c0_40 = arith.constant 0 : index
    %91 = vector.load %arg7[%c0_38, %c0_39, %c0_40] : memref<1x256x256xf32, #tpu.memory_space<vmem>>, vector<1x256x128xf32>
    %92 = vector.shape_cast %91 : vector<1x256x128xf32> to vector<256x128xf32>
    %c1 = arith.constant 1 : index
    %c0_41 = arith.constant 0 : index
    %93 = vector.load %arg3[%c1, %c0_41] : memref<4x256xf32, #tpu.memory_space<vmem>>, vector<1x128xf32>
    %94 = vector.broadcast %93 : vector<1x128xf32> to vector<256x128xf32>
    %95 = arith.mulf %92, %94 : vector<256x128xf32>
    %c1_42 = arith.constant 1 : index
    %c0_43 = arith.constant 0 : index
    %96 = vector.load %arg4[%c1_42, %c0_43] : memref<4x256xf32, #tpu.memory_space<vmem>>, vector<1x128xf32>
    %97 = vector.broadcast %96 : vector<1x128xf32> to vector<256x128xf32>
    %98 = arith.addf %95, %97 : vector<256x128xf32>
    %cst_44 = arith.constant 0.000000e+00 : f32
    %99 = vector.broadcast %cst_44 : f32 to vector<256x128xf32>
    %100 = arith.maximumf %98, %99 : vector<256x128xf32>
    %101 = arith.truncf %100 : vector<256x128xf32> to vector<256x128xbf16>
    %c1_45 = arith.constant 1 : index
    %c0_46 = arith.constant 0 : index
    %c0_47 = arith.constant 0 : index
    %102 = vector.load %arg2[%c1_45, %c0_46, %c0_47] : memref<4x256x128xbf16, #tpu.memory_space<vmem>>, vector<1x128x128xbf16>
    %103 = vector.shape_cast %102 : vector<1x128x128xbf16> to vector<128x128xbf16>
    %cst_48 = arith.constant dense<0.000000e+00> : vector<256x128xf32>
    %104 = tpu.matmul %101, %103, %cst_48 {dimension_numbers = #tpu.dot_dimension_numbers<[1], [0], [0], [1], [0, 0, 1, 1], [], []>} : vector<256x128xbf16>, vector<128x128xbf16>, vector<256x128xf32> -> vector<256x128xf32>
    %c1_49 = arith.constant 1 : index
    %c0_50 = arith.constant 0 : index
    %105 = vector.load %arg6[%c1_49, %c0_50] : memref<4x128xf32, #tpu.memory_space<vmem>>, vector<1x128xf32>
    %106 = vector.broadcast %105 : vector<1x128xf32> to vector<256x128xf32>
    %107 = arith.addf %104, %106 : vector<256x128xf32>
    %cst_51 = arith.constant 0.000000e+00 : f32
    %108 = vector.broadcast %cst_51 : f32 to vector<256x128xf32>
    %109 = arith.maximumf %107, %108 : vector<256x128xf32>
    %110 = arith.truncf %109 : vector<256x128xf32> to vector<256x128xbf16>
    %c1_52 = arith.constant 1 : index
    %c0_53 = arith.constant 0 : index
    %c0_54 = arith.constant 0 : index
    %111 = vector.load %arg5[%c1_52, %c0_53, %c0_54] : memref<4x128x288xbf16, #tpu.memory_space<vmem>>, vector<1x128x288xbf16>
    %112 = vector.shape_cast %111 : vector<1x128x288xbf16> to vector<128x288xbf16>
    %cst_55 = arith.constant dense<0.000000e+00> : vector<256x288xf32>
    %113 = tpu.matmul %110, %112, %cst_55 {dimension_numbers = #tpu.dot_dimension_numbers<[1], [0], [0], [1], [0, 0, 1, 1], [], []>} : vector<256x128xbf16>, vector<128x288xbf16>, vector<256x288xf32> -> vector<256x288xf32>
    %114 = vector.extract_strided_slice %113 {offsets = [0, 128], sizes = [256, 32], strides = [1, 1]} : vector<256x288xf32> to vector<256x32xf32>
    %115 = vector.extract_strided_slice %113 {offsets = [0, 0], sizes = [239, 32], strides = [1, 1]} : vector<256x288xf32> to vector<239x32xf32>
    %cst_56 = arith.constant 0.000000e+00 : f32
    %116 = vector.broadcast %cst_56 : f32 to vector<17x32xf32>
    %117 = tpu.concatenate %116, %115 in 0 : vector<17x32xf32>, vector<239x32xf32> -> vector<256x32xf32>
    %118 = vector.broadcast %6 : vector<256x1xf32> to vector<256x32xf32>
    %119 = arith.mulf %117, %118 : vector<256x32xf32>
    %120 = arith.addf %114, %119 : vector<256x32xf32>
    %121 = vector.extract_strided_slice %113 {offsets = [0, 32], sizes = [240, 32], strides = [1, 1]} : vector<256x288xf32> to vector<240x32xf32>
    %cst_57 = arith.constant 0.000000e+00 : f32
    %122 = vector.broadcast %cst_57 : f32 to vector<16x32xf32>
    %123 = tpu.concatenate %122, %121 in 0 : vector<16x32xf32>, vector<240x32xf32> -> vector<256x32xf32>
    %124 = arith.addf %120, %123 : vector<256x32xf32>
    %125 = vector.extract_strided_slice %113 {offsets = [0, 64], sizes = [241, 32], strides = [1, 1]} : vector<256x288xf32> to vector<241x32xf32>
    %cst_58 = arith.constant 0.000000e+00 : f32
    %126 = vector.broadcast %cst_58 : f32 to vector<15x32xf32>
    %127 = tpu.concatenate %126, %125 in 0 : vector<15x32xf32>, vector<241x32xf32> -> vector<256x32xf32>
    %128 = vector.broadcast %10 : vector<256x1xf32> to vector<256x32xf32>
    %129 = arith.mulf %127, %128 : vector<256x32xf32>
    %130 = arith.addf %124, %129 : vector<256x32xf32>
    %131 = vector.extract_strided_slice %113 {offsets = [0, 96], sizes = [255, 32], strides = [1, 1]} : vector<256x288xf32> to vector<255x32xf32>
    %cst_59 = arith.constant 0.000000e+00 : f32
    %132 = vector.broadcast %cst_59 : f32 to vector<1x32xf32>
    %133 = tpu.concatenate %132, %131 in 0 : vector<1x32xf32>, vector<255x32xf32> -> vector<256x32xf32>
    %134 = vector.broadcast %6 : vector<256x1xf32> to vector<256x32xf32>
    %135 = arith.mulf %133, %134 : vector<256x32xf32>
    %136 = arith.addf %130, %135 : vector<256x32xf32>
    %137 = vector.extract_strided_slice %113 {offsets = [1, 160], sizes = [255, 32], strides = [1, 1]} : vector<256x288xf32> to vector<255x32xf32>
    %cst_60 = arith.constant 0.000000e+00 : f32
    %138 = vector.broadcast %cst_60 : f32 to vector<1x32xf32>
    %139 = tpu.concatenate %137, %138 in 0 : vector<255x32xf32>, vector<1x32xf32> -> vector<256x32xf32>
    %140 = vector.broadcast %10 : vector<256x1xf32> to vector<256x32xf32>
    %141 = arith.mulf %139, %140 : vector<256x32xf32>
    %142 = arith.addf %136, %141 : vector<256x32xf32>
    %143 = vector.extract_strided_slice %113 {offsets = [15, 192], sizes = [241, 32], strides = [1, 1]} : vector<256x288xf32> to vector<241x32xf32>
    %cst_61 = arith.constant 0.000000e+00 : f32
    %144 = vector.broadcast %cst_61 : f32 to vector<15x32xf32>
    %145 = tpu.concatenate %143, %144 in 0 : vector<241x32xf32>, vector<15x32xf32> -> vector<256x32xf32>
    %146 = vector.broadcast %6 : vector<256x1xf32> to vector<256x32xf32>
    %147 = arith.mulf %145, %146 : vector<256x32xf32>
    %148 = arith.addf %142, %147 : vector<256x32xf32>
    %149 = vector.extract_strided_slice %113 {offsets = [16, 224], sizes = [240, 32], strides = [1, 1]} : vector<256x288xf32> to vector<240x32xf32>
    %cst_62 = arith.constant 0.000000e+00 : f32
    %150 = vector.broadcast %cst_62 : f32 to vector<16x32xf32>
    %151 = tpu.concatenate %149, %150 in 0 : vector<240x32xf32>, vector<16x32xf32> -> vector<256x32xf32>
    %152 = arith.addf %148, %151 : vector<256x32xf32>
    %153 = vector.extract_strided_slice %113 {offsets = [17, 256], sizes = [239, 32], strides = [1, 1]} : vector<256x288xf32> to vector<239x32xf32>
    %cst_63 = arith.constant 0.000000e+00 : f32
    %154 = vector.broadcast %cst_63 : f32 to vector<17x32xf32>
    %155 = tpu.concatenate %153, %154 in 0 : vector<239x32xf32>, vector<17x32xf32> -> vector<256x32xf32>
    %156 = vector.broadcast %10 : vector<256x1xf32> to vector<256x32xf32>
    %157 = arith.mulf %155, %156 : vector<256x32xf32>
    %158 = arith.addf %152, %157 : vector<256x32xf32>
    %c0_64 = arith.constant 0 : index
    %c0_65 = arith.constant 0 : index
    %c96 = arith.constant 96 : index
    %159 = vector.load %arg7[%c0_64, %c0_65, %c96] : memref<1x256x256xf32, #tpu.memory_space<vmem>>, vector<1x256x32xf32>
    %160 = vector.shape_cast %159 : vector<1x256x32xf32> to vector<256x32xf32>
    %161 = vector.shape_cast %158 : vector<256x32xf32> to vector<1x256x32xf32>
    tpu.vector_store %arg7[%c0_64, %c0_65, %c96], %161 {strides = array<i32>} : memref<1x256x256xf32, #tpu.memory_space<vmem>>, vector<1x256x32xf32>,
    %c0_66 = arith.constant 0 : index
    %c0_67 = arith.constant 0 : index
    %c0_68 = arith.constant 0 : index
    %162 = vector.load %arg7[%c0_66, %c0_67, %c0_68] : memref<1x256x256xf32, #tpu.memory_space<vmem>>, vector<1x256x128xf32>
    %163 = vector.shape_cast %162 : vector<1x256x128xf32> to vector<256x128xf32>
    %c2 = arith.constant 2 : index
    %c0_69 = arith.constant 0 : index
    %164 = vector.load %arg3[%c2, %c0_69] : memref<4x256xf32, #tpu.memory_space<vmem>>, vector<1x128xf32>
    %165 = vector.broadcast %164 : vector<1x128xf32> to vector<256x128xf32>
    %166 = arith.mulf %163, %165 : vector<256x128xf32>
    %c2_70 = arith.constant 2 : index
    %c0_71 = arith.constant 0 : index
    %167 = vector.load %arg4[%c2_70, %c0_71] : memref<4x256xf32, #tpu.memory_space<vmem>>, vector<1x128xf32>
    %168 = vector.broadcast %167 : vector<1x128xf32> to vector<256x128xf32>
    %169 = arith.addf %166, %168 : vector<256x128xf32>
    %cst_72 = arith.constant 0.000000e+00 : f32
    %170 = vector.broadcast %cst_72 : f32 to vector<256x128xf32>
    %171 = arith.maximumf %169, %170 : vector<256x128xf32>
    %172 = arith.truncf %171 : vector<256x128xf32> to vector<256x128xbf16>
    %c2_73 = arith.constant 2 : index
    %c0_74 = arith.constant 0 : index
    %c0_75 = arith.constant 0 : index
    %173 = vector.load %arg2[%c2_73, %c0_74, %c0_75] : memref<4x256x128xbf16, #tpu.memory_space<vmem>>, vector<1x128x128xbf16>
    %174 = vector.shape_cast %173 : vector<1x128x128xbf16> to vector<128x128xbf16>
    %cst_76 = arith.constant dense<0.000000e+00> : vector<256x128xf32>
    %175 = tpu.matmul %172, %174, %cst_76 {dimension_numbers = #tpu.dot_dimension_numbers<[1], [0], [0], [1], [0, 0, 1, 1], [], []>} : vector<256x128xbf16>, vector<128x128xbf16>, vector<256x128xf32> -> vector<256x128xf32>
    %c2_77 = arith.constant 2 : index
    %c0_78 = arith.constant 0 : index
    %176 = vector.load %arg6[%c2_77, %c0_78] : memref<4x128xf32, #tpu.memory_space<vmem>>, vector<1x128xf32>
    %177 = vector.broadcast %176 : vector<1x128xf32> to vector<256x128xf32>
    %178 = arith.addf %175, %177 : vector<256x128xf32>
    %cst_79 = arith.constant 0.000000e+00 : f32
    %179 = vector.broadcast %cst_79 : f32 to vector<256x128xf32>
    %180 = arith.maximumf %178, %179 : vector<256x128xf32>
    %181 = arith.truncf %180 : vector<256x128xf32> to vector<256x128xbf16>
    %c2_80 = arith.constant 2 : index
    %c0_81 = arith.constant 0 : index
    %c0_82 = arith.constant 0 : index
    %182 = vector.load %arg5[%c2_80, %c0_81, %c0_82] : memref<4x128x288xbf16, #tpu.memory_space<vmem>>, vector<1x128x288xbf16>
    %183 = vector.shape_cast %182 : vector<1x128x288xbf16> to vector<128x288xbf16>
    %cst_83 = arith.constant dense<0.000000e+00> : vector<256x288xf32>
    %184 = tpu.matmul %181, %183, %cst_83 {dimension_numbers = #tpu.dot_dimension_numbers<[1], [0], [0], [1], [0, 0, 1, 1], [], []>} : vector<256x128xbf16>, vector<128x288xbf16>, vector<256x288xf32> -> vector<256x288xf32>
    %185 = vector.extract_strided_slice %184 {offsets = [0, 128], sizes = [256, 32], strides = [1, 1]} : vector<256x288xf32> to vector<256x32xf32>
    %186 = vector.extract_strided_slice %184 {offsets = [0, 0], sizes = [239, 32], strides = [1, 1]} : vector<256x288xf32> to vector<239x32xf32>
    %cst_84 = arith.constant 0.000000e+00 : f32
    %187 = vector.broadcast %cst_84 : f32 to vector<17x32xf32>
    %188 = tpu.concatenate %187, %186 in 0 : vector<17x32xf32>, vector<239x32xf32> -> vector<256x32xf32>
    %189 = vector.broadcast %6 : vector<256x1xf32> to vector<256x32xf32>
    %190 = arith.mulf %188, %189 : vector<256x32xf32>
    %191 = arith.addf %185, %190 : vector<256x32xf32>
    %192 = vector.extract_strided_slice %184 {offsets = [0, 32], sizes = [240, 32], strides = [1, 1]} : vector<256x288xf32> to vector<240x32xf32>
    %cst_85 = arith.constant 0.000000e+00 : f32
    %193 = vector.broadcast %cst_85 : f32 to vector<16x32xf32>
    %194 = tpu.concatenate %193, %192 in 0 : vector<16x32xf32>, vector<240x32xf32> -> vector<256x32xf32>
    %195 = arith.addf %191, %194 : vector<256x32xf32>
    %196 = vector.extract_strided_slice %184 {offsets = [0, 64], sizes = [241, 32], strides = [1, 1]} : vector<256x288xf32> to vector<241x32xf32>
    %cst_86 = arith.constant 0.000000e+00 : f32
    %197 = vector.broadcast %cst_86 : f32 to vector<15x32xf32>
    %198 = tpu.concatenate %197, %196 in 0 : vector<15x32xf32>, vector<241x32xf32> -> vector<256x32xf32>
    %199 = vector.broadcast %10 : vector<256x1xf32> to vector<256x32xf32>
    %200 = arith.mulf %198, %199 : vector<256x32xf32>
    %201 = arith.addf %195, %200 : vector<256x32xf32>
    %202 = vector.extract_strided_slice %184 {offsets = [0, 96], sizes = [255, 32], strides = [1, 1]} : vector<256x288xf32> to vector<255x32xf32>
    %cst_87 = arith.constant 0.000000e+00 : f32
    %203 = vector.broadcast %cst_87 : f32 to vector<1x32xf32>
    %204 = tpu.concatenate %203, %202 in 0 : vector<1x32xf32>, vector<255x32xf32> -> vector<256x32xf32>
    %205 = vector.broadcast %6 : vector<256x1xf32> to vector<256x32xf32>
    %206 = arith.mulf %204, %205 : vector<256x32xf32>
    %207 = arith.addf %201, %206 : vector<256x32xf32>
    %208 = vector.extract_strided_slice %184 {offsets = [1, 160], sizes = [255, 32], strides = [1, 1]} : vector<256x288xf32> to vector<255x32xf32>
    %cst_88 = arith.constant 0.000000e+00 : f32
    %209 = vector.broadcast %cst_88 : f32 to vector<1x32xf32>
    %210 = tpu.concatenate %208, %209 in 0 : vector<255x32xf32>, vector<1x32xf32> -> vector<256x32xf32>
    %211 = vector.broadcast %10 : vector<256x1xf32> to vector<256x32xf32>
    %212 = arith.mulf %210, %211 : vector<256x32xf32>
    %213 = arith.addf %207, %212 : vector<256x32xf32>
    %214 = vector.extract_strided_slice %184 {offsets = [15, 192], sizes = [241, 32], strides = [1, 1]} : vector<256x288xf32> to vector<241x32xf32>
    %cst_89 = arith.constant 0.000000e+00 : f32
    %215 = vector.broadcast %cst_89 : f32 to vector<15x32xf32>
    %216 = tpu.concatenate %214, %215 in 0 : vector<241x32xf32>, vector<15x32xf32> -> vector<256x32xf32>
    %217 = vector.broadcast %6 : vector<256x1xf32> to vector<256x32xf32>
    %218 = arith.mulf %216, %217 : vector<256x32xf32>
    %219 = arith.addf %213, %218 : vector<256x32xf32>
    %220 = vector.extract_strided_slice %184 {offsets = [16, 224], sizes = [240, 32], strides = [1, 1]} : vector<256x288xf32> to vector<240x32xf32>
    %cst_90 = arith.constant 0.000000e+00 : f32
    %221 = vector.broadcast %cst_90 : f32 to vector<16x32xf32>
    %222 = tpu.concatenate %220, %221 in 0 : vector<240x32xf32>, vector<16x32xf32> -> vector<256x32xf32>
    %223 = arith.addf %219, %222 : vector<256x32xf32>
    %224 = vector.extract_strided_slice %184 {offsets = [17, 256], sizes = [239, 32], strides = [1, 1]} : vector<256x288xf32> to vector<239x32xf32>
    %cst_91 = arith.constant 0.000000e+00 : f32
    %225 = vector.broadcast %cst_91 : f32 to vector<17x32xf32>
    %226 = tpu.concatenate %224, %225 in 0 : vector<239x32xf32>, vector<17x32xf32> -> vector<256x32xf32>
    %227 = vector.broadcast %10 : vector<256x1xf32> to vector<256x32xf32>
    %228 = arith.mulf %226, %227 : vector<256x32xf32>
    %229 = arith.addf %223, %228 : vector<256x32xf32>
    %c0_92 = arith.constant 0 : index
    %c0_93 = arith.constant 0 : index
    %c128 = arith.constant 128 : index
    %230 = vector.load %arg7[%c0_92, %c0_93, %c128] : memref<1x256x256xf32, #tpu.memory_space<vmem>>, vector<1x256x32xf32>
    %231 = vector.shape_cast %230 : vector<1x256x32xf32> to vector<256x32xf32>
    %232 = vector.shape_cast %229 : vector<256x32xf32> to vector<1x256x32xf32>
    tpu.vector_store %arg7[%c0_92, %c0_93, %c128], %232 {strides = array<i32>} : memref<1x256x256xf32, #tpu.memory_space<vmem>>, vector<1x256x32xf32>,
    %c0_94 = arith.constant 0 : index
    %c0_95 = arith.constant 0 : index
    %c0_96 = arith.constant 0 : index
    %233 = vector.load %arg7[%c0_94, %c0_95, %c0_96] : memref<1x256x256xf32, #tpu.memory_space<vmem>>, vector<1x256x256xf32>
    %234 = vector.shape_cast %233 : vector<1x256x256xf32> to vector<256x256xf32>
    %c3 = arith.constant 3 : index
    %c0_97 = arith.constant 0 : index
    %235 = vector.load %arg3[%c3, %c0_97] : memref<4x256xf32, #tpu.memory_space<vmem>>, vector<1x256xf32>
    %236 = vector.broadcast %235 : vector<1x256xf32> to vector<256x256xf32>
    %237 = arith.mulf %234, %236 : vector<256x256xf32>
    %c3_98 = arith.constant 3 : index
    %c0_99 = arith.constant 0 : index
    %238 = vector.load %arg4[%c3_98, %c0_99] : memref<4x256xf32, #tpu.memory_space<vmem>>, vector<1x256xf32>
    %239 = vector.broadcast %238 : vector<1x256xf32> to vector<256x256xf32>
    %240 = arith.addf %237, %239 : vector<256x256xf32>
    %cst_100 = arith.constant 0.000000e+00 : f32
    %241 = vector.broadcast %cst_100 : f32 to vector<256x256xf32>
    %242 = arith.maximumf %240, %241 : vector<256x256xf32>
    %243 = arith.truncf %242 : vector<256x256xf32> to vector<256x256xbf16>
    %c3_101 = arith.constant 3 : index
    %c0_102 = arith.constant 0 : index
    %c0_103 = arith.constant 0 : index
    %244 = vector.load %arg2[%c3_101, %c0_102, %c0_103] : memref<4x256x128xbf16, #tpu.memory_space<vmem>>, vector<1x256x128xbf16>
    %245 = vector.shape_cast %244 : vector<1x256x128xbf16> to vector<256x128xbf16>
    %cst_104 = arith.constant dense<0.000000e+00> : vector<256x128xf32>
    %246 = tpu.matmul %243, %245, %cst_104 {dimension_numbers = #tpu.dot_dimension_numbers<[1], [0], [0], [1], [0, 0, 1, 1], [], []>} : vector<256x256xbf16>, vector<256x128xbf16>, vector<256x128xf32> -> vector<256x128xf32>
    %c3_105 = arith.constant 3 : index
    %c0_106 = arith.constant 0 : index
    %247 = vector.load %arg6[%c3_105, %c0_106] : memref<4x128xf32, #tpu.memory_space<vmem>>, vector<1x128xf32>
    %248 = vector.broadcast %247 : vector<1x128xf32> to vector<256x128xf32>
    %249 = arith.addf %246, %248 : vector<256x128xf32>
    %cst_107 = arith.constant 0.000000e+00 : f32
    %250 = vector.broadcast %cst_107 : f32 to vector<256x128xf32>
    %251 = arith.maximumf %249, %250 : vector<256x128xf32>
    %252 = arith.truncf %251 : vector<256x128xf32> to vector<256x128xbf16>
    %c3_108 = arith.constant 3 : index
    %c0_109 = arith.constant 0 : index
    %c0_110 = arith.constant 0 : index
    %253 = vector.load %arg5[%c3_108, %c0_109, %c0_110] : memref<4x128x288xbf16, #tpu.memory_space<vmem>>, vector<1x128x288xbf16>
    %254 = vector.shape_cast %253 : vector<1x128x288xbf16> to vector<128x288xbf16>
    %cst_111 = arith.constant dense<0.000000e+00> : vector<256x288xf32>
    %255 = tpu.matmul %252, %254, %cst_111 {dimension_numbers = #tpu.dot_dimension_numbers<[1], [0], [0], [1], [0, 0, 1, 1], [], []>} : vector<256x128xbf16>, vector<128x288xbf16>, vector<256x288xf32> -> vector<256x288xf32>
    %256 = vector.extract_strided_slice %255 {offsets = [0, 128], sizes = [256, 32], strides = [1, 1]} : vector<256x288xf32> to vector<256x32xf32>
    %257 = vector.extract_strided_slice %255 {offsets = [0, 0], sizes = [239, 32], strides = [1, 1]} : vector<256x288xf32> to vector<239x32xf32>
    %cst_112 = arith.constant 0.000000e+00 : f32
    %258 = vector.broadcast %cst_112 : f32 to vector<17x32xf32>
    %259 = tpu.concatenate %258, %257 in 0 : vector<17x32xf32>, vector<239x32xf32> -> vector<256x32xf32>
    %260 = vector.broadcast %6 : vector<256x1xf32> to vector<256x32xf32>
    %261 = arith.mulf %259, %260 : vector<256x32xf32>
    %262 = arith.addf %256, %261 : vector<256x32xf32>
    %263 = vector.extract_strided_slice %255 {offsets = [0, 32], sizes = [240, 32], strides = [1, 1]} : vector<256x288xf32> to vector<240x32xf32>
    %cst_113 = arith.constant 0.000000e+00 : f32
    %264 = vector.broadcast %cst_113 : f32 to vector<16x32xf32>
    %265 = tpu.concatenate %264, %263 in 0 : vector<16x32xf32>, vector<240x32xf32> -> vector<256x32xf32>
    %266 = arith.addf %262, %265 : vector<256x32xf32>
    %267 = vector.extract_strided_slice %255 {offsets = [0, 64], sizes = [241, 32], strides = [1, 1]} : vector<256x288xf32> to vector<241x32xf32>
    %cst_114 = arith.constant 0.000000e+00 : f32
    %268 = vector.broadcast %cst_114 : f32 to vector<15x32xf32>
    %269 = tpu.concatenate %268, %267 in 0 : vector<15x32xf32>, vector<241x32xf32> -> vector<256x32xf32>
    %270 = vector.broadcast %10 : vector<256x1xf32> to vector<256x32xf32>
    %271 = arith.mulf %269, %270 : vector<256x32xf32>
    %272 = arith.addf %266, %271 : vector<256x32xf32>
    %273 = vector.extract_strided_slice %255 {offsets = [0, 96], sizes = [255, 32], strides = [1, 1]} : vector<256x288xf32> to vector<255x32xf32>
    %cst_115 = arith.constant 0.000000e+00 : f32
    %274 = vector.broadcast %cst_115 : f32 to vector<1x32xf32>
    %275 = tpu.concatenate %274, %273 in 0 : vector<1x32xf32>, vector<255x32xf32> -> vector<256x32xf32>
    %276 = vector.broadcast %6 : vector<256x1xf32> to vector<256x32xf32>
    %277 = arith.mulf %275, %276 : vector<256x32xf32>
    %278 = arith.addf %272, %277 : vector<256x32xf32>
    %279 = vector.extract_strided_slice %255 {offsets = [1, 160], sizes = [255, 32], strides = [1, 1]} : vector<256x288xf32> to vector<255x32xf32>
    %cst_116 = arith.constant 0.000000e+00 : f32
    %280 = vector.broadcast %cst_116 : f32 to vector<1x32xf32>
    %281 = tpu.concatenate %279, %280 in 0 : vector<255x32xf32>, vector<1x32xf32> -> vector<256x32xf32>
    %282 = vector.broadcast %10 : vector<256x1xf32> to vector<256x32xf32>
    %283 = arith.mulf %281, %282 : vector<256x32xf32>
    %284 = arith.addf %278, %283 : vector<256x32xf32>
    %285 = vector.extract_strided_slice %255 {offsets = [15, 192], sizes = [241, 32], strides = [1, 1]} : vector<256x288xf32> to vector<241x32xf32>
    %cst_117 = arith.constant 0.000000e+00 : f32
    %286 = vector.broadcast %cst_117 : f32 to vector<15x32xf32>
    %287 = tpu.concatenate %285, %286 in 0 : vector<241x32xf32>, vector<15x32xf32> -> vector<256x32xf32>
    %288 = vector.broadcast %6 : vector<256x1xf32> to vector<256x32xf32>
    %289 = arith.mulf %287, %288 : vector<256x32xf32>
    %290 = arith.addf %284, %289 : vector<256x32xf32>
    %291 = vector.extract_strided_slice %255 {offsets = [16, 224], sizes = [240, 32], strides = [1, 1]} : vector<256x288xf32> to vector<240x32xf32>
    %cst_118 = arith.constant 0.000000e+00 : f32
    %292 = vector.broadcast %cst_118 : f32 to vector<16x32xf32>
    %293 = tpu.concatenate %291, %292 in 0 : vector<240x32xf32>, vector<16x32xf32> -> vector<256x32xf32>
    %294 = arith.addf %290, %293 : vector<256x32xf32>
    %295 = vector.extract_strided_slice %255 {offsets = [17, 256], sizes = [239, 32], strides = [1, 1]} : vector<256x288xf32> to vector<239x32xf32>
    %cst_119 = arith.constant 0.000000e+00 : f32
    %296 = vector.broadcast %cst_119 : f32 to vector<17x32xf32>
    %297 = tpu.concatenate %295, %296 in 0 : vector<239x32xf32>, vector<17x32xf32> -> vector<256x32xf32>
    %298 = vector.broadcast %10 : vector<256x1xf32> to vector<256x32xf32>
    %299 = arith.mulf %297, %298 : vector<256x32xf32>
    %300 = arith.addf %294, %299 : vector<256x32xf32>
    %c0_120 = arith.constant 0 : index
    %c0_121 = arith.constant 0 : index
    %c160 = arith.constant 160 : index
    %301 = vector.load %arg7[%c0_120, %c0_121, %c160] : memref<1x256x256xf32, #tpu.memory_space<vmem>>, vector<1x256x32xf32>
    %302 = vector.shape_cast %301 : vector<1x256x32xf32> to vector<256x32xf32>
    %303 = vector.shape_cast %300 : vector<256x32xf32> to vector<1x256x32xf32>
    tpu.vector_store %arg7[%c0_120, %c0_121, %c160], %303 {strides = array<i32>} : memref<1x256x256xf32, #tpu.memory_space<vmem>>, vector<1x256x32xf32>,
    return
  }
  func.func @transform_0(%arg0: i32) -> (i32, i32, i32) {
    %c0_i32 = arith.constant 0 : i32
    %c0_i32_0 = arith.constant 0 : i32
    %c0_i32_1 = arith.constant 0 : i32
    return %arg0, %c0_i32, %c0_i32_0 : i32, i32, i32
  }
  func.func @transform_1(%arg0: i32) -> (i32, i32, i32) {
    %c0_i32 = arith.constant 0 : i32
    %c0_i32_0 = arith.constant 0 : i32
    %c0_i32_1 = arith.constant 0 : i32
    %c0_i32_2 = arith.constant 0 : i32
    return %c0_i32, %c0_i32_0, %c0_i32_1 : i32, i32, i32
  }
  func.func @transform_2(%arg0: i32) -> (i32, i32) {
    %c0_i32 = arith.constant 0 : i32
    %c0_i32_0 = arith.constant 0 : i32
    %c0_i32_1 = arith.constant 0 : i32
    return %c0_i32, %c0_i32_0 : i32, i32
  }
  func.func @transform_3(%arg0: i32) -> (i32, i32) {
    %c0_i32 = arith.constant 0 : i32
    %c0_i32_0 = arith.constant 0 : i32
    %c0_i32_1 = arith.constant 0 : i32
    return %c0_i32, %c0_i32_0 : i32, i32
  }
  func.func @transform_4(%arg0: i32) -> (i32, i32, i32) {
    %c0_i32 = arith.constant 0 : i32
    %c0_i32_0 = arith.constant 0 : i32
    %c0_i32_1 = arith.constant 0 : i32
    %c0_i32_2 = arith.constant 0 : i32
    return %c0_i32, %c0_i32_0, %c0_i32_1 : i32, i32, i32
  }
  func.func @transform_5(%arg0: i32) -> (i32, i32) {
    %c0_i32 = arith.constant 0 : i32
    %c0_i32_0 = arith.constant 0 : i32
    %c0_i32_1 = arith.constant 0 : i32
    return %c0_i32, %c0_i32_0 : i32, i32
  }
  func.func @transform_6(%arg0: i32) -> (i32, i32, i32) {
    %c0_i32 = arith.constant 0 : i32
    %c0_i32_0 = arith.constant 0 : i32
    %c0_i32_1 = arith.constant 0 : i32
    return %arg0, %c0_i32, %c0_i32_0 : i32, i32, i32
  }
}

</mosaic_0001>

<llo_original>
// kernel: tpu_custom_call.1
$region0: #{tpu_custom_call.1}
  #allocation0 [shape = 'u32[]', space=smem, size = 0x4, offset = 0x4, fixed_abs, tag = 'smem constant byte address 0x4 - core index']
  #allocation1 [shape = 'u32[72,128]{1,0:T(1,128)}', space=vmem, size = 0x9000, scoped, tag = 'internal scratch']
  %s0 = inlined_call_operand.vmem [shape: f32[2,256,64], index: 0, kind: input, shape index: {}]
  %s1 = inlined_call_operand.vmem [shape: bf16[4,256,128], index: 1, kind: input, shape index: {}]
  %s2 = inlined_call_operand.vmem [shape: f32[4,256], index: 2, kind: input, shape index: {}]
  %s3 = inlined_call_operand.vmem [shape: f32[4,256], index: 3, kind: input, shape index: {}]
  %s4 = inlined_call_operand.vmem [shape: bf16[4,128,288], index: 4, kind: input, shape index: {}]
  %s5 = inlined_call_operand.vmem [shape: f32[4,128], index: 5, kind: input, shape index: {}]
  %s6 = inlined_call_operand.hbm [shape: f32[2,256,256], index: 6, kind: output, shape index: {}]
  %s7 = sld [smem:[#allocation0]]
  $region57: #{tpu_custom_call.1} parent=0
    _
  %s9 = ssub.s32 1, %s7
  %s10 = scalar_select 0, %s9, %s7
  $region1: #{tpu_custom_call.1} parent=0
    #allocation2 [shape = 'u8[524288]{0}', space=vmem, size = 0x80000, scoped, tag = 'output window, operand 0']
    #allocation3 [shape = 's32[2]{0}', space=sflag, size = 0x8, scoped, tag = 'scoped memory for tpu_custom_call.1']
    %11 = vsyncpa [#allocation3], 0
    %s12 = scalar_lea.sflag [#allocation3], 1
    %13 = vsyncpa %s12, 0
    loop: start=0, step=1, limit=4
    $region2: #{tpu_custom_call.1} parent=1 // loop_pre_header
      _
    $region3: #{tpu_custom_call.1} parent=1 // loop_header
      %s15 = sphi 0, %s19
      %p16 = scmp.ge.s32.totalorder %s15, 4
      %s25 = sphi 0, %s27
      %s28 = sphi 0, %s25
      %s29 = sphi 0, %s28
      %s45 = sphi 0, %s29
      %s49 = sphi 0, %s49
      %s51 = sphi 0, %s49
      %s52 = sphi 0, %s51
      %s66 = sphi 0, %s52
      %s70 = sphi 0, %s70
      %s72 = sphi 0, %s70
      %s73 = sphi 0, %s72
      %s87 = sphi 0, %s73
      %s91 = sphi 0, %s91
      %s93 = sphi 0, %s91
      %s94 = sphi 0, %s93
      %s108 = sphi 0, %s94
      %s112 = sphi 0, %s112
      %s114 = sphi 0, %s112
      %s115 = sphi 0, %s114
      %s129 = sphi 0, %s115
      %s133 = sphi 0, %s133
      %s135 = sphi 0, %s133
      %s136 = sphi 0, %s135
      %s150 = sphi 0, %s136
      %s156 = sphi 0, %s158
      %s159 = sphi 0, %s156
      %s160 = sphi 0, %s159
      %s176 = sphi 0, %s160
    $region4: #{tpu_custom_call.1} parent=1 // loop_header_branch
      %18 = sbr.rel (%p16) target = $region8
    $region5: #{tpu_custom_call.1} parent=1 // loop_body
      %s20 = ssub.s32 %s15, 1
      %s21 = ssub.s32 %s15, 2
      %s22 = sadd.s32 %s15, 1
      %s23 = ssub.s32 %s15, %s22
      %p24 = scmp.eq.s32.totalorder %s23, 0
      %s26 = sadd.s32 %s25, 1
      %s27 = scalar_select %p24, %s25, %s26
      %p30 = pneg %p24
      %p31 = scmp.eq.s32.totalorder %s15, 1
      %p32 = por %p30, %p31
      %p33 = scmp.ne.s32.totalorder %s25, %s28
      %p34 = scmp.eq.s32.totalorder %s15, 0
      %p35 = por %p33, %p34
      %p36 = scmp.ne.s32.totalorder %s25, %s28
      %p37 = scmp.eq.s32.totalorder %s20, 1
      %p38 = por %p36, %p37
      %p39 = scmp.ne.s32.totalorder %s28, %s29
      %p40 = scmp.eq.s32.totalorder %s20, 0
      %p41 = por %p39, %p40
      %p42 = scmp.ne.s32.totalorder %s28, %s29
      %p43 = scmp.eq.s32.totalorder %s21, 1
      %p44 = por %p42, %p43
      %p46 = scmp.ne.s32.totalorder %s29, %s45
      %p47 = scmp.eq.s32.totalorder %s21, 0
      %p48 = por %p46, %p47
      %s50 = sadd.s32 %s49, 1
      %p53 = scmp.eq.s32.totalorder %s15, 1
      %p54 = scmp.ne.s32.totalorder %s49, %s51
      %p55 = scmp.eq.s32.totalorder %s15, 0
      %p56 = por %p54, %p55
      %p57 = scmp.ne.s32.totalorder %s49, %s51
      %p58 = scmp.eq.s32.totalorder %s20, 1
      %p59 = por %p57, %p58
      %p60 = scmp.ne.s32.totalorder %s51, %s52
      %p61 = scmp.eq.s32.totalorder %s20, 0
      %p62 = por %p60, %p61
      %p63 = scmp.ne.s32.totalorder %s51, %s52
      %p64 = scmp.eq.s32.totalorder %s21, 1
      %p65 = por %p63, %p64
      %p67 = scmp.ne.s32.totalorder %s52, %s66
      %p68 = scmp.eq.s32.totalorder %s21, 0
      %p69 = por %p67, %p68
      %s71 = sadd.s32 %s70, 1
      %p74 = scmp.eq.s32.totalorder %s15, 1
      %p75 = scmp.ne.s32.totalorder %s70, %s72
      %p76 = scmp.eq.s32.totalorder %s15, 0
      %p77 = por %p75, %p76
      %p78 = scmp.ne.s32.totalorder %s70, %s72
      %p79 = scmp.eq.s32.totalorder %s20, 1
      %p80 = por %p78, %p79
      %p81 = scmp.ne.s32.totalorder %s72, %s73
      %p82 = scmp.eq.s32.totalorder %s20, 0
      %p83 = por %p81, %p82
      %p84 = scmp.ne.s32.totalorder %s72, %s73
      %p85 = scmp.eq.s32.totalorder %s21, 1
      %p86 = por %p84, %p85
      %p88 = scmp.ne.s32.totalorder %s73, %s87
      %p89 = scmp.eq.s32.totalorder %s21, 0
      %p90 = por %p88, %p89
      %s92 = sadd.s32 %s91, 1
      %p95 = scmp.eq.s32.totalorder %s15, 1
      %p96 = scmp.ne.s32.totalorder %s91, %s93
      %p97 = scmp.eq.s32.totalorder %s15, 0
      %p98 = por %p96, %p97
      %p99 = scmp.ne.s32.totalorder %s91, %s93
      %p100 = scmp.eq.s32.totalorder %s20, 1
      %p101 = por %p99, %p100
      %p102 = scmp.ne.s32.totalorder %s93, %s94
      %p103 = scmp.eq.s32.totalorder %s20, 0
      %p104 = por %p102, %p103
      %p105 = scmp.ne.s32.totalorder %s93, %s94
      %p106 = scmp.eq.s32.totalorder %s21, 1
      %p107 = por %p105, %p106
      %p109 = scmp.ne.s32.totalorder %s94, %s108
      %p110 = scmp.eq.s32.totalorder %s21, 0
      %p111 = por %p109, %p110
      %s113 = sadd.s32 %s112, 1
      %p116 = scmp.eq.s32.totalorder %s15, 1
      %p117 = scmp.ne.s32.totalorder %s112, %s114
      %p118 = scmp.eq.s32.totalorder %s15, 0
      %p119 = por %p117, %p118
      %p120 = scmp.ne.s32.totalorder %s112, %s114
      %p121 = scmp.eq.s32.totalorder %s20, 1
      %p122 = por %p120, %p121
      %p123 = scmp.ne.s32.totalorder %s114, %s115
      %p124 = scmp.eq.s32.totalorder %s20, 0
      %p125 = por %p123, %p124
      %p126 = scmp.ne.s32.totalorder %s114, %s115
      %p127 = scmp.eq.s32.totalorder %s21, 1
      %p128 = por %p126, %p127
      %p130 = scmp.ne.s32.totalorder %s115, %s129
      %p131 = scmp.eq.s32.totalorder %s21, 0
      %p132 = por %p130, %p131
      %s134 = sadd.s32 %s133, 1
      %p137 = scmp.eq.s32.totalorder %s15, 1
      %p138 = scmp.ne.s32.totalorder %s133, %s135
      %p139 = scmp.eq.s32.totalorder %s15, 0
      %p140 = por %p138, %p139
      %p141 = scmp.ne.s32.totalorder %s133, %s135
      %p142 = scmp.eq.s32.totalorder %s20, 1
      %p143 = por %p141, %p142
      %p144 = scmp.ne.s32.totalorder %s135, %s136
      %p145 = scmp.eq.s32.totalorder %s20, 0
      %p146 = por %p144, %p145
      %p147 = scmp.ne.s32.totalorder %s135, %s136
      %p148 = scmp.eq.s32.totalorder %s21, 1
      %p149 = por %p147, %p148
      %p151 = scmp.ne.s32.totalorder %s136, %s150
      %p152 = scmp.eq.s32.totalorder %s21, 0
      %p153 = por %p151, %p152
      %s154 = ssub.s32 %s15, %s22
      %p155 = scmp.eq.s32.totalorder %s154, 0
      %s157 = sadd.s32 %s156, 1
      %s158 = scalar_select %p155, %s156, %s157
      %p161 = pneg %p155
      %p162 = scmp.eq.s32.totalorder %s15, 1
      %p163 = por %p161, %p162
      %p164 = scmp.ne.s32.totalorder %s156, %s159
      %p165 = scmp.eq.s32.totalorder %s15, 0
      %p166 = por %p164, %p165
      %p167 = scmp.ne.s32.totalorder %s156, %s159
      %p168 = scmp.eq.s32.totalorder %s20, 1
      %p169 = por %p167, %p168
      %p170 = scmp.ne.s32.totalorder %s159, %s160
      %p171 = scmp.eq.s32.totalorder %s20, 0
      %p172 = por %p170, %p171
      %p173 = scmp.ne.s32.totalorder %s159, %s160
      %p174 = scmp.eq.s32.totalorder %s21, 1
      %p175 = por %p173, %p174
      %p177 = scmp.ne.s32.totalorder %s160, %s176
      %p178 = scmp.eq.s32.totalorder %s21, 0
      %p179 = por %p177, %p178
      %p180 = scmp.le.s32.totalorder 1, %s15
      %p181 = scmp.lt.s32.totalorder %s15, 3
      %p182 = pnand %p180, %p181
      %p183 = pneg %p182
      // Predicated region
      $region9: #{tpu_custom_call.1} parent=5 // pred_check
        _
      $region10: #{tpu_custom_call.1} parent=5 // pred_check_branch
        %185 = sbr.rel (%p182) target = $region12
      $region11: #{tpu_custom_call.1} parent=5 // pred_region
        %s186 = ssub.s32 %s15, 1
        // Predicated region
        $region13: #{tpu_custom_call.1} parent=11 // pred_check
          %p187 = pneg %p62
        $region14: #{tpu_custom_call.1} parent=11 // pred_check_branch
          %189 = sbr.rel (%p187) target = $region16
        $region15: #{tpu_custom_call.1} parent=11 // pred_region
          _
        $region16: #{tpu_custom_call.1} parent=11 // pred_fallthru
          _
        // Predicated region
        $region17: #{tpu_custom_call.1} parent=11 // pred_check
          %p190 = pneg %p83
        $region18: #{tpu_custom_call.1} parent=11 // pred_check_branch
          %192 = sbr.rel (%p190) target = $region20
        $region19: #{tpu_custom_call.1} parent=11 // pred_region
          _
        $region20: #{tpu_custom_call.1} parent=11 // pred_fallthru
          _
        // Predicated region
        $region21: #{tpu_custom_call.1} parent=11 // pred_check
          %p193 = pneg %p104
        $region22: #{tpu_custom_call.1} parent=11 // pred_check_branch
          %195 = sbr.rel (%p193) target = $region24
        $region23: #{tpu_custom_call.1} parent=11 // pred_region
          _
        $region24: #{tpu_custom_call.1} parent=11 // pred_fallthru
          _
        // Predicated region
        $region25: #{tpu_custom_call.1} parent=11 // pred_check
          %p196 = pneg %p125
        $region26: #{tpu_custom_call.1} parent=11 // pred_check_branch
          %198 = sbr.rel (%p196) target = $region28
        $region27: #{tpu_custom_call.1} parent=11 // pred_region
          _
        $region28: #{tpu_custom_call.1} parent=11 // pred_fallthru
          _
        // Predicated region
        $region29: #{tpu_custom_call.1} parent=11 // pred_check
          %p199 = pneg %p146
        $region30: #{tpu_custom_call.1} parent=11 // pred_check_branch
          %201 = sbr.rel (%p199) target = $region32
        $region31: #{tpu_custom_call.1} parent=11 // pred_region
          _
        $region32: #{tpu_custom_call.1} parent=11 // pred_fallthru
          _
      $region12: #{tpu_custom_call.1} parent=5 // pred_fallthru
        _
      %p202 = scmp.lt.s32.totalorder %s15, 2
      // Predicated region
      $region33: #{tpu_custom_call.1} parent=5 // pred_check
        %p203 = pneg %p202
      $region34: #{tpu_custom_call.1} parent=5 // pred_check_branch
        %205 = sbr.rel (%p203) target = $region36
      $region35: #{tpu_custom_call.1} parent=5 // pred_region
        // Predicated region
        $region37: #{tpu_custom_call.1} parent=35 // pred_check
          %p206 = pneg %p35
        $region38: #{tpu_custom_call.1} parent=35 // pred_check_branch
          %208 = sbr.rel (%p206) target = $region40
        $region39: #{tpu_custom_call.1} parent=35 // pred_region
          %p209 = scmp.lt.s32.totalorder %s15, 1
          %s210 = scalar_select %p209, %s15, 1
          %s211 = smul.addr %s210, 32
          %s212 = smul.addr %s211, 8
          %s213 = scalar_lea.vmem %s0, %s212
        $region40: #{tpu_custom_call.1} parent=35 // pred_fallthru
          _
      $region36: #{tpu_custom_call.1} parent=5 // pred_fallthru
        _
      %p214 = scmp.le.s32.totalorder 1, %s15
      %p215 = scmp.lt.s32.totalorder %s15, 3
      %p216 = pnand %p214, %p215
      %p217 = pneg %p216
      // Predicated region
      $region41: #{tpu_custom_call.1} parent=5 // pred_check
        _
      $region42: #{tpu_custom_call.1} parent=5 // pred_check_branch
        %219 = sbr.rel (%p216) target = $region44
      $region43: #{tpu_custom_call.1} parent=5 // pred_region
        %s220 = ssub.s32 %s15, 1
        %p221 = scmp.lt.s32.totalorder %s20, 1
        %s222 = scalar_select %p221, %s20, 1
        %s223 = smul.addr %s222, 32
        %s224 = smul.addr %s223, 8
        %s225 = scalar_lea.vmem %s0, %s224
        %p226 = pneg %p41
        %p227 = pneg %p38
        %p228 = pneg %p62
        %p229 = pneg %p59
        %p230 = pneg %p83
        %p231 = pneg %p80
        %p232 = pneg %p104
        %p233 = pneg %p101
        %p234 = pneg %p125
        %p235 = pneg %p122
        %p236 = pneg %p146
        %p237 = pneg %p143
        %p238 = pneg %p172
        %p239 = pneg %p169
        %s240 = sand.u32 %s159, 1
        %s241 = scalar_lea.sflag [#allocation3], %s240
        %s242 = sand.u32 %s159, 1
        %s243 = smul.addr %s242, 512
        %s244 = scalar_lea.vmem [#allocation2], %s243
        %p245 = scmp.lt.s32.totalorder %s20, 1
        %s246 = scalar_select %p245, %s20, 1
        %s247 = smul.addr %s246, 32
        %s248 = smul.addr %s247, 8
        %s249 = scalar_lea.vmem %s0, %s248
        %v250 = vlaneseq
        %v251 = vshrl.u32 %v250, 7
        %v252 = vadd.s32 %v251, 8
        %v253 = vadd.s32 %v251, 16
        %v254 = vadd.s32 %v251, 24
        %v255 = vadd.s32 %v251, 32
        %v256 = vadd.s32 %v251, 40
        %v257 = vadd.s32 %v251, 48
        %v258 = vadd.s32 %v251, 56
        %v259 = vadd.s32 %v251, 64
        %v260 = vadd.s32 %v251, 72
        %v261 = vadd.s32 %v251, 80
        %v262 = vadd.s32 %v251, 88
        %v263 = vadd.s32 %v251, 96
        %v264 = vadd.s32 %v251, 104
        %v265 = vadd.s32 %v251, 112
        %v266 = vadd.s32 %v251, 120
        %v267 = vadd.s32 %v251, 128
        %v268 = vadd.s32 %v251, 136
        %v269 = vadd.s32 %v251, 144
        %v270 = vadd.s32 %v251, 152
        %v271 = vadd.s32 %v251, 160
        %v272 = vadd.s32 %v251, 168
        %v273 = vadd.s32 %v251, 176
        %v274 = vadd.s32 %v251, 184
        %v275 = vadd.s32 %v251, 192
        %v276 = vadd.s32 %v251, 200
        %v277 = vadd.s32 %v251, 208
        %v278 = vadd.s32 %v251, 216
        %v279 = vadd.s32 %v251, 224
        %v280 = vadd.s32 %v251, 232
        %v281 = vadd.s32 %v251, 240
        %v282 = vadd.s32 %v251, 248
        %v283 = vand.u32 %v251, 15
        %v284 = vand.u32 %v252, 15
        %v285 = vand.u32 %v253, 15
        %v286 = vand.u32 %v254, 15
        %v287 = vand.u32 %v255, 15
        %v288 = vand.u32 %v256, 15
        %v289 = vand.u32 %v257, 15
        %v290 = vand.u32 %v258, 15
        %v291 = vand.u32 %v259, 15
        %v292 = vand.u32 %v260, 15
        %v293 = vand.u32 %v261, 15
        %v294 = vand.u32 %v262, 15
        %v295 = vand.u32 %v263, 15
        %v296 = vand.u32 %v264, 15
        %v297 = vand.u32 %v265, 15
        %v298 = vand.u32 %v266, 15
        %v299 = vand.u32 %v267, 15
        %v300 = vand.u32 %v268, 15
        %v301 = vand.u32 %v269, 15
        %v302 = vand.u32 %v270, 15
        %v303 = vand.u32 %v271, 15
        %v304 = vand.u32 %v272, 15
        %v305 = vand.u32 %v273, 15
        %v306 = vand.u32 %v274, 15
        %v307 = vand.u32 %v275, 15
        %v308 = vand.u32 %v276, 15
        %v309 = vand.u32 %v277, 15
        %v310 = vand.u32 %v278, 15
        %v311 = vand.u32 %v279, 15
        %v312 = vand.u32 %v280, 15
        %v313 = vand.u32 %v281, 15
        %v314 = vand.u32 %v282, 15
        %vm315 = vcmp.gt.s32.totalorder %v283, 0
        %vm316 = vcmp.gt.s32.totalorder %v284, 0
        %vm317 = vcmp.gt.s32.totalorder %v285, 0
        %vm318 = vcmp.gt.s32.totalorder %v286, 0
        %vm319 = vcmp.gt.s32.totalorder %v287, 0
        %vm320 = vcmp.gt.s32.totalorder %v288, 0
        %vm321 = vcmp.gt.s32.totalorder %v289, 0
        %vm322 = vcmp.gt.s32.totalorder %v290, 0
        %vm323 = vcmp.gt.s32.totalorder %v291, 0
        %vm324 = vcmp.gt.s32.totalorder %v292, 0
        %vm325 = vcmp.gt.s32.totalorder %v293, 0
        %vm326 = vcmp.gt.s32.totalorder %v294, 0
        %vm327 = vcmp.gt.s32.totalorder %v295, 0
        %vm328 = vcmp.gt.s32.totalorder %v296, 0
        %vm329 = vcmp.gt.s32.totalorder %v297, 0
        %vm330 = vcmp.gt.s32.totalorder %v298, 0
        %vm331 = vcmp.gt.s32.totalorder %v299, 0
        %vm332 = vcmp.gt.s32.totalorder %v300, 0
        %vm333 = vcmp.gt.s32.totalorder %v301, 0
        %vm334 = vcmp.gt.s32.totalorder %v302, 0
        %vm335 = vcmp.gt.s32.totalorder %v303, 0
        %vm336 = vcmp.gt.s32.totalorder %v304, 0
        %vm337 = vcmp.gt.s32.totalorder %v305, 0
        %vm338 = vcmp.gt.s32.totalorder %v306, 0
        %vm339 = vcmp.gt.s32.totalorder %v307, 0
        %vm340 = vcmp.gt.s32.totalorder %v308, 0
        %vm341 = vcmp.gt.s32.totalorder %v309, 0
        %vm342 = vcmp.gt.s32.totalorder %v310, 0
        %vm343 = vcmp.gt.s32.totalorder %v311, 0
        %vm344 = vcmp.gt.s32.totalorder %v312, 0
        %vm345 = vcmp.gt.s32.totalorder %v313, 0
        %vm346 = vcmp.gt.s32.totalorder %v314, 0
        %v347 = vsel %vm315, 1, 0
        %v348 = vsel %vm316, 1, 0
        %v349 = vsel %vm317, 1, 0
        %v350 = vsel %vm318, 1, 0
        %v351 = vsel %vm319, 1, 0
        %v352 = vsel %vm320, 1, 0
        %v353 = vsel %vm321, 1, 0
        %v354 = vsel %vm322, 1, 0
        %v355 = vsel %vm323, 1, 0
        %v356 = vsel %vm324, 1, 0
        %v357 = vsel %vm325, 1, 0
        %v358 = vsel %vm326, 1, 0
        %v359 = vsel %vm327, 1, 0
        %v360 = vsel %vm328, 1, 0
        %v361 = vsel %vm329, 1, 0
        %v362 = vsel %vm330, 1, 0
        %v363 = vsel %vm331, 1, 0
        %v364 = vsel %vm332, 1, 0
        %v365 = vsel %vm333, 1, 0
        %v366 = vsel %vm334, 1, 0
        %v367 = vsel %vm335, 1, 0
        %v368 = vsel %vm336, 1, 0
        %v369 = vsel %vm337, 1, 0
        %v370 = vsel %vm338, 1, 0
        %v371 = vsel %vm339, 1, 0
        %v372 = vsel %vm340, 1, 0
        %v373 = vsel %vm341, 1, 0
        %v374 = vsel %vm342, 1, 0
        %v375 = vsel %vm343, 1, 0
        %v376 = vsel %vm344, 1, 0
        %v377 = vsel %vm345, 1, 0
        %v378 = vsel %vm346, 1, 0
        %v379 = vcvt.s32.f32 %v347
        %v380 = vcvt.s32.f32 %v348
        %v381 = vcvt.s32.f32 %v349
        %v382 = vcvt.s32.f32 %v350
        %v383 = vcvt.s32.f32 %v351
        %v384 = vcvt.s32.f32 %v352
        %v385 = vcvt.s32.f32 %v353
        %v386 = vcvt.s32.f32 %v354
        %v387 = vcvt.s32.f32 %v355
        %v388 = vcvt.s32.f32 %v356
        %v389 = vcvt.s32.f32 %v357
        %v390 = vcvt.s32.f32 %v358
        %v391 = vcvt.s32.f32 %v359
        %v392 = vcvt.s32.f32 %v360
        %v393 = vcvt.s32.f32 %v361
        %v394 = vcvt.s32.f32 %v362
        %v395 = vcvt.s32.f32 %v363
        %v396 = vcvt.s32.f32 %v364
        %v397 = vcvt.s32.f32 %v365
        %v398 = vcvt.s32.f32 %v366
        %v399 = vcvt.s32.f32 %v367
        %v400 = vcvt.s32.f32 %v368
        %v401 = vcvt.s32.f32 %v369
        %v402 = vcvt.s32.f32 %v370
        %v403 = vcvt.s32.f32 %v371
        %v404 = vcvt.s32.f32 %v372
        %v405 = vcvt.s32.f32 %v373
        %v406 = vcvt.s32.f32 %v374
        %v407 = vcvt.s32.f32 %v375
        %v408 = vcvt.s32.f32 %v376
        %v409 = vcvt.s32.f32 %v377
        %v410 = vcvt.s32.f32 %v378
        %vm411 = vcmp.lt.s32.totalorder %v283, 15
        %vm412 = vcmp.lt.s32.totalorder %v284, 15
        %vm413 = vcmp.lt.s32.totalorder %v285, 15
        %vm414 = vcmp.lt.s32.totalorder %v286, 15
        %vm415 = vcmp.lt.s32.totalorder %v287, 15
        %vm416 = vcmp.lt.s32.totalorder %v288, 15
        %vm417 = vcmp.lt.s32.totalorder %v289, 15
        %vm418 = vcmp.lt.s32.totalorder %v290, 15
        %vm419 = vcmp.lt.s32.totalorder %v291, 15
        %vm420 = vcmp.lt.s32.totalorder %v292, 15
        %vm421 = vcmp.lt.s32.totalorder %v293, 15
        %vm422 = vcmp.lt.s32.totalorder %v294, 15
        %vm423 = vcmp.lt.s32.totalorder %v295, 15
        %vm424 = vcmp.lt.s32.totalorder %v296, 15
        %vm425 = vcmp.lt.s32.totalorder %v297, 15
        %vm426 = vcmp.lt.s32.totalorder %v298, 15
        %vm427 = vcmp.lt.s32.totalorder %v299, 15
        %vm428 = vcmp.lt.s32.totalorder %v300, 15
        %vm429 = vcmp.lt.s32.totalorder %v301, 15
        %vm430 = vcmp.lt.s32.totalorder %v302, 15
        %vm431 = vcmp.lt.s32.totalorder %v303, 15
        %vm432 = vcmp.lt.s32.totalorder %v304, 15
        %vm433 = vcmp.lt.s32.totalorder %v305, 15
        %vm434 = vcmp.lt.s32.totalorder %v306, 15
        %vm435 = vcmp.lt.s32.totalorder %v307, 15
        %vm436 = vcmp.lt.s32.totalorder %v308, 15
        %vm437 = vcmp.lt.s32.totalorder %v309, 15
        %vm438 = vcmp.lt.s32.totalorder %v310, 15
        %vm439 = vcmp.lt.s32.totalorder %v311, 15
        %vm440 = vcmp.lt.s32.totalorder %v312, 15
        %vm441 = vcmp.lt.s32.totalorder %v313, 15
        %vm442 = vcmp.lt.s32.totalorder %v314, 15
        %v443 = vsel %vm411, 1, 0
        %v444 = vsel %vm412, 1, 0
        %v445 = vsel %vm413, 1, 0
        %v446 = vsel %vm414, 1, 0
        %v447 = vsel %vm415, 1, 0
        %v448 = vsel %vm416, 1, 0
        %v449 = vsel %vm417, 1, 0
        %v450 = vsel %vm418, 1, 0
        %v451 = vsel %vm419, 1, 0
        %v452 = vsel %vm420, 1, 0
        %v453 = vsel %vm421, 1, 0
        %v454 = vsel %vm422, 1, 0
        %v455 = vsel %vm423, 1, 0
        %v456 = vsel %vm424, 1, 0
        %v457 = vsel %vm425, 1, 0
        %v458 = vsel %vm426, 1, 0
        %v459 = vsel %vm427, 1, 0
        %v460 = vsel %vm428, 1, 0
        %v461 = vsel %vm429, 1, 0
        %v462 = vsel %vm430, 1, 0
        %v463 = vsel %vm431, 1, 0
        %v464 = vsel %vm432, 1, 0
        %v465 = vsel %vm433, 1, 0
        %v466 = vsel %vm434, 1, 0
        %v467 = vsel %vm435, 1, 0
        %v468 = vsel %vm436, 1, 0
        %v469 = vsel %vm437, 1, 0
        %v470 = vsel %vm438, 1, 0
        %v471 = vsel %vm439, 1, 0
        %v472 = vsel %vm440, 1, 0
        %v473 = vsel %vm441, 1, 0
        %v474 = vsel %vm442, 1, 0
        %v475 = vcvt.s32.f32 %v443
        %v476 = vcvt.s32.f32 %v444
        %v477 = vcvt.s32.f32 %v445
        %v478 = vcvt.s32.f32 %v446
        %v479 = vcvt.s32.f32 %v447
        %v480 = vcvt.s32.f32 %v448
        %v481 = vcvt.s32.f32 %v449
        %v482 = vcvt.s32.f32 %v450
        %v483 = vcvt.s32.f32 %v451
        %v484 = vcvt.s32.f32 %v452
        %v485 = vcvt.s32.f32 %v453
        %v486 = vcvt.s32.f32 %v454
        %v487 = vcvt.s32.f32 %v455
        %v488 = vcvt.s32.f32 %v456
        %v489 = vcvt.s32.f32 %v457
        %v490 = vcvt.s32.f32 %v458
        %v491 = vcvt.s32.f32 %v459
        %v492 = vcvt.s32.f32 %v460
        %v493 = vcvt.s32.f32 %v461
        %v494 = vcvt.s32.f32 %v462
        %v495 = vcvt.s32.f32 %v463
        %v496 = vcvt.s32.f32 %v464
        %v497 = vcvt.s32.f32 %v465
        %v498 = vcvt.s32.f32 %v466
        %v499 = vcvt.s32.f32 %v467
        %v500 = vcvt.s32.f32 %v468
        %v501 = vcvt.s32.f32 %v469
        %v502 = vcvt.s32.f32 %v470
        %v503 = vcvt.s32.f32 %v471
        %v504 = vcvt.s32.f32 %v472
        %v505 = vcvt.s32.f32 %v473
        %v506 = vcvt.s32.f32 %v474
        %507 = vst [vmem:[%s244] sm:$0xff] 0.0
        %508 = vst [vmem:[%s244 + $0x8] sm:$0xff] 0.0
        %509 = vst [vmem:[%s244 + $0x10] sm:$0xff] 0.0
        %510 = vst [vmem:[%s244 + $0x18] sm:$0xff] 0.0
        %511 = vst [vmem:[%s244 + $0x20] sm:$0xff] 0.0
        %512 = vst [vmem:[%s244 + $0x28] sm:$0xff] 0.0
        %513 = vst [vmem:[%s244 + $0x30] sm:$0xff] 0.0
        %514 = vst [vmem:[%s244 + $0x38] sm:$0xff] 0.0
        %515 = vst [vmem:[%s244 + $0x40] sm:$0xff] 0.0
        %516 = vst [vmem:[%s244 + $0x48] sm:$0xff] 0.0
        %517 = vst [vmem:[%s244 + $0x50] sm:$0xff] 0.0
        %518 = vst [vmem:[%s244 + $0x58] sm:$0xff] 0.0
        %519 = vst [vmem:[%s244 + $0x60] sm:$0xff] 0.0
        %520 = vst [vmem:[%s244 + $0x68] sm:$0xff] 0.0
        %521 = vst [vmem:[%s244 + $0x70] sm:$0xff] 0.0
        %522 = vst [vmem:[%s244 + $0x78] sm:$0xff] 0.0
        %523 = vst [vmem:[%s244 + $0x80] sm:$0xff] 0.0
        %524 = vst [vmem:[%s244 + $0x88] sm:$0xff] 0.0
        %525 = vst [vmem:[%s244 + $0x90] sm:$0xff] 0.0
        %526 = vst [vmem:[%s244 + $0x98] sm:$0xff] 0.0
        %527 = vst [vmem:[%s244 + $0xa0] sm:$0xff] 0.0
        %528 = vst [vmem:[%s244 + $0xa8] sm:$0xff] 0.0
        %529 = vst [vmem:[%s244 + $0xb0] sm:$0xff] 0.0
        %530 = vst [vmem:[%s244 + $0xb8] sm:$0xff] 0.0
        %531 = vst [vmem:[%s244 + $0xc0] sm:$0xff] 0.0
        %532 = vst [vmem:[%s244 + $0xc8] sm:$0xff] 0.0
        %533 = vst [vmem:[%s244 + $0xd0] sm:$0xff] 0.0
        %534 = vst [vmem:[%s244 + $0xd8] sm:$0xff] 0.0
        %535 = vst [vmem:[%s244 + $0xe0] sm:$0xff] 0.0
        %536 = vst [vmem:[%s244 + $0xe8] sm:$0xff] 0.0
        %537 = vst [vmem:[%s244 + $0xf0] sm:$0xff] 0.0
        %538 = vst [vmem:[%s244 + $0xf8] sm:$0xff] 0.0
        %539 = vst [vmem:[%s244 + $0x100] sm:$0xff] 0.0
        %540 = vst [vmem:[%s244 + $0x108] sm:$0xff] 0.0
        %541 = vst [vmem:[%s244 + $0x110] sm:$0xff] 0.0
        %542 = vst [vmem:[%s244 + $0x118] sm:$0xff] 0.0
        %543 = vst [vmem:[%s244 + $0x120] sm:$0xff] 0.0
        %544 = vst [vmem:[%s244 + $0x128] sm:$0xff] 0.0
        %545 = vst [vmem:[%s244 + $0x130] sm:$0xff] 0.0
        %546 = vst [vmem:[%s244 + $0x138] sm:$0xff] 0.0
        %547 = vst [vmem:[%s244 + $0x140] sm:$0xff] 0.0
        %548 = vst [vmem:[%s244 + $0x148] sm:$0xff] 0.0
        %549 = vst [vmem:[%s244 + $0x150] sm:$0xff] 0.0
        %550 = vst [vmem:[%s244 + $0x158] sm:$0xff] 0.0
        %551 = vst [vmem:[%s244 + $0x160] sm:$0xff] 0.0
        %552 = vst [vmem:[%s244 + $0x168] sm:$0xff] 0.0
        %553 = vst [vmem:[%s244 + $0x170] sm:$0xff] 0.0
        %554 = vst [vmem:[%s244 + $0x178] sm:$0xff] 0.0
        %555 = vst [vmem:[%s244 + $0x180] sm:$0xff] 0.0
        %556 = vst [vmem:[%s244 + $0x188] sm:$0xff] 0.0
        %557 = vst [vmem:[%s244 + $0x190] sm:$0xff] 0.0
        %558 = vst [vmem:[%s244 + $0x198] sm:$0xff] 0.0
        %559 = vst [vmem:[%s244 + $0x1a0] sm:$0xff] 0.0
        %560 = vst [vmem:[%s244 + $0x1a8] sm:$0xff] 0.0
        %561 = vst [vmem:[%s244 + $0x1b0] sm:$0xff] 0.0
        %562 = vst [vmem:[%s244 + $0x1b8] sm:$0xff] 0.0
        %563 = vst [vmem:[%s244 + $0x1c0] sm:$0xff] 0.0
        %564 = vst [vmem:[%s244 + $0x1c8] sm:$0xff] 0.0
        %565 = vst [vmem:[%s244 + $0x1d0] sm:$0xff] 0.0
        %566 = vst [vmem:[%s244 + $0x1d8] sm:$0xff] 0.0
        %567 = vst [vmem:[%s244 + $0x1e0] sm:$0xff] 0.0
        %568 = vst [vmem:[%s244 + $0x1e8] sm:$0xff] 0.0
        %569 = vst [vmem:[%s244 + $0x1f0] sm:$0xff] 0.0
        %570 = vst [vmem:[%s244 + $0x1f8] sm:$0xff] 0.0
        %v571 = vld [vmem:[%s249] sm:$0xff]
        %v572 = vld [vmem:[%s249 + $0x8] sm:$0xff]
        %v573 = vld [vmem:[%s249 + $0x10] sm:$0xff]
        %v574 = vld [vmem:[%s249 + $0x18] sm:$0xff]
        %v575 = vld [vmem:[%s249 + $0x20] sm:$0xff]
        %v576 = vld [vmem:[%s249 + $0x28] sm:$0xff]
        %v577 = vld [vmem:[%s249 + $0x30] sm:$0xff]
        %v578 = vld [vmem:[%s249 + $0x38] sm:$0xff]
        %v579 = vld [vmem:[%s249 + $0x40] sm:$0xff]
        %v580 = vld [vmem:[%s249 + $0x48] sm:$0xff]
        %v581 = vld [vmem:[%s249 + $0x50] sm:$0xff]
        %v582 = vld [vmem:[%s249 + $0x58] sm:$0xff]
        %v583 = vld [vmem:[%s249 + $0x60] sm:$0xff]
        %v584 = vld [vmem:[%s249 + $0x68] sm:$0xff]
        %v585 = vld [vmem:[%s249 + $0x70] sm:$0xff]
        %v586 = vld [vmem:[%s249 + $0x78] sm:$0xff]
        %v587 = vld [vmem:[%s249 + $0x80] sm:$0xff]
        %v588 = vld [vmem:[%s249 + $0x88] sm:$0xff]
        %v589 = vld [vmem:[%s249 + $0x90] sm:$0xff]
        %v590 = vld [vmem:[%s249 + $0x98] sm:$0xff]
        %v591 = vld [vmem:[%s249 + $0xa0] sm:$0xff]
        %v592 = vld [vmem:[%s249 + $0xa8] sm:$0xff]
        %v593 = vld [vmem:[%s249 + $0xb0] sm:$0xff]
        %v594 = vld [vmem:[%s249 + $0xb8] sm:$0xff]
        %v595 = vld [vmem:[%s249 + $0xc0] sm:$0xff]
        %v596 = vld [vmem:[%s249 + $0xc8] sm:$0xff]
        %v597 = vld [vmem:[%s249 + $0xd0] sm:$0xff]
        %v598 = vld [vmem:[%s249 + $0xd8] sm:$0xff]
        %v599 = vld [vmem:[%s249 + $0xe0] sm:$0xff]
        %v600 = vld [vmem:[%s249 + $0xe8] sm:$0xff]
        %v601 = vld [vmem:[%s249 + $0xf0] sm:$0xff]
        %v602 = vld [vmem:[%s249 + $0xf8] sm:$0xff]
        %vm603 = vcmask 523264
        %604 = vst.msk [vmem:[%s244] sm:$0xff] %vm603, %v571
        %605 = vst.msk [vmem:[%s244 + $0x10] sm:$0xff] %vm603, %v572
        %606 = vst.msk [vmem:[%s244 + $0x20] sm:$0xff] %vm603, %v573
        %607 = vst.msk [vmem:[%s244 + $0x30] sm:$0xff] %vm603, %v574
        %608 = vst.msk [vmem:[%s244 + $0x40] sm:$0xff] %vm603, %v575
        %609 = vst.msk [vmem:[%s244 + $0x50] sm:$0xff] %vm603, %v576
        %610 = vst.msk [vmem:[%s244 + $0x60] sm:$0xff] %vm603, %v577
        %611 = vst.msk [vmem:[%s244 + $0x70] sm:$0xff] %vm603, %v578
        %612 = vst.msk [vmem:[%s244 + $0x80] sm:$0xff] %vm603, %v579
        %613 = vst.msk [vmem:[%s244 + $0x90] sm:$0xff] %vm603, %v580
        %614 = vst.msk [vmem:[%s244 + $0xa0] sm:$0xff] %vm603, %v581
        %615 = vst.msk [vmem:[%s244 + $0xb0] sm:$0xff] %vm603, %v582
        %616 = vst.msk [vmem:[%s244 + $0xc0] sm:$0xff] %vm603, %v583
        %617 = vst.msk [vmem:[%s244 + $0xd0] sm:$0xff] %vm603, %v584
        %618 = vst.msk [vmem:[%s244 + $0xe0] sm:$0xff] %vm603, %v585
        %619 = vst.msk [vmem:[%s244 + $0xf0] sm:$0xff] %vm603, %v586
        %620 = vst.msk [vmem:[%s244 + $0x100] sm:$0xff] %vm603, %v587
        %621 = vst.msk [vmem:[%s244 + $0x110] sm:$0xff] %vm603, %v588
        %622 = vst.msk [vmem:[%s244 + $0x120] sm:$0xff] %vm603, %v589
        %623 = vst.msk [vmem:[%s244 + $0x130] sm:$0xff] %vm603, %v590
        %624 = vst.msk [vmem:[%s244 + $0x140] sm:$0xff] %vm603, %v591
        %625 = vst.msk [vmem:[%s244 + $0x150] sm:$0xff] %vm603, %v592
        %626 = vst.msk [vmem:[%s244 + $0x160] sm:$0xff] %vm603, %v593
        %627 = vst.msk [vmem:[%s244 + $0x170] sm:$0xff] %vm603, %v594
        %628 = vst.msk [vmem:[%s244 + $0x180] sm:$0xff] %vm603, %v595
        %629 = vst.msk [vmem:[%s244 + $0x190] sm:$0xff] %vm603, %v596
        %630 = vst.msk [vmem:[%s244 + $0x1a0] sm:$0xff] %vm603, %v597
        %631 = vst.msk [vmem:[%s244 + $0x1b0] sm:$0xff] %vm603, %v598
        %632 = vst.msk [vmem:[%s244 + $0x1c0] sm:$0xff] %vm603, %v599
        %633 = vst.msk [vmem:[%s244 + $0x1d0] sm:$0xff] %vm603, %v600
        %634 = vst.msk [vmem:[%s244 + $0x1e0] sm:$0xff] %vm603, %v601
        %635 = vst.msk [vmem:[%s244 + $0x1f0] sm:$0xff] %vm603, %v602
        %v636 = vld [vmem:[%s244] sm:$0xff]
        %v637 = vld [vmem:[%s244 + $0x10] sm:$0xff]
        %v638 = vld [vmem:[%s244 + $0x20] sm:$0xff]
        %v639 = vld [vmem:[%s244 + $0x30] sm:$0xff]
        %v640 = vld [vmem:[%s244 + $0x40] sm:$0xff]
        %v641 = vld [vmem:[%s244 + $0x50] sm:$0xff]
        %v642 = vld [vmem:[%s244 + $0x60] sm:$0xff]
        %v643 = vld [vmem:[%s244 + $0x70] sm:$0xff]
        %v644 = vld [vmem:[%s244 + $0x80] sm:$0xff]
        %v645 = vld [vmem:[%s244 + $0x90] sm:$0xff]
        %v646 = vld [vmem:[%s244 + $0xa0] sm:$0xff]
        %v647 = vld [vmem:[%s244 + $0xb0] sm:$0xff]
        %v648 = vld [vmem:[%s244 + $0xc0] sm:$0xff]
        %v649 = vld [vmem:[%s244 + $0xd0] sm:$0xff]
        %v650 = vld [vmem:[%s244 + $0xe0] sm:$0xff]
        %v651 = vld [vmem:[%s244 + $0xf0] sm:$0xff]
        %v652 = vld [vmem:[%s244 + $0x100] sm:$0xff]
        %v653 = vld [vmem:[%s244 + $0x110] sm:$0xff]
        %v654 = vld [vmem:[%s244 + $0x120] sm:$0xff]
        %v655 = vld [vmem:[%s244 + $0x130] sm:$0xff]
        %v656 = vld [vmem:[%s244 + $0x140] sm:$0xff]
        %v657 = vld [vmem:[%s244 + $0x150] sm:$0xff]
        %v658 = vld [vmem:[%s244 + $0x160] sm:$0xff]
        %v659 = vld [vmem:[%s244 + $0x170] sm:$0xff]
        %v660 = vld [vmem:[%s244 + $0x180] sm:$0xff]
        %v661 = vld [vmem:[%s244 + $0x190] sm:$0xff]
        %v662 = vld [vmem:[%s244 + $0x1a0] sm:$0xff]
        %v663 = vld [vmem:[%s244 + $0x1b0] sm:$0xff]
        %v664 = vld [vmem:[%s244 + $0x1c0] sm:$0xff]
        %v665 = vld [vmem:[%s244 + $0x1d0] sm:$0xff]
        %v666 = vld [vmem:[%s244 + $0x1e0] sm:$0xff]
        %v667 = vld [vmem:[%s244 + $0x1f0] sm:$0xff]
        %v668 = vld [vmem:[%s2] sm:$0x1]
        %v669 = vperm.slane %v668, 0
        %v670 = vmul.f32 %v636, %v669
        %v671 = vmul.f32 %v637, %v669
        %v672 = vmul.f32 %v638, %v669
        %v673 = vmul.f32 %v639, %v669
        %v674 = vmul.f32 %v640, %v669
        %v675 = vmul.f32 %v641, %v669
        %v676 = vmul.f32 %v642, %v669
        %v677 = vmul.f32 %v643, %v669
        %v678 = vmul.f32 %v644, %v669
        %v679 = vmul.f32 %v645, %v669
        %v680 = vmul.f32 %v646, %v669
        %v681 = vmul.f32 %v647, %v669
        %v682 = vmul.f32 %v648, %v669
        %v683 = vmul.f32 %v649, %v669
        %v684 = vmul.f32 %v650, %v669
        %v685 = vmul.f32 %v651, %v669
        %v686 = vmul.f32 %v652, %v669
        %v687 = vmul.f32 %v653, %v669
        %v688 = vmul.f32 %v654, %v669
        %v689 = vmul.f32 %v655, %v669
        %v690 = vmul.f32 %v656, %v669
        %v691 = vmul.f32 %v657, %v669
        %v692 = vmul.f32 %v658, %v669
        %v693 = vmul.f32 %v659, %v669
        %v694 = vmul.f32 %v660, %v669
        %v695 = vmul.f32 %v661, %v669
        %v696 = vmul.f32 %v662, %v669
        %v697 = vmul.f32 %v663, %v669
        %v698 = vmul.f32 %v664, %v669
        %v699 = vmul.f32 %v665, %v669
        %v700 = vmul.f32 %v666, %v669
        %v701 = vmul.f32 %v667, %v669
        %v702 = vld [vmem:[%s3] sm:$0x1]
        %v703 = vperm.slane %v702, 0
        %v704 = vadd.f32 %v670, %v703
        %v705 = vadd.f32 %v671, %v703
        %v706 = vadd.f32 %v672, %v703
        %v707 = vadd.f32 %v673, %v703
        %v708 = vadd.f32 %v674, %v703
        %v709 = vadd.f32 %v675, %v703
        %v710 = vadd.f32 %v676, %v703
        %v711 = vadd.f32 %v677, %v703
        %v712 = vadd.f32 %v678, %v703
        %v713 = vadd.f32 %v679, %v703
        %v714 = vadd.f32 %v680, %v703
        %v715 = vadd.f32 %v681, %v703
        %v716 = vadd.f32 %v682, %v703
        %v717 = vadd.f32 %v683, %v703
        %v718 = vadd.f32 %v684, %v703
        %v719 = vadd.f32 %v685, %v703
        %v720 = vadd.f32 %v686, %v703
        %v721 = vadd.f32 %v687, %v703
        %v722 = vadd.f32 %v688, %v703
        %v723 = vadd.f32 %v689, %v703
        %v724 = vadd.f32 %v690, %v703
        %v725 = vadd.f32 %v691, %v703
        %v726 = vadd.f32 %v692, %v703
        %v727 = vadd.f32 %v693, %v703
        %v728 = vadd.f32 %v694, %v703
        %v729 = vadd.f32 %v695, %v703
        %v730 = vadd.f32 %v696, %v703
        %v731 = vadd.f32 %v697, %v703
        %v732 = vadd.f32 %v698, %v703
        %v733 = vadd.f32 %v699, %v703
        %v734 = vadd.f32 %v700, %v703
        %v735 = vadd.f32 %v701, %v703
        %v736 = vmax.f32 %v704, 0.0
        %v737 = vmax.f32 %v705, 0.0
        %v738 = vmax.f32 %v706, 0.0
        %v739 = vmax.f32 %v707, 0.0
        %v740 = vmax.f32 %v708, 0.0
        %v741 = vmax.f32 %v709, 0.0
        %v742 = vmax.f32 %v710, 0.0
        %v743 = vmax.f32 %v711, 0.0
        %v744 = vmax.f32 %v712, 0.0
        %v745 = vmax.f32 %v713, 0.0
        %v746 = vmax.f32 %v714, 0.0
        %v747 = vmax.f32 %v715, 0.0
        %v748 = vmax.f32 %v716, 0.0
        %v749 = vmax.f32 %v717, 0.0
        %v750 = vmax.f32 %v718, 0.0
        %v751 = vmax.f32 %v719, 0.0
        %v752 = vmax.f32 %v720, 0.0
        %v753 = vmax.f32 %v721, 0.0
        %v754 = vmax.f32 %v722, 0.0
        %v755 = vmax.f32 %v723, 0.0
        %v756 = vmax.f32 %v724, 0.0
        %v757 = vmax.f32 %v725, 0.0
        %v758 = vmax.f32 %v726, 0.0
        %v759 = vmax.f32 %v727, 0.0
        %v760 = vmax.f32 %v728, 0.0
        %v761 = vmax.f32 %v729, 0.0
        %v762 = vmax.f32 %v730, 0.0
        %v763 = vmax.f32 %v731, 0.0
        %v764 = vmax.f32 %v732, 0.0
        %v765 = vmax.f32 %v733, 0.0
        %v766 = vmax.f32 %v734, 0.0
        %v767 = vmax.f32 %v735, 0.0
        %v768 = vpack.c.bf16 %v737, %v736
        %v769 = vpack.c.bf16 %v739, %v738
        %v770 = vpack.c.bf16 %v741, %v740
        %v771 = vpack.c.bf16 %v743, %v742
        %v772 = vpack.c.bf16 %v745, %v744
        %v773 = vpack.c.bf16 %v747, %v746
        %v774 = vpack.c.bf16 %v749, %v748
        %v775 = vpack.c.bf16 %v751, %v750
        %v776 = vpack.c.bf16 %v753, %v752
        %v777 = vpack.c.bf16 %v755, %v754
        %v778 = vpack.c.bf16 %v757, %v756
        %v779 = vpack.c.bf16 %v759, %v758
        %v780 = vpack.c.bf16 %v761, %v760
        %v781 = vpack.c.bf16 %v763, %v762
        %v782 = vpack.c.bf16 %v765, %v764
        %v783 = vpack.c.bf16 %v767, %v766
        %v784 = vld [vmem:[%s1] sm:$0xf]
        %v785 = vld [vmem:[%s1 + $0x4] sm:$0xf]
        %v786 = vld [vmem:[%s1 + $0x8] sm:$0xf]
        %v787 = vld [vmem:[%s1 + $0xc] sm:$0xf]
        %v788 = vld [vmem:[%s1 + $0x10] sm:$0xf]
        %v789 = vld [vmem:[%s1 + $0x14] sm:$0xf]
        %v790 = vld [vmem:[%s1 + $0x18] sm:$0xf]
        %v791 = vld [vmem:[%s1 + $0x1c] sm:$0xf]
        %v792 = vld [vmem:[%s1 + $0x20] sm:$0xf]
        %v793 = vld [vmem:[%s1 + $0x24] sm:$0xf]
        %v794 = vld [vmem:[%s1 + $0x28] sm:$0xf]
        %v795 = vld [vmem:[%s1 + $0x2c] sm:$0xf]
        %v796 = vld [vmem:[%s1 + $0x30] sm:$0xf]
        %v797 = vld [vmem:[%s1 + $0x34] sm:$0xf]
        %v798 = vld [vmem:[%s1 + $0x38] sm:$0xf]
        %v799 = vld [vmem:[%s1 + $0x3c] sm:$0xf]
        %v800 = vld [vmem:[%s5] sm:$0x1]
        %v801 = vperm.slane %v800, 0
        %v818 = vunpack.c.l.b16 %v784
        %v819 = vunpack.c.l.b16 %v785
        %v820 = vunpack.c.l.b16 %v786
        %v821 = vunpack.c.l.b16 %v787
        %v822 = vunpack.c.l.b16 %v788
        %v823 = vunpack.c.l.b16 %v789
        %v824 = vunpack.c.l.b16 %v790
        %v825 = vunpack.c.l.b16 %v791
        %v826 = vunpack.c.l.b16 %v792
        %v827 = vunpack.c.l.b16 %v793
        %v828 = vunpack.c.l.b16 %v794
        %v829 = vunpack.c.l.b16 %v795
        %v830 = vunpack.c.l.b16 %v796
        %v831 = vunpack.c.l.b16 %v797
        %v832 = vunpack.c.l.b16 %v798
        %v833 = vunpack.c.l.b16 %v799
        %v834 = vpack.c.b16 %v819, %v818
        %v835 = vpack.c.b16 %v821, %v820
        %v836 = vpack.c.b16 %v823, %v822
        %v837 = vpack.c.b16 %v825, %v824
        %v838 = vpack.c.b16 %v827, %v826
        %v839 = vpack.c.b16 %v829, %v828
        %v840 = vpack.c.b16 %v831, %v830
        %v841 = vpack.c.b16 %v833, %v832
        %850 = vmatpush.bf16.msra.mxu0 %v841
        %851 = vmatpush.bf16.msra.mxu0 %v840
        %852 = vmatpush.bf16.msra.mxu0 %v839
        %853 = vmatpush.bf16.msra.mxu0 %v838
        %854 = vmatpush.bf16.msra.mxu0 %v837
        %855 = vmatpush.bf16.msra.mxu0 %v836
        %856 = vmatpush.bf16.msra.mxu0 %v835
        %857 = vmatpush.bf16.msra.mxu0 %v834
        %858 = vmatmul.bf16.gmra.mxu0 %v768
        %v859 = vpop.f32.mrf.mxu0
        %v860 = vadd.f32 %v801, %v859
        %v861 = vpop.f32.mrf.mxu0
        %v862 = vadd.f32 %v801, %v861
        %863 = vmatmul.bf16.gmra.mxu0 %v769
        %v864 = vpop.f32.mrf.mxu0
        %v865 = vadd.f32 %v801, %v864
        %v866 = vpop.f32.mrf.mxu0
        %v867 = vadd.f32 %v801, %v866
        %868 = vmatmul.bf16.gmra.mxu0 %v770
        %v869 = vpop.f32.mrf.mxu0
        %v870 = vadd.f32 %v801, %v869
        %v871 = vpop.f32.mrf.mxu0
        %v872 = vadd.f32 %v801, %v871
        %873 = vmatmul.bf16.gmra.mxu0 %v771
        %v874 = vpop.f32.mrf.mxu0
        %v875 = vadd.f32 %v801, %v874
        %v876 = vpop.f32.mrf.mxu0
        %v877 = vadd.f32 %v801, %v876
        %878 = vmatmul.bf16.gmra.mxu0 %v772
        %v879 = vpop.f32.mrf.mxu0
        %v880 = vadd.f32 %v801, %v879
        %v881 = vpop.f32.mrf.mxu0
        %v882 = vadd.f32 %v801, %v881
        %883 = vmatmul.bf16.gmra.mxu0 %v773
        %v884 = vpop.f32.mrf.mxu0
        %v885 = vadd.f32 %v801, %v884
        %v886 = vpop.f32.mrf.mxu0
        %v887 = vadd.f32 %v801, %v886
        %888 = vmatmul.bf16.gmra.mxu0 %v774
        %v889 = vpop.f32.mrf.mxu0
        %v890 = vadd.f32 %v801, %v889
        %v891 = vpop.f32.mrf.mxu0
        %v892 = vadd.f32 %v801, %v891
        %893 = vmatmul.bf16.gmra.mxu0 %v775
        %v894 = vpop.f32.mrf.mxu0
        %v895 = vadd.f32 %v801, %v894
        %v896 = vpop.f32.mrf.mxu0
        %v897 = vadd.f32 %v801, %v896
        %898 = vmatmul.bf16.gmra.mxu0 %v776
        %v899 = vpop.f32.mrf.mxu0
        %v900 = vadd.f32 %v801, %v899
        %v901 = vpop.f32.mrf.mxu0
        %v902 = vadd.f32 %v801, %v901
        %903 = vmatmul.bf16.gmra.mxu0 %v777
        %v904 = vpop.f32.mrf.mxu0
        %v905 = vadd.f32 %v801, %v904
        %v906 = vpop.f32.mrf.mxu0
        %v907 = vadd.f32 %v801, %v906
        %908 = vmatmul.bf16.gmra.mxu0 %v778
        %v909 = vpop.f32.mrf.mxu0
        %v910 = vadd.f32 %v801, %v909
        %v911 = vpop.f32.mrf.mxu0
        %v912 = vadd.f32 %v801, %v911
        %913 = vmatmul.bf16.gmra.mxu0 %v779
        %v914 = vpop.f32.mrf.mxu0
        %v915 = vadd.f32 %v801, %v914
        %v916 = vpop.f32.mrf.mxu0
        %v917 = vadd.f32 %v801, %v916
        %918 = vmatmul.bf16.gmra.mxu0 %v780
        %v919 = vpop.f32.mrf.mxu0
        %v920 = vadd.f32 %v801, %v919
        %v921 = vpop.f32.mrf.mxu0
        %v922 = vadd.f32 %v801, %v921
        %923 = vmatmul.bf16.gmra.mxu0 %v781
        %v924 = vpop.f32.mrf.mxu0
        %v925 = vadd.f32 %v801, %v924
        %v926 = vpop.f32.mrf.mxu0
        %v927 = vadd.f32 %v801, %v926
        %928 = vmatmul.bf16.gmra.mxu0 %v782
        %v929 = vpop.f32.mrf.mxu0
        %v930 = vadd.f32 %v801, %v929
        %v931 = vpop.f32.mrf.mxu0
        %v932 = vadd.f32 %v801, %v931
        %933 = vmatmul.bf16.gmra.mxu0 %v783
        %v934 = vpop.f32.mrf.mxu0
        %v935 = vadd.f32 %v801, %v934
        %v936 = vpop.f32.mrf.mxu0
        %v937 = vadd.f32 %v801, %v936
        %938 = vdwg.mxu0
        %v939 = vmax.f32 %v860, 0.0
        %v940 = vmax.f32 %v862, 0.0
        %v941 = vmax.f32 %v865, 0.0
        %v942 = vmax.f32 %v867, 0.0
        %v943 = vmax.f32 %v870, 0.0
        %v944 = vmax.f32 %v872, 0.0
        %v945 = vmax.f32 %v875, 0.0
        %v946 = vmax.f32 %v877, 0.0
        %v947 = vmax.f32 %v880, 0.0
        %v948 = vmax.f32 %v882, 0.0
        %v949 = vmax.f32 %v885, 0.0
        %v950 = vmax.f32 %v887, 0.0
        %v951 = vmax.f32 %v890, 0.0
        %v952 = vmax.f32 %v892, 0.0
        %v953 = vmax.f32 %v895, 0.0
        %v954 = vmax.f32 %v897, 0.0
        %v955 = vmax.f32 %v900, 0.0
        %v956 = vmax.f32 %v902, 0.0
        %v957 = vmax.f32 %v905, 0.0
        %v958 = vmax.f32 %v907, 0.0
        %v959 = vmax.f32 %v910, 0.0
        %v960 = vmax.f32 %v912, 0.0
        %v961 = vmax.f32 %v915, 0.0
        %v962 = vmax.f32 %v917, 0.0
        %v963 = vmax.f32 %v920, 0.0
        %v964 = vmax.f32 %v922, 0.0
        %v965 = vmax.f32 %v925, 0.0
        %v966 = vmax.f32 %v927, 0.0
        %v967 = vmax.f32 %v930, 0.0
        %v968 = vmax.f32 %v932, 0.0
        %v969 = vmax.f32 %v935, 0.0
        %v970 = vmax.f32 %v937, 0.0
        %v971 = vpack.c.bf16 %v940, %v939
        %v972 = vpack.c.bf16 %v942, %v941
        %v973 = vpack.c.bf16 %v944, %v943
        %v974 = vpack.c.bf16 %v946, %v945
        %v975 = vpack.c.bf16 %v948, %v947
        %v976 = vpack.c.bf16 %v950, %v949
        %v977 = vpack.c.bf16 %v952, %v951
        %v978 = vpack.c.bf16 %v954, %v953
        %v979 = vpack.c.bf16 %v956, %v955
        %v980 = vpack.c.bf16 %v958, %v957
        %v981 = vpack.c.bf16 %v960, %v959
        %v982 = vpack.c.bf16 %v962, %v961
        %v983 = vpack.c.bf16 %v964, %v963
        %v984 = vpack.c.bf16 %v966, %v965
        %v985 = vpack.c.bf16 %v968, %v967
        %v986 = vpack.c.bf16 %v970, %v969
        %v987 = vld [vmem:[%s4] sm:$0xff]
        %v988 = vld [vmem:[%s4 + $0x8] sm:$0xf]
        %v989 = vld [vmem:[%s4 + $0xc] sm:$0xff]
        %v990 = vld [vmem:[%s4 + $0x14] sm:$0xf]
        %v991 = vld [vmem:[%s4 + $0x18] sm:$0xff]
        %v992 = vld [vmem:[%s4 + $0x20] sm:$0xf]
        %v993 = vld [vmem:[%s4 + $0x24] sm:$0xff]
        %v994 = vld [vmem:[%s4 + $0x2c] sm:$0xf]
        %v995 = vld [vmem:[%s4 + $0x30] sm:$0xff]
        %v996 = vld [vmem:[%s4 + $0x38] sm:$0xf]
        %v997 = vld [vmem:[%s4 + $0x3c] sm:$0xff]
        %v998 = vld [vmem:[%s4 + $0x44] sm:$0xf]
        %v999 = vld [vmem:[%s4 + $0x48] sm:$0xff]
        %v1000 = vld [vmem:[%s4 + $0x50] sm:$0xf]
        %v1001 = vld [vmem:[%s4 + $0x54] sm:$0xff]
        %v1002 = vld [vmem:[%s4 + $0x5c] sm:$0xf]
        %v1003 = vld [vmem:[%s4 + $0x60] sm:$0xff]
        %v1004 = vld [vmem:[%s4 + $0x68] sm:$0xf]
        %v1005 = vld [vmem:[%s4 + $0x6c] sm:$0xff]
        %v1006 = vld [vmem:[%s4 + $0x74] sm:$0xf]
        %v1007 = vld [vmem:[%s4 + $0x78] sm:$0xff]
        %v1008 = vld [vmem:[%s4 + $0x80] sm:$0xf]
        %v1009 = vld [vmem:[%s4 + $0x84] sm:$0xff]
        %v1010 = vld [vmem:[%s4 + $0x8c] sm:$0xf]
        %v1011 = vld [vmem:[%s4 + $0x90] sm:$0xff]
        %v1012 = vld [vmem:[%s4 + $0x98] sm:$0xf]
        %v1013 = vld [vmem:[%s4 + $0x9c] sm:$0xff]
        %v1014 = vld [vmem:[%s4 + $0xa4] sm:$0xf]
        %v1015 = vld [vmem:[%s4 + $0xa8] sm:$0xff]
        %v1016 = vld [vmem:[%s4 + $0xb0] sm:$0xf]
        %v1017 = vld [vmem:[%s4 + $0xb4] sm:$0xff]
        %v1018 = vld [vmem:[%s4 + $0xbc] sm:$0xf]
        %v1051 = vunpack.c.l.b16 %v987
        %v1052 = vunpack.c.h.b16 %v987
        %v1053 = vunpack.c.l.b16 %v988
        %v1054 = vunpack.c.l.b16 %v989
        %v1055 = vunpack.c.h.b16 %v989
        %v1056 = vunpack.c.l.b16 %v990
        %v1057 = vunpack.c.l.b16 %v991
        %v1058 = vunpack.c.h.b16 %v991
        %v1059 = vunpack.c.l.b16 %v992
        %v1060 = vunpack.c.l.b16 %v993
        %v1061 = vunpack.c.h.b16 %v993
        %v1062 = vunpack.c.l.b16 %v994
        %v1063 = vunpack.c.l.b16 %v995
        %v1064 = vunpack.c.h.b16 %v995
        %v1065 = vunpack.c.l.b16 %v996
        %v1066 = vunpack.c.l.b16 %v997
        %v1067 = vunpack.c.h.b16 %v997
        %v1068 = vunpack.c.l.b16 %v998
        %v1069 = vunpack.c.l.b16 %v999
        %v1070 = vunpack.c.h.b16 %v999
        %v1071 = vunpack.c.l.b16 %v1000
        %v1072 = vunpack.c.l.b16 %v1001
        %v1073 = vunpack.c.h.b16 %v1001
        %v1074 = vunpack.c.l.b16 %v1002
        %v1075 = vunpack.c.l.b16 %v1003
        %v1076 = vunpack.c.h.b16 %v1003
        %v1077 = vunpack.c.l.b16 %v1004
        %v1078 = vunpack.c.l.b16 %v1005
        %v1079 = vunpack.c.h.b16 %v1005
        %v1080 = vunpack.c.l.b16 %v1006
        %v1081 = vunpack.c.l.b16 %v1007
        %v1082 = vunpack.c.h.b16 %v1007
        %v1083 = vunpack.c.l.b16 %v1008
        %v1084 = vunpack.c.l.b16 %v1009
        %v1085 = vunpack.c.h.b16 %v1009
        %v1086 = vunpack.c.l.b16 %v1010
        %v1087 = vunpack.c.l.b16 %v1011
        %v1088 = vunpack.c.h.b16 %v1011
        %v1089 = vunpack.c.l.b16 %v1012
        %v1090 = vunpack.c.l.b16 %v1013
        %v1091 = vunpack.c.h.b16 %v1013
        %v1092 = vunpack.c.l.b16 %v1014
        %v1093 = vunpack.c.l.b16 %v1015
        %v1094 = vunpack.c.h.b16 %v1015
        %v1095 = vunpack.c.l.b16 %v1016
        %v1096 = vunpack.c.l.b16 %v1017
        %v1097 = vunpack.c.h.b16 %v1017
        %v1098 = vunpack.c.l.b16 %v1018
        %v1099 = vpack.c.b16 %v1054, %v1051
        %v1100 = vpack.c.b16 %v1055, %v1052
        %v1101 = vpack.c.b16 %v1056, %v1053
        %v1102 = vpack.c.b16 %v1060, %v1057
        %v1103 = vpack.c.b16 %v1061, %v1058
        %v1104 = vpack.c.b16 %v1062, %v1059
        %v1105 = vpack.c.b16 %v1066, %v1063
        %v1106 = vpack.c.b16 %v1067, %v1064
        %v1107 = vpack.c.b16 %v1068, %v1065
        %v1108 = vpack.c.b16 %v1072, %v1069
        %v1109 = vpack.c.b16 %v1073, %v1070
        %v1110 = vpack.c.b16 %v1074, %v1071
        %v1111 = vpack.c.b16 %v1078, %v1075
        %v1112 = vpack.c.b16 %v1079, %v1076
        %v1113 = vpack.c.b16 %v1080, %v1077
        %v1114 = vpack.c.b16 %v1084, %v1081
        %v1115 = vpack.c.b16 %v1085, %v1082
        %v1116 = vpack.c.b16 %v1086, %v1083
        %v1117 = vpack.c.b16 %v1090, %v1087
        %v1118 = vpack.c.b16 %v1091, %v1088
        %v1119 = vpack.c.b16 %v1092, %v1089
        %v1120 = vpack.c.b16 %v1096, %v1093
        %v1121 = vpack.c.b16 %v1097, %v1094
        %v1122 = vpack.c.b16 %v1098, %v1095
        %1147 = vmatpush.bf16.msra.mxu0 %v1120
        %1148 = vmatpush.bf16.msra.mxu0 %v1117
        %1149 = vmatpush.bf16.msra.mxu0 %v1114
        %1150 = vmatpush.bf16.msra.mxu0 %v1111
        %1151 = vmatpush.bf16.msra.mxu0 %v1108
        %1152 = vmatpush.bf16.msra.mxu0 %v1105
        %1153 = vmatpush.bf16.msra.mxu0 %v1102
        %1154 = vmatpush.bf16.msra.mxu0 %v1099
        %1155 = vmatmul.bf16.gmra.mxu0 %v971
        %v1156 = vpop.f32.mrf.mxu0
        %v1157 = vadd.f32 0.0, %v1156
        %v1158 = vpop.f32.mrf.mxu0
        %v1159 = vadd.f32 0.0, %v1158
        %1160 = vmatmul.bf16.gmra.mxu0 %v972
        %v1161 = vpop.f32.mrf.mxu0
        %v1162 = vadd.f32 0.0, %v1161
        %v1163 = vpop.f32.mrf.mxu0
        %v1164 = vadd.f32 0.0, %v1163
        %1165 = vmatmul.bf16.gmra.mxu0 %v973
        %v1166 = vpop.f32.mrf.mxu0
        %v1167 = vadd.f32 0.0, %v1166
        %v1168 = vpop.f32.mrf.mxu0
        %v1169 = vadd.f32 0.0, %v1168
        %1170 = vmatmul.bf16.gmra.mxu0 %v974
        %v1171 = vpop.f32.mrf.mxu0
        %v1172 = vadd.f32 0.0, %v1171
        %v1173 = vpop.f32.mrf.mxu0
        %v1174 = vadd.f32 0.0, %v1173
        %1175 = vmatmul.bf16.gmra.mxu0 %v975
        %v1176 = vpop.f32.mrf.mxu0
        %v1177 = vadd.f32 0.0, %v1176
        %v1178 = vpop.f32.mrf.mxu0
        %v1179 = vadd.f32 0.0, %v1178
        %1180 = vmatmul.bf16.gmra.mxu0 %v976
        %v1181 = vpop.f32.mrf.mxu0
        %v1182 = vadd.f32 0.0, %v1181
        %v1183 = vpop.f32.mrf.mxu0
        %v1184 = vadd.f32 0.0, %v1183
        %1185 = vmatmul.bf16.gmra.mxu0 %v977
        %v1186 = vpop.f32.mrf.mxu0
        %v1187 = vadd.f32 0.0, %v1186
        %v1188 = vpop.f32.mrf.mxu0
        %v1189 = vadd.f32 0.0, %v1188
        %1190 = vmatmul.bf16.gmra.mxu0 %v978
        %v1191 = vpop.f32.mrf.mxu0
        %v1192 = vadd.f32 0.0, %v1191
        %v1193 = vpop.f32.mrf.mxu0
        %v1194 = vadd.f32 0.0, %v1193
        %1195 = vmatmul.bf16.gmra.mxu0 %v979
        %v1196 = vpop.f32.mrf.mxu0
        %v1197 = vadd.f32 0.0, %v1196
        %v1198 = vpop.f32.mrf.mxu0
        %v1199 = vadd.f32 0.0, %v1198
        %1200 = vmatmul.bf16.gmra.mxu0 %v980
        %v1201 = vpop.f32.mrf.mxu0
        %v1202 = vadd.f32 0.0, %v1201
        %v1203 = vpop.f32.mrf.mxu0
        %v1204 = vadd.f32 0.0, %v1203
        %1205 = vmatmul.bf16.gmra.mxu0 %v981
        %v1206 = vpop.f32.mrf.mxu0
        %v1207 = vadd.f32 0.0, %v1206
        %v1208 = vpop.f32.mrf.mxu0
        %v1209 = vadd.f32 0.0, %v1208
        %1210 = vmatmul.bf16.gmra.mxu0 %v982
        %v1211 = vpop.f32.mrf.mxu0
        %v1212 = vadd.f32 0.0, %v1211
        %v1213 = vpop.f32.mrf.mxu0
        %v1214 = vadd.f32 0.0, %v1213
        %1215 = vmatmul.bf16.gmra.mxu0 %v983
        %v1216 = vpop.f32.mrf.mxu0
        %v1217 = vadd.f32 0.0, %v1216
        %v1218 = vpop.f32.mrf.mxu0
        %v1219 = vadd.f32 0.0, %v1218
        %1220 = vmatmul.bf16.gmra.mxu0 %v984
        %v1221 = vpop.f32.mrf.mxu0
        %v1222 = vadd.f32 0.0, %v1221
        %v1223 = vpop.f32.mrf.mxu0
        %v1224 = vadd.f32 0.0, %v1223
        %1225 = vmatmul.bf16.gmra.mxu0 %v985
        %v1226 = vpop.f32.mrf.mxu0
        %v1227 = vadd.f32 0.0, %v1226
        %v1228 = vpop.f32.mrf.mxu0
        %v1229 = vadd.f32 0.0, %v1228
        %1230 = vmatmul.bf16.gmra.mxu0 %v986
        %v1231 = vpop.f32.mrf.mxu0
        %v1232 = vadd.f32 0.0, %v1231
        %v1233 = vpop.f32.mrf.mxu0
        %v1234 = vadd.f32 0.0, %v1233
        %1235 = vdwg.mxu0
        %1236 = vmatpush.bf16.msra.mxu0 %v1121
        %1237 = vmatpush.bf16.msra.mxu0 %v1118
        %1238 = vmatpush.bf16.msra.mxu0 %v1115
        %1239 = vmatpush.bf16.msra.mxu0 %v1112
        %1240 = vmatpush.bf16.msra.mxu0 %v1109
        %1241 = vmatpush.bf16.msra.mxu0 %v1106
        %1242 = vmatpush.bf16.msra.mxu0 %v1103
        %1243 = vmatpush.bf16.msra.mxu0 %v1100
        %1244 = vmatmul.bf16.gmra.mxu0 %v971
        %v1245 = vpop.f32.mrf.mxu0
        %v1246 = vadd.f32 0.0, %v1245
        %v1247 = vpop.f32.mrf.mxu0
        %v1248 = vadd.f32 0.0, %v1247
        %1249 = vmatmul.bf16.gmra.mxu0 %v972
        %v1250 = vpop.f32.mrf.mxu0
        %v1251 = vadd.f32 0.0, %v1250
        %v1252 = vpop.f32.mrf.mxu0
        %v1253 = vadd.f32 0.0, %v1252
        %1254 = vmatmul.bf16.gmra.mxu0 %v973
        %v1255 = vpop.f32.mrf.mxu0
        %v1256 = vadd.f32 0.0, %v1255
        %v1257 = vpop.f32.mrf.mxu0
        %v1258 = vadd.f32 0.0, %v1257
        %1259 = vmatmul.bf16.gmra.mxu0 %v974
        %v1260 = vpop.f32.mrf.mxu0
        %v1261 = vadd.f32 0.0, %v1260
        %v1262 = vpop.f32.mrf.mxu0
        %v1263 = vadd.f32 0.0, %v1262
        %1264 = vmatmul.bf16.gmra.mxu0 %v975
        %v1265 = vpop.f32.mrf.mxu0
        %v1266 = vadd.f32 0.0, %v1265
        %v1267 = vpop.f32.mrf.mxu0
        %v1268 = vadd.f32 0.0, %v1267
        %1269 = vmatmul.bf16.gmra.mxu0 %v976
        %v1270 = vpop.f32.mrf.mxu0
        %v1271 = vadd.f32 0.0, %v1270
        %v1272 = vpop.f32.mrf.mxu0
        %v1273 = vadd.f32 0.0, %v1272
        %1274 = vmatmul.bf16.gmra.mxu0 %v977
        %v1275 = vpop.f32.mrf.mxu0
        %v1276 = vadd.f32 0.0, %v1275
        %v1277 = vpop.f32.mrf.mxu0
        %v1278 = vadd.f32 0.0, %v1277
        %1279 = vmatmul.bf16.gmra.mxu0 %v978
        %v1280 = vpop.f32.mrf.mxu0
        %v1281 = vadd.f32 0.0, %v1280
        %v1282 = vpop.f32.mrf.mxu0
        %v1283 = vadd.f32 0.0, %v1282
        %1284 = vmatmul.bf16.gmra.mxu0 %v979
        %v1285 = vpop.f32.mrf.mxu0
        %v1286 = vadd.f32 0.0, %v1285
        %v1287 = vpop.f32.mrf.mxu0
        %v1288 = vadd.f32 0.0, %v1287
        %1289 = vmatmul.bf16.gmra.mxu0 %v980
        %v1290 = vpop.f32.mrf.mxu0
        %v1291 = vadd.f32 0.0, %v1290
        %v1292 = vpop.f32.mrf.mxu0
        %v1293 = vadd.f32 0.0, %v1292
        %1294 = vmatmul.bf16.gmra.mxu0 %v981
        %v1295 = vpop.f32.mrf.mxu0
        %v1296 = vadd.f32 0.0, %v1295
        %v1297 = vpop.f32.mrf.mxu0
        %v1298 = vadd.f32 0.0, %v1297
        %1299 = vmatmul.bf16.gmra.mxu0 %v982
        %v1300 = vpop.f32.mrf.mxu0
        %v1301 = vadd.f32 0.0, %v1300
        %v1302 = vpop.f32.mrf.mxu0
        %v1303 = vadd.f32 0.0, %v1302
        %1304 = vmatmul.bf16.gmra.mxu0 %v983
        %v1305 = vpop.f32.mrf.mxu0
        %v1306 = vadd.f32 0.0, %v1305
        %v1307 = vpop.f32.mrf.mxu0
        %v1308 = vadd.f32 0.0, %v1307
        %1309 = vmatmul.bf16.gmra.mxu0 %v984
        %v1310 = vpop.f32.mrf.mxu0
        %v1311 = vadd.f32 0.0, %v1310
        %v1312 = vpop.f32.mrf.mxu0
        %v1313 = vadd.f32 0.0, %v1312
        %1314 = vmatmul.bf16.gmra.mxu0 %v985
        %v1315 = vpop.f32.mrf.mxu0
        %v1316 = vadd.f32 0.0, %v1315
        %v1317 = vpop.f32.mrf.mxu0
        %v1318 = vadd.f32 0.0, %v1317
        %1319 = vmatmul.bf16.gmra.mxu0 %v986
        %v1320 = vpop.f32.mrf.mxu0
        %v1321 = vadd.f32 0.0, %v1320
        %v1322 = vpop.f32.mrf.mxu0
        %v1323 = vadd.f32 0.0, %v1322
        %1324 = vdwg.mxu0
        %1325 = vmatpush.bf16.msra.mxu0 %v1122
        %1326 = vmatpush.bf16.msra.mxu0 %v1119
        %1327 = vmatpush.bf16.msra.mxu0 %v1116
        %1328 = vmatpush.bf16.msra.mxu0 %v1113
        %1329 = vmatpush.bf16.msra.mxu0 %v1110
        %1330 = vmatpush.bf16.msra.mxu0 %v1107
        %1331 = vmatpush.bf16.msra.mxu0 %v1104
        %1332 = vmatpush.bf16.msra.mxu0 %v1101
        %1333 = vmatmul.bf16.gmra.mxu0 %v971
        %v1334 = vpop.f32.mrf.mxu0
        %v1335 = vpop.f32.mrf.mxu0
        %1336 = vmatmul.bf16.gmra.mxu0 %v972
        %v1337 = vpop.f32.mrf.mxu0
        %v1338 = vadd.f32 0.0, %v1337
        %v1339 = vpop.f32.mrf.mxu0
        %v1340 = vadd.f32 0.0, %v1339
        %1341 = vmatmul.bf16.gmra.mxu0 %v973
        %v1342 = vpop.f32.mrf.mxu0
        %v1343 = vadd.f32 0.0, %v1342
        %v1344 = vpop.f32.mrf.mxu0
        %v1345 = vadd.f32 0.0, %v1344
        %1346 = vmatmul.bf16.gmra.mxu0 %v974
        %v1347 = vpop.f32.mrf.mxu0
        %v1348 = vadd.f32 0.0, %v1347
        %v1349 = vpop.f32.mrf.mxu0
        %v1350 = vadd.f32 0.0, %v1349
        %1351 = vmatmul.bf16.gmra.mxu0 %v975
        %v1352 = vpop.f32.mrf.mxu0
        %v1353 = vadd.f32 0.0, %v1352
        %v1354 = vpop.f32.mrf.mxu0
        %v1355 = vadd.f32 0.0, %v1354
        %1356 = vmatmul.bf16.gmra.mxu0 %v976
        %v1357 = vpop.f32.mrf.mxu0
        %v1358 = vadd.f32 0.0, %v1357
        %v1359 = vpop.f32.mrf.mxu0
        %v1360 = vadd.f32 0.0, %v1359
        %1361 = vmatmul.bf16.gmra.mxu0 %v977
        %v1362 = vpop.f32.mrf.mxu0
        %v1363 = vadd.f32 0.0, %v1362
        %v1364 = vpop.f32.mrf.mxu0
        %v1365 = vadd.f32 0.0, %v1364
        %1366 = vmatmul.bf16.gmra.mxu0 %v978
        %v1367 = vpop.f32.mrf.mxu0
        %v1368 = vadd.f32 0.0, %v1367
        %v1369 = vpop.f32.mrf.mxu0
        %v1370 = vadd.f32 0.0, %v1369
        %1371 = vmatmul.bf16.gmra.mxu0 %v979
        %v1372 = vpop.f32.mrf.mxu0
        %v1373 = vadd.f32 0.0, %v1372
        %v1374 = vpop.f32.mrf.mxu0
        %v1375 = vadd.f32 0.0, %v1374
        %1376 = vmatmul.bf16.gmra.mxu0 %v980
        %v1377 = vpop.f32.mrf.mxu0
        %v1378 = vadd.f32 0.0, %v1377
        %v1379 = vpop.f32.mrf.mxu0
        %v1380 = vadd.f32 0.0, %v1379
        %1381 = vmatmul.bf16.gmra.mxu0 %v981
        %v1382 = vpop.f32.mrf.mxu0
        %v1383 = vadd.f32 0.0, %v1382
        %v1384 = vpop.f32.mrf.mxu0
        %v1385 = vadd.f32 0.0, %v1384
        %1386 = vmatmul.bf16.gmra.mxu0 %v982
        %v1387 = vpop.f32.mrf.mxu0
        %v1388 = vadd.f32 0.0, %v1387
        %v1389 = vpop.f32.mrf.mxu0
        %v1390 = vadd.f32 0.0, %v1389
        %1391 = vmatmul.bf16.gmra.mxu0 %v983
        %v1392 = vpop.f32.mrf.mxu0
        %v1393 = vadd.f32 0.0, %v1392
        %v1394 = vpop.f32.mrf.mxu0
        %v1395 = vadd.f32 0.0, %v1394
        %1396 = vmatmul.bf16.gmra.mxu0 %v984
        %v1397 = vpop.f32.mrf.mxu0
        %v1398 = vadd.f32 0.0, %v1397
        %v1399 = vpop.f32.mrf.mxu0
        %v1400 = vadd.f32 0.0, %v1399
        %1401 = vmatmul.bf16.gmra.mxu0 %v985
        %v1402 = vpop.f32.mrf.mxu0
        %v1403 = vadd.f32 0.0, %v1402
        %v1404 = vpop.f32.mrf.mxu0
        %v1405 = vadd.f32 0.0, %v1404
        %1406 = vmatmul.bf16.gmra.mxu0 %v986
        %v1407 = vpop.f32.mrf.mxu0
        %v1408 = vadd.f32 0.0, %v1407
        %v1409 = vpop.f32.mrf.mxu0
        %v1410 = vadd.f32 0.0, %v1409
        %1411 = vdwg.mxu0
        %vm1442 = vcmask 1040384
        %v1443 = vrot.slane %v1157, 7
        %v1444 = vrot.slane %v1159, 7
        %v1445 = vsel %vm1442, %v1443, %v1444
        %v1446 = vrot.slane %v1162, 7
        %v1447 = vsel %vm1442, %v1444, %v1446
        %v1448 = vrot.slane %v1164, 7
        %v1449 = vsel %vm1442, %v1446, %v1448
        %v1450 = vrot.slane %v1167, 7
        %v1451 = vsel %vm1442, %v1448, %v1450
        %v1452 = vrot.slane %v1169, 7
        %v1453 = vsel %vm1442, %v1450, %v1452
        %v1454 = vrot.slane %v1172, 7
        %v1455 = vsel %vm1442, %v1452, %v1454
        %v1456 = vrot.slane %v1174, 7
        %v1457 = vsel %vm1442, %v1454, %v1456
        %v1458 = vrot.slane %v1177, 7
        %v1459 = vsel %vm1442, %v1456, %v1458
        %v1460 = vrot.slane %v1179, 7
        %v1461 = vsel %vm1442, %v1458, %v1460
        %v1462 = vrot.slane %v1182, 7
        %v1463 = vsel %vm1442, %v1460, %v1462
        %v1464 = vrot.slane %v1184, 7
        %v1465 = vsel %vm1442, %v1462, %v1464
        %v1466 = vrot.slane %v1187, 7
        %v1467 = vsel %vm1442, %v1464, %v1466
        %v1468 = vrot.slane %v1189, 7
        %v1469 = vsel %vm1442, %v1466, %v1468
        %v1470 = vrot.slane %v1192, 7
        %v1471 = vsel %vm1442, %v1468, %v1470
        %v1472 = vrot.slane %v1194, 7
        %v1473 = vsel %vm1442, %v1470, %v1472
        %v1474 = vrot.slane %v1197, 7
        %v1475 = vsel %vm1442, %v1472, %v1474
        %v1476 = vrot.slane %v1199, 7
        %v1477 = vsel %vm1442, %v1474, %v1476
        %v1478 = vrot.slane %v1202, 7
        %v1479 = vsel %vm1442, %v1476, %v1478
        %v1480 = vrot.slane %v1204, 7
        %v1481 = vsel %vm1442, %v1478, %v1480
        %v1482 = vrot.slane %v1207, 7
        %v1483 = vsel %vm1442, %v1480, %v1482
        %v1484 = vrot.slane %v1209, 7
        %v1485 = vsel %vm1442, %v1482, %v1484
        %v1486 = vrot.slane %v1212, 7
        %v1487 = vsel %vm1442, %v1484, %v1486
        %v1488 = vrot.slane %v1214, 7
        %v1489 = vsel %vm1442, %v1486, %v1488
        %v1490 = vrot.slane %v1217, 7
        %v1491 = vsel %vm1442, %v1488, %v1490
        %v1492 = vrot.slane %v1219, 7
        %v1493 = vsel %vm1442, %v1490, %v1492
        %v1494 = vrot.slane %v1222, 7
        %v1495 = vsel %vm1442, %v1492, %v1494
        %v1496 = vrot.slane %v1224, 7
        %v1497 = vsel %vm1442, %v1494, %v1496
        %v1498 = vrot.slane %v1227, 7
        %v1499 = vsel %vm1442, %v1496, %v1498
        %v1500 = vrot.slane %v1229, 7
        %v1501 = vsel %vm1442, %v1498, %v1500
        %v1532 = vsel %vm1442, 0.0, %v1443
        %v1533 = vmul.f32 %v379, 0.0
        %v1534 = vmul.f32 %v380, 0.0
        %v1535 = vmul.f32 %v1532, %v381
        %v1536 = vmul.f32 %v1445, %v382
        %v1537 = vmul.f32 %v1447, %v383
        %v1538 = vmul.f32 %v1449, %v384
        %v1539 = vmul.f32 %v1451, %v385
        %v1540 = vmul.f32 %v1453, %v386
        %v1541 = vmul.f32 %v1455, %v387
        %v1542 = vmul.f32 %v1457, %v388
        %v1543 = vmul.f32 %v1459, %v389
        %v1544 = vmul.f32 %v1461, %v390
        %v1545 = vmul.f32 %v1463, %v391
        %v1546 = vmul.f32 %v1465, %v392
        %v1547 = vmul.f32 %v1467, %v393
        %v1548 = vmul.f32 %v1469, %v394
        %v1549 = vmul.f32 %v1471, %v395
        %v1550 = vmul.f32 %v1473, %v396
        %v1551 = vmul.f32 %v1475, %v397
        %v1552 = vmul.f32 %v1477, %v398
        %v1553 = vmul.f32 %v1479, %v399
        %v1554 = vmul.f32 %v1481, %v400
        %v1555 = vmul.f32 %v1483, %v401
        %v1556 = vmul.f32 %v1485, %v402
        %v1557 = vmul.f32 %v1487, %v403
        %v1558 = vmul.f32 %v1489, %v404
        %v1559 = vmul.f32 %v1491, %v405
        %v1560 = vmul.f32 %v1493, %v406
        %v1561 = vmul.f32 %v1495, %v407
        %v1562 = vmul.f32 %v1497, %v408
        %v1563 = vmul.f32 %v1499, %v409
        %v1564 = vmul.f32 %v1501, %v410
        %v1565 = vadd.f32 %v1246, %v1533
        %v1566 = vadd.f32 %v1248, %v1534
        %v1567 = vadd.f32 %v1251, %v1535
        %v1568 = vadd.f32 %v1253, %v1536
        %v1569 = vadd.f32 %v1256, %v1537
        %v1570 = vadd.f32 %v1258, %v1538
        %v1571 = vadd.f32 %v1261, %v1539
        %v1572 = vadd.f32 %v1263, %v1540
        %v1573 = vadd.f32 %v1266, %v1541
        %v1574 = vadd.f32 %v1268, %v1542
        %v1575 = vadd.f32 %v1271, %v1543
        %v1576 = vadd.f32 %v1273, %v1544
        %v1577 = vadd.f32 %v1276, %v1545
        %v1578 = vadd.f32 %v1278, %v1546
        %v1579 = vadd.f32 %v1281, %v1547
        %v1580 = vadd.f32 %v1283, %v1548
        %v1581 = vadd.f32 %v1286, %v1549
        %v1582 = vadd.f32 %v1288, %v1550
        %v1583 = vadd.f32 %v1291, %v1551
        %v1584 = vadd.f32 %v1293, %v1552
        %v1585 = vadd.f32 %v1296, %v1553
        %v1586 = vadd.f32 %v1298, %v1554
        %v1587 = vadd.f32 %v1301, %v1555
        %v1588 = vadd.f32 %v1303, %v1556
        %v1589 = vadd.f32 %v1306, %v1557
        %v1590 = vadd.f32 %v1308, %v1558
        %v1591 = vadd.f32 %v1311, %v1559
        %v1592 = vadd.f32 %v1313, %v1560
        %v1593 = vadd.f32 %v1316, %v1561
        %v1594 = vadd.f32 %v1318, %v1562
        %v1595 = vadd.f32 %v1321, %v1563
        %v1596 = vadd.f32 %v1323, %v1564
        %1597 = vrot.lane.b32.xlu0 %v1157, 96
        %v1598 = vpop.permute.xlu0 %1597
        %1599 = vrot.lane.b32.xlu0 %v1159, 96
        %v1600 = vpop.permute.xlu0 %1599
        %1601 = vrot.lane.b32.xlu0 %v1162, 96
        %v1602 = vpop.permute.xlu0 %1601
        %1603 = vrot.lane.b32.xlu0 %v1164, 96
        %v1604 = vpop.permute.xlu0 %1603
        %1605 = vrot.lane.b32.xlu0 %v1167, 96
        %v1606 = vpop.permute.xlu0 %1605
        %1607 = vrot.lane.b32.xlu0 %v1169, 96
        %v1608 = vpop.permute.xlu0 %1607
        %1609 = vrot.lane.b32.xlu0 %v1172, 96
        %v1610 = vpop.permute.xlu0 %1609
        %1611 = vrot.lane.b32.xlu0 %v1174, 96
        %v1612 = vpop.permute.xlu0 %1611
        %1613 = vrot.lane.b32.xlu0 %v1177, 96
        %v1614 = vpop.permute.xlu0 %1613
        %1615 = vrot.lane.b32.xlu0 %v1179, 96
        %v1616 = vpop.permute.xlu0 %1615
        %1617 = vrot.lane.b32.xlu0 %v1182, 96
        %v1618 = vpop.permute.xlu0 %1617
        %1619 = vrot.lane.b32.xlu0 %v1184, 96
        %v1620 = vpop.permute.xlu0 %1619
        %1621 = vrot.lane.b32.xlu0 %v1187, 96
        %v1622 = vpop.permute.xlu0 %1621
        %1623 = vrot.lane.b32.xlu0 %v1189, 96
        %v1624 = vpop.permute.xlu0 %1623
        %1625 = vrot.lane.b32.xlu0 %v1192, 96
        %v1626 = vpop.permute.xlu0 %1625
        %1627 = vrot.lane.b32.xlu0 %v1194, 96
        %v1628 = vpop.permute.xlu0 %1627
        %1629 = vrot.lane.b32.xlu0 %v1197, 96
        %v1630 = vpop.permute.xlu0 %1629
        %1631 = vrot.lane.b32.xlu0 %v1199, 96
        %v1632 = vpop.permute.xlu0 %1631
        %1633 = vrot.lane.b32.xlu0 %v1202, 96
        %v1634 = vpop.permute.xlu0 %1633
        %1635 = vrot.lane.b32.xlu0 %v1204, 96
        %v1636 = vpop.permute.xlu0 %1635
        %1637 = vrot.lane.b32.xlu0 %v1207, 96
        %v1638 = vpop.permute.xlu0 %1637
        %1639 = vrot.lane.b32.xlu0 %v1209, 96
        %v1640 = vpop.permute.xlu0 %1639
        %1641 = vrot.lane.b32.xlu0 %v1212, 96
        %v1642 = vpop.permute.xlu0 %1641
        %1643 = vrot.lane.b32.xlu0 %v1214, 96
        %v1644 = vpop.permute.xlu0 %1643
        %1645 = vrot.lane.b32.xlu0 %v1217, 96
        %v1646 = vpop.permute.xlu0 %1645
        %1647 = vrot.lane.b32.xlu0 %v1219, 96
        %v1648 = vpop.permute.xlu0 %1647
        %1649 = vrot.lane.b32.xlu0 %v1222, 96
        %v1650 = vpop.permute.xlu0 %1649
        %1651 = vrot.lane.b32.xlu0 %v1224, 96
        %v1652 = vpop.permute.xlu0 %1651
        %1653 = vrot.lane.b32.xlu0 %v1227, 96
        %v1654 = vpop.permute.xlu0 %1653
        %1655 = vrot.lane.b32.xlu0 %v1229, 96
        %v1656 = vpop.permute.xlu0 %1655
        %v1687 = vadd.f32 %v1565, 0.0
        %v1688 = vadd.f32 %v1566, 0.0
        %v1689 = vadd.f32 %v1567, %v1598
        %v1690 = vadd.f32 %v1568, %v1600
        %v1691 = vadd.f32 %v1569, %v1602
        %v1692 = vadd.f32 %v1570, %v1604
        %v1693 = vadd.f32 %v1571, %v1606
        %v1694 = vadd.f32 %v1572, %v1608
        %v1695 = vadd.f32 %v1573, %v1610
        %v1696 = vadd.f32 %v1574, %v1612
        %v1697 = vadd.f32 %v1575, %v1614
        %v1698 = vadd.f32 %v1576, %v1616
        %v1699 = vadd.f32 %v1577, %v1618
        %v1700 = vadd.f32 %v1578, %v1620
        %v1701 = vadd.f32 %v1579, %v1622
        %v1702 = vadd.f32 %v1580, %v1624
        %v1703 = vadd.f32 %v1581, %v1626
        %v1704 = vadd.f32 %v1582, %v1628
        %v1705 = vadd.f32 %v1583, %v1630
        %v1706 = vadd.f32 %v1584, %v1632
        %v1707 = vadd.f32 %v1585, %v1634
        %v1708 = vadd.f32 %v1586, %v1636
        %v1709 = vadd.f32 %v1587, %v1638
        %v1710 = vadd.f32 %v1588, %v1640
        %v1711 = vadd.f32 %v1589, %v1642
        %v1712 = vadd.f32 %v1590, %v1644
        %v1713 = vadd.f32 %v1591, %v1646
        %v1714 = vadd.f32 %v1592, %v1648
        %v1715 = vadd.f32 %v1593, %v1650
        %v1716 = vadd.f32 %v1594, %v1652
        %v1717 = vadd.f32 %v1595, %v1654
        %v1718 = vadd.f32 %v1596, %v1656
        %vm1720 = vcmask 1046528
        %v1721 = vrot.slane %v1157, 1
        %v1722 = vrot.slane %v1159, 1
        %v1723 = vsel %vm1720, %v1721, %v1722
        %v1724 = vrot.slane %v1162, 1
        %v1725 = vsel %vm1720, %v1722, %v1724
        %v1726 = vrot.slane %v1164, 1
        %v1727 = vsel %vm1720, %v1724, %v1726
        %v1728 = vrot.slane %v1167, 1
        %v1729 = vsel %vm1720, %v1726, %v1728
        %v1730 = vrot.slane %v1169, 1
        %v1731 = vsel %vm1720, %v1728, %v1730
        %v1732 = vrot.slane %v1172, 1
        %v1733 = vsel %vm1720, %v1730, %v1732
        %v1734 = vrot.slane %v1174, 1
        %v1735 = vsel %vm1720, %v1732, %v1734
        %v1736 = vrot.slane %v1177, 1
        %v1737 = vsel %vm1720, %v1734, %v1736
        %v1738 = vrot.slane %v1179, 1
        %v1739 = vsel %vm1720, %v1736, %v1738
        %v1740 = vrot.slane %v1182, 1
        %v1741 = vsel %vm1720, %v1738, %v1740
        %v1742 = vrot.slane %v1184, 1
        %v1743 = vsel %vm1720, %v1740, %v1742
        %v1744 = vrot.slane %v1187, 1
        %v1745 = vsel %vm1720, %v1742, %v1744
        %v1746 = vrot.slane %v1189, 1
        %v1747 = vsel %vm1720, %v1744, %v1746
        %v1748 = vrot.slane %v1192, 1
        %v1749 = vsel %vm1720, %v1746, %v1748
        %v1750 = vrot.slane %v1194, 1
        %v1751 = vsel %vm1720, %v1748, %v1750
        %v1752 = vrot.slane %v1197, 1
        %v1753 = vsel %vm1720, %v1750, %v1752
        %v1754 = vrot.slane %v1199, 1
        %v1755 = vsel %vm1720, %v1752, %v1754
        %v1756 = vrot.slane %v1202, 1
        %v1757 = vsel %vm1720, %v1754, %v1756
        %v1758 = vrot.slane %v1204, 1
        %v1759 = vsel %vm1720, %v1756, %v1758
        %v1760 = vrot.slane %v1207, 1
        %v1761 = vsel %vm1720, %v1758, %v1760
        %v1762 = vrot.slane %v1209, 1
        %v1763 = vsel %vm1720, %v1760, %v1762
        %v1764 = vrot.slane %v1212, 1
        %v1765 = vsel %vm1720, %v1762, %v1764
        %v1766 = vrot.slane %v1214, 1
        %v1767 = vsel %vm1720, %v1764, %v1766
        %v1768 = vrot.slane %v1217, 1
        %v1769 = vsel %vm1720, %v1766, %v1768
        %v1770 = vrot.slane %v1219, 1
        %v1771 = vsel %vm1720, %v1768, %v1770
        %v1772 = vrot.slane %v1222, 1
        %v1773 = vsel %vm1720, %v1770, %v1772
        %v1774 = vrot.slane %v1224, 1
        %v1775 = vsel %vm1720, %v1772, %v1774
        %v1776 = vrot.slane %v1227, 1
        %v1777 = vsel %vm1720, %v1774, %v1776
        %v1778 = vrot.slane %v1229, 1
        %v1779 = vsel %vm1720, %v1776, %v1778
        %v1780 = vrot.slane %v1232, 1
        %v1781 = vsel %vm1720, %v1778, %v1780
        %1782 = vrot.lane.b32.xlu0 %v1721, 64
        %v1783 = vpop.permute.xlu0 %1782
        %1784 = vrot.lane.b32.xlu0 %v1723, 64
        %v1785 = vpop.permute.xlu0 %1784
        %1786 = vrot.lane.b32.xlu0 %v1725, 64
        %v1787 = vpop.permute.xlu0 %1786
        %1788 = vrot.lane.b32.xlu0 %v1727, 64
        %v1789 = vpop.permute.xlu0 %1788
        %1790 = vrot.lane.b32.xlu0 %v1729, 64
        %v1791 = vpop.permute.xlu0 %1790
        %1792 = vrot.lane.b32.xlu0 %v1731, 64
        %v1793 = vpop.permute.xlu0 %1792
        %1794 = vrot.lane.b32.xlu0 %v1733, 64
        %v1795 = vpop.permute.xlu0 %1794
        %1796 = vrot.lane.b32.xlu0 %v1735, 64
        %v1797 = vpop.permute.xlu0 %1796
        %1798 = vrot.lane.b32.xlu0 %v1737, 64
        %v1799 = vpop.permute.xlu0 %1798
        %1800 = vrot.lane.b32.xlu0 %v1739, 64
        %v1801 = vpop.permute.xlu0 %1800
        %1802 = vrot.lane.b32.xlu0 %v1741, 64
        %v1803 = vpop.permute.xlu0 %1802
        %1804 = vrot.lane.b32.xlu0 %v1743, 64
        %v1805 = vpop.permute.xlu0 %1804
        %1806 = vrot.lane.b32.xlu0 %v1745, 64
        %v1807 = vpop.permute.xlu0 %1806
        %1808 = vrot.lane.b32.xlu0 %v1747, 64
        %v1809 = vpop.permute.xlu0 %1808
        %1810 = vrot.lane.b32.xlu0 %v1749, 64
        %v1811 = vpop.permute.xlu0 %1810
        %1812 = vrot.lane.b32.xlu0 %v1751, 64
        %v1813 = vpop.permute.xlu0 %1812
        %1814 = vrot.lane.b32.xlu0 %v1753, 64
        %v1815 = vpop.permute.xlu0 %1814
        %1816 = vrot.lane.b32.xlu0 %v1755, 64
        %v1817 = vpop.permute.xlu0 %1816
        %1818 = vrot.lane.b32.xlu0 %v1757, 64
        %v1819 = vpop.permute.xlu0 %1818
        %1820 = vrot.lane.b32.xlu0 %v1759, 64
        %v1821 = vpop.permute.xlu0 %1820
        %1822 = vrot.lane.b32.xlu0 %v1761, 64
        %v1823 = vpop.permute.xlu0 %1822
        %1824 = vrot.lane.b32.xlu0 %v1763, 64
        %v1825 = vpop.permute.xlu0 %1824
        %1826 = vrot.lane.b32.xlu0 %v1765, 64
        %v1827 = vpop.permute.xlu0 %1826
        %1828 = vrot.lane.b32.xlu0 %v1767, 64
        %v1829 = vpop.permute.xlu0 %1828
        %1830 = vrot.lane.b32.xlu0 %v1769, 64
        %v1831 = vpop.permute.xlu0 %1830
        %1832 = vrot.lane.b32.xlu0 %v1771, 64
        %v1833 = vpop.permute.xlu0 %1832
        %1834 = vrot.lane.b32.xlu0 %v1773, 64
        %v1835 = vpop.permute.xlu0 %1834
        %1836 = vrot.lane.b32.xlu0 %v1775, 64
        %v1837 = vpop.permute.xlu0 %1836
        %1838 = vrot.lane.b32.xlu0 %v1777, 64
        %v1839 = vpop.permute.xlu0 %1838
        %1840 = vrot.lane.b32.xlu0 %v1779, 64
        %v1841 = vpop.permute.xlu0 %1840
        %1842 = vrot.lane.b32.xlu0 %v1781, 64
        %v1843 = vpop.permute.xlu0 %1842
        %v1875 = vsel %vm1720, 0.0, %v1783
        %v1876 = vmul.f32 %v475, 0.0
        %v1877 = vmul.f32 %v1875, %v476
        %v1878 = vmul.f32 %v1785, %v477
        %v1879 = vmul.f32 %v1787, %v478
        %v1880 = vmul.f32 %v1789, %v479
        %v1881 = vmul.f32 %v1791, %v480
        %v1882 = vmul.f32 %v1793, %v481
        %v1883 = vmul.f32 %v1795, %v482
        %v1884 = vmul.f32 %v1797, %v483
        %v1885 = vmul.f32 %v1799, %v484
        %v1886 = vmul.f32 %v1801, %v485
        %v1887 = vmul.f32 %v1803, %v486
        %v1888 = vmul.f32 %v1805, %v487
        %v1889 = vmul.f32 %v1807, %v488
        %v1890 = vmul.f32 %v1809, %v489
        %v1891 = vmul.f32 %v1811, %v490
        %v1892 = vmul.f32 %v1813, %v491
        %v1893 = vmul.f32 %v1815, %v492
        %v1894 = vmul.f32 %v1817, %v493
        %v1895 = vmul.f32 %v1819, %v494
        %v1896 = vmul.f32 %v1821, %v495
        %v1897 = vmul.f32 %v1823, %v496
        %v1898 = vmul.f32 %v1825, %v497
        %v1899 = vmul.f32 %v1827, %v498
        %v1900 = vmul.f32 %v1829, %v499
        %v1901 = vmul.f32 %v1831, %v500
        %v1902 = vmul.f32 %v1833, %v501
        %v1903 = vmul.f32 %v1835, %v502
        %v1904 = vmul.f32 %v1837, %v503
        %v1905 = vmul.f32 %v1839, %v504
        %v1906 = vmul.f32 %v1841, %v505
        %v1907 = vmul.f32 %v1843, %v506
        %v1908 = vadd.f32 %v1687, %v1876
        %v1909 = vadd.f32 %v1688, %v1877
        %v1910 = vadd.f32 %v1689, %v1878
        %v1911 = vadd.f32 %v1690, %v1879
        %v1912 = vadd.f32 %v1691, %v1880
        %v1913 = vadd.f32 %v1692, %v1881
        %v1914 = vadd.f32 %v1693, %v1882
        %v1915 = vadd.f32 %v1694, %v1883
        %v1916 = vadd.f32 %v1695, %v1884
        %v1917 = vadd.f32 %v1696, %v1885
        %v1918 = vadd.f32 %v1697, %v1886
        %v1919 = vadd.f32 %v1698, %v1887
        %v1920 = vadd.f32 %v1699, %v1888
        %v1921 = vadd.f32 %v1700, %v1889
        %v1922 = vadd.f32 %v1701, %v1890
        %v1923 = vadd.f32 %v1702, %v1891
        %v1924 = vadd.f32 %v1703, %v1892
        %v1925 = vadd.f32 %v1704, %v1893
        %v1926 = vadd.f32 %v1705, %v1894
        %v1927 = vadd.f32 %v1706, %v1895
        %v1928 = vadd.f32 %v1707, %v1896
        %v1929 = vadd.f32 %v1708, %v1897
        %v1930 = vadd.f32 %v1709, %v1898
        %v1931 = vadd.f32 %v1710, %v1899
        %v1932 = vadd.f32 %v1711, %v1900
        %v1933 = vadd.f32 %v1712, %v1901
        %v1934 = vadd.f32 %v1713, %v1902
        %v1935 = vadd.f32 %v1714, %v1903
        %v1936 = vadd.f32 %v1715, %v1904
        %v1937 = vadd.f32 %v1716, %v1905
        %v1938 = vadd.f32 %v1717, %v1906
        %v1939 = vadd.f32 %v1718, %v1907
        %v1941 = vrot.slane %v1232, 7
        %v1942 = vsel %vm1442, %v1500, %v1941
        %v1943 = vrot.slane %v1234, 7
        %v1944 = vsel %vm1442, %v1941, %v1943
        %1945 = vrot.lane.b32.xlu0 %v1443, 32
        %v1946 = vpop.permute.xlu0 %1945
        %1947 = vrot.lane.b32.xlu0 %v1445, 32
        %v1948 = vpop.permute.xlu0 %1947
        %1949 = vrot.lane.b32.xlu0 %v1447, 32
        %v1950 = vpop.permute.xlu0 %1949
        %1951 = vrot.lane.b32.xlu0 %v1449, 32
        %v1952 = vpop.permute.xlu0 %1951
        %1953 = vrot.lane.b32.xlu0 %v1451, 32
        %v1954 = vpop.permute.xlu0 %1953
        %1955 = vrot.lane.b32.xlu0 %v1453, 32
        %v1956 = vpop.permute.xlu0 %1955
        %1957 = vrot.lane.b32.xlu0 %v1455, 32
        %v1958 = vpop.permute.xlu0 %1957
        %1959 = vrot.lane.b32.xlu0 %v1457, 32
        %v1960 = vpop.permute.xlu0 %1959
        %1961 = vrot.lane.b32.xlu0 %v1459, 32
        %v1962 = vpop.permute.xlu0 %1961
        %1963 = vrot.lane.b32.xlu0 %v1461, 32
        %v1964 = vpop.permute.xlu0 %1963
        %1965 = vrot.lane.b32.xlu0 %v1463, 32
        %v1966 = vpop.permute.xlu0 %1965
        %1967 = vrot.lane.b32.xlu0 %v1465, 32
        %v1968 = vpop.permute.xlu0 %1967
        %1969 = vrot.lane.b32.xlu0 %v1467, 32
        %v1970 = vpop.permute.xlu0 %1969
        %1971 = vrot.lane.b32.xlu0 %v1469, 32
        %v1972 = vpop.permute.xlu0 %1971
        %1973 = vrot.lane.b32.xlu0 %v1471, 32
        %v1974 = vpop.permute.xlu0 %1973
        %1975 = vrot.lane.b32.xlu0 %v1473, 32
        %v1976 = vpop.permute.xlu0 %1975
        %1977 = vrot.lane.b32.xlu0 %v1475, 32
        %v1978 = vpop.permute.xlu0 %1977
        %1979 = vrot.lane.b32.xlu0 %v1477, 32
        %v1980 = vpop.permute.xlu0 %1979
        %1981 = vrot.lane.b32.xlu0 %v1479, 32
        %v1982 = vpop.permute.xlu0 %1981
        %1983 = vrot.lane.b32.xlu0 %v1481, 32
        %v1984 = vpop.permute.xlu0 %1983
        %1985 = vrot.lane.b32.xlu0 %v1483, 32
        %v1986 = vpop.permute.xlu0 %1985
        %1987 = vrot.lane.b32.xlu0 %v1485, 32
        %v1988 = vpop.permute.xlu0 %1987
        %1989 = vrot.lane.b32.xlu0 %v1487, 32
        %v1990 = vpop.permute.xlu0 %1989
        %1991 = vrot.lane.b32.xlu0 %v1489, 32
        %v1992 = vpop.permute.xlu0 %1991
        %1993 = vrot.lane.b32.xlu0 %v1491, 32
        %v1994 = vpop.permute.xlu0 %1993
        %1995 = vrot.lane.b32.xlu0 %v1493, 32
        %v1996 = vpop.permute.xlu0 %1995
        %1997 = vrot.lane.b32.xlu0 %v1495, 32
        %v1998 = vpop.permute.xlu0 %1997
        %1999 = vrot.lane.b32.xlu0 %v1497, 32
        %v2000 = vpop.permute.xlu0 %1999
        %2001 = vrot.lane.b32.xlu0 %v1499, 32
        %v2002 = vpop.permute.xlu0 %2001
        %2003 = vrot.lane.b32.xlu0 %v1501, 32
        %v2004 = vpop.permute.xlu0 %2003
        %2005 = vrot.lane.b32.xlu0 %v1942, 32
        %v2006 = vpop.permute.xlu0 %2005
        %2007 = vrot.lane.b32.xlu0 %v1944, 32
        %v2008 = vpop.permute.xlu0 %2007
        %v2041 = vsel %vm1442, 0.0, %v1946
        %v2042 = vmul.f32 %v2041, %v379
        %v2043 = vmul.f32 %v1948, %v380
        %v2044 = vmul.f32 %v1950, %v381
        %v2045 = vmul.f32 %v1952, %v382
        %v2046 = vmul.f32 %v1954, %v383
        %v2047 = vmul.f32 %v1956, %v384
        %v2048 = vmul.f32 %v1958, %v385
        %v2049 = vmul.f32 %v1960, %v386
        %v2050 = vmul.f32 %v1962, %v387
        %v2051 = vmul.f32 %v1964, %v388
        %v2052 = vmul.f32 %v1966, %v389
        %v2053 = vmul.f32 %v1968, %v390
        %v2054 = vmul.f32 %v1970, %v391
        %v2055 = vmul.f32 %v1972, %v392
        %v2056 = vmul.f32 %v1974, %v393
        %v2057 = vmul.f32 %v1976, %v394
        %v2058 = vmul.f32 %v1978, %v395
        %v2059 = vmul.f32 %v1980, %v396
        %v2060 = vmul.f32 %v1982, %v397
        %v2061 = vmul.f32 %v1984, %v398
        %v2062 = vmul.f32 %v1986, %v399
        %v2063 = vmul.f32 %v1988, %v400
        %v2064 = vmul.f32 %v1990, %v401
        %v2065 = vmul.f32 %v1992, %v402
        %v2066 = vmul.f32 %v1994, %v403
        %v2067 = vmul.f32 %v1996, %v404
        %v2068 = vmul.f32 %v1998, %v405
        %v2069 = vmul.f32 %v2000, %v406
        %v2070 = vmul.f32 %v2002, %v407
        %v2071 = vmul.f32 %v2004, %v408
        %v2072 = vmul.f32 %v2006, %v409
        %v2073 = vmul.f32 %v2008, %v410
        %v2074 = vadd.f32 %v1908, %v2042
        %v2075 = vadd.f32 %v1909, %v2043
        %v2076 = vadd.f32 %v1910, %v2044
        %v2077 = vadd.f32 %v1911, %v2045
        %v2078 = vadd.f32 %v1912, %v2046
        %v2079 = vadd.f32 %v1913, %v2047
        %v2080 = vadd.f32 %v1914, %v2048
        %v2081 = vadd.f32 %v1915, %v2049
        %v2082 = vadd.f32 %v1916, %v2050
        %v2083 = vadd.f32 %v1917, %v2051
        %v2084 = vadd.f32 %v1918, %v2052
        %v2085 = vadd.f32 %v1919, %v2053
        %v2086 = vadd.f32 %v1920, %v2054
        %v2087 = vadd.f32 %v1921, %v2055
        %v2088 = vadd.f32 %v1922, %v2056
        %v2089 = vadd.f32 %v1923, %v2057
        %v2090 = vadd.f32 %v1924, %v2058
        %v2091 = vadd.f32 %v1925, %v2059
        %v2092 = vadd.f32 %v1926, %v2060
        %v2093 = vadd.f32 %v1927, %v2061
        %v2094 = vadd.f32 %v1928, %v2062
        %v2095 = vadd.f32 %v1929, %v2063
        %v2096 = vadd.f32 %v1930, %v2064
        %v2097 = vadd.f32 %v1931, %v2065
        %v2098 = vadd.f32 %v1932, %v2066
        %v2099 = vadd.f32 %v1933, %v2067
        %v2100 = vadd.f32 %v1934, %v2068
        %v2101 = vadd.f32 %v1935, %v2069
        %v2102 = vadd.f32 %v1936, %v2070
        %v2103 = vadd.f32 %v1937, %v2071
        %v2104 = vadd.f32 %v1938, %v2072
        %v2105 = vadd.f32 %v1939, %v2073
        %v2138 = vrot.slane %v1246, 1
        %v2139 = vrot.slane %v1248, 1
        %v2140 = vsel %vm1720, %v2138, %v2139
        %v2141 = vrot.slane %v1251, 1
        %v2142 = vsel %vm1720, %v2139, %v2141
        %v2143 = vrot.slane %v1253, 1
        %v2144 = vsel %vm1720, %v2141, %v2143
        %v2145 = vrot.slane %v1256, 1
        %v2146 = vsel %vm1720, %v2143, %v2145
        %v2147 = vrot.slane %v1258, 1
        %v2148 = vsel %vm1720, %v2145, %v2147
        %v2149 = vrot.slane %v1261, 1
        %v2150 = vsel %vm1720, %v2147, %v2149
        %v2151 = vrot.slane %v1263, 1
        %v2152 = vsel %vm1720, %v2149, %v2151
        %v2153 = vrot.slane %v1266, 1
        %v2154 = vsel %vm1720, %v2151, %v2153
        %v2155 = vrot.slane %v1268, 1
        %v2156 = vsel %vm1720, %v2153, %v2155
        %v2157 = vrot.slane %v1271, 1
        %v2158 = vsel %vm1720, %v2155, %v2157
        %v2159 = vrot.slane %v1273, 1
        %v2160 = vsel %vm1720, %v2157, %v2159
        %v2161 = vrot.slane %v1276, 1
        %v2162 = vsel %vm1720, %v2159, %v2161
        %v2163 = vrot.slane %v1278, 1
        %v2164 = vsel %vm1720, %v2161, %v2163
        %v2165 = vrot.slane %v1281, 1
        %v2166 = vsel %vm1720, %v2163, %v2165
        %v2167 = vrot.slane %v1283, 1
        %v2168 = vsel %vm1720, %v2165, %v2167
        %v2169 = vrot.slane %v1286, 1
        %v2170 = vsel %vm1720, %v2167, %v2169
        %v2171 = vrot.slane %v1288, 1
        %v2172 = vsel %vm1720, %v2169, %v2171
        %v2173 = vrot.slane %v1291, 1
        %v2174 = vsel %vm1720, %v2171, %v2173
        %v2175 = vrot.slane %v1293, 1
        %v2176 = vsel %vm1720, %v2173, %v2175
        %v2177 = vrot.slane %v1296, 1
        %v2178 = vsel %vm1720, %v2175, %v2177
        %v2179 = vrot.slane %v1298, 1
        %v2180 = vsel %vm1720, %v2177, %v2179
        %v2181 = vrot.slane %v1301, 1
        %v2182 = vsel %vm1720, %v2179, %v2181
        %v2183 = vrot.slane %v1303, 1
        %v2184 = vsel %vm1720, %v2181, %v2183
        %v2185 = vrot.slane %v1306, 1
        %v2186 = vsel %vm1720, %v2183, %v2185
        %v2187 = vrot.slane %v1308, 1
        %v2188 = vsel %vm1720, %v2185, %v2187
        %v2189 = vrot.slane %v1311, 1
        %v2190 = vsel %vm1720, %v2187, %v2189
        %v2191 = vrot.slane %v1313, 1
        %v2192 = vsel %vm1720, %v2189, %v2191
        %v2193 = vrot.slane %v1316, 1
        %v2194 = vsel %vm1720, %v2191, %v2193
        %v2195 = vrot.slane %v1318, 1
        %v2196 = vsel %vm1720, %v2193, %v2195
        %v2197 = vrot.slane %v1321, 1
        %v2198 = vsel %vm1720, %v2195, %v2197
        %v2199 = vrot.slane %v1323, 1
        %v2200 = vsel %vm1720, %v2197, %v2199
        %v2233 = vsel %vm1720, %v2199, 0.0
        %v2234 = vmul.f32 %v2140, %v475
        %v2235 = vmul.f32 %v2142, %v476
        %v2236 = vmul.f32 %v2144, %v477
        %v2237 = vmul.f32 %v2146, %v478
        %v2238 = vmul.f32 %v2148, %v479
        %v2239 = vmul.f32 %v2150, %v480
        %v2240 = vmul.f32 %v2152, %v481
        %v2241 = vmul.f32 %v2154, %v482
        %v2242 = vmul.f32 %v2156, %v483
        %v2243 = vmul.f32 %v2158, %v484
        %v2244 = vmul.f32 %v2160, %v485
        %v2245 = vmul.f32 %v2162, %v486
        %v2246 = vmul.f32 %v2164, %v487
        %v2247 = vmul.f32 %v2166, %v488
        %v2248 = vmul.f32 %v2168, %v489
        %v2249 = vmul.f32 %v2170, %v490
        %v2250 = vmul.f32 %v2172, %v491
        %v2251 = vmul.f32 %v2174, %v492
        %v2252 = vmul.f32 %v2176, %v493
        %v2253 = vmul.f32 %v2178, %v494
        %v2254 = vmul.f32 %v2180, %v495
        %v2255 = vmul.f32 %v2182, %v496
        %v2256 = vmul.f32 %v2184, %v497
        %v2257 = vmul.f32 %v2186, %v498
        %v2258 = vmul.f32 %v2188, %v499
        %v2259 = vmul.f32 %v2190, %v500
        %v2260 = vmul.f32 %v2192, %v501
        %v2261 = vmul.f32 %v2194, %v502
        %v2262 = vmul.f32 %v2196, %v503
        %v2263 = vmul.f32 %v2198, %v504
        %v2264 = vmul.f32 %v2200, %v505
        %v2265 = vmul.f32 %v2233, %v506
        %2298 = vrot.lane.b32.xlu0 %v2234, 96
        %v2299 = vpop.permute.xlu0 %2298
        %2300 = vrot.lane.b32.xlu0 %v2235, 96
        %v2301 = vpop.permute.xlu0 %2300
        %2302 = vrot.lane.b32.xlu0 %v2236, 96
        %v2303 = vpop.permute.xlu0 %2302
        %2304 = vrot.lane.b32.xlu0 %v2237, 96
        %v2305 = vpop.permute.xlu0 %2304
        %2306 = vrot.lane.b32.xlu0 %v2238, 96
        %v2307 = vpop.permute.xlu0 %2306
        %2308 = vrot.lane.b32.xlu0 %v2239, 96
        %v2309 = vpop.permute.xlu0 %2308
        %2310 = vrot.lane.b32.xlu0 %v2240, 96
        %v2311 = vpop.permute.xlu0 %2310
        %2312 = vrot.lane.b32.xlu0 %v2241, 96
        %v2313 = vpop.permute.xlu0 %2312
        %2314 = vrot.lane.b32.xlu0 %v2242, 96
        %v2315 = vpop.permute.xlu0 %2314
        %2316 = vrot.lane.b32.xlu0 %v2243, 96
        %v2317 = vpop.permute.xlu0 %2316
        %2318 = vrot.lane.b32.xlu0 %v2244, 96
        %v2319 = vpop.permute.xlu0 %2318
        %2320 = vrot.lane.b32.xlu0 %v2245, 96
        %v2321 = vpop.permute.xlu0 %2320
        %2322 = vrot.lane.b32.xlu0 %v2246, 96
        %v2323 = vpop.permute.xlu0 %2322
        %2324 = vrot.lane.b32.xlu0 %v2247, 96
        %v2325 = vpop.permute.xlu0 %2324
        %2326 = vrot.lane.b32.xlu0 %v2248, 96
        %v2327 = vpop.permute.xlu0 %2326
        %2328 = vrot.lane.b32.xlu0 %v2249, 96
        %v2329 = vpop.permute.xlu0 %2328
        %2330 = vrot.lane.b32.xlu0 %v2250, 96
        %v2331 = vpop.permute.xlu0 %2330
        %2332 = vrot.lane.b32.xlu0 %v2251, 96
        %v2333 = vpop.permute.xlu0 %2332
        %2334 = vrot.lane.b32.xlu0 %v2252, 96
        %v2335 = vpop.permute.xlu0 %2334
        %2336 = vrot.lane.b32.xlu0 %v2253, 96
        %v2337 = vpop.permute.xlu0 %2336
        %2338 = vrot.lane.b32.xlu0 %v2254, 96
        %v2339 = vpop.permute.xlu0 %2338
        %2340 = vrot.lane.b32.xlu0 %v2255, 96
        %v2341 = vpop.permute.xlu0 %2340
        %2342 = vrot.lane.b32.xlu0 %v2256, 96
        %v2343 = vpop.permute.xlu0 %2342
        %2344 = vrot.lane.b32.xlu0 %v2257, 96
        %v2345 = vpop.permute.xlu0 %2344
        %2346 = vrot.lane.b32.xlu0 %v2258, 96
        %v2347 = vpop.permute.xlu0 %2346
        %2348 = vrot.lane.b32.xlu0 %v2259, 96
        %v2349 = vpop.permute.xlu0 %2348
        %2350 = vrot.lane.b32.xlu0 %v2260, 96
        %v2351 = vpop.permute.xlu0 %2350
        %2352 = vrot.lane.b32.xlu0 %v2261, 96
        %v2353 = vpop.permute.xlu0 %2352
        %2354 = vrot.lane.b32.xlu0 %v2262, 96
        %v2355 = vpop.permute.xlu0 %2354
        %2356 = vrot.lane.b32.xlu0 %v2263, 96
        %v2357 = vpop.permute.xlu0 %2356
        %2358 = vrot.lane.b32.xlu0 %v2264, 96
        %v2359 = vpop.permute.xlu0 %2358
        %2360 = vrot.lane.b32.xlu0 %v2265, 96
        %v2361 = vpop.permute.xlu0 %2360
        %v2394 = vadd.f32 %v2074, %v2299
        %v2395 = vadd.f32 %v2075, %v2301
        %v2396 = vadd.f32 %v2076, %v2303
        %v2397 = vadd.f32 %v2077, %v2305
        %v2398 = vadd.f32 %v2078, %v2307
        %v2399 = vadd.f32 %v2079, %v2309
        %v2400 = vadd.f32 %v2080, %v2311
        %v2401 = vadd.f32 %v2081, %v2313
        %v2402 = vadd.f32 %v2082, %v2315
        %v2403 = vadd.f32 %v2083, %v2317
        %v2404 = vadd.f32 %v2084, %v2319
        %v2405 = vadd.f32 %v2085, %v2321
        %v2406 = vadd.f32 %v2086, %v2323
        %v2407 = vadd.f32 %v2087, %v2325
        %v2408 = vadd.f32 %v2088, %v2327
        %v2409 = vadd.f32 %v2089, %v2329
        %v2410 = vadd.f32 %v2090, %v2331
        %v2411 = vadd.f32 %v2091, %v2333
        %v2412 = vadd.f32 %v2092, %v2335
        %v2413 = vadd.f32 %v2093, %v2337
        %v2414 = vadd.f32 %v2094, %v2339
        %v2415 = vadd.f32 %v2095, %v2341
        %v2416 = vadd.f32 %v2096, %v2343
        %v2417 = vadd.f32 %v2097, %v2345
        %v2418 = vadd.f32 %v2098, %v2347
        %v2419 = vadd.f32 %v2099, %v2349
        %v2420 = vadd.f32 %v2100, %v2351
        %v2421 = vadd.f32 %v2101, %v2353
        %v2422 = vadd.f32 %v2102, %v2355
        %v2423 = vadd.f32 %v2103, %v2357
        %v2424 = vadd.f32 %v2104, %v2359
        %v2425 = vadd.f32 %v2105, %v2361
        %v2426 = vrot.slane %v1248, 7
        %v2427 = vrot.slane %v1251, 7
        %v2428 = vsel %vm1442, %v2426, %v2427
        %v2429 = vrot.slane %v1253, 7
        %v2430 = vsel %vm1442, %v2427, %v2429
        %v2431 = vrot.slane %v1256, 7
        %v2432 = vsel %vm1442, %v2429, %v2431
        %v2433 = vrot.slane %v1258, 7
        %v2434 = vsel %vm1442, %v2431, %v2433
        %v2435 = vrot.slane %v1261, 7
        %v2436 = vsel %vm1442, %v2433, %v2435
        %v2437 = vrot.slane %v1263, 7
        %v2438 = vsel %vm1442, %v2435, %v2437
        %v2439 = vrot.slane %v1266, 7
        %v2440 = vsel %vm1442, %v2437, %v2439
        %v2441 = vrot.slane %v1268, 7
        %v2442 = vsel %vm1442, %v2439, %v2441
        %v2443 = vrot.slane %v1271, 7
        %v2444 = vsel %vm1442, %v2441, %v2443
        %v2445 = vrot.slane %v1273, 7
        %v2446 = vsel %vm1442, %v2443, %v2445
        %v2447 = vrot.slane %v1276, 7
        %v2448 = vsel %vm1442, %v2445, %v2447
        %v2449 = vrot.slane %v1278, 7
        %v2450 = vsel %vm1442, %v2447, %v2449
        %v2451 = vrot.slane %v1281, 7
        %v2452 = vsel %vm1442, %v2449, %v2451
        %v2453 = vrot.slane %v1283, 7
        %v2454 = vsel %vm1442, %v2451, %v2453
        %v2455 = vrot.slane %v1286, 7
        %v2456 = vsel %vm1442, %v2453, %v2455
        %v2457 = vrot.slane %v1288, 7
        %v2458 = vsel %vm1442, %v2455, %v2457
        %v2459 = vrot.slane %v1291, 7
        %v2460 = vsel %vm1442, %v2457, %v2459
        %v2461 = vrot.slane %v1293, 7
        %v2462 = vsel %vm1442, %v2459, %v2461
        %v2463 = vrot.slane %v1296, 7
        %v2464 = vsel %vm1442, %v2461, %v2463
        %v2465 = vrot.slane %v1298, 7
        %v2466 = vsel %vm1442, %v2463, %v2465
        %v2467 = vrot.slane %v1301, 7
        %v2468 = vsel %vm1442, %v2465, %v2467
        %v2469 = vrot.slane %v1303, 7
        %v2470 = vsel %vm1442, %v2467, %v2469
        %v2471 = vrot.slane %v1306, 7
        %v2472 = vsel %vm1442, %v2469, %v2471
        %v2473 = vrot.slane %v1308, 7
        %v2474 = vsel %vm1442, %v2471, %v2473
        %v2475 = vrot.slane %v1311, 7
        %v2476 = vsel %vm1442, %v2473, %v2475
        %v2477 = vrot.slane %v1313, 7
        %v2478 = vsel %vm1442, %v2475, %v2477
        %v2479 = vrot.slane %v1316, 7
        %v2480 = vsel %vm1442, %v2477, %v2479
        %v2481 = vrot.slane %v1318, 7
        %v2482 = vsel %vm1442, %v2479, %v2481
        %v2483 = vrot.slane %v1321, 7
        %v2484 = vsel %vm1442, %v2481, %v2483
        %v2485 = vrot.slane %v1323, 7
        %v2486 = vsel %vm1442, %v2483, %v2485
        %v2518 = vsel %vm1442, %v2485, 0.0
        %v2519 = vmul.f32 %v2428, %v379
        %v2520 = vmul.f32 %v2430, %v380
        %v2521 = vmul.f32 %v2432, %v381
        %v2522 = vmul.f32 %v2434, %v382
        %v2523 = vmul.f32 %v2436, %v383
        %v2524 = vmul.f32 %v2438, %v384
        %v2525 = vmul.f32 %v2440, %v385
        %v2526 = vmul.f32 %v2442, %v386
        %v2527 = vmul.f32 %v2444, %v387
        %v2528 = vmul.f32 %v2446, %v388
        %v2529 = vmul.f32 %v2448, %v389
        %v2530 = vmul.f32 %v2450, %v390
        %v2531 = vmul.f32 %v2452, %v391
        %v2532 = vmul.f32 %v2454, %v392
        %v2533 = vmul.f32 %v2456, %v393
        %v2534 = vmul.f32 %v2458, %v394
        %v2535 = vmul.f32 %v2460, %v395
        %v2536 = vmul.f32 %v2462, %v396
        %v2537 = vmul.f32 %v2464, %v397
        %v2538 = vmul.f32 %v2466, %v398
        %v2539 = vmul.f32 %v2468, %v399
        %v2540 = vmul.f32 %v2470, %v400
        %v2541 = vmul.f32 %v2472, %v401
        %v2542 = vmul.f32 %v2474, %v402
        %v2543 = vmul.f32 %v2476, %v403
        %v2544 = vmul.f32 %v2478, %v404
        %v2545 = vmul.f32 %v2480, %v405
        %v2546 = vmul.f32 %v2482, %v406
        %v2547 = vmul.f32 %v2484, %v407
        %v2548 = vmul.f32 %v2486, %v408
        %v2549 = vmul.f32 %v2518, %v409
        %v2550 = vmul.f32 %v410, 0.0
        %2583 = vrot.lane.b32.xlu0 %v2519, 64
        %v2584 = vpop.permute.xlu0 %2583
        %2585 = vrot.lane.b32.xlu0 %v2520, 64
        %v2586 = vpop.permute.xlu0 %2585
        %2587 = vrot.lane.b32.xlu0 %v2521, 64
        %v2588 = vpop.permute.xlu0 %2587
        %2589 = vrot.lane.b32.xlu0 %v2522, 64
        %v2590 = vpop.permute.xlu0 %2589
        %2591 = vrot.lane.b32.xlu0 %v2523, 64
        %v2592 = vpop.permute.xlu0 %2591
        %2593 = vrot.lane.b32.xlu0 %v2524, 64
        %v2594 = vpop.permute.xlu0 %2593
        %2595 = vrot.lane.b32.xlu0 %v2525, 64
        %v2596 = vpop.permute.xlu0 %2595
        %2597 = vrot.lane.b32.xlu0 %v2526, 64
        %v2598 = vpop.permute.xlu0 %2597
        %2599 = vrot.lane.b32.xlu0 %v2527, 64
        %v2600 = vpop.permute.xlu0 %2599
        %2601 = vrot.lane.b32.xlu0 %v2528, 64
        %v2602 = vpop.permute.xlu0 %2601
        %2603 = vrot.lane.b32.xlu0 %v2529, 64
        %v2604 = vpop.permute.xlu0 %2603
        %2605 = vrot.lane.b32.xlu0 %v2530, 64
        %v2606 = vpop.permute.xlu0 %2605
        %2607 = vrot.lane.b32.xlu0 %v2531, 64
        %v2608 = vpop.permute.xlu0 %2607
        %2609 = vrot.lane.b32.xlu0 %v2532, 64
        %v2610 = vpop.permute.xlu0 %2609
        %2611 = vrot.lane.b32.xlu0 %v2533, 64
        %v2612 = vpop.permute.xlu0 %2611
        %2613 = vrot.lane.b32.xlu0 %v2534, 64
        %v2614 = vpop.permute.xlu0 %2613
        %2615 = vrot.lane.b32.xlu0 %v2535, 64
        %v2616 = vpop.permute.xlu0 %2615
        %2617 = vrot.lane.b32.xlu0 %v2536, 64
        %v2618 = vpop.permute.xlu0 %2617
        %2619 = vrot.lane.b32.xlu0 %v2537, 64
        %v2620 = vpop.permute.xlu0 %2619
        %2621 = vrot.lane.b32.xlu0 %v2538, 64
        %v2622 = vpop.permute.xlu0 %2621
        %2623 = vrot.lane.b32.xlu0 %v2539, 64
        %v2624 = vpop.permute.xlu0 %2623
        %2625 = vrot.lane.b32.xlu0 %v2540, 64
        %v2626 = vpop.permute.xlu0 %2625
        %2627 = vrot.lane.b32.xlu0 %v2541, 64
        %v2628 = vpop.permute.xlu0 %2627
        %2629 = vrot.lane.b32.xlu0 %v2542, 64
        %v2630 = vpop.permute.xlu0 %2629
        %2631 = vrot.lane.b32.xlu0 %v2543, 64
        %v2632 = vpop.permute.xlu0 %2631
        %2633 = vrot.lane.b32.xlu0 %v2544, 64
        %v2634 = vpop.permute.xlu0 %2633
        %2635 = vrot.lane.b32.xlu0 %v2545, 64
        %v2636 = vpop.permute.xlu0 %2635
        %2637 = vrot.lane.b32.xlu0 %v2546, 64
        %v2638 = vpop.permute.xlu0 %2637
        %2639 = vrot.lane.b32.xlu0 %v2547, 64
        %v2640 = vpop.permute.xlu0 %2639
        %2641 = vrot.lane.b32.xlu0 %v2548, 64
        %v2642 = vpop.permute.xlu0 %2641
        %2643 = vrot.lane.b32.xlu0 %v2549, 64
        %v2644 = vpop.permute.xlu0 %2643
        %2645 = vrot.lane.b32.xlu0 %v2550, 64
        %v2646 = vpop.permute.xlu0 %2645
        %v2679 = vadd.f32 %v2394, %v2584
        %v2680 = vadd.f32 %v2395, %v2586
        %v2681 = vadd.f32 %v2396, %v2588
        %v2682 = vadd.f32 %v2397, %v2590
        %v2683 = vadd.f32 %v2398, %v2592
        %v2684 = vadd.f32 %v2399, %v2594
        %v2685 = vadd.f32 %v2400, %v2596
        %v2686 = vadd.f32 %v2401, %v2598
        %v2687 = vadd.f32 %v2402, %v2600
        %v2688 = vadd.f32 %v2403, %v2602
        %v2689 = vadd.f32 %v2404, %v2604
        %v2690 = vadd.f32 %v2405, %v2606
        %v2691 = vadd.f32 %v2406, %v2608
        %v2692 = vadd.f32 %v2407, %v2610
        %v2693 = vadd.f32 %v2408, %v2612
        %v2694 = vadd.f32 %v2409, %v2614
        %v2695 = vadd.f32 %v2410, %v2616
        %v2696 = vadd.f32 %v2411, %v2618
        %v2697 = vadd.f32 %v2412, %v2620
        %v2698 = vadd.f32 %v2413, %v2622
        %v2699 = vadd.f32 %v2414, %v2624
        %v2700 = vadd.f32 %v2415, %v2626
        %v2701 = vadd.f32 %v2416, %v2628
        %v2702 = vadd.f32 %v2417, %v2630
        %v2703 = vadd.f32 %v2418, %v2632
        %v2704 = vadd.f32 %v2419, %v2634
        %v2705 = vadd.f32 %v2420, %v2636
        %v2706 = vadd.f32 %v2421, %v2638
        %v2707 = vadd.f32 %v2422, %v2640
        %v2708 = vadd.f32 %v2423, %v2642
        %v2709 = vadd.f32 %v2424, %v2644
        %v2710 = vadd.f32 %v2425, %v2646
        %2712 = vrot.lane.b32.xlu0 %v1251, 32
        %v2713 = vpop.permute.xlu0 %2712
        %2714 = vrot.lane.b32.xlu0 %v1253, 32
        %v2715 = vpop.permute.xlu0 %2714
        %2716 = vrot.lane.b32.xlu0 %v1256, 32
        %v2717 = vpop.permute.xlu0 %2716
        %2718 = vrot.lane.b32.xlu0 %v1258, 32
        %v2719 = vpop.permute.xlu0 %2718
        %2720 = vrot.lane.b32.xlu0 %v1261, 32
        %v2721 = vpop.permute.xlu0 %2720
        %2722 = vrot.lane.b32.xlu0 %v1263, 32
        %v2723 = vpop.permute.xlu0 %2722
        %2724 = vrot.lane.b32.xlu0 %v1266, 32
        %v2725 = vpop.permute.xlu0 %2724
        %2726 = vrot.lane.b32.xlu0 %v1268, 32
        %v2727 = vpop.permute.xlu0 %2726
        %2728 = vrot.lane.b32.xlu0 %v1271, 32
        %v2729 = vpop.permute.xlu0 %2728
        %2730 = vrot.lane.b32.xlu0 %v1273, 32
        %v2731 = vpop.permute.xlu0 %2730
        %2732 = vrot.lane.b32.xlu0 %v1276, 32
        %v2733 = vpop.permute.xlu0 %2732
        %2734 = vrot.lane.b32.xlu0 %v1278, 32
        %v2735 = vpop.permute.xlu0 %2734
        %2736 = vrot.lane.b32.xlu0 %v1281, 32
        %v2737 = vpop.permute.xlu0 %2736
        %2738 = vrot.lane.b32.xlu0 %v1283, 32
        %v2739 = vpop.permute.xlu0 %2738
        %2740 = vrot.lane.b32.xlu0 %v1286, 32
        %v2741 = vpop.permute.xlu0 %2740
        %2742 = vrot.lane.b32.xlu0 %v1288, 32
        %v2743 = vpop.permute.xlu0 %2742
        %2744 = vrot.lane.b32.xlu0 %v1291, 32
        %v2745 = vpop.permute.xlu0 %2744
        %2746 = vrot.lane.b32.xlu0 %v1293, 32
        %v2747 = vpop.permute.xlu0 %2746
        %2748 = vrot.lane.b32.xlu0 %v1296, 32
        %v2749 = vpop.permute.xlu0 %2748
        %2750 = vrot.lane.b32.xlu0 %v1298, 32
        %v2751 = vpop.permute.xlu0 %2750
        %2752 = vrot.lane.b32.xlu0 %v1301, 32
        %v2753 = vpop.permute.xlu0 %2752
        %2754 = vrot.lane.b32.xlu0 %v1303, 32
        %v2755 = vpop.permute.xlu0 %2754
        %2756 = vrot.lane.b32.xlu0 %v1306, 32
        %v2757 = vpop.permute.xlu0 %2756
        %2758 = vrot.lane.b32.xlu0 %v1308, 32
        %v2759 = vpop.permute.xlu0 %2758
        %2760 = vrot.lane.b32.xlu0 %v1311, 32
        %v2761 = vpop.permute.xlu0 %2760
        %2762 = vrot.lane.b32.xlu0 %v1313, 32
        %v2763 = vpop.permute.xlu0 %2762
        %2764 = vrot.lane.b32.xlu0 %v1316, 32
        %v2765 = vpop.permute.xlu0 %2764
        %2766 = vrot.lane.b32.xlu0 %v1318, 32
        %v2767 = vpop.permute.xlu0 %2766
        %2768 = vrot.lane.b32.xlu0 %v1321, 32
        %v2769 = vpop.permute.xlu0 %2768
        %2770 = vrot.lane.b32.xlu0 %v1323, 32
        %v2771 = vpop.permute.xlu0 %2770
        %2772 = vrot.lane.b32.xlu0 0.0, 32
        %v2773 = vpop.permute.xlu0 %2772
        %v2805 = vadd.f32 %v2679, %v2713
        %v2806 = vadd.f32 %v2680, %v2715
        %v2807 = vadd.f32 %v2681, %v2717
        %v2808 = vadd.f32 %v2682, %v2719
        %v2809 = vadd.f32 %v2683, %v2721
        %v2810 = vadd.f32 %v2684, %v2723
        %v2811 = vadd.f32 %v2685, %v2725
        %v2812 = vadd.f32 %v2686, %v2727
        %v2813 = vadd.f32 %v2687, %v2729
        %v2814 = vadd.f32 %v2688, %v2731
        %v2815 = vadd.f32 %v2689, %v2733
        %v2816 = vadd.f32 %v2690, %v2735
        %v2817 = vadd.f32 %v2691, %v2737
        %v2818 = vadd.f32 %v2692, %v2739
        %v2819 = vadd.f32 %v2693, %v2741
        %v2820 = vadd.f32 %v2694, %v2743
        %v2821 = vadd.f32 %v2695, %v2745
        %v2822 = vadd.f32 %v2696, %v2747
        %v2823 = vadd.f32 %v2697, %v2749
        %v2824 = vadd.f32 %v2698, %v2751
        %v2825 = vadd.f32 %v2699, %v2753
        %v2826 = vadd.f32 %v2700, %v2755
        %v2827 = vadd.f32 %v2701, %v2757
        %v2828 = vadd.f32 %v2702, %v2759
        %v2829 = vadd.f32 %v2703, %v2761
        %v2830 = vadd.f32 %v2704, %v2763
        %v2831 = vadd.f32 %v2705, %v2765
        %v2832 = vadd.f32 %v2706, %v2767
        %v2833 = vadd.f32 %v2707, %v2769
        %v2834 = vadd.f32 %v2708, %v2771
        %v2835 = vadd.f32 %v2709, %v2773
        %v2836 = vadd.f32 %v2710, %v2773
        %v2867 = vrot.slane %v1338, 1
        %v2868 = vrot.slane %v1340, 1
        %v2869 = vsel %vm1720, %v2867, %v2868
        %v2870 = vrot.slane %v1343, 1
        %v2871 = vsel %vm1720, %v2868, %v2870
        %v2872 = vrot.slane %v1345, 1
        %v2873 = vsel %vm1720, %v2870, %v2872
        %v2874 = vrot.slane %v1348, 1
        %v2875 = vsel %vm1720, %v2872, %v2874
        %v2876 = vrot.slane %v1350, 1
        %v2877 = vsel %vm1720, %v2874, %v2876
        %v2878 = vrot.slane %v1353, 1
        %v2879 = vsel %vm1720, %v2876, %v2878
        %v2880 = vrot.slane %v1355, 1
        %v2881 = vsel %vm1720, %v2878, %v2880
        %v2882 = vrot.slane %v1358, 1
        %v2883 = vsel %vm1720, %v2880, %v2882
        %v2884 = vrot.slane %v1360, 1
        %v2885 = vsel %vm1720, %v2882, %v2884
        %v2886 = vrot.slane %v1363, 1
        %v2887 = vsel %vm1720, %v2884, %v2886
        %v2888 = vrot.slane %v1365, 1
        %v2889 = vsel %vm1720, %v2886, %v2888
        %v2890 = vrot.slane %v1368, 1
        %v2891 = vsel %vm1720, %v2888, %v2890
        %v2892 = vrot.slane %v1370, 1
        %v2893 = vsel %vm1720, %v2890, %v2892
        %v2894 = vrot.slane %v1373, 1
        %v2895 = vsel %vm1720, %v2892, %v2894
        %v2896 = vrot.slane %v1375, 1
        %v2897 = vsel %vm1720, %v2894, %v2896
        %v2898 = vrot.slane %v1378, 1
        %v2899 = vsel %vm1720, %v2896, %v2898
        %v2900 = vrot.slane %v1380, 1
        %v2901 = vsel %vm1720, %v2898, %v2900
        %v2902 = vrot.slane %v1383, 1
        %v2903 = vsel %vm1720, %v2900, %v2902
        %v2904 = vrot.slane %v1385, 1
        %v2905 = vsel %vm1720, %v2902, %v2904
        %v2906 = vrot.slane %v1388, 1
        %v2907 = vsel %vm1720, %v2904, %v2906
        %v2908 = vrot.slane %v1390, 1
        %v2909 = vsel %vm1720, %v2906, %v2908
        %v2910 = vrot.slane %v1393, 1
        %v2911 = vsel %vm1720, %v2908, %v2910
        %v2912 = vrot.slane %v1395, 1
        %v2913 = vsel %vm1720, %v2910, %v2912
        %v2914 = vrot.slane %v1398, 1
        %v2915 = vsel %vm1720, %v2912, %v2914
        %v2916 = vrot.slane %v1400, 1
        %v2917 = vsel %vm1720, %v2914, %v2916
        %v2918 = vrot.slane %v1403, 1
        %v2919 = vsel %vm1720, %v2916, %v2918
        %v2920 = vrot.slane %v1405, 1
        %v2921 = vsel %vm1720, %v2918, %v2920
        %v2922 = vrot.slane %v1408, 1
        %v2923 = vsel %vm1720, %v2920, %v2922
        %v2924 = vrot.slane %v1410, 1
        %v2925 = vsel %vm1720, %v2922, %v2924
        %v2956 = vsel %vm1720, %v2924, 0.0
        %v2957 = vmul.f32 %v2869, %v475
        %v2958 = vmul.f32 %v2871, %v476
        %v2959 = vmul.f32 %v2873, %v477
        %v2960 = vmul.f32 %v2875, %v478
        %v2961 = vmul.f32 %v2877, %v479
        %v2962 = vmul.f32 %v2879, %v480
        %v2963 = vmul.f32 %v2881, %v481
        %v2964 = vmul.f32 %v2883, %v482
        %v2965 = vmul.f32 %v2885, %v483
        %v2966 = vmul.f32 %v2887, %v484
        %v2967 = vmul.f32 %v2889, %v485
        %v2968 = vmul.f32 %v2891, %v486
        %v2969 = vmul.f32 %v2893, %v487
        %v2970 = vmul.f32 %v2895, %v488
        %v2971 = vmul.f32 %v2897, %v489
        %v2972 = vmul.f32 %v2899, %v490
        %v2973 = vmul.f32 %v2901, %v491
        %v2974 = vmul.f32 %v2903, %v492
        %v2975 = vmul.f32 %v2905, %v493
        %v2976 = vmul.f32 %v2907, %v494
        %v2977 = vmul.f32 %v2909, %v495
        %v2978 = vmul.f32 %v2911, %v496
        %v2979 = vmul.f32 %v2913, %v497
        %v2980 = vmul.f32 %v2915, %v498
        %v2981 = vmul.f32 %v2917, %v499
        %v2982 = vmul.f32 %v2919, %v500
        %v2983 = vmul.f32 %v2921, %v501
        %v2984 = vmul.f32 %v2923, %v502
        %v2985 = vmul.f32 %v2925, %v503
        %v2986 = vmul.f32 %v2956, %v504
        %v2987 = vmul.f32 %v505, 0.0
        %v2988 = vmul.f32 %v506, 0.0
        %v2989 = vadd.f32 %v2805, %v2957
        %v2990 = vadd.f32 %v2806, %v2958
        %v2991 = vadd.f32 %v2807, %v2959
        %v2992 = vadd.f32 %v2808, %v2960
        %v2993 = vadd.f32 %v2809, %v2961
        %v2994 = vadd.f32 %v2810, %v2962
        %v2995 = vadd.f32 %v2811, %v2963
        %v2996 = vadd.f32 %v2812, %v2964
        %v2997 = vadd.f32 %v2813, %v2965
        %v2998 = vadd.f32 %v2814, %v2966
        %v2999 = vadd.f32 %v2815, %v2967
        %v3000 = vadd.f32 %v2816, %v2968
        %v3001 = vadd.f32 %v2817, %v2969
        %v3002 = vadd.f32 %v2818, %v2970
        %v3003 = vadd.f32 %v2819, %v2971
        %v3004 = vadd.f32 %v2820, %v2972
        %v3005 = vadd.f32 %v2821, %v2973
        %v3006 = vadd.f32 %v2822, %v2974
        %v3007 = vadd.f32 %v2823, %v2975
        %v3008 = vadd.f32 %v2824, %v2976
        %v3009 = vadd.f32 %v2825, %v2977
        %v3010 = vadd.f32 %v2826, %v2978
        %v3011 = vadd.f32 %v2827, %v2979
        %v3012 = vadd.f32 %v2828, %v2980
        %v3013 = vadd.f32 %v2829, %v2981
        %v3014 = vadd.f32 %v2830, %v2982
        %v3015 = vadd.f32 %v2831, %v2983
        %v3016 = vadd.f32 %v2832, %v2984
        %v3017 = vadd.f32 %v2833, %v2985
        %v3018 = vadd.f32 %v2834, %v2986
        %v3019 = vadd.f32 %v2835, %v2987
        %v3020 = vadd.f32 %v2836, %v2988
        %3053 = vrot.lane.b32.xlu0 %v2989, 64
        %v3054 = vpop.permute.xlu0 %3053
        %3055 = vrot.lane.b32.xlu0 %v2990, 64
        %v3056 = vpop.permute.xlu0 %3055
        %3057 = vrot.lane.b32.xlu0 %v2991, 64
        %v3058 = vpop.permute.xlu0 %3057
        %3059 = vrot.lane.b32.xlu0 %v2992, 64
        %v3060 = vpop.permute.xlu0 %3059
        %3061 = vrot.lane.b32.xlu0 %v2993, 64
        %v3062 = vpop.permute.xlu0 %3061
        %3063 = vrot.lane.b32.xlu0 %v2994, 64
        %v3064 = vpop.permute.xlu0 %3063
        %3065 = vrot.lane.b32.xlu0 %v2995, 64
        %v3066 = vpop.permute.xlu0 %3065
        %3067 = vrot.lane.b32.xlu0 %v2996, 64
        %v3068 = vpop.permute.xlu0 %3067
        %3069 = vrot.lane.b32.xlu0 %v2997, 64
        %v3070 = vpop.permute.xlu0 %3069
        %3071 = vrot.lane.b32.xlu0 %v2998, 64
        %v3072 = vpop.permute.xlu0 %3071
        %3073 = vrot.lane.b32.xlu0 %v2999, 64
        %v3074 = vpop.permute.xlu0 %3073
        %3075 = vrot.lane.b32.xlu0 %v3000, 64
        %v3076 = vpop.permute.xlu0 %3075
        %3077 = vrot.lane.b32.xlu0 %v3001, 64
        %v3078 = vpop.permute.xlu0 %3077
        %3079 = vrot.lane.b32.xlu0 %v3002, 64
        %v3080 = vpop.permute.xlu0 %3079
        %3081 = vrot.lane.b32.xlu0 %v3003, 64
        %v3082 = vpop.permute.xlu0 %3081
        %3083 = vrot.lane.b32.xlu0 %v3004, 64
        %v3084 = vpop.permute.xlu0 %3083
        %3085 = vrot.lane.b32.xlu0 %v3005, 64
        %v3086 = vpop.permute.xlu0 %3085
        %3087 = vrot.lane.b32.xlu0 %v3006, 64
        %v3088 = vpop.permute.xlu0 %3087
        %3089 = vrot.lane.b32.xlu0 %v3007, 64
        %v3090 = vpop.permute.xlu0 %3089
        %3091 = vrot.lane.b32.xlu0 %v3008, 64
        %v3092 = vpop.permute.xlu0 %3091
        %3093 = vrot.lane.b32.xlu0 %v3009, 64
        %v3094 = vpop.permute.xlu0 %3093
        %3095 = vrot.lane.b32.xlu0 %v3010, 64
        %v3096 = vpop.permute.xlu0 %3095
        %3097 = vrot.lane.b32.xlu0 %v3011, 64
        %v3098 = vpop.permute.xlu0 %3097
        %3099 = vrot.lane.b32.xlu0 %v3012, 64
        %v3100 = vpop.permute.xlu0 %3099
        %3101 = vrot.lane.b32.xlu0 %v3013, 64
        %v3102 = vpop.permute.xlu0 %3101
        %3103 = vrot.lane.b32.xlu0 %v3014, 64
        %v3104 = vpop.permute.xlu0 %3103
        %3105 = vrot.lane.b32.xlu0 %v3015, 64
        %v3106 = vpop.permute.xlu0 %3105
        %3107 = vrot.lane.b32.xlu0 %v3016, 64
        %v3108 = vpop.permute.xlu0 %3107
        %3109 = vrot.lane.b32.xlu0 %v3017, 64
        %v3110 = vpop.permute.xlu0 %3109
        %3111 = vrot.lane.b32.xlu0 %v3018, 64
        %v3112 = vpop.permute.xlu0 %3111
        %3113 = vrot.lane.b32.xlu0 %v3019, 64
        %v3114 = vpop.permute.xlu0 %3113
        %3115 = vrot.lane.b32.xlu0 %v3020, 64
        %v3116 = vpop.permute.xlu0 %3115
        %vm3149 = vcmask 785920
        %3150 = vst.msk [vmem:[%s244] sm:$0xff] %vm3149, %v3054
        %3151 = vst.msk [vmem:[%s244 + $0x10] sm:$0xff] %vm3149, %v3056
        %3152 = vst.msk [vmem:[%s244 + $0x20] sm:$0xff] %vm3149, %v3058
        %3153 = vst.msk [vmem:[%s244 + $0x30] sm:$0xff] %vm3149, %v3060
        %3154 = vst.msk [vmem:[%s244 + $0x40] sm:$0xff] %vm3149, %v3062
        %3155 = vst.msk [vmem:[%s244 + $0x50] sm:$0xff] %vm3149, %v3064
        %3156 = vst.msk [vmem:[%s244 + $0x60] sm:$0xff] %vm3149, %v3066
        %3157 = vst.msk [vmem:[%s244 + $0x70] sm:$0xff] %vm3149, %v3068
        %3158 = vst.msk [vmem:[%s244 + $0x80] sm:$0xff] %vm3149, %v3070
        %3159 = vst.msk [vmem:[%s244 + $0x90] sm:$0xff] %vm3149, %v3072
        %3160 = vst.msk [vmem:[%s244 + $0xa0] sm:$0xff] %vm3149, %v3074
        %3161 = vst.msk [vmem:[%s244 + $0xb0] sm:$0xff] %vm3149, %v3076
        %3162 = vst.msk [vmem:[%s244 + $0xc0] sm:$0xff] %vm3149, %v3078
        %3163 = vst.msk [vmem:[%s244 + $0xd0] sm:$0xff] %vm3149, %v3080
        %3164 = vst.msk [vmem:[%s244 + $0xe0] sm:$0xff] %vm3149, %v3082
        %3165 = vst.msk [vmem:[%s244 + $0xf0] sm:$0xff] %vm3149, %v3084
        %3166 = vst.msk [vmem:[%s244 + $0x100] sm:$0xff] %vm3149, %v3086
        %3167 = vst.msk [vmem:[%s244 + $0x110] sm:$0xff] %vm3149, %v3088
        %3168 = vst.msk [vmem:[%s244 + $0x120] sm:$0xff] %vm3149, %v3090
        %3169 = vst.msk [vmem:[%s244 + $0x130] sm:$0xff] %vm3149, %v3092
        %3170 = vst.msk [vmem:[%s244 + $0x140] sm:$0xff] %vm3149, %v3094
        %3171 = vst.msk [vmem:[%s244 + $0x150] sm:$0xff] %vm3149, %v3096
        %3172 = vst.msk [vmem:[%s244 + $0x160] sm:$0xff] %vm3149, %v3098
        %3173 = vst.msk [vmem:[%s244 + $0x170] sm:$0xff] %vm3149, %v3100
        %3174 = vst.msk [vmem:[%s244 + $0x180] sm:$0xff] %vm3149, %v3102
        %3175 = vst.msk [vmem:[%s244 + $0x190] sm:$0xff] %vm3149, %v3104
        %3176 = vst.msk [vmem:[%s244 + $0x1a0] sm:$0xff] %vm3149, %v3106
        %3177 = vst.msk [vmem:[%s244 + $0x1b0] sm:$0xff] %vm3149, %v3108
        %3178 = vst.msk [vmem:[%s244 + $0x1c0] sm:$0xff] %vm3149, %v3110
        %3179 = vst.msk [vmem:[%s244 + $0x1d0] sm:$0xff] %vm3149, %v3112
        %3180 = vst.msk [vmem:[%s244 + $0x1e0] sm:$0xff] %vm3149, %v3114
        %3181 = vst.msk [vmem:[%s244 + $0x1f0] sm:$0xff] %vm3149, %v3116
        %v3182 = vld [vmem:[%s244] sm:$0xff]
        %v3183 = vld [vmem:[%s244 + $0x10] sm:$0xff]
        %v3184 = vld [vmem:[%s244 + $0x20] sm:$0xff]
        %v3185 = vld [vmem:[%s244 + $0x30] sm:$0xff]
        %v3186 = vld [vmem:[%s244 + $0x40] sm:$0xff]
        %v3187 = vld [vmem:[%s244 + $0x50] sm:$0xff]
        %v3188 = vld [vmem:[%s244 + $0x60] sm:$0xff]
        %v3189 = vld [vmem:[%s244 + $0x70] sm:$0xff]
        %v3190 = vld [vmem:[%s244 + $0x80] sm:$0xff]
        %v3191 = vld [vmem:[%s244 + $0x90] sm:$0xff]
        %v3192 = vld [vmem:[%s244 + $0xa0] sm:$0xff]
        %v3193 = vld [vmem:[%s244 + $0xb0] sm:$0xff]
        %v3194 = vld [vmem:[%s244 + $0xc0] sm:$0xff]
        %v3195 = vld [vmem:[%s244 + $0xd0] sm:$0xff]
        %v3196 = vld [vmem:[%s244 + $0xe0] sm:$0xff]
        %v3197 = vld [vmem:[%s244 + $0xf0] sm:$0xff]
        %v3198 = vld [vmem:[%s244 + $0x100] sm:$0xff]
        %v3199 = vld [vmem:[%s244 + $0x110] sm:$0xff]
        %v3200 = vld [vmem:[%s244 + $0x120] sm:$0xff]
        %v3201 = vld [vmem:[%s244 + $0x130] sm:$0xff]
        %v3202 = vld [vmem:[%s244 + $0x140] sm:$0xff]
        %v3203 = vld [vmem:[%s244 + $0x150] sm:$0xff]
        %v3204 = vld [vmem:[%s244 + $0x160] sm:$0xff]
        %v3205 = vld [vmem:[%s244 + $0x170] sm:$0xff]
        %v3206 = vld [vmem:[%s244 + $0x180] sm:$0xff]
        %v3207 = vld [vmem:[%s244 + $0x190] sm:$0xff]
        %v3208 = vld [vmem:[%s244 + $0x1a0] sm:$0xff]
        %v3209 = vld [vmem:[%s244 + $0x1b0] sm:$0xff]
        %v3210 = vld [vmem:[%s244 + $0x1c0] sm:$0xff]
        %v3211 = vld [vmem:[%s244 + $0x1d0] sm:$0xff]
        %v3212 = vld [vmem:[%s244 + $0x1e0] sm:$0xff]
        %v3213 = vld [vmem:[%s244 + $0x1f0] sm:$0xff]
        %v3214 = vld [vmem:[%s2 + $0x1] sm:$0x1]
        %v3215 = vperm.slane %v3214, 0
        %v3216 = vmul.f32 %v3182, %v3215
        %v3217 = vmul.f32 %v3183, %v3215
        %v3218 = vmul.f32 %v3184, %v3215
        %v3219 = vmul.f32 %v3185, %v3215
        %v3220 = vmul.f32 %v3186, %v3215
        %v3221 = vmul.f32 %v3187, %v3215
        %v3222 = vmul.f32 %v3188, %v3215
        %v3223 = vmul.f32 %v3189, %v3215
        %v3224 = vmul.f32 %v3190, %v3215
        %v3225 = vmul.f32 %v3191, %v3215
        %v3226 = vmul.f32 %v3192, %v3215
        %v3227 = vmul.f32 %v3193, %v3215
        %v3228 = vmul.f32 %v3194, %v3215
        %v3229 = vmul.f32 %v3195, %v3215
        %v3230 = vmul.f32 %v3196, %v3215
        %v3231 = vmul.f32 %v3197, %v3215
        %v3232 = vmul.f32 %v3198, %v3215
        %v3233 = vmul.f32 %v3199, %v3215
        %v3234 = vmul.f32 %v3200, %v3215
        %v3235 = vmul.f32 %v3201, %v3215
        %v3236 = vmul.f32 %v3202, %v3215
        %v3237 = vmul.f32 %v3203, %v3215
        %v3238 = vmul.f32 %v3204, %v3215
        %v3239 = vmul.f32 %v3205, %v3215
        %v3240 = vmul.f32 %v3206, %v3215
        %v3241 = vmul.f32 %v3207, %v3215
        %v3242 = vmul.f32 %v3208, %v3215
        %v3243 = vmul.f32 %v3209, %v3215
        %v3244 = vmul.f32 %v3210, %v3215
        %v3245 = vmul.f32 %v3211, %v3215
        %v3246 = vmul.f32 %v3212, %v3215
        %v3247 = vmul.f32 %v3213, %v3215
        %v3248 = vld [vmem:[%s3 + $0x1] sm:$0x1]
        %v3249 = vperm.slane %v3248, 0
        %v3250 = vadd.f32 %v3216, %v3249
        %v3251 = vadd.f32 %v3217, %v3249
        %v3252 = vadd.f32 %v3218, %v3249
        %v3253 = vadd.f32 %v3219, %v3249
        %v3254 = vadd.f32 %v3220, %v3249
        %v3255 = vadd.f32 %v3221, %v3249
        %v3256 = vadd.f32 %v3222, %v3249
        %v3257 = vadd.f32 %v3223, %v3249
        %v3258 = vadd.f32 %v3224, %v3249
        %v3259 = vadd.f32 %v3225, %v3249
        %v3260 = vadd.f32 %v3226, %v3249
        %v3261 = vadd.f32 %v3227, %v3249
        %v3262 = vadd.f32 %v3228, %v3249
        %v3263 = vadd.f32 %v3229, %v3249
        %v3264 = vadd.f32 %v3230, %v3249
        %v3265 = vadd.f32 %v3231, %v3249
        %v3266 = vadd.f32 %v3232, %v3249
        %v3267 = vadd.f32 %v3233, %v3249
        %v3268 = vadd.f32 %v3234, %v3249
        %v3269 = vadd.f32 %v3235, %v3249
        %v3270 = vadd.f32 %v3236, %v3249
        %v3271 = vadd.f32 %v3237, %v3249
        %v3272 = vadd.f32 %v3238, %v3249
        %v3273 = vadd.f32 %v3239, %v3249
        %v3274 = vadd.f32 %v3240, %v3249
        %v3275 = vadd.f32 %v3241, %v3249
        %v3276 = vadd.f32 %v3242, %v3249
        %v3277 = vadd.f32 %v3243, %v3249
        %v3278 = vadd.f32 %v3244, %v3249
        %v3279 = vadd.f32 %v3245, %v3249
        %v3280 = vadd.f32 %v3246, %v3249
        %v3281 = vadd.f32 %v3247, %v3249
        %v3282 = vmax.f32 %v3250, 0.0
        %v3283 = vmax.f32 %v3251, 0.0
        %v3284 = vmax.f32 %v3252, 0.0
        %v3285 = vmax.f32 %v3253, 0.0
        %v3286 = vmax.f32 %v3254, 0.0
        %v3287 = vmax.f32 %v3255, 0.0
        %v3288 = vmax.f32 %v3256, 0.0
        %v3289 = vmax.f32 %v3257, 0.0
        %v3290 = vmax.f32 %v3258, 0.0
        %v3291 = vmax.f32 %v3259, 0.0
        %v3292 = vmax.f32 %v3260, 0.0
        %v3293 = vmax.f32 %v3261, 0.0
        %v3294 = vmax.f32 %v3262, 0.0
        %v3295 = vmax.f32 %v3263, 0.0
        %v3296 = vmax.f32 %v3264, 0.0
        %v3297 = vmax.f32 %v3265, 0.0
        %v3298 = vmax.f32 %v3266, 0.0
        %v3299 = vmax.f32 %v3267, 0.0
        %v3300 = vmax.f32 %v3268, 0.0
        %v3301 = vmax.f32 %v3269, 0.0
        %v3302 = vmax.f32 %v3270, 0.0
        %v3303 = vmax.f32 %v3271, 0.0
        %v3304 = vmax.f32 %v3272, 0.0
        %v3305 = vmax.f32 %v3273, 0.0
        %v3306 = vmax.f32 %v3274, 0.0
        %v3307 = vmax.f32 %v3275, 0.0
        %v3308 = vmax.f32 %v3276, 0.0
        %v3309 = vmax.f32 %v3277, 0.0
        %v3310 = vmax.f32 %v3278, 0.0
        %v3311 = vmax.f32 %v3279, 0.0
        %v3312 = vmax.f32 %v3280, 0.0
        %v3313 = vmax.f32 %v3281, 0.0
        %v3314 = vpack.c.bf16 %v3283, %v3282
        %v3315 = vpack.c.bf16 %v3285, %v3284
        %v3316 = vpack.c.bf16 %v3287, %v3286
        %v3317 = vpack.c.bf16 %v3289, %v3288
        %v3318 = vpack.c.bf16 %v3291, %v3290
        %v3319 = vpack.c.bf16 %v3293, %v3292
        %v3320 = vpack.c.bf16 %v3295, %v3294
        %v3321 = vpack.c.bf16 %v3297, %v3296
        %v3322 = vpack.c.bf16 %v3299, %v3298
        %v3323 = vpack.c.bf16 %v3301, %v3300
        %v3324 = vpack.c.bf16 %v3303, %v3302
        %v3325 = vpack.c.bf16 %v3305, %v3304
        %v3326 = vpack.c.bf16 %v3307, %v3306
        %v3327 = vpack.c.bf16 %v3309, %v3308
        %v3328 = vpack.c.bf16 %v3311, %v3310
        %v3329 = vpack.c.bf16 %v3313, %v3312
        %s3330 = scalar_lea.vmem %s1, 128
        %v3331 = vld [vmem:[%s3330] sm:$0xf]
        %v3332 = vld [vmem:[%s3330 + $0x4] sm:$0xf]
        %v3333 = vld [vmem:[%s3330 + $0x8] sm:$0xf]
        %v3334 = vld [vmem:[%s3330 + $0xc] sm:$0xf]
        %v3335 = vld [vmem:[%s3330 + $0x10] sm:$0xf]
        %v3336 = vld [vmem:[%s3330 + $0x14] sm:$0xf]
        %v3337 = vld [vmem:[%s3330 + $0x18] sm:$0xf]
        %v3338 = vld [vmem:[%s3330 + $0x1c] sm:$0xf]
        %v3339 = vld [vmem:[%s3330 + $0x20] sm:$0xf]
        %v3340 = vld [vmem:[%s3330 + $0x24] sm:$0xf]
        %v3341 = vld [vmem:[%s3330 + $0x28] sm:$0xf]
        %v3342 = vld [vmem:[%s3330 + $0x2c] sm:$0xf]
        %v3343 = vld [vmem:[%s3330 + $0x30] sm:$0xf]
        %v3344 = vld [vmem:[%s3330 + $0x34] sm:$0xf]
        %v3345 = vld [vmem:[%s3330 + $0x38] sm:$0xf]
        %v3346 = vld [vmem:[%s3330 + $0x3c] sm:$0xf]
        %v3347 = vld [vmem:[%s5 + $0x1] sm:$0x1]
        %v3348 = vperm.slane %v3347, 0
        %v3365 = vunpack.c.l.b16 %v3331
        %v3366 = vunpack.c.l.b16 %v3332
        %v3367 = vunpack.c.l.b16 %v3333
        %v3368 = vunpack.c.l.b16 %v3334
        %v3369 = vunpack.c.l.b16 %v3335
        %v3370 = vunpack.c.l.b16 %v3336
        %v3371 = vunpack.c.l.b16 %v3337
        %v3372 = vunpack.c.l.b16 %v3338
        %v3373 = vunpack.c.l.b16 %v3339
        %v3374 = vunpack.c.l.b16 %v3340
        %v3375 = vunpack.c.l.b16 %v3341
        %v3376 = vunpack.c.l.b16 %v3342
        %v3377 = vunpack.c.l.b16 %v3343
        %v3378 = vunpack.c.l.b16 %v3344
        %v3379 = vunpack.c.l.b16 %v3345
        %v3380 = vunpack.c.l.b16 %v3346
        %v3381 = vpack.c.b16 %v3366, %v3365
        %v3382 = vpack.c.b16 %v3368, %v3367
        %v3383 = vpack.c.b16 %v3370, %v3369
        %v3384 = vpack.c.b16 %v3372, %v3371
        %v3385 = vpack.c.b16 %v3374, %v3373
        %v3386 = vpack.c.b16 %v3376, %v3375
        %v3387 = vpack.c.b16 %v3378, %v3377
        %v3388 = vpack.c.b16 %v3380, %v3379
        %3397 = vmatpush.bf16.msra.mxu0 %v3388
        %3398 = vmatpush.bf16.msra.mxu0 %v3387
        %3399 = vmatpush.bf16.msra.mxu0 %v3386
        %3400 = vmatpush.bf16.msra.mxu0 %v3385
        %3401 = vmatpush.bf16.msra.mxu0 %v3384
        %3402 = vmatpush.bf16.msra.mxu0 %v3383
        %3403 = vmatpush.bf16.msra.mxu0 %v3382
        %3404 = vmatpush.bf16.msra.mxu0 %v3381
        %3405 = vmatmul.bf16.gmra.mxu0 %v3314
        %v3406 = vpop.f32.mrf.mxu0
        %v3407 = vadd.f32 %v3348, %v3406
        %v3408 = vpop.f32.mrf.mxu0
        %v3409 = vadd.f32 %v3348, %v3408
        %3410 = vmatmul.bf16.gmra.mxu0 %v3315
        %v3411 = vpop.f32.mrf.mxu0
        %v3412 = vadd.f32 %v3348, %v3411
        %v3413 = vpop.f32.mrf.mxu0
        %v3414 = vadd.f32 %v3348, %v3413
        %3415 = vmatmul.bf16.gmra.mxu0 %v3316
        %v3416 = vpop.f32.mrf.mxu0
        %v3417 = vadd.f32 %v3348, %v3416
        %v3418 = vpop.f32.mrf.mxu0
        %v3419 = vadd.f32 %v3348, %v3418
        %3420 = vmatmul.bf16.gmra.mxu0 %v3317
        %v3421 = vpop.f32.mrf.mxu0
        %v3422 = vadd.f32 %v3348, %v3421
        %v3423 = vpop.f32.mrf.mxu0
        %v3424 = vadd.f32 %v3348, %v3423
        %3425 = vmatmul.bf16.gmra.mxu0 %v3318
        %v3426 = vpop.f32.mrf.mxu0
        %v3427 = vadd.f32 %v3348, %v3426
        %v3428 = vpop.f32.mrf.mxu0
        %v3429 = vadd.f32 %v3348, %v3428
        %3430 = vmatmul.bf16.gmra.mxu0 %v3319
        %v3431 = vpop.f32.mrf.mxu0
        %v3432 = vadd.f32 %v3348, %v3431
        %v3433 = vpop.f32.mrf.mxu0
        %v3434 = vadd.f32 %v3348, %v3433
        %3435 = vmatmul.bf16.gmra.mxu0 %v3320
        %v3436 = vpop.f32.mrf.mxu0
        %v3437 = vadd.f32 %v3348, %v3436
        %v3438 = vpop.f32.mrf.mxu0
        %v3439 = vadd.f32 %v3348, %v3438
        %3440 = vmatmul.bf16.gmra.mxu0 %v3321
        %v3441 = vpop.f32.mrf.mxu0
        %v3442 = vadd.f32 %v3348, %v3441
        %v3443 = vpop.f32.mrf.mxu0
        %v3444 = vadd.f32 %v3348, %v3443
        %3445 = vmatmul.bf16.gmra.mxu0 %v3322
        %v3446 = vpop.f32.mrf.mxu0
        %v3447 = vadd.f32 %v3348, %v3446
        %v3448 = vpop.f32.mrf.mxu0
        %v3449 = vadd.f32 %v3348, %v3448
        %3450 = vmatmul.bf16.gmra.mxu0 %v3323
        %v3451 = vpop.f32.mrf.mxu0
        %v3452 = vadd.f32 %v3348, %v3451
        %v3453 = vpop.f32.mrf.mxu0
        %v3454 = vadd.f32 %v3348, %v3453
        %3455 = vmatmul.bf16.gmra.mxu0 %v3324
        %v3456 = vpop.f32.mrf.mxu0
        %v3457 = vadd.f32 %v3348, %v3456
        %v3458 = vpop.f32.mrf.mxu0
        %v3459 = vadd.f32 %v3348, %v3458
        %3460 = vmatmul.bf16.gmra.mxu0 %v3325
        %v3461 = vpop.f32.mrf.mxu0
        %v3462 = vadd.f32 %v3348, %v3461
        %v3463 = vpop.f32.mrf.mxu0
        %v3464 = vadd.f32 %v3348, %v3463
        %3465 = vmatmul.bf16.gmra.mxu0 %v3326
        %v3466 = vpop.f32.mrf.mxu0
        %v3467 = vadd.f32 %v3348, %v3466
        %v3468 = vpop.f32.mrf.mxu0
        %v3469 = vadd.f32 %v3348, %v3468
        %3470 = vmatmul.bf16.gmra.mxu0 %v3327
        %v3471 = vpop.f32.mrf.mxu0
        %v3472 = vadd.f32 %v3348, %v3471
        %v3473 = vpop.f32.mrf.mxu0
        %v3474 = vadd.f32 %v3348, %v3473
        %3475 = vmatmul.bf16.gmra.mxu0 %v3328
        %v3476 = vpop.f32.mrf.mxu0
        %v3477 = vadd.f32 %v3348, %v3476
        %v3478 = vpop.f32.mrf.mxu0
        %v3479 = vadd.f32 %v3348, %v3478
        %3480 = vmatmul.bf16.gmra.mxu0 %v3329
        %v3481 = vpop.f32.mrf.mxu0
        %v3482 = vadd.f32 %v3348, %v3481
        %v3483 = vpop.f32.mrf.mxu0
        %v3484 = vadd.f32 %v3348, %v3483
        %3485 = vdwg.mxu0
        %v3486 = vmax.f32 %v3407, 0.0
        %v3487 = vmax.f32 %v3409, 0.0
        %v3488 = vmax.f32 %v3412, 0.0
        %v3489 = vmax.f32 %v3414, 0.0
        %v3490 = vmax.f32 %v3417, 0.0
        %v3491 = vmax.f32 %v3419, 0.0
        %v3492 = vmax.f32 %v3422, 0.0
        %v3493 = vmax.f32 %v3424, 0.0
        %v3494 = vmax.f32 %v3427, 0.0
        %v3495 = vmax.f32 %v3429, 0.0
        %v3496 = vmax.f32 %v3432, 0.0
        %v3497 = vmax.f32 %v3434, 0.0
        %v3498 = vmax.f32 %v3437, 0.0
        %v3499 = vmax.f32 %v3439, 0.0
        %v3500 = vmax.f32 %v3442, 0.0
        %v3501 = vmax.f32 %v3444, 0.0
        %v3502 = vmax.f32 %v3447, 0.0
        %v3503 = vmax.f32 %v3449, 0.0
        %v3504 = vmax.f32 %v3452, 0.0
        %v3505 = vmax.f32 %v3454, 0.0
        %v3506 = vmax.f32 %v3457, 0.0
        %v3507 = vmax.f32 %v3459, 0.0
        %v3508 = vmax.f32 %v3462, 0.0
        %v3509 = vmax.f32 %v3464, 0.0
        %v3510 = vmax.f32 %v3467, 0.0
        %v3511 = vmax.f32 %v3469, 0.0
        %v3512 = vmax.f32 %v3472, 0.0
        %v3513 = vmax.f32 %v3474, 0.0
        %v3514 = vmax.f32 %v3477, 0.0
        %v3515 = vmax.f32 %v3479, 0.0
        %v3516 = vmax.f32 %v3482, 0.0
        %v3517 = vmax.f32 %v3484, 0.0
        %v3518 = vpack.c.bf16 %v3487, %v3486
        %v3519 = vpack.c.bf16 %v3489, %v3488
        %v3520 = vpack.c.bf16 %v3491, %v3490
        %v3521 = vpack.c.bf16 %v3493, %v3492
        %v3522 = vpack.c.bf16 %v3495, %v3494
        %v3523 = vpack.c.bf16 %v3497, %v3496
        %v3524 = vpack.c.bf16 %v3499, %v3498
        %v3525 = vpack.c.bf16 %v3501, %v3500
        %v3526 = vpack.c.bf16 %v3503, %v3502
        %v3527 = vpack.c.bf16 %v3505, %v3504
        %v3528 = vpack.c.bf16 %v3507, %v3506
        %v3529 = vpack.c.bf16 %v3509, %v3508
        %v3530 = vpack.c.bf16 %v3511, %v3510
        %v3531 = vpack.c.bf16 %v3513, %v3512
        %v3532 = vpack.c.bf16 %v3515, %v3514
        %v3533 = vpack.c.bf16 %v3517, %v3516
        %s3534 = scalar_lea.vmem %s4, 192
        %v3535 = vld [vmem:[%s3534] sm:$0xff]
        %v3536 = vld [vmem:[%s3534 + $0x8] sm:$0xf]
        %v3537 = vld [vmem:[%s3534 + $0xc] sm:$0xff]
        %v3538 = vld [vmem:[%s3534 + $0x14] sm:$0xf]
        %v3539 = vld [vmem:[%s3534 + $0x18] sm:$0xff]
        %v3540 = vld [vmem:[%s3534 + $0x20] sm:$0xf]
        %v3541 = vld [vmem:[%s3534 + $0x24] sm:$0xff]
        %v3542 = vld [vmem:[%s3534 + $0x2c] sm:$0xf]
        %v3543 = vld [vmem:[%s3534 + $0x30] sm:$0xff]
        %v3544 = vld [vmem:[%s3534 + $0x38] sm:$0xf]
        %v3545 = vld [vmem:[%s3534 + $0x3c] sm:$0xff]
        %v3546 = vld [vmem:[%s3534 + $0x44] sm:$0xf]
        %v3547 = vld [vmem:[%s3534 + $0x48] sm:$0xff]
        %v3548 = vld [vmem:[%s3534 + $0x50] sm:$0xf]
        %v3549 = vld [vmem:[%s3534 + $0x54] sm:$0xff]
        %v3550 = vld [vmem:[%s3534 + $0x5c] sm:$0xf]
        %v3551 = vld [vmem:[%s3534 + $0x60] sm:$0xff]
        %v3552 = vld [vmem:[%s3534 + $0x68] sm:$0xf]
        %v3553 = vld [vmem:[%s3534 + $0x6c] sm:$0xff]
        %v3554 = vld [vmem:[%s3534 + $0x74] sm:$0xf]
        %v3555 = vld [vmem:[%s3534 + $0x78] sm:$0xff]
        %v3556 = vld [vmem:[%s3534 + $0x80] sm:$0xf]
        %v3557 = vld [vmem:[%s3534 + $0x84] sm:$0xff]
        %v3558 = vld [vmem:[%s3534 + $0x8c] sm:$0xf]
        %v3559 = vld [vmem:[%s3534 + $0x90] sm:$0xff]
        %v3560 = vld [vmem:[%s3534 + $0x98] sm:$0xf]
        %v3561 = vld [vmem:[%s3534 + $0x9c] sm:$0xff]
        %v3562 = vld [vmem:[%s3534 + $0xa4] sm:$0xf]
        %v3563 = vld [vmem:[%s3534 + $0xa8] sm:$0xff]
        %v3564 = vld [vmem:[%s3534 + $0xb0] sm:$0xf]
        %v3565 = vld [vmem:[%s3534 + $0xb4] sm:$0xff]
        %v3566 = vld [vmem:[%s3534 + $0xbc] sm:$0xf]
        %v3599 = vunpack.c.l.b16 %v3535
        %v3600 = vunpack.c.h.b16 %v3535
        %v3601 = vunpack.c.l.b16 %v3536
        %v3602 = vunpack.c.l.b16 %v3537
        %v3603 = vunpack.c.h.b16 %v3537
        %v3604 = vunpack.c.l.b16 %v3538
        %v3605 = vunpack.c.l.b16 %v3539
        %v3606 = vunpack.c.h.b16 %v3539
        %v3607 = vunpack.c.l.b16 %v3540
        %v3608 = vunpack.c.l.b16 %v3541
        %v3609 = vunpack.c.h.b16 %v3541
        %v3610 = vunpack.c.l.b16 %v3542
        %v3611 = vunpack.c.l.b16 %v3543
        %v3612 = vunpack.c.h.b16 %v3543
        %v3613 = vunpack.c.l.b16 %v3544
        %v3614 = vunpack.c.l.b16 %v3545
        %v3615 = vunpack.c.h.b16 %v3545
        %v3616 = vunpack.c.l.b16 %v3546
        %v3617 = vunpack.c.l.b16 %v3547
        %v3618 = vunpack.c.h.b16 %v3547
        %v3619 = vunpack.c.l.b16 %v3548
        %v3620 = vunpack.c.l.b16 %v3549
        %v3621 = vunpack.c.h.b16 %v3549
        %v3622 = vunpack.c.l.b16 %v3550
        %v3623 = vunpack.c.l.b16 %v3551
        %v3624 = vunpack.c.h.b16 %v3551
        %v3625 = vunpack.c.l.b16 %v3552
        %v3626 = vunpack.c.l.b16 %v3553
        %v3627 = vunpack.c.h.b16 %v3553
        %v3628 = vunpack.c.l.b16 %v3554
        %v3629 = vunpack.c.l.b16 %v3555
        %v3630 = vunpack.c.h.b16 %v3555
        %v3631 = vunpack.c.l.b16 %v3556
        %v3632 = vunpack.c.l.b16 %v3557
        %v3633 = vunpack.c.h.b16 %v3557
        %v3634 = vunpack.c.l.b16 %v3558
        %v3635 = vunpack.c.l.b16 %v3559
        %v3636 = vunpack.c.h.b16 %v3559
        %v3637 = vunpack.c.l.b16 %v3560
        %v3638 = vunpack.c.l.b16 %v3561
        %v3639 = vunpack.c.h.b16 %v3561
        %v3640 = vunpack.c.l.b16 %v3562
        %v3641 = vunpack.c.l.b16 %v3563
        %v3642 = vunpack.c.h.b16 %v3563
        %v3643 = vunpack.c.l.b16 %v3564
        %v3644 = vunpack.c.l.b16 %v3565
        %v3645 = vunpack.c.h.b16 %v3565
        %v3646 = vunpack.c.l.b16 %v3566
        %v3647 = vpack.c.b16 %v3602, %v3599
        %v3648 = vpack.c.b16 %v3603, %v3600
        %v3649 = vpack.c.b16 %v3604, %v3601
        %v3650 = vpack.c.b16 %v3608, %v3605
        %v3651 = vpack.c.b16 %v3609, %v3606
        %v3652 = vpack.c.b16 %v3610, %v3607
        %v3653 = vpack.c.b16 %v3614, %v3611
        %v3654 = vpack.c.b16 %v3615, %v3612
        %v3655 = vpack.c.b16 %v3616, %v3613
        %v3656 = vpack.c.b16 %v3620, %v3617
        %v3657 = vpack.c.b16 %v3621, %v3618
        %v3658 = vpack.c.b16 %v3622, %v3619
        %v3659 = vpack.c.b16 %v3626, %v3623
        %v3660 = vpack.c.b16 %v3627, %v3624
        %v3661 = vpack.c.b16 %v3628, %v3625
        %v3662 = vpack.c.b16 %v3632, %v3629
        %v3663 = vpack.c.b16 %v3633, %v3630
        %v3664 = vpack.c.b16 %v3634, %v3631
        %v3665 = vpack.c.b16 %v3638, %v3635
        %v3666 = vpack.c.b16 %v3639, %v3636
        %v3667 = vpack.c.b16 %v3640, %v3637
        %v3668 = vpack.c.b16 %v3644, %v3641
        %v3669 = vpack.c.b16 %v3645, %v3642
        %v3670 = vpack.c.b16 %v3646, %v3643
        %3695 = vmatpush.bf16.msra.mxu0 %v3668
        %3696 = vmatpush.bf16.msra.mxu0 %v3665
        %3697 = vmatpush.bf16.msra.mxu0 %v3662
        %3698 = vmatpush.bf16.msra.mxu0 %v3659
        %3699 = vmatpush.bf16.msra.mxu0 %v3656
        %3700 = vmatpush.bf16.msra.mxu0 %v3653
        %3701 = vmatpush.bf16.msra.mxu0 %v3650
        %3702 = vmatpush.bf16.msra.mxu0 %v3647
        %3703 = vmatmul.bf16.gmra.mxu0 %v3518
        %v3704 = vpop.f32.mrf.mxu0
        %v3705 = vadd.f32 0.0, %v3704
        %v3706 = vpop.f32.mrf.mxu0
        %v3707 = vadd.f32 0.0, %v3706
        %3708 = vmatmul.bf16.gmra.mxu0 %v3519
        %v3709 = vpop.f32.mrf.mxu0
        %v3710 = vadd.f32 0.0, %v3709
        %v3711 = vpop.f32.mrf.mxu0
        %v3712 = vadd.f32 0.0, %v3711
        %3713 = vmatmul.bf16.gmra.mxu0 %v3520
        %v3714 = vpop.f32.mrf.mxu0
        %v3715 = vadd.f32 0.0, %v3714
        %v3716 = vpop.f32.mrf.mxu0
        %v3717 = vadd.f32 0.0, %v3716
        %3718 = vmatmul.bf16.gmra.mxu0 %v3521
        %v3719 = vpop.f32.mrf.mxu0
        %v3720 = vadd.f32 0.0, %v3719
        %v3721 = vpop.f32.mrf.mxu0
        %v3722 = vadd.f32 0.0, %v3721
        %3723 = vmatmul.bf16.gmra.mxu0 %v3522
        %v3724 = vpop.f32.mrf.mxu0
        %v3725 = vadd.f32 0.0, %v3724
        %v3726 = vpop.f32.mrf.mxu0
        %v3727 = vadd.f32 0.0, %v3726
        %3728 = vmatmul.bf16.gmra.mxu0 %v3523
        %v3729 = vpop.f32.mrf.mxu0
        %v3730 = vadd.f32 0.0, %v3729
        %v3731 = vpop.f32.mrf.mxu0
        %v3732 = vadd.f32 0.0, %v3731
        %3733 = vmatmul.bf16.gmra.mxu0 %v3524
        %v3734 = vpop.f32.mrf.mxu0
        %v3735 = vadd.f32 0.0, %v3734
        %v3736 = vpop.f32.mrf.mxu0
        %v3737 = vadd.f32 0.0, %v3736
        %3738 = vmatmul.bf16.gmra.mxu0 %v3525
        %v3739 = vpop.f32.mrf.mxu0
        %v3740 = vadd.f32 0.0, %v3739
        %v3741 = vpop.f32.mrf.mxu0
        %v3742 = vadd.f32 0.0, %v3741
        %3743 = vmatmul.bf16.gmra.mxu0 %v3526
        %v3744 = vpop.f32.mrf.mxu0
        %v3745 = vadd.f32 0.0, %v3744
        %v3746 = vpop.f32.mrf.mxu0
        %v3747 = vadd.f32 0.0, %v3746
        %3748 = vmatmul.bf16.gmra.mxu0 %v3527
        %v3749 = vpop.f32.mrf.mxu0
        %v3750 = vadd.f32 0.0, %v3749
        %v3751 = vpop.f32.mrf.mxu0
        %v3752 = vadd.f32 0.0, %v3751
        %3753 = vmatmul.bf16.gmra.mxu0 %v3528
        %v3754 = vpop.f32.mrf.mxu0
        %v3755 = vadd.f32 0.0, %v3754
        %v3756 = vpop.f32.mrf.mxu0
        %v3757 = vadd.f32 0.0, %v3756
        %3758 = vmatmul.bf16.gmra.mxu0 %v3529
        %v3759 = vpop.f32.mrf.mxu0
        %v3760 = vadd.f32 0.0, %v3759
        %v3761 = vpop.f32.mrf.mxu0
        %v3762 = vadd.f32 0.0, %v3761
        %3763 = vmatmul.bf16.gmra.mxu0 %v3530
        %v3764 = vpop.f32.mrf.mxu0
        %v3765 = vadd.f32 0.0, %v3764
        %v3766 = vpop.f32.mrf.mxu0
        %v3767 = vadd.f32 0.0, %v3766
        %3768 = vmatmul.bf16.gmra.mxu0 %v3531
        %v3769 = vpop.f32.mrf.mxu0
        %v3770 = vadd.f32 0.0, %v3769
        %v3771 = vpop.f32.mrf.mxu0
        %v3772 = vadd.f32 0.0, %v3771
        %3773 = vmatmul.bf16.gmra.mxu0 %v3532
        %v3774 = vpop.f32.mrf.mxu0
        %v3775 = vadd.f32 0.0, %v3774
        %v3776 = vpop.f32.mrf.mxu0
        %v3777 = vadd.f32 0.0, %v3776
        %3778 = vmatmul.bf16.gmra.mxu0 %v3533
        %v3779 = vpop.f32.mrf.mxu0
        %v3780 = vadd.f32 0.0, %v3779
        %v3781 = vpop.f32.mrf.mxu0
        %v3782 = vadd.f32 0.0, %v3781
        %3783 = vdwg.mxu0
        %3784 = vmatpush.bf16.msra.mxu0 %v3669
        %3785 = vmatpush.bf16.msra.mxu0 %v3666
        %3786 = vmatpush.bf16.msra.mxu0 %v3663
        %3787 = vmatpush.bf16.msra.mxu0 %v3660
        %3788 = vmatpush.bf16.msra.mxu0 %v3657
        %3789 = vmatpush.bf16.msra.mxu0 %v3654
        %3790 = vmatpush.bf16.msra.mxu0 %v3651
        %3791 = vmatpush.bf16.msra.mxu0 %v3648
        %3792 = vmatmul.bf16.gmra.mxu0 %v3518
        %v3793 = vpop.f32.mrf.mxu0
        %v3794 = vadd.f32 0.0, %v3793
        %v3795 = vpop.f32.mrf.mxu0
        %v3796 = vadd.f32 0.0, %v3795
        %3797 = vmatmul.bf16.gmra.mxu0 %v3519
        %v3798 = vpop.f32.mrf.mxu0
        %v3799 = vadd.f32 0.0, %v3798
        %v3800 = vpop.f32.mrf.mxu0
        %v3801 = vadd.f32 0.0, %v3800
        %3802 = vmatmul.bf16.gmra.mxu0 %v3520
        %v3803 = vpop.f32.mrf.mxu0
        %v3804 = vadd.f32 0.0, %v3803
        %v3805 = vpop.f32.mrf.mxu0
        %v3806 = vadd.f32 0.0, %v3805
        %3807 = vmatmul.bf16.gmra.mxu0 %v3521
        %v3808 = vpop.f32.mrf.mxu0
        %v3809 = vadd.f32 0.0, %v3808
        %v3810 = vpop.f32.mrf.mxu0
        %v3811 = vadd.f32 0.0, %v3810
        %3812 = vmatmul.bf16.gmra.mxu0 %v3522
        %v3813 = vpop.f32.mrf.mxu0
        %v3814 = vadd.f32 0.0, %v3813
        %v3815 = vpop.f32.mrf.mxu0
        %v3816 = vadd.f32 0.0, %v3815
        %3817 = vmatmul.bf16.gmra.mxu0 %v3523
        %v3818 = vpop.f32.mrf.mxu0
        %v3819 = vadd.f32 0.0, %v3818
        %v3820 = vpop.f32.mrf.mxu0
        %v3821 = vadd.f32 0.0, %v3820
        %3822 = vmatmul.bf16.gmra.mxu0 %v3524
        %v3823 = vpop.f32.mrf.mxu0
        %v3824 = vadd.f32 0.0, %v3823
        %v3825 = vpop.f32.mrf.mxu0
        %v3826 = vadd.f32 0.0, %v3825
        %3827 = vmatmul.bf16.gmra.mxu0 %v3525
        %v3828 = vpop.f32.mrf.mxu0
        %v3829 = vadd.f32 0.0, %v3828
        %v3830 = vpop.f32.mrf.mxu0
        %v3831 = vadd.f32 0.0, %v3830
        %3832 = vmatmul.bf16.gmra.mxu0 %v3526
        %v3833 = vpop.f32.mrf.mxu0
        %v3834 = vadd.f32 0.0, %v3833
        %v3835 = vpop.f32.mrf.mxu0
        %v3836 = vadd.f32 0.0, %v3835
        %3837 = vmatmul.bf16.gmra.mxu0 %v3527
        %v3838 = vpop.f32.mrf.mxu0
        %v3839 = vadd.f32 0.0, %v3838
        %v3840 = vpop.f32.mrf.mxu0
        %v3841 = vadd.f32 0.0, %v3840
        %3842 = vmatmul.bf16.gmra.mxu0 %v3528
        %v3843 = vpop.f32.mrf.mxu0
        %v3844 = vadd.f32 0.0, %v3843
        %v3845 = vpop.f32.mrf.mxu0
        %v3846 = vadd.f32 0.0, %v3845
        %3847 = vmatmul.bf16.gmra.mxu0 %v3529
        %v3848 = vpop.f32.mrf.mxu0
        %v3849 = vadd.f32 0.0, %v3848
        %v3850 = vpop.f32.mrf.mxu0
        %v3851 = vadd.f32 0.0, %v3850
        %3852 = vmatmul.bf16.gmra.mxu0 %v3530
        %v3853 = vpop.f32.mrf.mxu0
        %v3854 = vadd.f32 0.0, %v3853
        %v3855 = vpop.f32.mrf.mxu0
        %v3856 = vadd.f32 0.0, %v3855
        %3857 = vmatmul.bf16.gmra.mxu0 %v3531
        %v3858 = vpop.f32.mrf.mxu0
        %v3859 = vadd.f32 0.0, %v3858
        %v3860 = vpop.f32.mrf.mxu0
        %v3861 = vadd.f32 0.0, %v3860
        %3862 = vmatmul.bf16.gmra.mxu0 %v3532
        %v3863 = vpop.f32.mrf.mxu0
        %v3864 = vadd.f32 0.0, %v3863
        %v3865 = vpop.f32.mrf.mxu0
        %v3866 = vadd.f32 0.0, %v3865
        %3867 = vmatmul.bf16.gmra.mxu0 %v3533
        %v3868 = vpop.f32.mrf.mxu0
        %v3869 = vadd.f32 0.0, %v3868
        %v3870 = vpop.f32.mrf.mxu0
        %v3871 = vadd.f32 0.0, %v3870
        %3872 = vdwg.mxu0
        %3873 = vmatpush.bf16.msra.mxu0 %v3670
        %3874 = vmatpush.bf16.msra.mxu0 %v3667
        %3875 = vmatpush.bf16.msra.mxu0 %v3664
        %3876 = vmatpush.bf16.msra.mxu0 %v3661
        %3877 = vmatpush.bf16.msra.mxu0 %v3658
        %3878 = vmatpush.bf16.msra.mxu0 %v3655
        %3879 = vmatpush.bf16.msra.mxu0 %v3652
        %3880 = vmatpush.bf16.msra.mxu0 %v3649
        %3881 = vmatmul.bf16.gmra.mxu0 %v3518
        %v3882 = vpop.f32.mrf.mxu0
        %v3883 = vpop.f32.mrf.mxu0
        %3884 = vmatmul.bf16.gmra.mxu0 %v3519
        %v3885 = vpop.f32.mrf.mxu0
        %v3886 = vadd.f32 0.0, %v3885
        %v3887 = vpop.f32.mrf.mxu0
        %v3888 = vadd.f32 0.0, %v3887
        %3889 = vmatmul.bf16.gmra.mxu0 %v3520
        %v3890 = vpop.f32.mrf.mxu0
        %v3891 = vadd.f32 0.0, %v3890
        %v3892 = vpop.f32.mrf.mxu0
        %v3893 = vadd.f32 0.0, %v3892
        %3894 = vmatmul.bf16.gmra.mxu0 %v3521
        %v3895 = vpop.f32.mrf.mxu0
        %v3896 = vadd.f32 0.0, %v3895
        %v3897 = vpop.f32.mrf.mxu0
        %v3898 = vadd.f32 0.0, %v3897
        %3899 = vmatmul.bf16.gmra.mxu0 %v3522
        %v3900 = vpop.f32.mrf.mxu0
        %v3901 = vadd.f32 0.0, %v3900
        %v3902 = vpop.f32.mrf.mxu0
        %v3903 = vadd.f32 0.0, %v3902
        %3904 = vmatmul.bf16.gmra.mxu0 %v3523
        %v3905 = vpop.f32.mrf.mxu0
        %v3906 = vadd.f32 0.0, %v3905
        %v3907 = vpop.f32.mrf.mxu0
        %v3908 = vadd.f32 0.0, %v3907
        %3909 = vmatmul.bf16.gmra.mxu0 %v3524
        %v3910 = vpop.f32.mrf.mxu0
        %v3911 = vadd.f32 0.0, %v3910
        %v3912 = vpop.f32.mrf.mxu0
        %v3913 = vadd.f32 0.0, %v3912
        %3914 = vmatmul.bf16.gmra.mxu0 %v3525
        %v3915 = vpop.f32.mrf.mxu0
        %v3916 = vadd.f32 0.0, %v3915
        %v3917 = vpop.f32.mrf.mxu0
        %v3918 = vadd.f32 0.0, %v3917
        %3919 = vmatmul.bf16.gmra.mxu0 %v3526
        %v3920 = vpop.f32.mrf.mxu0
        %v3921 = vadd.f32 0.0, %v3920
        %v3922 = vpop.f32.mrf.mxu0
        %v3923 = vadd.f32 0.0, %v3922
        %3924 = vmatmul.bf16.gmra.mxu0 %v3527
        %v3925 = vpop.f32.mrf.mxu0
        %v3926 = vadd.f32 0.0, %v3925
        %v3927 = vpop.f32.mrf.mxu0
        %v3928 = vadd.f32 0.0, %v3927
        %3929 = vmatmul.bf16.gmra.mxu0 %v3528
        %v3930 = vpop.f32.mrf.mxu0
        %v3931 = vadd.f32 0.0, %v3930
        %v3932 = vpop.f32.mrf.mxu0
        %v3933 = vadd.f32 0.0, %v3932
        %3934 = vmatmul.bf16.gmra.mxu0 %v3529
        %v3935 = vpop.f32.mrf.mxu0
        %v3936 = vadd.f32 0.0, %v3935
        %v3937 = vpop.f32.mrf.mxu0
        %v3938 = vadd.f32 0.0, %v3937
        %3939 = vmatmul.bf16.gmra.mxu0 %v3530
        %v3940 = vpop.f32.mrf.mxu0
        %v3941 = vadd.f32 0.0, %v3940
        %v3942 = vpop.f32.mrf.mxu0
        %v3943 = vadd.f32 0.0, %v3942
        %3944 = vmatmul.bf16.gmra.mxu0 %v3531
        %v3945 = vpop.f32.mrf.mxu0
        %v3946 = vadd.f32 0.0, %v3945
        %v3947 = vpop.f32.mrf.mxu0
        %v3948 = vadd.f32 0.0, %v3947
        %3949 = vmatmul.bf16.gmra.mxu0 %v3532
        %v3950 = vpop.f32.mrf.mxu0
        %v3951 = vadd.f32 0.0, %v3950
        %v3952 = vpop.f32.mrf.mxu0
        %v3953 = vadd.f32 0.0, %v3952
        %3954 = vmatmul.bf16.gmra.mxu0 %v3533
        %v3955 = vpop.f32.mrf.mxu0
        %v3956 = vadd.f32 0.0, %v3955
        %v3957 = vpop.f32.mrf.mxu0
        %v3958 = vadd.f32 0.0, %v3957
        %3959 = vdwg.mxu0
        %v3990 = vrot.slane %v3705, 7
        %v3991 = vrot.slane %v3707, 7
        %v3992 = vsel %vm1442, %v3990, %v3991
        %v3993 = vrot.slane %v3710, 7
        %v3994 = vsel %vm1442, %v3991, %v3993
        %v3995 = vrot.slane %v3712, 7
        %v3996 = vsel %vm1442, %v3993, %v3995
        %v3997 = vrot.slane %v3715, 7
        %v3998 = vsel %vm1442, %v3995, %v3997
        %v3999 = vrot.slane %v3717, 7
        %v4000 = vsel %vm1442, %v3997, %v3999
        %v4001 = vrot.slane %v3720, 7
        %v4002 = vsel %vm1442, %v3999, %v4001
        %v4003 = vrot.slane %v3722, 7
        %v4004 = vsel %vm1442, %v4001, %v4003
        %v4005 = vrot.slane %v3725, 7
        %v4006 = vsel %vm1442, %v4003, %v4005
        %v4007 = vrot.slane %v3727, 7
        %v4008 = vsel %vm1442, %v4005, %v4007
        %v4009 = vrot.slane %v3730, 7
        %v4010 = vsel %vm1442, %v4007, %v4009
        %v4011 = vrot.slane %v3732, 7
        %v4012 = vsel %vm1442, %v4009, %v4011
        %v4013 = vrot.slane %v3735, 7
        %v4014 = vsel %vm1442, %v4011, %v4013
        %v4015 = vrot.slane %v3737, 7
        %v4016 = vsel %vm1442, %v4013, %v4015
        %v4017 = vrot.slane %v3740, 7
        %v4018 = vsel %vm1442, %v4015, %v4017
        %v4019 = vrot.slane %v3742, 7
        %v4020 = vsel %vm1442, %v4017, %v4019
        %v4021 = vrot.slane %v3745, 7
        %v4022 = vsel %vm1442, %v4019, %v4021
        %v4023 = vrot.slane %v3747, 7
        %v4024 = vsel %vm1442, %v4021, %v4023
        %v4025 = vrot.slane %v3750, 7
        %v4026 = vsel %vm1442, %v4023, %v4025
        %v4027 = vrot.slane %v3752, 7
        %v4028 = vsel %vm1442, %v4025, %v4027
        %v4029 = vrot.slane %v3755, 7
        %v4030 = vsel %vm1442, %v4027, %v4029
        %v4031 = vrot.slane %v3757, 7
        %v4032 = vsel %vm1442, %v4029, %v4031
        %v4033 = vrot.slane %v3760, 7
        %v4034 = vsel %vm1442, %v4031, %v4033
        %v4035 = vrot.slane %v3762, 7
        %v4036 = vsel %vm1442, %v4033, %v4035
        %v4037 = vrot.slane %v3765, 7
        %v4038 = vsel %vm1442, %v4035, %v4037
        %v4039 = vrot.slane %v3767, 7
        %v4040 = vsel %vm1442, %v4037, %v4039
        %v4041 = vrot.slane %v3770, 7
        %v4042 = vsel %vm1442, %v4039, %v4041
        %v4043 = vrot.slane %v3772, 7
        %v4044 = vsel %vm1442, %v4041, %v4043
        %v4045 = vrot.slane %v3775, 7
        %v4046 = vsel %vm1442, %v4043, %v4045
        %v4047 = vrot.slane %v3777, 7
        %v4048 = vsel %vm1442, %v4045, %v4047
        %v4079 = vsel %vm1442, 0.0, %v3990
        %v4080 = vmul.f32 %v4079, %v381
        %v4081 = vmul.f32 %v3992, %v382
        %v4082 = vmul.f32 %v3994, %v383
        %v4083 = vmul.f32 %v3996, %v384
        %v4084 = vmul.f32 %v3998, %v385
        %v4085 = vmul.f32 %v4000, %v386
        %v4086 = vmul.f32 %v4002, %v387
        %v4087 = vmul.f32 %v4004, %v388
        %v4088 = vmul.f32 %v4006, %v389
        %v4089 = vmul.f32 %v4008, %v390
        %v4090 = vmul.f32 %v4010, %v391
        %v4091 = vmul.f32 %v4012, %v392
        %v4092 = vmul.f32 %v4014, %v393
        %v4093 = vmul.f32 %v4016, %v394
        %v4094 = vmul.f32 %v4018, %v395
        %v4095 = vmul.f32 %v4020, %v396
        %v4096 = vmul.f32 %v4022, %v397
        %v4097 = vmul.f32 %v4024, %v398
        %v4098 = vmul.f32 %v4026, %v399
        %v4099 = vmul.f32 %v4028, %v400
        %v4100 = vmul.f32 %v4030, %v401
        %v4101 = vmul.f32 %v4032, %v402
        %v4102 = vmul.f32 %v4034, %v403
        %v4103 = vmul.f32 %v4036, %v404
        %v4104 = vmul.f32 %v4038, %v405
        %v4105 = vmul.f32 %v4040, %v406
        %v4106 = vmul.f32 %v4042, %v407
        %v4107 = vmul.f32 %v4044, %v408
        %v4108 = vmul.f32 %v4046, %v409
        %v4109 = vmul.f32 %v4048, %v410
        %v4110 = vadd.f32 %v3794, %v1533
        %v4111 = vadd.f32 %v3796, %v1534
        %v4112 = vadd.f32 %v3799, %v4080
        %v4113 = vadd.f32 %v3801, %v4081
        %v4114 = vadd.f32 %v3804, %v4082
        %v4115 = vadd.f32 %v3806, %v4083
        %v4116 = vadd.f32 %v3809, %v4084
        %v4117 = vadd.f32 %v3811, %v4085
        %v4118 = vadd.f32 %v3814, %v4086
        %v4119 = vadd.f32 %v3816, %v4087
        %v4120 = vadd.f32 %v3819, %v4088
        %v4121 = vadd.f32 %v3821, %v4089
        %v4122 = vadd.f32 %v3824, %v4090
        %v4123 = vadd.f32 %v3826, %v4091
        %v4124 = vadd.f32 %v3829, %v4092
        %v4125 = vadd.f32 %v3831, %v4093
        %v4126 = vadd.f32 %v3834, %v4094
        %v4127 = vadd.f32 %v3836, %v4095
        %v4128 = vadd.f32 %v3839, %v4096
        %v4129 = vadd.f32 %v3841, %v4097
        %v4130 = vadd.f32 %v3844, %v4098
        %v4131 = vadd.f32 %v3846, %v4099
        %v4132 = vadd.f32 %v3849, %v4100
        %v4133 = vadd.f32 %v3851, %v4101
        %v4134 = vadd.f32 %v3854, %v4102
        %v4135 = vadd.f32 %v3856, %v4103
        %v4136 = vadd.f32 %v3859, %v4104
        %v4137 = vadd.f32 %v3861, %v4105
        %v4138 = vadd.f32 %v3864, %v4106
        %v4139 = vadd.f32 %v3866, %v4107
        %v4140 = vadd.f32 %v3869, %v4108
        %v4141 = vadd.f32 %v3871, %v4109
        %4142 = vrot.lane.b32.xlu0 %v3705, 96
        %v4143 = vpop.permute.xlu0 %4142
        %4144 = vrot.lane.b32.xlu0 %v3707, 96
        %v4145 = vpop.permute.xlu0 %4144
        %4146 = vrot.lane.b32.xlu0 %v3710, 96
        %v4147 = vpop.permute.xlu0 %4146
        %4148 = vrot.lane.b32.xlu0 %v3712, 96
        %v4149 = vpop.permute.xlu0 %4148
        %4150 = vrot.lane.b32.xlu0 %v3715, 96
        %v4151 = vpop.permute.xlu0 %4150
        %4152 = vrot.lane.b32.xlu0 %v3717, 96
        %v4153 = vpop.permute.xlu0 %4152
        %4154 = vrot.lane.b32.xlu0 %v3720, 96
        %v4155 = vpop.permute.xlu0 %4154
        %4156 = vrot.lane.b32.xlu0 %v3722, 96
        %v4157 = vpop.permute.xlu0 %4156
        %4158 = vrot.lane.b32.xlu0 %v3725, 96
        %v4159 = vpop.permute.xlu0 %4158
        %4160 = vrot.lane.b32.xlu0 %v3727, 96
        %v4161 = vpop.permute.xlu0 %4160
        %4162 = vrot.lane.b32.xlu0 %v3730, 96
        %v4163 = vpop.permute.xlu0 %4162
        %4164 = vrot.lane.b32.xlu0 %v3732, 96
        %v4165 = vpop.permute.xlu0 %4164
        %4166 = vrot.lane.b32.xlu0 %v3735, 96
        %v4167 = vpop.permute.xlu0 %4166
        %4168 = vrot.lane.b32.xlu0 %v3737, 96
        %v4169 = vpop.permute.xlu0 %4168
        %4170 = vrot.lane.b32.xlu0 %v3740, 96
        %v4171 = vpop.permute.xlu0 %4170
        %4172 = vrot.lane.b32.xlu0 %v3742, 96
        %v4173 = vpop.permute.xlu0 %4172
        %4174 = vrot.lane.b32.xlu0 %v3745, 96
        %v4175 = vpop.permute.xlu0 %4174
        %4176 = vrot.lane.b32.xlu0 %v3747, 96
        %v4177 = vpop.permute.xlu0 %4176
        %4178 = vrot.lane.b32.xlu0 %v3750, 96
        %v4179 = vpop.permute.xlu0 %4178
        %4180 = vrot.lane.b32.xlu0 %v3752, 96
        %v4181 = vpop.permute.xlu0 %4180
        %4182 = vrot.lane.b32.xlu0 %v3755, 96
        %v4183 = vpop.permute.xlu0 %4182
        %4184 = vrot.lane.b32.xlu0 %v3757, 96
        %v4185 = vpop.permute.xlu0 %4184
        %4186 = vrot.lane.b32.xlu0 %v3760, 96
        %v4187 = vpop.permute.xlu0 %4186
        %4188 = vrot.lane.b32.xlu0 %v3762, 96
        %v4189 = vpop.permute.xlu0 %4188
        %4190 = vrot.lane.b32.xlu0 %v3765, 96
        %v4191 = vpop.permute.xlu0 %4190
        %4192 = vrot.lane.b32.xlu0 %v3767, 96
        %v4193 = vpop.permute.xlu0 %4192
        %4194 = vrot.lane.b32.xlu0 %v3770, 96
        %v4195 = vpop.permute.xlu0 %4194
        %4196 = vrot.lane.b32.xlu0 %v3772, 96
        %v4197 = vpop.permute.xlu0 %4196
        %4198 = vrot.lane.b32.xlu0 %v3775, 96
        %v4199 = vpop.permute.xlu0 %4198
        %4200 = vrot.lane.b32.xlu0 %v3777, 96
        %v4201 = vpop.permute.xlu0 %4200
        %v4232 = vadd.f32 %v4110, 0.0
        %v4233 = vadd.f32 %v4111, 0.0
        %v4234 = vadd.f32 %v4112, %v4143
        %v4235 = vadd.f32 %v4113, %v4145
        %v4236 = vadd.f32 %v4114, %v4147
        %v4237 = vadd.f32 %v4115, %v4149
        %v4238 = vadd.f32 %v4116, %v4151
        %v4239 = vadd.f32 %v4117, %v4153
        %v4240 = vadd.f32 %v4118, %v4155
        %v4241 = vadd.f32 %v4119, %v4157
        %v4242 = vadd.f32 %v4120, %v4159
        %v4243 = vadd.f32 %v4121, %v4161
        %v4244 = vadd.f32 %v4122, %v4163
        %v4245 = vadd.f32 %v4123, %v4165
        %v4246 = vadd.f32 %v4124, %v4167
        %v4247 = vadd.f32 %v4125, %v4169
        %v4248 = vadd.f32 %v4126, %v4171
        %v4249 = vadd.f32 %v4127, %v4173
        %v4250 = vadd.f32 %v4128, %v4175
        %v4251 = vadd.f32 %v4129, %v4177
        %v4252 = vadd.f32 %v4130, %v4179
        %v4253 = vadd.f32 %v4131, %v4181
        %v4254 = vadd.f32 %v4132, %v4183
        %v4255 = vadd.f32 %v4133, %v4185
        %v4256 = vadd.f32 %v4134, %v4187
        %v4257 = vadd.f32 %v4135, %v4189
        %v4258 = vadd.f32 %v4136, %v4191
        %v4259 = vadd.f32 %v4137, %v4193
        %v4260 = vadd.f32 %v4138, %v4195
        %v4261 = vadd.f32 %v4139, %v4197
        %v4262 = vadd.f32 %v4140, %v4199
        %v4263 = vadd.f32 %v4141, %v4201
        %v4265 = vrot.slane %v3705, 1
        %v4266 = vrot.slane %v3707, 1
        %v4267 = vsel %vm1720, %v4265, %v4266
        %v4268 = vrot.slane %v3710, 1
        %v4269 = vsel %vm1720, %v4266, %v4268
        %v4270 = vrot.slane %v3712, 1
        %v4271 = vsel %vm1720, %v4268, %v4270
        %v4272 = vrot.slane %v3715, 1
        %v4273 = vsel %vm1720, %v4270, %v4272
        %v4274 = vrot.slane %v3717, 1
        %v4275 = vsel %vm1720, %v4272, %v4274
        %v4276 = vrot.slane %v3720, 1
        %v4277 = vsel %vm1720, %v4274, %v4276
        %v4278 = vrot.slane %v3722, 1
        %v4279 = vsel %vm1720, %v4276, %v4278
        %v4280 = vrot.slane %v3725, 1
        %v4281 = vsel %vm1720, %v4278, %v4280
        %v4282 = vrot.slane %v3727, 1
        %v4283 = vsel %vm1720, %v4280, %v4282
        %v4284 = vrot.slane %v3730, 1
        %v4285 = vsel %vm1720, %v4282, %v4284
        %v4286 = vrot.slane %v3732, 1
        %v4287 = vsel %vm1720, %v4284, %v4286
        %v4288 = vrot.slane %v3735, 1
        %v4289 = vsel %vm1720, %v4286, %v4288
        %v4290 = vrot.slane %v3737, 1
        %v4291 = vsel %vm1720, %v4288, %v4290
        %v4292 = vrot.slane %v3740, 1
        %v4293 = vsel %vm1720, %v4290, %v4292
        %v4294 = vrot.slane %v3742, 1
        %v4295 = vsel %vm1720, %v4292, %v4294
        %v4296 = vrot.slane %v3745, 1
        %v4297 = vsel %vm1720, %v4294, %v4296
        %v4298 = vrot.slane %v3747, 1
        %v4299 = vsel %vm1720, %v4296, %v4298
        %v4300 = vrot.slane %v3750, 1
        %v4301 = vsel %vm1720, %v4298, %v4300
        %v4302 = vrot.slane %v3752, 1
        %v4303 = vsel %vm1720, %v4300, %v4302
        %v4304 = vrot.slane %v3755, 1
        %v4305 = vsel %vm1720, %v4302, %v4304
        %v4306 = vrot.slane %v3757, 1
        %v4307 = vsel %vm1720, %v4304, %v4306
        %v4308 = vrot.slane %v3760, 1
        %v4309 = vsel %vm1720, %v4306, %v4308
        %v4310 = vrot.slane %v3762, 1
        %v4311 = vsel %vm1720, %v4308, %v4310
        %v4312 = vrot.slane %v3765, 1
        %v4313 = vsel %vm1720, %v4310, %v4312
        %v4314 = vrot.slane %v3767, 1
        %v4315 = vsel %vm1720, %v4312, %v4314
        %v4316 = vrot.slane %v3770, 1
        %v4317 = vsel %vm1720, %v4314, %v4316
        %v4318 = vrot.slane %v3772, 1
        %v4319 = vsel %vm1720, %v4316, %v4318
        %v4320 = vrot.slane %v3775, 1
        %v4321 = vsel %vm1720, %v4318, %v4320
        %v4322 = vrot.slane %v3777, 1
        %v4323 = vsel %vm1720, %v4320, %v4322
        %v4324 = vrot.slane %v3780, 1
        %v4325 = vsel %vm1720, %v4322, %v4324
        %4326 = vrot.lane.b32.xlu0 %v4265, 64
        %v4327 = vpop.permute.xlu0 %4326
        %4328 = vrot.lane.b32.xlu0 %v4267, 64
        %v4329 = vpop.permute.xlu0 %4328
        %4330 = vrot.lane.b32.xlu0 %v4269, 64
        %v4331 = vpop.permute.xlu0 %4330
        %4332 = vrot.lane.b32.xlu0 %v4271, 64
        %v4333 = vpop.permute.xlu0 %4332
        %4334 = vrot.lane.b32.xlu0 %v4273, 64
        %v4335 = vpop.permute.xlu0 %4334
        %4336 = vrot.lane.b32.xlu0 %v4275, 64
        %v4337 = vpop.permute.xlu0 %4336
        %4338 = vrot.lane.b32.xlu0 %v4277, 64
        %v4339 = vpop.permute.xlu0 %4338
        %4340 = vrot.lane.b32.xlu0 %v4279, 64
        %v4341 = vpop.permute.xlu0 %4340
        %4342 = vrot.lane.b32.xlu0 %v4281, 64
        %v4343 = vpop.permute.xlu0 %4342
        %4344 = vrot.lane.b32.xlu0 %v4283, 64
        %v4345 = vpop.permute.xlu0 %4344
        %4346 = vrot.lane.b32.xlu0 %v4285, 64
        %v4347 = vpop.permute.xlu0 %4346
        %4348 = vrot.lane.b32.xlu0 %v4287, 64
        %v4349 = vpop.permute.xlu0 %4348
        %4350 = vrot.lane.b32.xlu0 %v4289, 64
        %v4351 = vpop.permute.xlu0 %4350
        %4352 = vrot.lane.b32.xlu0 %v4291, 64
        %v4353 = vpop.permute.xlu0 %4352
        %4354 = vrot.lane.b32.xlu0 %v4293, 64
        %v4355 = vpop.permute.xlu0 %4354
        %4356 = vrot.lane.b32.xlu0 %v4295, 64
        %v4357 = vpop.permute.xlu0 %4356
        %4358 = vrot.lane.b32.xlu0 %v4297, 64
        %v4359 = vpop.permute.xlu0 %4358
        %4360 = vrot.lane.b32.xlu0 %v4299, 64
        %v4361 = vpop.permute.xlu0 %4360
        %4362 = vrot.lane.b32.xlu0 %v4301, 64
        %v4363 = vpop.permute.xlu0 %4362
        %4364 = vrot.lane.b32.xlu0 %v4303, 64
        %v4365 = vpop.permute.xlu0 %4364
        %4366 = vrot.lane.b32.xlu0 %v4305, 64
        %v4367 = vpop.permute.xlu0 %4366
        %4368 = vrot.lane.b32.xlu0 %v4307, 64
        %v4369 = vpop.permute.xlu0 %4368
        %4370 = vrot.lane.b32.xlu0 %v4309, 64
        %v4371 = vpop.permute.xlu0 %4370
        %4372 = vrot.lane.b32.xlu0 %v4311, 64
        %v4373 = vpop.permute.xlu0 %4372
        %4374 = vrot.lane.b32.xlu0 %v4313, 64
        %v4375 = vpop.permute.xlu0 %4374
        %4376 = vrot.lane.b32.xlu0 %v4315, 64
        %v4377 = vpop.permute.xlu0 %4376
        %4378 = vrot.lane.b32.xlu0 %v4317, 64
        %v4379 = vpop.permute.xlu0 %4378
        %4380 = vrot.lane.b32.xlu0 %v4319, 64
        %v4381 = vpop.permute.xlu0 %4380
        %4382 = vrot.lane.b32.xlu0 %v4321, 64
        %v4383 = vpop.permute.xlu0 %4382
        %4384 = vrot.lane.b32.xlu0 %v4323, 64
        %v4385 = vpop.permute.xlu0 %4384
        %4386 = vrot.lane.b32.xlu0 %v4325, 64
        %v4387 = vpop.permute.xlu0 %4386
        %v4419 = vsel %vm1720, 0.0, %v4327
        %v4420 = vmul.f32 %v4419, %v476
        %v4421 = vmul.f32 %v4329, %v477
        %v4422 = vmul.f32 %v4331, %v478
        %v4423 = vmul.f32 %v4333, %v479
        %v4424 = vmul.f32 %v4335, %v480
        %v4425 = vmul.f32 %v4337, %v481
        %v4426 = vmul.f32 %v4339, %v482
        %v4427 = vmul.f32 %v4341, %v483
        %v4428 = vmul.f32 %v4343, %v484
        %v4429 = vmul.f32 %v4345, %v485
        %v4430 = vmul.f32 %v4347, %v486
        %v4431 = vmul.f32 %v4349, %v487
        %v4432 = vmul.f32 %v4351, %v488
        %v4433 = vmul.f32 %v4353, %v489
        %v4434 = vmul.f32 %v4355, %v490
        %v4435 = vmul.f32 %v4357, %v491
        %v4436 = vmul.f32 %v4359, %v492
        %v4437 = vmul.f32 %v4361, %v493
        %v4438 = vmul.f32 %v4363, %v494
        %v4439 = vmul.f32 %v4365, %v495
        %v4440 = vmul.f32 %v4367, %v496
        %v4441 = vmul.f32 %v4369, %v497
        %v4442 = vmul.f32 %v4371, %v498
        %v4443 = vmul.f32 %v4373, %v499
        %v4444 = vmul.f32 %v4375, %v500
        %v4445 = vmul.f32 %v4377, %v501
        %v4446 = vmul.f32 %v4379, %v502
        %v4447 = vmul.f32 %v4381, %v503
        %v4448 = vmul.f32 %v4383, %v504
        %v4449 = vmul.f32 %v4385, %v505
        %v4450 = vmul.f32 %v4387, %v506
        %v4451 = vadd.f32 %v4232, %v1876
        %v4452 = vadd.f32 %v4233, %v4420
        %v4453 = vadd.f32 %v4234, %v4421
        %v4454 = vadd.f32 %v4235, %v4422
        %v4455 = vadd.f32 %v4236, %v4423
        %v4456 = vadd.f32 %v4237, %v4424
        %v4457 = vadd.f32 %v4238, %v4425
        %v4458 = vadd.f32 %v4239, %v4426
        %v4459 = vadd.f32 %v4240, %v4427
        %v4460 = vadd.f32 %v4241, %v4428
        %v4461 = vadd.f32 %v4242, %v4429
        %v4462 = vadd.f32 %v4243, %v4430
        %v4463 = vadd.f32 %v4244, %v4431
        %v4464 = vadd.f32 %v4245, %v4432
        %v4465 = vadd.f32 %v4246, %v4433
        %v4466 = vadd.f32 %v4247, %v4434
        %v4467 = vadd.f32 %v4248, %v4435
        %v4468 = vadd.f32 %v4249, %v4436
        %v4469 = vadd.f32 %v4250, %v4437
        %v4470 = vadd.f32 %v4251, %v4438
        %v4471 = vadd.f32 %v4252, %v4439
        %v4472 = vadd.f32 %v4253, %v4440
        %v4473 = vadd.f32 %v4254, %v4441
        %v4474 = vadd.f32 %v4255, %v4442
        %v4475 = vadd.f32 %v4256, %v4443
        %v4476 = vadd.f32 %v4257, %v4444
        %v4477 = vadd.f32 %v4258, %v4445
        %v4478 = vadd.f32 %v4259, %v4446
        %v4479 = vadd.f32 %v4260, %v4447
        %v4480 = vadd.f32 %v4261, %v4448
        %v4481 = vadd.f32 %v4262, %v4449
        %v4482 = vadd.f32 %v4263, %v4450
        %v4484 = vrot.slane %v3780, 7
        %v4485 = vsel %vm1442, %v4047, %v4484
        %v4486 = vrot.slane %v3782, 7
        %v4487 = vsel %vm1442, %v4484, %v4486
        %4488 = vrot.lane.b32.xlu0 %v3990, 32
        %v4489 = vpop.permute.xlu0 %4488
        %4490 = vrot.lane.b32.xlu0 %v3992, 32
        %v4491 = vpop.permute.xlu0 %4490
        %4492 = vrot.lane.b32.xlu0 %v3994, 32
        %v4493 = vpop.permute.xlu0 %4492
        %4494 = vrot.lane.b32.xlu0 %v3996, 32
        %v4495 = vpop.permute.xlu0 %4494
        %4496 = vrot.lane.b32.xlu0 %v3998, 32
        %v4497 = vpop.permute.xlu0 %4496
        %4498 = vrot.lane.b32.xlu0 %v4000, 32
        %v4499 = vpop.permute.xlu0 %4498
        %4500 = vrot.lane.b32.xlu0 %v4002, 32
        %v4501 = vpop.permute.xlu0 %4500
        %4502 = vrot.lane.b32.xlu0 %v4004, 32
        %v4503 = vpop.permute.xlu0 %4502
        %4504 = vrot.lane.b32.xlu0 %v4006, 32
        %v4505 = vpop.permute.xlu0 %4504
        %4506 = vrot.lane.b32.xlu0 %v4008, 32
        %v4507 = vpop.permute.xlu0 %4506
        %4508 = vrot.lane.b32.xlu0 %v4010, 32
        %v4509 = vpop.permute.xlu0 %4508
        %4510 = vrot.lane.b32.xlu0 %v4012, 32
        %v4511 = vpop.permute.xlu0 %4510
        %4512 = vrot.lane.b32.xlu0 %v4014, 32
        %v4513 = vpop.permute.xlu0 %4512
        %4514 = vrot.lane.b32.xlu0 %v4016, 32
        %v4515 = vpop.permute.xlu0 %4514
        %4516 = vrot.lane.b32.xlu0 %v4018, 32
        %v4517 = vpop.permute.xlu0 %4516
        %4518 = vrot.lane.b32.xlu0 %v4020, 32
        %v4519 = vpop.permute.xlu0 %4518
        %4520 = vrot.lane.b32.xlu0 %v4022, 32
        %v4521 = vpop.permute.xlu0 %4520
        %4522 = vrot.lane.b32.xlu0 %v4024, 32
        %v4523 = vpop.permute.xlu0 %4522
        %4524 = vrot.lane.b32.xlu0 %v4026, 32
        %v4525 = vpop.permute.xlu0 %4524
        %4526 = vrot.lane.b32.xlu0 %v4028, 32
        %v4527 = vpop.permute.xlu0 %4526
        %4528 = vrot.lane.b32.xlu0 %v4030, 32
        %v4529 = vpop.permute.xlu0 %4528
        %4530 = vrot.lane.b32.xlu0 %v4032, 32
        %v4531 = vpop.permute.xlu0 %4530
        %4532 = vrot.lane.b32.xlu0 %v4034, 32
        %v4533 = vpop.permute.xlu0 %4532
        %4534 = vrot.lane.b32.xlu0 %v4036, 32
        %v4535 = vpop.permute.xlu0 %4534
        %4536 = vrot.lane.b32.xlu0 %v4038, 32
        %v4537 = vpop.permute.xlu0 %4536
        %4538 = vrot.lane.b32.xlu0 %v4040, 32
        %v4539 = vpop.permute.xlu0 %4538
        %4540 = vrot.lane.b32.xlu0 %v4042, 32
        %v4541 = vpop.permute.xlu0 %4540
        %4542 = vrot.lane.b32.xlu0 %v4044, 32
        %v4543 = vpop.permute.xlu0 %4542
        %4544 = vrot.lane.b32.xlu0 %v4046, 32
        %v4545 = vpop.permute.xlu0 %4544
        %4546 = vrot.lane.b32.xlu0 %v4048, 32
        %v4547 = vpop.permute.xlu0 %4546
        %4548 = vrot.lane.b32.xlu0 %v4485, 32
        %v4549 = vpop.permute.xlu0 %4548
        %4550 = vrot.lane.b32.xlu0 %v4487, 32
        %v4551 = vpop.permute.xlu0 %4550
        %v4584 = vsel %vm1442, 0.0, %v4489
        %v4585 = vmul.f32 %v4584, %v379
        %v4586 = vmul.f32 %v4491, %v380
        %v4587 = vmul.f32 %v4493, %v381
        %v4588 = vmul.f32 %v4495, %v382
        %v4589 = vmul.f32 %v4497, %v383
        %v4590 = vmul.f32 %v4499, %v384
        %v4591 = vmul.f32 %v4501, %v385
        %v4592 = vmul.f32 %v4503, %v386
        %v4593 = vmul.f32 %v4505, %v387
        %v4594 = vmul.f32 %v4507, %v388
        %v4595 = vmul.f32 %v4509, %v389
        %v4596 = vmul.f32 %v4511, %v390
        %v4597 = vmul.f32 %v4513, %v391
        %v4598 = vmul.f32 %v4515, %v392
        %v4599 = vmul.f32 %v4517, %v393
        %v4600 = vmul.f32 %v4519, %v394
        %v4601 = vmul.f32 %v4521, %v395
        %v4602 = vmul.f32 %v4523, %v396
        %v4603 = vmul.f32 %v4525, %v397
        %v4604 = vmul.f32 %v4527, %v398
        %v4605 = vmul.f32 %v4529, %v399
        %v4606 = vmul.f32 %v4531, %v400
        %v4607 = vmul.f32 %v4533, %v401
        %v4608 = vmul.f32 %v4535, %v402
        %v4609 = vmul.f32 %v4537, %v403
        %v4610 = vmul.f32 %v4539, %v404
        %v4611 = vmul.f32 %v4541, %v405
        %v4612 = vmul.f32 %v4543, %v406
        %v4613 = vmul.f32 %v4545, %v407
        %v4614 = vmul.f32 %v4547, %v408
        %v4615 = vmul.f32 %v4549, %v409
        %v4616 = vmul.f32 %v4551, %v410
        %v4617 = vadd.f32 %v4451, %v4585
        %v4618 = vadd.f32 %v4452, %v4586
        %v4619 = vadd.f32 %v4453, %v4587
        %v4620 = vadd.f32 %v4454, %v4588
        %v4621 = vadd.f32 %v4455, %v4589
        %v4622 = vadd.f32 %v4456, %v4590
        %v4623 = vadd.f32 %v4457, %v4591
        %v4624 = vadd.f32 %v4458, %v4592
        %v4625 = vadd.f32 %v4459, %v4593
        %v4626 = vadd.f32 %v4460, %v4594
        %v4627 = vadd.f32 %v4461, %v4595
        %v4628 = vadd.f32 %v4462, %v4596
        %v4629 = vadd.f32 %v4463, %v4597
        %v4630 = vadd.f32 %v4464, %v4598
        %v4631 = vadd.f32 %v4465, %v4599
        %v4632 = vadd.f32 %v4466, %v4600
        %v4633 = vadd.f32 %v4467, %v4601
        %v4634 = vadd.f32 %v4468, %v4602
        %v4635 = vadd.f32 %v4469, %v4603
        %v4636 = vadd.f32 %v4470, %v4604
        %v4637 = vadd.f32 %v4471, %v4605
        %v4638 = vadd.f32 %v4472, %v4606
        %v4639 = vadd.f32 %v4473, %v4607
        %v4640 = vadd.f32 %v4474, %v4608
        %v4641 = vadd.f32 %v4475, %v4609
        %v4642 = vadd.f32 %v4476, %v4610
        %v4643 = vadd.f32 %v4477, %v4611
        %v4644 = vadd.f32 %v4478, %v4612
        %v4645 = vadd.f32 %v4479, %v4613
        %v4646 = vadd.f32 %v4480, %v4614
        %v4647 = vadd.f32 %v4481, %v4615
        %v4648 = vadd.f32 %v4482, %v4616
        %v4681 = vrot.slane %v3794, 1
        %v4682 = vrot.slane %v3796, 1
        %v4683 = vsel %vm1720, %v4681, %v4682
        %v4684 = vrot.slane %v3799, 1
        %v4685 = vsel %vm1720, %v4682, %v4684
        %v4686 = vrot.slane %v3801, 1
        %v4687 = vsel %vm1720, %v4684, %v4686
        %v4688 = vrot.slane %v3804, 1
        %v4689 = vsel %vm1720, %v4686, %v4688
        %v4690 = vrot.slane %v3806, 1
        %v4691 = vsel %vm1720, %v4688, %v4690
        %v4692 = vrot.slane %v3809, 1
        %v4693 = vsel %vm1720, %v4690, %v4692
        %v4694 = vrot.slane %v3811, 1
        %v4695 = vsel %vm1720, %v4692, %v4694
        %v4696 = vrot.slane %v3814, 1
        %v4697 = vsel %vm1720, %v4694, %v4696
        %v4698 = vrot.slane %v3816, 1
        %v4699 = vsel %vm1720, %v4696, %v4698
        %v4700 = vrot.slane %v3819, 1
        %v4701 = vsel %vm1720, %v4698, %v4700
        %v4702 = vrot.slane %v3821, 1
        %v4703 = vsel %vm1720, %v4700, %v4702
        %v4704 = vrot.slane %v3824, 1
        %v4705 = vsel %vm1720, %v4702, %v4704
        %v4706 = vrot.slane %v3826, 1
        %v4707 = vsel %vm1720, %v4704, %v4706
        %v4708 = vrot.slane %v3829, 1
        %v4709 = vsel %vm1720, %v4706, %v4708
        %v4710 = vrot.slane %v3831, 1
        %v4711 = vsel %vm1720, %v4708, %v4710
        %v4712 = vrot.slane %v3834, 1
        %v4713 = vsel %vm1720, %v4710, %v4712
        %v4714 = vrot.slane %v3836, 1
        %v4715 = vsel %vm1720, %v4712, %v4714
        %v4716 = vrot.slane %v3839, 1
        %v4717 = vsel %vm1720, %v4714, %v4716
        %v4718 = vrot.slane %v3841, 1
        %v4719 = vsel %vm1720, %v4716, %v4718
        %v4720 = vrot.slane %v3844, 1
        %v4721 = vsel %vm1720, %v4718, %v4720
        %v4722 = vrot.slane %v3846, 1
        %v4723 = vsel %vm1720, %v4720, %v4722
        %v4724 = vrot.slane %v3849, 1
        %v4725 = vsel %vm1720, %v4722, %v4724
        %v4726 = vrot.slane %v3851, 1
        %v4727 = vsel %vm1720, %v4724, %v4726
        %v4728 = vrot.slane %v3854, 1
        %v4729 = vsel %vm1720, %v4726, %v4728
        %v4730 = vrot.slane %v3856, 1
        %v4731 = vsel %vm1720, %v4728, %v4730
        %v4732 = vrot.slane %v3859, 1
        %v4733 = vsel %vm1720, %v4730, %v4732
        %v4734 = vrot.slane %v3861, 1
        %v4735 = vsel %vm1720, %v4732, %v4734
        %v4736 = vrot.slane %v3864, 1
        %v4737 = vsel %vm1720, %v4734, %v4736
        %v4738 = vrot.slane %v3866, 1
        %v4739 = vsel %vm1720, %v4736, %v4738
        %v4740 = vrot.slane %v3869, 1
        %v4741 = vsel %vm1720, %v4738, %v4740
        %v4742 = vrot.slane %v3871, 1
        %v4743 = vsel %vm1720, %v4740, %v4742
        %v4776 = vsel %vm1720, %v4742, 0.0
        %v4777 = vmul.f32 %v4683, %v475
        %v4778 = vmul.f32 %v4685, %v476
        %v4779 = vmul.f32 %v4687, %v477
        %v4780 = vmul.f32 %v4689, %v478
        %v4781 = vmul.f32 %v4691, %v479
        %v4782 = vmul.f32 %v4693, %v480
        %v4783 = vmul.f32 %v4695, %v481
        %v4784 = vmul.f32 %v4697, %v482
        %v4785 = vmul.f32 %v4699, %v483
        %v4786 = vmul.f32 %v4701, %v484
        %v4787 = vmul.f32 %v4703, %v485
        %v4788 = vmul.f32 %v4705, %v486
        %v4789 = vmul.f32 %v4707, %v487
        %v4790 = vmul.f32 %v4709, %v488
        %v4791 = vmul.f32 %v4711, %v489
        %v4792 = vmul.f32 %v4713, %v490
        %v4793 = vmul.f32 %v4715, %v491
        %v4794 = vmul.f32 %v4717, %v492
        %v4795 = vmul.f32 %v4719, %v493
        %v4796 = vmul.f32 %v4721, %v494
        %v4797 = vmul.f32 %v4723, %v495
        %v4798 = vmul.f32 %v4725, %v496
        %v4799 = vmul.f32 %v4727, %v497
        %v4800 = vmul.f32 %v4729, %v498
        %v4801 = vmul.f32 %v4731, %v499
        %v4802 = vmul.f32 %v4733, %v500
        %v4803 = vmul.f32 %v4735, %v501
        %v4804 = vmul.f32 %v4737, %v502
        %v4805 = vmul.f32 %v4739, %v503
        %v4806 = vmul.f32 %v4741, %v504
        %v4807 = vmul.f32 %v4743, %v505
        %v4808 = vmul.f32 %v4776, %v506
        %4841 = vrot.lane.b32.xlu0 %v4777, 96
        %v4842 = vpop.permute.xlu0 %4841
        %4843 = vrot.lane.b32.xlu0 %v4778, 96
        %v4844 = vpop.permute.xlu0 %4843
        %4845 = vrot.lane.b32.xlu0 %v4779, 96
        %v4846 = vpop.permute.xlu0 %4845
        %4847 = vrot.lane.b32.xlu0 %v4780, 96
        %v4848 = vpop.permute.xlu0 %4847
        %4849 = vrot.lane.b32.xlu0 %v4781, 96
        %v4850 = vpop.permute.xlu0 %4849
        %4851 = vrot.lane.b32.xlu0 %v4782, 96
        %v4852 = vpop.permute.xlu0 %4851
        %4853 = vrot.lane.b32.xlu0 %v4783, 96
        %v4854 = vpop.permute.xlu0 %4853
        %4855 = vrot.lane.b32.xlu0 %v4784, 96
        %v4856 = vpop.permute.xlu0 %4855
        %4857 = vrot.lane.b32.xlu0 %v4785, 96
        %v4858 = vpop.permute.xlu0 %4857
        %4859 = vrot.lane.b32.xlu0 %v4786, 96
        %v4860 = vpop.permute.xlu0 %4859
        %4861 = vrot.lane.b32.xlu0 %v4787, 96
        %v4862 = vpop.permute.xlu0 %4861
        %4863 = vrot.lane.b32.xlu0 %v4788, 96
        %v4864 = vpop.permute.xlu0 %4863
        %4865 = vrot.lane.b32.xlu0 %v4789, 96
        %v4866 = vpop.permute.xlu0 %4865
        %4867 = vrot.lane.b32.xlu0 %v4790, 96
        %v4868 = vpop.permute.xlu0 %4867
        %4869 = vrot.lane.b32.xlu0 %v4791, 96
        %v4870 = vpop.permute.xlu0 %4869
        %4871 = vrot.lane.b32.xlu0 %v4792, 96
        %v4872 = vpop.permute.xlu0 %4871
        %4873 = vrot.lane.b32.xlu0 %v4793, 96
        %v4874 = vpop.permute.xlu0 %4873
        %4875 = vrot.lane.b32.xlu0 %v4794, 96
        %v4876 = vpop.permute.xlu0 %4875
        %4877 = vrot.lane.b32.xlu0 %v4795, 96
        %v4878 = vpop.permute.xlu0 %4877
        %4879 = vrot.lane.b32.xlu0 %v4796, 96
        %v4880 = vpop.permute.xlu0 %4879
        %4881 = vrot.lane.b32.xlu0 %v4797, 96
        %v4882 = vpop.permute.xlu0 %4881
        %4883 = vrot.lane.b32.xlu0 %v4798, 96
        %v4884 = vpop.permute.xlu0 %4883
        %4885 = vrot.lane.b32.xlu0 %v4799, 96
        %v4886 = vpop.permute.xlu0 %4885
        %4887 = vrot.lane.b32.xlu0 %v4800, 96
        %v4888 = vpop.permute.xlu0 %4887
        %4889 = vrot.lane.b32.xlu0 %v4801, 96
        %v4890 = vpop.permute.xlu0 %4889
        %4891 = vrot.lane.b32.xlu0 %v4802, 96
        %v4892 = vpop.permute.xlu0 %4891
        %4893 = vrot.lane.b32.xlu0 %v4803, 96
        %v4894 = vpop.permute.xlu0 %4893
        %4895 = vrot.lane.b32.xlu0 %v4804, 96
        %v4896 = vpop.permute.xlu0 %4895
        %4897 = vrot.lane.b32.xlu0 %v4805, 96
        %v4898 = vpop.permute.xlu0 %4897
        %4899 = vrot.lane.b32.xlu0 %v4806, 96
        %v4900 = vpop.permute.xlu0 %4899
        %4901 = vrot.lane.b32.xlu0 %v4807, 96
        %v4902 = vpop.permute.xlu0 %4901
        %4903 = vrot.lane.b32.xlu0 %v4808, 96
        %v4904 = vpop.permute.xlu0 %4903
        %v4937 = vadd.f32 %v4617, %v4842
        %v4938 = vadd.f32 %v4618, %v4844
        %v4939 = vadd.f32 %v4619, %v4846
        %v4940 = vadd.f32 %v4620, %v4848
        %v4941 = vadd.f32 %v4621, %v4850
        %v4942 = vadd.f32 %v4622, %v4852
        %v4943 = vadd.f32 %v4623, %v4854
        %v4944 = vadd.f32 %v4624, %v4856
        %v4945 = vadd.f32 %v4625, %v4858
        %v4946 = vadd.f32 %v4626, %v4860
        %v4947 = vadd.f32 %v4627, %v4862
        %v4948 = vadd.f32 %v4628, %v4864
        %v4949 = vadd.f32 %v4629, %v4866
        %v4950 = vadd.f32 %v4630, %v4868
        %v4951 = vadd.f32 %v4631, %v4870
        %v4952 = vadd.f32 %v4632, %v4872
        %v4953 = vadd.f32 %v4633, %v4874
        %v4954 = vadd.f32 %v4634, %v4876
        %v4955 = vadd.f32 %v4635, %v4878
        %v4956 = vadd.f32 %v4636, %v4880
        %v4957 = vadd.f32 %v4637, %v4882
        %v4958 = vadd.f32 %v4638, %v4884
        %v4959 = vadd.f32 %v4639, %v4886
        %v4960 = vadd.f32 %v4640, %v4888
        %v4961 = vadd.f32 %v4641, %v4890
        %v4962 = vadd.f32 %v4642, %v4892
        %v4963 = vadd.f32 %v4643, %v4894
        %v4964 = vadd.f32 %v4644, %v4896
        %v4965 = vadd.f32 %v4645, %v4898
        %v4966 = vadd.f32 %v4646, %v4900
        %v4967 = vadd.f32 %v4647, %v4902
        %v4968 = vadd.f32 %v4648, %v4904
        %v4969 = vrot.slane %v3796, 7
        %v4970 = vrot.slane %v3799, 7
        %v4971 = vsel %vm1442, %v4969, %v4970
        %v4972 = vrot.slane %v3801, 7
        %v4973 = vsel %vm1442, %v4970, %v4972
        %v4974 = vrot.slane %v3804, 7
        %v4975 = vsel %vm1442, %v4972, %v4974
        %v4976 = vrot.slane %v3806, 7
        %v4977 = vsel %vm1442, %v4974, %v4976
        %v4978 = vrot.slane %v3809, 7
        %v4979 = vsel %vm1442, %v4976, %v4978
        %v4980 = vrot.slane %v3811, 7
        %v4981 = vsel %vm1442, %v4978, %v4980
        %v4982 = vrot.slane %v3814, 7
        %v4983 = vsel %vm1442, %v4980, %v4982
        %v4984 = vrot.slane %v3816, 7
        %v4985 = vsel %vm1442, %v4982, %v4984
        %v4986 = vrot.slane %v3819, 7
        %v4987 = vsel %vm1442, %v4984, %v4986
        %v4988 = vrot.slane %v3821, 7
        %v4989 = vsel %vm1442, %v4986, %v4988
        %v4990 = vrot.slane %v3824, 7
        %v4991 = vsel %vm1442, %v4988, %v4990
        %v4992 = vrot.slane %v3826, 7
        %v4993 = vsel %vm1442, %v4990, %v4992
        %v4994 = vrot.slane %v3829, 7
        %v4995 = vsel %vm1442, %v4992, %v4994
        %v4996 = vrot.slane %v3831, 7
        %v4997 = vsel %vm1442, %v4994, %v4996
        %v4998 = vrot.slane %v3834, 7
        %v4999 = vsel %vm1442, %v4996, %v4998
        %v5000 = vrot.slane %v3836, 7
        %v5001 = vsel %vm1442, %v4998, %v5000
        %v5002 = vrot.slane %v3839, 7
        %v5003 = vsel %vm1442, %v5000, %v5002
        %v5004 = vrot.slane %v3841, 7
        %v5005 = vsel %vm1442, %v5002, %v5004
        %v5006 = vrot.slane %v3844, 7
        %v5007 = vsel %vm1442, %v5004, %v5006
        %v5008 = vrot.slane %v3846, 7
        %v5009 = vsel %vm1442, %v5006, %v5008
        %v5010 = vrot.slane %v3849, 7
        %v5011 = vsel %vm1442, %v5008, %v5010
        %v5012 = vrot.slane %v3851, 7
        %v5013 = vsel %vm1442, %v5010, %v5012
        %v5014 = vrot.slane %v3854, 7
        %v5015 = vsel %vm1442, %v5012, %v5014
        %v5016 = vrot.slane %v3856, 7
        %v5017 = vsel %vm1442, %v5014, %v5016
        %v5018 = vrot.slane %v3859, 7
        %v5019 = vsel %vm1442, %v5016, %v5018
        %v5020 = vrot.slane %v3861, 7
        %v5021 = vsel %vm1442, %v5018, %v5020
        %v5022 = vrot.slane %v3864, 7
        %v5023 = vsel %vm1442, %v5020, %v5022
        %v5024 = vrot.slane %v3866, 7
        %v5025 = vsel %vm1442, %v5022, %v5024
        %v5026 = vrot.slane %v3869, 7
        %v5027 = vsel %vm1442, %v5024, %v5026
        %v5028 = vrot.slane %v3871, 7
        %v5029 = vsel %vm1442, %v5026, %v5028
        %v5061 = vsel %vm1442, %v5028, 0.0
        %v5062 = vmul.f32 %v4971, %v379
        %v5063 = vmul.f32 %v4973, %v380
        %v5064 = vmul.f32 %v4975, %v381
        %v5065 = vmul.f32 %v4977, %v382
        %v5066 = vmul.f32 %v4979, %v383
        %v5067 = vmul.f32 %v4981, %v384
        %v5068 = vmul.f32 %v4983, %v385
        %v5069 = vmul.f32 %v4985, %v386
        %v5070 = vmul.f32 %v4987, %v387
        %v5071 = vmul.f32 %v4989, %v388
        %v5072 = vmul.f32 %v4991, %v389
        %v5073 = vmul.f32 %v4993, %v390
        %v5074 = vmul.f32 %v4995, %v391
        %v5075 = vmul.f32 %v4997, %v392
        %v5076 = vmul.f32 %v4999, %v393
        %v5077 = vmul.f32 %v5001, %v394
        %v5078 = vmul.f32 %v5003, %v395
        %v5079 = vmul.f32 %v5005, %v396
        %v5080 = vmul.f32 %v5007, %v397
        %v5081 = vmul.f32 %v5009, %v398
        %v5082 = vmul.f32 %v5011, %v399
        %v5083 = vmul.f32 %v5013, %v400
        %v5084 = vmul.f32 %v5015, %v401
        %v5085 = vmul.f32 %v5017, %v402
        %v5086 = vmul.f32 %v5019, %v403
        %v5087 = vmul.f32 %v5021, %v404
        %v5088 = vmul.f32 %v5023, %v405
        %v5089 = vmul.f32 %v5025, %v406
        %v5090 = vmul.f32 %v5027, %v407
        %v5091 = vmul.f32 %v5029, %v408
        %v5092 = vmul.f32 %v5061, %v409
        %5124 = vrot.lane.b32.xlu0 %v5062, 64
        %v5125 = vpop.permute.xlu0 %5124
        %5126 = vrot.lane.b32.xlu0 %v5063, 64
        %v5127 = vpop.permute.xlu0 %5126
        %5128 = vrot.lane.b32.xlu0 %v5064, 64
        %v5129 = vpop.permute.xlu0 %5128
        %5130 = vrot.lane.b32.xlu0 %v5065, 64
        %v5131 = vpop.permute.xlu0 %5130
        %5132 = vrot.lane.b32.xlu0 %v5066, 64
        %v5133 = vpop.permute.xlu0 %5132
        %5134 = vrot.lane.b32.xlu0 %v5067, 64
        %v5135 = vpop.permute.xlu0 %5134
        %5136 = vrot.lane.b32.xlu0 %v5068, 64
        %v5137 = vpop.permute.xlu0 %5136
        %5138 = vrot.lane.b32.xlu0 %v5069, 64
        %v5139 = vpop.permute.xlu0 %5138
        %5140 = vrot.lane.b32.xlu0 %v5070, 64
        %v5141 = vpop.permute.xlu0 %5140
        %5142 = vrot.lane.b32.xlu0 %v5071, 64
        %v5143 = vpop.permute.xlu0 %5142
        %5144 = vrot.lane.b32.xlu0 %v5072, 64
        %v5145 = vpop.permute.xlu0 %5144
        %5146 = vrot.lane.b32.xlu0 %v5073, 64
        %v5147 = vpop.permute.xlu0 %5146
        %5148 = vrot.lane.b32.xlu0 %v5074, 64
        %v5149 = vpop.permute.xlu0 %5148
        %5150 = vrot.lane.b32.xlu0 %v5075, 64
        %v5151 = vpop.permute.xlu0 %5150
        %5152 = vrot.lane.b32.xlu0 %v5076, 64
        %v5153 = vpop.permute.xlu0 %5152
        %5154 = vrot.lane.b32.xlu0 %v5077, 64
        %v5155 = vpop.permute.xlu0 %5154
        %5156 = vrot.lane.b32.xlu0 %v5078, 64
        %v5157 = vpop.permute.xlu0 %5156
        %5158 = vrot.lane.b32.xlu0 %v5079, 64
        %v5159 = vpop.permute.xlu0 %5158
        %5160 = vrot.lane.b32.xlu0 %v5080, 64
        %v5161 = vpop.permute.xlu0 %5160
        %5162 = vrot.lane.b32.xlu0 %v5081, 64
        %v5163 = vpop.permute.xlu0 %5162
        %5164 = vrot.lane.b32.xlu0 %v5082, 64
        %v5165 = vpop.permute.xlu0 %5164
        %5166 = vrot.lane.b32.xlu0 %v5083, 64
        %v5167 = vpop.permute.xlu0 %5166
        %5168 = vrot.lane.b32.xlu0 %v5084, 64
        %v5169 = vpop.permute.xlu0 %5168
        %5170 = vrot.lane.b32.xlu0 %v5085, 64
        %v5171 = vpop.permute.xlu0 %5170
        %5172 = vrot.lane.b32.xlu0 %v5086, 64
        %v5173 = vpop.permute.xlu0 %5172
        %5174 = vrot.lane.b32.xlu0 %v5087, 64
        %v5175 = vpop.permute.xlu0 %5174
        %5176 = vrot.lane.b32.xlu0 %v5088, 64
        %v5177 = vpop.permute.xlu0 %5176
        %5178 = vrot.lane.b32.xlu0 %v5089, 64
        %v5179 = vpop.permute.xlu0 %5178
        %5180 = vrot.lane.b32.xlu0 %v5090, 64
        %v5181 = vpop.permute.xlu0 %5180
        %5182 = vrot.lane.b32.xlu0 %v5091, 64
        %v5183 = vpop.permute.xlu0 %5182
        %5184 = vrot.lane.b32.xlu0 %v5092, 64
        %v5185 = vpop.permute.xlu0 %5184
        %v5217 = vadd.f32 %v4937, %v5125
        %v5218 = vadd.f32 %v4938, %v5127
        %v5219 = vadd.f32 %v4939, %v5129
        %v5220 = vadd.f32 %v4940, %v5131
        %v5221 = vadd.f32 %v4941, %v5133
        %v5222 = vadd.f32 %v4942, %v5135
        %v5223 = vadd.f32 %v4943, %v5137
        %v5224 = vadd.f32 %v4944, %v5139
        %v5225 = vadd.f32 %v4945, %v5141
        %v5226 = vadd.f32 %v4946, %v5143
        %v5227 = vadd.f32 %v4947, %v5145
        %v5228 = vadd.f32 %v4948, %v5147
        %v5229 = vadd.f32 %v4949, %v5149
        %v5230 = vadd.f32 %v4950, %v5151
        %v5231 = vadd.f32 %v4951, %v5153
        %v5232 = vadd.f32 %v4952, %v5155
        %v5233 = vadd.f32 %v4953, %v5157
        %v5234 = vadd.f32 %v4954, %v5159
        %v5235 = vadd.f32 %v4955, %v5161
        %v5236 = vadd.f32 %v4956, %v5163
        %v5237 = vadd.f32 %v4957, %v5165
        %v5238 = vadd.f32 %v4958, %v5167
        %v5239 = vadd.f32 %v4959, %v5169
        %v5240 = vadd.f32 %v4960, %v5171
        %v5241 = vadd.f32 %v4961, %v5173
        %v5242 = vadd.f32 %v4962, %v5175
        %v5243 = vadd.f32 %v4963, %v5177
        %v5244 = vadd.f32 %v4964, %v5179
        %v5245 = vadd.f32 %v4965, %v5181
        %v5246 = vadd.f32 %v4966, %v5183
        %v5247 = vadd.f32 %v4967, %v5185
        %v5248 = vadd.f32 %v4968, %v2646
        %5249 = vrot.lane.b32.xlu0 %v3799, 32
        %v5250 = vpop.permute.xlu0 %5249
        %5251 = vrot.lane.b32.xlu0 %v3801, 32
        %v5252 = vpop.permute.xlu0 %5251
        %5253 = vrot.lane.b32.xlu0 %v3804, 32
        %v5254 = vpop.permute.xlu0 %5253
        %5255 = vrot.lane.b32.xlu0 %v3806, 32
        %v5256 = vpop.permute.xlu0 %5255
        %5257 = vrot.lane.b32.xlu0 %v3809, 32
        %v5258 = vpop.permute.xlu0 %5257
        %5259 = vrot.lane.b32.xlu0 %v3811, 32
        %v5260 = vpop.permute.xlu0 %5259
        %5261 = vrot.lane.b32.xlu0 %v3814, 32
        %v5262 = vpop.permute.xlu0 %5261
        %5263 = vrot.lane.b32.xlu0 %v3816, 32
        %v5264 = vpop.permute.xlu0 %5263
        %5265 = vrot.lane.b32.xlu0 %v3819, 32
        %v5266 = vpop.permute.xlu0 %5265
        %5267 = vrot.lane.b32.xlu0 %v3821, 32
        %v5268 = vpop.permute.xlu0 %5267
        %5269 = vrot.lane.b32.xlu0 %v3824, 32
        %v5270 = vpop.permute.xlu0 %5269
        %5271 = vrot.lane.b32.xlu0 %v3826, 32
        %v5272 = vpop.permute.xlu0 %5271
        %5273 = vrot.lane.b32.xlu0 %v3829, 32
        %v5274 = vpop.permute.xlu0 %5273
        %5275 = vrot.lane.b32.xlu0 %v3831, 32
        %v5276 = vpop.permute.xlu0 %5275
        %5277 = vrot.lane.b32.xlu0 %v3834, 32
        %v5278 = vpop.permute.xlu0 %5277
        %5279 = vrot.lane.b32.xlu0 %v3836, 32
        %v5280 = vpop.permute.xlu0 %5279
        %5281 = vrot.lane.b32.xlu0 %v3839, 32
        %v5282 = vpop.permute.xlu0 %5281
        %5283 = vrot.lane.b32.xlu0 %v3841, 32
        %v5284 = vpop.permute.xlu0 %5283
        %5285 = vrot.lane.b32.xlu0 %v3844, 32
        %v5286 = vpop.permute.xlu0 %5285
        %5287 = vrot.lane.b32.xlu0 %v3846, 32
        %v5288 = vpop.permute.xlu0 %5287
        %5289 = vrot.lane.b32.xlu0 %v3849, 32
        %v5290 = vpop.permute.xlu0 %5289
        %5291 = vrot.lane.b32.xlu0 %v3851, 32
        %v5292 = vpop.permute.xlu0 %5291
        %5293 = vrot.lane.b32.xlu0 %v3854, 32
        %v5294 = vpop.permute.xlu0 %5293
        %5295 = vrot.lane.b32.xlu0 %v3856, 32
        %v5296 = vpop.permute.xlu0 %5295
        %5297 = vrot.lane.b32.xlu0 %v3859, 32
        %v5298 = vpop.permute.xlu0 %5297
        %5299 = vrot.lane.b32.xlu0 %v3861, 32
        %v5300 = vpop.permute.xlu0 %5299
        %5301 = vrot.lane.b32.xlu0 %v3864, 32
        %v5302 = vpop.permute.xlu0 %5301
        %5303 = vrot.lane.b32.xlu0 %v3866, 32
        %v5304 = vpop.permute.xlu0 %5303
        %5305 = vrot.lane.b32.xlu0 %v3869, 32
        %v5306 = vpop.permute.xlu0 %5305
        %5307 = vrot.lane.b32.xlu0 %v3871, 32
        %v5308 = vpop.permute.xlu0 %5307
        %v5339 = vadd.f32 %v5217, %v5250
        %v5340 = vadd.f32 %v5218, %v5252
        %v5341 = vadd.f32 %v5219, %v5254
        %v5342 = vadd.f32 %v5220, %v5256
        %v5343 = vadd.f32 %v5221, %v5258
        %v5344 = vadd.f32 %v5222, %v5260
        %v5345 = vadd.f32 %v5223, %v5262
        %v5346 = vadd.f32 %v5224, %v5264
        %v5347 = vadd.f32 %v5225, %v5266
        %v5348 = vadd.f32 %v5226, %v5268
        %v5349 = vadd.f32 %v5227, %v5270
        %v5350 = vadd.f32 %v5228, %v5272
        %v5351 = vadd.f32 %v5229, %v5274
        %v5352 = vadd.f32 %v5230, %v5276
        %v5353 = vadd.f32 %v5231, %v5278
        %v5354 = vadd.f32 %v5232, %v5280
        %v5355 = vadd.f32 %v5233, %v5282
        %v5356 = vadd.f32 %v5234, %v5284
        %v5357 = vadd.f32 %v5235, %v5286
        %v5358 = vadd.f32 %v5236, %v5288
        %v5359 = vadd.f32 %v5237, %v5290
        %v5360 = vadd.f32 %v5238, %v5292
        %v5361 = vadd.f32 %v5239, %v5294
        %v5362 = vadd.f32 %v5240, %v5296
        %v5363 = vadd.f32 %v5241, %v5298
        %v5364 = vadd.f32 %v5242, %v5300
        %v5365 = vadd.f32 %v5243, %v5302
        %v5366 = vadd.f32 %v5244, %v5304
        %v5367 = vadd.f32 %v5245, %v5306
        %v5368 = vadd.f32 %v5246, %v5308
        %v5369 = vadd.f32 %v5247, %v2773
        %v5370 = vadd.f32 %v5248, %v2773
        %v5401 = vrot.slane %v3886, 1
        %v5402 = vrot.slane %v3888, 1
        %v5403 = vsel %vm1720, %v5401, %v5402
        %v5404 = vrot.slane %v3891, 1
        %v5405 = vsel %vm1720, %v5402, %v5404
        %v5406 = vrot.slane %v3893, 1
        %v5407 = vsel %vm1720, %v5404, %v5406
        %v5408 = vrot.slane %v3896, 1
        %v5409 = vsel %vm1720, %v5406, %v5408
        %v5410 = vrot.slane %v3898, 1
        %v5411 = vsel %vm1720, %v5408, %v5410
        %v5412 = vrot.slane %v3901, 1
        %v5413 = vsel %vm1720, %v5410, %v5412
        %v5414 = vrot.slane %v3903, 1
        %v5415 = vsel %vm1720, %v5412, %v5414
        %v5416 = vrot.slane %v3906, 1
        %v5417 = vsel %vm1720, %v5414, %v5416
        %v5418 = vrot.slane %v3908, 1
        %v5419 = vsel %vm1720, %v5416, %v5418
        %v5420 = vrot.slane %v3911, 1
        %v5421 = vsel %vm1720, %v5418, %v5420
        %v5422 = vrot.slane %v3913, 1
        %v5423 = vsel %vm1720, %v5420, %v5422
        %v5424 = vrot.slane %v3916, 1
        %v5425 = vsel %vm1720, %v5422, %v5424
        %v5426 = vrot.slane %v3918, 1
        %v5427 = vsel %vm1720, %v5424, %v5426
        %v5428 = vrot.slane %v3921, 1
        %v5429 = vsel %vm1720, %v5426, %v5428
        %v5430 = vrot.slane %v3923, 1
        %v5431 = vsel %vm1720, %v5428, %v5430
        %v5432 = vrot.slane %v3926, 1
        %v5433 = vsel %vm1720, %v5430, %v5432
        %v5434 = vrot.slane %v3928, 1
        %v5435 = vsel %vm1720, %v5432, %v5434
        %v5436 = vrot.slane %v3931, 1
        %v5437 = vsel %vm1720, %v5434, %v5436
        %v5438 = vrot.slane %v3933, 1
        %v5439 = vsel %vm1720, %v5436, %v5438
        %v5440 = vrot.slane %v3936, 1
        %v5441 = vsel %vm1720, %v5438, %v5440
        %v5442 = vrot.slane %v3938, 1
        %v5443 = vsel %vm1720, %v5440, %v5442
        %v5444 = vrot.slane %v3941, 1
        %v5445 = vsel %vm1720, %v5442, %v5444
        %v5446 = vrot.slane %v3943, 1
        %v5447 = vsel %vm1720, %v5444, %v5446
        %v5448 = vrot.slane %v3946, 1
        %v5449 = vsel %vm1720, %v5446, %v5448
        %v5450 = vrot.slane %v3948, 1
        %v5451 = vsel %vm1720, %v5448, %v5450
        %v5452 = vrot.slane %v3951, 1
        %v5453 = vsel %vm1720, %v5450, %v5452
        %v5454 = vrot.slane %v3953, 1
        %v5455 = vsel %vm1720, %v5452, %v5454
        %v5456 = vrot.slane %v3956, 1
        %v5457 = vsel %vm1720, %v5454, %v5456
        %v5458 = vrot.slane %v3958, 1
        %v5459 = vsel %vm1720, %v5456, %v5458
        %v5490 = vsel %vm1720, %v5458, 0.0
        %v5491 = vmul.f32 %v5403, %v475
        %v5492 = vmul.f32 %v5405, %v476
        %v5493 = vmul.f32 %v5407, %v477
        %v5494 = vmul.f32 %v5409, %v478
        %v5495 = vmul.f32 %v5411, %v479
        %v5496 = vmul.f32 %v5413, %v480
        %v5497 = vmul.f32 %v5415, %v481
        %v5498 = vmul.f32 %v5417, %v482
        %v5499 = vmul.f32 %v5419, %v483
        %v5500 = vmul.f32 %v5421, %v484
        %v5501 = vmul.f32 %v5423, %v485
        %v5502 = vmul.f32 %v5425, %v486
        %v5503 = vmul.f32 %v5427, %v487
        %v5504 = vmul.f32 %v5429, %v488
        %v5505 = vmul.f32 %v5431, %v489
        %v5506 = vmul.f32 %v5433, %v490
        %v5507 = vmul.f32 %v5435, %v491
        %v5508 = vmul.f32 %v5437, %v492
        %v5509 = vmul.f32 %v5439, %v493
        %v5510 = vmul.f32 %v5441, %v494
        %v5511 = vmul.f32 %v5443, %v495
        %v5512 = vmul.f32 %v5445, %v496
        %v5513 = vmul.f32 %v5447, %v497
        %v5514 = vmul.f32 %v5449, %v498
        %v5515 = vmul.f32 %v5451, %v499
        %v5516 = vmul.f32 %v5453, %v500
        %v5517 = vmul.f32 %v5455, %v501
        %v5518 = vmul.f32 %v5457, %v502
        %v5519 = vmul.f32 %v5459, %v503
        %v5520 = vmul.f32 %v5490, %v504
        %v5521 = vadd.f32 %v5339, %v5491
        %v5522 = vadd.f32 %v5340, %v5492
        %v5523 = vadd.f32 %v5341, %v5493
        %v5524 = vadd.f32 %v5342, %v5494
        %v5525 = vadd.f32 %v5343, %v5495
        %v5526 = vadd.f32 %v5344, %v5496
        %v5527 = vadd.f32 %v5345, %v5497
        %v5528 = vadd.f32 %v5346, %v5498
        %v5529 = vadd.f32 %v5347, %v5499
        %v5530 = vadd.f32 %v5348, %v5500
        %v5531 = vadd.f32 %v5349, %v5501
        %v5532 = vadd.f32 %v5350, %v5502
        %v5533 = vadd.f32 %v5351, %v5503
        %v5534 = vadd.f32 %v5352, %v5504
        %v5535 = vadd.f32 %v5353, %v5505
        %v5536 = vadd.f32 %v5354, %v5506
        %v5537 = vadd.f32 %v5355, %v5507
        %v5538 = vadd.f32 %v5356, %v5508
        %v5539 = vadd.f32 %v5357, %v5509
        %v5540 = vadd.f32 %v5358, %v5510
        %v5541 = vadd.f32 %v5359, %v5511
        %v5542 = vadd.f32 %v5360, %v5512
        %v5543 = vadd.f32 %v5361, %v5513
        %v5544 = vadd.f32 %v5362, %v5514
        %v5545 = vadd.f32 %v5363, %v5515
        %v5546 = vadd.f32 %v5364, %v5516
        %v5547 = vadd.f32 %v5365, %v5517
        %v5548 = vadd.f32 %v5366, %v5518
        %v5549 = vadd.f32 %v5367, %v5519
        %v5550 = vadd.f32 %v5368, %v5520
        %v5551 = vadd.f32 %v5369, %v2987
        %v5552 = vadd.f32 %v5370, %v2988
        %5585 = vrot.lane.b32.xlu0 %v5521, 96
        %v5586 = vpop.permute.xlu0 %5585
        %5587 = vrot.lane.b32.xlu0 %v5522, 96
        %v5588 = vpop.permute.xlu0 %5587
        %5589 = vrot.lane.b32.xlu0 %v5523, 96
        %v5590 = vpop.permute.xlu0 %5589
        %5591 = vrot.lane.b32.xlu0 %v5524, 96
        %v5592 = vpop.permute.xlu0 %5591
        %5593 = vrot.lane.b32.xlu0 %v5525, 96
        %v5594 = vpop.permute.xlu0 %5593
        %5595 = vrot.lane.b32.xlu0 %v5526, 96
        %v5596 = vpop.permute.xlu0 %5595
        %5597 = vrot.lane.b32.xlu0 %v5527, 96
        %v5598 = vpop.permute.xlu0 %5597
        %5599 = vrot.lane.b32.xlu0 %v5528, 96
        %v5600 = vpop.permute.xlu0 %5599
        %5601 = vrot.lane.b32.xlu0 %v5529, 96
        %v5602 = vpop.permute.xlu0 %5601
        %5603 = vrot.lane.b32.xlu0 %v5530, 96
        %v5604 = vpop.permute.xlu0 %5603
        %5605 = vrot.lane.b32.xlu0 %v5531, 96
        %v5606 = vpop.permute.xlu0 %5605
        %5607 = vrot.lane.b32.xlu0 %v5532, 96
        %v5608 = vpop.permute.xlu0 %5607
        %5609 = vrot.lane.b32.xlu0 %v5533, 96
        %v5610 = vpop.permute.xlu0 %5609
        %5611 = vrot.lane.b32.xlu0 %v5534, 96
        %v5612 = vpop.permute.xlu0 %5611
        %5613 = vrot.lane.b32.xlu0 %v5535, 96
        %v5614 = vpop.permute.xlu0 %5613
        %5615 = vrot.lane.b32.xlu0 %v5536, 96
        %v5616 = vpop.permute.xlu0 %5615
        %5617 = vrot.lane.b32.xlu0 %v5537, 96
        %v5618 = vpop.permute.xlu0 %5617
        %5619 = vrot.lane.b32.xlu0 %v5538, 96
        %v5620 = vpop.permute.xlu0 %5619
        %5621 = vrot.lane.b32.xlu0 %v5539, 96
        %v5622 = vpop.permute.xlu0 %5621
        %5623 = vrot.lane.b32.xlu0 %v5540, 96
        %v5624 = vpop.permute.xlu0 %5623
        %5625 = vrot.lane.b32.xlu0 %v5541, 96
        %v5626 = vpop.permute.xlu0 %5625
        %5627 = vrot.lane.b32.xlu0 %v5542, 96
        %v5628 = vpop.permute.xlu0 %5627
        %5629 = vrot.lane.b32.xlu0 %v5543, 96
        %v5630 = vpop.permute.xlu0 %5629
        %5631 = vrot.lane.b32.xlu0 %v5544, 96
        %v5632 = vpop.permute.xlu0 %5631
        %5633 = vrot.lane.b32.xlu0 %v5545, 96
        %v5634 = vpop.permute.xlu0 %5633
        %5635 = vrot.lane.b32.xlu0 %v5546, 96
        %v5636 = vpop.permute.xlu0 %5635
        %5637 = vrot.lane.b32.xlu0 %v5547, 96
        %v5638 = vpop.permute.xlu0 %5637
        %5639 = vrot.lane.b32.xlu0 %v5548, 96
        %v5640 = vpop.permute.xlu0 %5639
        %5641 = vrot.lane.b32.xlu0 %v5549, 96
        %v5642 = vpop.permute.xlu0 %5641
        %5643 = vrot.lane.b32.xlu0 %v5550, 96
        %v5644 = vpop.permute.xlu0 %5643
        %5645 = vrot.lane.b32.xlu0 %v5551, 96
        %v5646 = vpop.permute.xlu0 %5645
        %5647 = vrot.lane.b32.xlu0 %v5552, 96
        %v5648 = vpop.permute.xlu0 %5647
        %vm5681 = vcmask 1048320
        %5682 = vst.msk [vmem:[%s244] sm:$0xff] %vm5681, %v5586
        %5683 = vst.msk [vmem:[%s244 + $0x10] sm:$0xff] %vm5681, %v5588
        %5684 = vst.msk [vmem:[%s244 + $0x20] sm:$0xff] %vm5681, %v5590
        %5685 = vst.msk [vmem:[%s244 + $0x30] sm:$0xff] %vm5681, %v5592
        %5686 = vst.msk [vmem:[%s244 + $0x40] sm:$0xff] %vm5681, %v5594
        %5687 = vst.msk [vmem:[%s244 + $0x50] sm:$0xff] %vm5681, %v5596
        %5688 = vst.msk [vmem:[%s244 + $0x60] sm:$0xff] %vm5681, %v5598
        %5689 = vst.msk [vmem:[%s244 + $0x70] sm:$0xff] %vm5681, %v5600
        %5690 = vst.msk [vmem:[%s244 + $0x80] sm:$0xff] %vm5681, %v5602
        %5691 = vst.msk [vmem:[%s244 + $0x90] sm:$0xff] %vm5681, %v5604
        %5692 = vst.msk [vmem:[%s244 + $0xa0] sm:$0xff] %vm5681, %v5606
        %5693 = vst.msk [vmem:[%s244 + $0xb0] sm:$0xff] %vm5681, %v5608
        %5694 = vst.msk [vmem:[%s244 + $0xc0] sm:$0xff] %vm5681, %v5610
        %5695 = vst.msk [vmem:[%s244 + $0xd0] sm:$0xff] %vm5681, %v5612
        %5696 = vst.msk [vmem:[%s244 + $0xe0] sm:$0xff] %vm5681, %v5614
        %5697 = vst.msk [vmem:[%s244 + $0xf0] sm:$0xff] %vm5681, %v5616
        %5698 = vst.msk [vmem:[%s244 + $0x100] sm:$0xff] %vm5681, %v5618
        %5699 = vst.msk [vmem:[%s244 + $0x110] sm:$0xff] %vm5681, %v5620
        %5700 = vst.msk [vmem:[%s244 + $0x120] sm:$0xff] %vm5681, %v5622
        %5701 = vst.msk [vmem:[%s244 + $0x130] sm:$0xff] %vm5681, %v5624
        %5702 = vst.msk [vmem:[%s244 + $0x140] sm:$0xff] %vm5681, %v5626
        %5703 = vst.msk [vmem:[%s244 + $0x150] sm:$0xff] %vm5681, %v5628
        %5704 = vst.msk [vmem:[%s244 + $0x160] sm:$0xff] %vm5681, %v5630
        %5705 = vst.msk [vmem:[%s244 + $0x170] sm:$0xff] %vm5681, %v5632
        %5706 = vst.msk [vmem:[%s244 + $0x180] sm:$0xff] %vm5681, %v5634
        %5707 = vst.msk [vmem:[%s244 + $0x190] sm:$0xff] %vm5681, %v5636
        %5708 = vst.msk [vmem:[%s244 + $0x1a0] sm:$0xff] %vm5681, %v5638
        %5709 = vst.msk [vmem:[%s244 + $0x1b0] sm:$0xff] %vm5681, %v5640
        %5710 = vst.msk [vmem:[%s244 + $0x1c0] sm:$0xff] %vm5681, %v5642
        %5711 = vst.msk [vmem:[%s244 + $0x1d0] sm:$0xff] %vm5681, %v5644
        %5712 = vst.msk [vmem:[%s244 + $0x1e0] sm:$0xff] %vm5681, %v5646
        %5713 = vst.msk [vmem:[%s244 + $0x1f0] sm:$0xff] %vm5681, %v5648
        %v5714 = vld [vmem:[%s244] sm:$0xff]
        %v5715 = vld [vmem:[%s244 + $0x10] sm:$0xff]
        %v5716 = vld [vmem:[%s244 + $0x20] sm:$0xff]
        %v5717 = vld [vmem:[%s244 + $0x30] sm:$0xff]
        %v5718 = vld [vmem:[%s244 + $0x40] sm:$0xff]
        %v5719 = vld [vmem:[%s244 + $0x50] sm:$0xff]
        %v5720 = vld [vmem:[%s244 + $0x60] sm:$0xff]
        %v5721 = vld [vmem:[%s244 + $0x70] sm:$0xff]
        %v5722 = vld [vmem:[%s244 + $0x80] sm:$0xff]
        %v5723 = vld [vmem:[%s244 + $0x90] sm:$0xff]
        %v5724 = vld [vmem:[%s244 + $0xa0] sm:$0xff]
        %v5725 = vld [vmem:[%s244 + $0xb0] sm:$0xff]
        %v5726 = vld [vmem:[%s244 + $0xc0] sm:$0xff]
        %v5727 = vld [vmem:[%s244 + $0xd0] sm:$0xff]
        %v5728 = vld [vmem:[%s244 + $0xe0] sm:$0xff]
        %v5729 = vld [vmem:[%s244 + $0xf0] sm:$0xff]
        %v5730 = vld [vmem:[%s244 + $0x100] sm:$0xff]
        %v5731 = vld [vmem:[%s244 + $0x110] sm:$0xff]
        %v5732 = vld [vmem:[%s244 + $0x120] sm:$0xff]
        %v5733 = vld [vmem:[%s244 + $0x130] sm:$0xff]
        %v5734 = vld [vmem:[%s244 + $0x140] sm:$0xff]
        %v5735 = vld [vmem:[%s244 + $0x150] sm:$0xff]
        %v5736 = vld [vmem:[%s244 + $0x160] sm:$0xff]
        %v5737 = vld [vmem:[%s244 + $0x170] sm:$0xff]
        %v5738 = vld [vmem:[%s244 + $0x180] sm:$0xff]
        %v5739 = vld [vmem:[%s244 + $0x190] sm:$0xff]
        %v5740 = vld [vmem:[%s244 + $0x1a0] sm:$0xff]
        %v5741 = vld [vmem:[%s244 + $0x1b0] sm:$0xff]
        %v5742 = vld [vmem:[%s244 + $0x1c0] sm:$0xff]
        %v5743 = vld [vmem:[%s244 + $0x1d0] sm:$0xff]
        %v5744 = vld [vmem:[%s244 + $0x1e0] sm:$0xff]
        %v5745 = vld [vmem:[%s244 + $0x1f0] sm:$0xff]
        %v5746 = vld [vmem:[%s2 + $0x2] sm:$0x1]
        %v5747 = vperm.slane %v5746, 0
        %v5748 = vmul.f32 %v5714, %v5747
        %v5749 = vmul.f32 %v5715, %v5747
        %v5750 = vmul.f32 %v5716, %v5747
        %v5751 = vmul.f32 %v5717, %v5747
        %v5752 = vmul.f32 %v5718, %v5747
        %v5753 = vmul.f32 %v5719, %v5747
        %v5754 = vmul.f32 %v5720, %v5747
        %v5755 = vmul.f32 %v5721, %v5747
        %v5756 = vmul.f32 %v5722, %v5747
        %v5757 = vmul.f32 %v5723, %v5747
        %v5758 = vmul.f32 %v5724, %v5747
        %v5759 = vmul.f32 %v5725, %v5747
        %v5760 = vmul.f32 %v5726, %v5747
        %v5761 = vmul.f32 %v5727, %v5747
        %v5762 = vmul.f32 %v5728, %v5747
        %v5763 = vmul.f32 %v5729, %v5747
        %v5764 = vmul.f32 %v5730, %v5747
        %v5765 = vmul.f32 %v5731, %v5747
        %v5766 = vmul.f32 %v5732, %v5747
        %v5767 = vmul.f32 %v5733, %v5747
        %v5768 = vmul.f32 %v5734, %v5747
        %v5769 = vmul.f32 %v5735, %v5747
        %v5770 = vmul.f32 %v5736, %v5747
        %v5771 = vmul.f32 %v5737, %v5747
        %v5772 = vmul.f32 %v5738, %v5747
        %v5773 = vmul.f32 %v5739, %v5747
        %v5774 = vmul.f32 %v5740, %v5747
        %v5775 = vmul.f32 %v5741, %v5747
        %v5776 = vmul.f32 %v5742, %v5747
        %v5777 = vmul.f32 %v5743, %v5747
        %v5778 = vmul.f32 %v5744, %v5747
        %v5779 = vmul.f32 %v5745, %v5747
        %v5780 = vld [vmem:[%s3 + $0x2] sm:$0x1]
        %v5781 = vperm.slane %v5780, 0
        %v5782 = vadd.f32 %v5748, %v5781
        %v5783 = vadd.f32 %v5749, %v5781
        %v5784 = vadd.f32 %v5750, %v5781
        %v5785 = vadd.f32 %v5751, %v5781
        %v5786 = vadd.f32 %v5752, %v5781
        %v5787 = vadd.f32 %v5753, %v5781
        %v5788 = vadd.f32 %v5754, %v5781
        %v5789 = vadd.f32 %v5755, %v5781
        %v5790 = vadd.f32 %v5756, %v5781
        %v5791 = vadd.f32 %v5757, %v5781
        %v5792 = vadd.f32 %v5758, %v5781
        %v5793 = vadd.f32 %v5759, %v5781
        %v5794 = vadd.f32 %v5760, %v5781
        %v5795 = vadd.f32 %v5761, %v5781
        %v5796 = vadd.f32 %v5762, %v5781
        %v5797 = vadd.f32 %v5763, %v5781
        %v5798 = vadd.f32 %v5764, %v5781
        %v5799 = vadd.f32 %v5765, %v5781
        %v5800 = vadd.f32 %v5766, %v5781
        %v5801 = vadd.f32 %v5767, %v5781
        %v5802 = vadd.f32 %v5768, %v5781
        %v5803 = vadd.f32 %v5769, %v5781
        %v5804 = vadd.f32 %v5770, %v5781
        %v5805 = vadd.f32 %v5771, %v5781
        %v5806 = vadd.f32 %v5772, %v5781
        %v5807 = vadd.f32 %v5773, %v5781
        %v5808 = vadd.f32 %v5774, %v5781
        %v5809 = vadd.f32 %v5775, %v5781
        %v5810 = vadd.f32 %v5776, %v5781
        %v5811 = vadd.f32 %v5777, %v5781
        %v5812 = vadd.f32 %v5778, %v5781
        %v5813 = vadd.f32 %v5779, %v5781
        %v5814 = vmax.f32 %v5782, 0.0
        %v5815 = vmax.f32 %v5783, 0.0
        %v5816 = vmax.f32 %v5784, 0.0
        %v5817 = vmax.f32 %v5785, 0.0
        %v5818 = vmax.f32 %v5786, 0.0
        %v5819 = vmax.f32 %v5787, 0.0
        %v5820 = vmax.f32 %v5788, 0.0
        %v5821 = vmax.f32 %v5789, 0.0
        %v5822 = vmax.f32 %v5790, 0.0
        %v5823 = vmax.f32 %v5791, 0.0
        %v5824 = vmax.f32 %v5792, 0.0
        %v5825 = vmax.f32 %v5793, 0.0
        %v5826 = vmax.f32 %v5794, 0.0
        %v5827 = vmax.f32 %v5795, 0.0
        %v5828 = vmax.f32 %v5796, 0.0
        %v5829 = vmax.f32 %v5797, 0.0
        %v5830 = vmax.f32 %v5798, 0.0
        %v5831 = vmax.f32 %v5799, 0.0
        %v5832 = vmax.f32 %v5800, 0.0
        %v5833 = vmax.f32 %v5801, 0.0
        %v5834 = vmax.f32 %v5802, 0.0
        %v5835 = vmax.f32 %v5803, 0.0
        %v5836 = vmax.f32 %v5804, 0.0
        %v5837 = vmax.f32 %v5805, 0.0
        %v5838 = vmax.f32 %v5806, 0.0
        %v5839 = vmax.f32 %v5807, 0.0
        %v5840 = vmax.f32 %v5808, 0.0
        %v5841 = vmax.f32 %v5809, 0.0
        %v5842 = vmax.f32 %v5810, 0.0
        %v5843 = vmax.f32 %v5811, 0.0
        %v5844 = vmax.f32 %v5812, 0.0
        %v5845 = vmax.f32 %v5813, 0.0
        %v5846 = vpack.c.bf16 %v5815, %v5814
        %v5847 = vpack.c.bf16 %v5817, %v5816
        %v5848 = vpack.c.bf16 %v5819, %v5818
        %v5849 = vpack.c.bf16 %v5821, %v5820
        %v5850 = vpack.c.bf16 %v5823, %v5822
        %v5851 = vpack.c.bf16 %v5825, %v5824
        %v5852 = vpack.c.bf16 %v5827, %v5826
        %v5853 = vpack.c.bf16 %v5829, %v5828
        %v5854 = vpack.c.bf16 %v5831, %v5830
        %v5855 = vpack.c.bf16 %v5833, %v5832
        %v5856 = vpack.c.bf16 %v5835, %v5834
        %v5857 = vpack.c.bf16 %v5837, %v5836
        %v5858 = vpack.c.bf16 %v5839, %v5838
        %v5859 = vpack.c.bf16 %v5841, %v5840
        %v5860 = vpack.c.bf16 %v5843, %v5842
        %v5861 = vpack.c.bf16 %v5845, %v5844
        %s5862 = scalar_lea.vmem %s1, 256
        %v5863 = vld [vmem:[%s5862] sm:$0xf]
        %v5864 = vld [vmem:[%s5862 + $0x4] sm:$0xf]
        %v5865 = vld [vmem:[%s5862 + $0x8] sm:$0xf]
        %v5866 = vld [vmem:[%s5862 + $0xc] sm:$0xf]
        %v5867 = vld [vmem:[%s5862 + $0x10] sm:$0xf]
        %v5868 = vld [vmem:[%s5862 + $0x14] sm:$0xf]
        %v5869 = vld [vmem:[%s5862 + $0x18] sm:$0xf]
        %v5870 = vld [vmem:[%s5862 + $0x1c] sm:$0xf]
        %v5871 = vld [vmem:[%s5862 + $0x20] sm:$0xf]
        %v5872 = vld [vmem:[%s5862 + $0x24] sm:$0xf]
        %v5873 = vld [vmem:[%s5862 + $0x28] sm:$0xf]
        %v5874 = vld [vmem:[%s5862 + $0x2c] sm:$0xf]
        %v5875 = vld [vmem:[%s5862 + $0x30] sm:$0xf]
        %v5876 = vld [vmem:[%s5862 + $0x34] sm:$0xf]
        %v5877 = vld [vmem:[%s5862 + $0x38] sm:$0xf]
        %v5878 = vld [vmem:[%s5862 + $0x3c] sm:$0xf]
        %v5879 = vld [vmem:[%s5 + $0x2] sm:$0x1]
        %v5880 = vperm.slane %v5879, 0
        %v5897 = vunpack.c.l.b16 %v5863
        %v5898 = vunpack.c.l.b16 %v5864
        %v5899 = vunpack.c.l.b16 %v5865
        %v5900 = vunpack.c.l.b16 %v5866
        %v5901 = vunpack.c.l.b16 %v5867
        %v5902 = vunpack.c.l.b16 %v5868
        %v5903 = vunpack.c.l.b16 %v5869
        %v5904 = vunpack.c.l.b16 %v5870
        %v5905 = vunpack.c.l.b16 %v5871
        %v5906 = vunpack.c.l.b16 %v5872
        %v5907 = vunpack.c.l.b16 %v5873
        %v5908 = vunpack.c.l.b16 %v5874
        %v5909 = vunpack.c.l.b16 %v5875
        %v5910 = vunpack.c.l.b16 %v5876
        %v5911 = vunpack.c.l.b16 %v5877
        %v5912 = vunpack.c.l.b16 %v5878
        %v5913 = vpack.c.b16 %v5898, %v5897
        %v5914 = vpack.c.b16 %v5900, %v5899
        %v5915 = vpack.c.b16 %v5902, %v5901
        %v5916 = vpack.c.b16 %v5904, %v5903
        %v5917 = vpack.c.b16 %v5906, %v5905
        %v5918 = vpack.c.b16 %v5908, %v5907
        %v5919 = vpack.c.b16 %v5910, %v5909
        %v5920 = vpack.c.b16 %v5912, %v5911
        %5929 = vmatpush.bf16.msra.mxu0 %v5920
        %5930 = vmatpush.bf16.msra.mxu0 %v5919
        %5931 = vmatpush.bf16.msra.mxu0 %v5918
        %5932 = vmatpush.bf16.msra.mxu0 %v5917
        %5933 = vmatpush.bf16.msra.mxu0 %v5916
        %5934 = vmatpush.bf16.msra.mxu0 %v5915
        %5935 = vmatpush.bf16.msra.mxu0 %v5914
        %5936 = vmatpush.bf16.msra.mxu0 %v5913
        %5937 = vmatmul.bf16.gmra.mxu0 %v5846
        %v5938 = vpop.f32.mrf.mxu0
        %v5939 = vadd.f32 %v5880, %v5938
        %v5940 = vpop.f32.mrf.mxu0
        %v5941 = vadd.f32 %v5880, %v5940
        %5942 = vmatmul.bf16.gmra.mxu0 %v5847
        %v5943 = vpop.f32.mrf.mxu0
        %v5944 = vadd.f32 %v5880, %v5943
        %v5945 = vpop.f32.mrf.mxu0
        %v5946 = vadd.f32 %v5880, %v5945
        %5947 = vmatmul.bf16.gmra.mxu0 %v5848
        %v5948 = vpop.f32.mrf.mxu0
        %v5949 = vadd.f32 %v5880, %v5948
        %v5950 = vpop.f32.mrf.mxu0
        %v5951 = vadd.f32 %v5880, %v5950
        %5952 = vmatmul.bf16.gmra.mxu0 %v5849
        %v5953 = vpop.f32.mrf.mxu0
        %v5954 = vadd.f32 %v5880, %v5953
        %v5955 = vpop.f32.mrf.mxu0
        %v5956 = vadd.f32 %v5880, %v5955
        %5957 = vmatmul.bf16.gmra.mxu0 %v5850
        %v5958 = vpop.f32.mrf.mxu0
        %v5959 = vadd.f32 %v5880, %v5958
        %v5960 = vpop.f32.mrf.mxu0
        %v5961 = vadd.f32 %v5880, %v5960
        %5962 = vmatmul.bf16.gmra.mxu0 %v5851
        %v5963 = vpop.f32.mrf.mxu0
        %v5964 = vadd.f32 %v5880, %v5963
        %v5965 = vpop.f32.mrf.mxu0
        %v5966 = vadd.f32 %v5880, %v5965
        %5967 = vmatmul.bf16.gmra.mxu0 %v5852
        %v5968 = vpop.f32.mrf.mxu0
        %v5969 = vadd.f32 %v5880, %v5968
        %v5970 = vpop.f32.mrf.mxu0
        %v5971 = vadd.f32 %v5880, %v5970
        %5972 = vmatmul.bf16.gmra.mxu0 %v5853
        %v5973 = vpop.f32.mrf.mxu0
        %v5974 = vadd.f32 %v5880, %v5973
        %v5975 = vpop.f32.mrf.mxu0
        %v5976 = vadd.f32 %v5880, %v5975
        %5977 = vmatmul.bf16.gmra.mxu0 %v5854
        %v5978 = vpop.f32.mrf.mxu0
        %v5979 = vadd.f32 %v5880, %v5978
        %v5980 = vpop.f32.mrf.mxu0
        %v5981 = vadd.f32 %v5880, %v5980
        %5982 = vmatmul.bf16.gmra.mxu0 %v5855
        %v5983 = vpop.f32.mrf.mxu0
        %v5984 = vadd.f32 %v5880, %v5983
        %v5985 = vpop.f32.mrf.mxu0
        %v5986 = vadd.f32 %v5880, %v5985
        %5987 = vmatmul.bf16.gmra.mxu0 %v5856
        %v5988 = vpop.f32.mrf.mxu0
        %v5989 = vadd.f32 %v5880, %v5988
        %v5990 = vpop.f32.mrf.mxu0
        %v5991 = vadd.f32 %v5880, %v5990
        %5992 = vmatmul.bf16.gmra.mxu0 %v5857
        %v5993 = vpop.f32.mrf.mxu0
        %v5994 = vadd.f32 %v5880, %v5993
        %v5995 = vpop.f32.mrf.mxu0
        %v5996 = vadd.f32 %v5880, %v5995
        %5997 = vmatmul.bf16.gmra.mxu0 %v5858
        %v5998 = vpop.f32.mrf.mxu0
        %v5999 = vadd.f32 %v5880, %v5998
        %v6000 = vpop.f32.mrf.mxu0
        %v6001 = vadd.f32 %v5880, %v6000
        %6002 = vmatmul.bf16.gmra.mxu0 %v5859
        %v6003 = vpop.f32.mrf.mxu0
        %v6004 = vadd.f32 %v5880, %v6003
        %v6005 = vpop.f32.mrf.mxu0
        %v6006 = vadd.f32 %v5880, %v6005
        %6007 = vmatmul.bf16.gmra.mxu0 %v5860
        %v6008 = vpop.f32.mrf.mxu0
        %v6009 = vadd.f32 %v5880, %v6008
        %v6010 = vpop.f32.mrf.mxu0
        %v6011 = vadd.f32 %v5880, %v6010
        %6012 = vmatmul.bf16.gmra.mxu0 %v5861
        %v6013 = vpop.f32.mrf.mxu0
        %v6014 = vadd.f32 %v5880, %v6013
        %v6015 = vpop.f32.mrf.mxu0
        %v6016 = vadd.f32 %v5880, %v6015
        %6017 = vdwg.mxu0
        %v6018 = vmax.f32 %v5939, 0.0
        %v6019 = vmax.f32 %v5941, 0.0
        %v6020 = vmax.f32 %v5944, 0.0
        %v6021 = vmax.f32 %v5946, 0.0
        %v6022 = vmax.f32 %v5949, 0.0
        %v6023 = vmax.f32 %v5951, 0.0
        %v6024 = vmax.f32 %v5954, 0.0
        %v6025 = vmax.f32 %v5956, 0.0
        %v6026 = vmax.f32 %v5959, 0.0
        %v6027 = vmax.f32 %v5961, 0.0
        %v6028 = vmax.f32 %v5964, 0.0
        %v6029 = vmax.f32 %v5966, 0.0
        %v6030 = vmax.f32 %v5969, 0.0
        %v6031 = vmax.f32 %v5971, 0.0
        %v6032 = vmax.f32 %v5974, 0.0
        %v6033 = vmax.f32 %v5976, 0.0
        %v6034 = vmax.f32 %v5979, 0.0
        %v6035 = vmax.f32 %v5981, 0.0
        %v6036 = vmax.f32 %v5984, 0.0
        %v6037 = vmax.f32 %v5986, 0.0
        %v6038 = vmax.f32 %v5989, 0.0
        %v6039 = vmax.f32 %v5991, 0.0
        %v6040 = vmax.f32 %v5994, 0.0
        %v6041 = vmax.f32 %v5996, 0.0
        %v6042 = vmax.f32 %v5999, 0.0
        %v6043 = vmax.f32 %v6001, 0.0
        %v6044 = vmax.f32 %v6004, 0.0
        %v6045 = vmax.f32 %v6006, 0.0
        %v6046 = vmax.f32 %v6009, 0.0
        %v6047 = vmax.f32 %v6011, 0.0
        %v6048 = vmax.f32 %v6014, 0.0
        %v6049 = vmax.f32 %v6016, 0.0
        %v6050 = vpack.c.bf16 %v6019, %v6018
        %v6051 = vpack.c.bf16 %v6021, %v6020
        %v6052 = vpack.c.bf16 %v6023, %v6022
        %v6053 = vpack.c.bf16 %v6025, %v6024
        %v6054 = vpack.c.bf16 %v6027, %v6026
        %v6055 = vpack.c.bf16 %v6029, %v6028
        %v6056 = vpack.c.bf16 %v6031, %v6030
        %v6057 = vpack.c.bf16 %v6033, %v6032
        %v6058 = vpack.c.bf16 %v6035, %v6034
        %v6059 = vpack.c.bf16 %v6037, %v6036
        %v6060 = vpack.c.bf16 %v6039, %v6038
        %v6061 = vpack.c.bf16 %v6041, %v6040
        %v6062 = vpack.c.bf16 %v6043, %v6042
        %v6063 = vpack.c.bf16 %v6045, %v6044
        %v6064 = vpack.c.bf16 %v6047, %v6046
        %v6065 = vpack.c.bf16 %v6049, %v6048
        %s6066 = scalar_lea.vmem %s4, 384
        %v6067 = vld [vmem:[%s6066] sm:$0xff]
        %v6068 = vld [vmem:[%s6066 + $0x8] sm:$0xf]
        %v6069 = vld [vmem:[%s6066 + $0xc] sm:$0xff]
        %v6070 = vld [vmem:[%s6066 + $0x14] sm:$0xf]
        %v6071 = vld [vmem:[%s6066 + $0x18] sm:$0xff]
        %v6072 = vld [vmem:[%s6066 + $0x20] sm:$0xf]
        %v6073 = vld [vmem:[%s6066 + $0x24] sm:$0xff]
        %v6074 = vld [vmem:[%s6066 + $0x2c] sm:$0xf]
        %v6075 = vld [vmem:[%s6066 + $0x30] sm:$0xff]
        %v6076 = vld [vmem:[%s6066 + $0x38] sm:$0xf]
        %v6077 = vld [vmem:[%s6066 + $0x3c] sm:$0xff]
        %v6078 = vld [vmem:[%s6066 + $0x44] sm:$0xf]
        %v6079 = vld [vmem:[%s6066 + $0x48] sm:$0xff]
        %v6080 = vld [vmem:[%s6066 + $0x50] sm:$0xf]
        %v6081 = vld [vmem:[%s6066 + $0x54] sm:$0xff]
        %v6082 = vld [vmem:[%s6066 + $0x5c] sm:$0xf]
        %v6083 = vld [vmem:[%s6066 + $0x60] sm:$0xff]
        %v6084 = vld [vmem:[%s6066 + $0x68] sm:$0xf]
        %v6085 = vld [vmem:[%s6066 + $0x6c] sm:$0xff]
        %v6086 = vld [vmem:[%s6066 + $0x74] sm:$0xf]
        %v6087 = vld [vmem:[%s6066 + $0x78] sm:$0xff]
        %v6088 = vld [vmem:[%s6066 + $0x80] sm:$0xf]
        %v6089 = vld [vmem:[%s6066 + $0x84] sm:$0xff]
        %v6090 = vld [vmem:[%s6066 + $0x8c] sm:$0xf]
        %v6091 = vld [vmem:[%s6066 + $0x90] sm:$0xff]
        %v6092 = vld [vmem:[%s6066 + $0x98] sm:$0xf]
        %v6093 = vld [vmem:[%s6066 + $0x9c] sm:$0xff]
        %v6094 = vld [vmem:[%s6066 + $0xa4] sm:$0xf]
        %v6095 = vld [vmem:[%s6066 + $0xa8] sm:$0xff]
        %v6096 = vld [vmem:[%s6066 + $0xb0] sm:$0xf]
        %v6097 = vld [vmem:[%s6066 + $0xb4] sm:$0xff]
        %v6098 = vld [vmem:[%s6066 + $0xbc] sm:$0xf]
        %v6131 = vunpack.c.l.b16 %v6067
        %v6132 = vunpack.c.h.b16 %v6067
        %v6133 = vunpack.c.l.b16 %v6068
        %v6134 = vunpack.c.l.b16 %v6069
        %v6135 = vunpack.c.h.b16 %v6069
        %v6136 = vunpack.c.l.b16 %v6070
        %v6137 = vunpack.c.l.b16 %v6071
        %v6138 = vunpack.c.h.b16 %v6071
        %v6139 = vunpack.c.l.b16 %v6072
        %v6140 = vunpack.c.l.b16 %v6073
        %v6141 = vunpack.c.h.b16 %v6073
        %v6142 = vunpack.c.l.b16 %v6074
        %v6143 = vunpack.c.l.b16 %v6075
        %v6144 = vunpack.c.h.b16 %v6075
        %v6145 = vunpack.c.l.b16 %v6076
        %v6146 = vunpack.c.l.b16 %v6077
        %v6147 = vunpack.c.h.b16 %v6077
        %v6148 = vunpack.c.l.b16 %v6078
        %v6149 = vunpack.c.l.b16 %v6079
        %v6150 = vunpack.c.h.b16 %v6079
        %v6151 = vunpack.c.l.b16 %v6080
        %v6152 = vunpack.c.l.b16 %v6081
        %v6153 = vunpack.c.h.b16 %v6081
        %v6154 = vunpack.c.l.b16 %v6082
        %v6155 = vunpack.c.l.b16 %v6083
        %v6156 = vunpack.c.h.b16 %v6083
        %v6157 = vunpack.c.l.b16 %v6084
        %v6158 = vunpack.c.l.b16 %v6085
        %v6159 = vunpack.c.h.b16 %v6085
        %v6160 = vunpack.c.l.b16 %v6086
        %v6161 = vunpack.c.l.b16 %v6087
        %v6162 = vunpack.c.h.b16 %v6087
        %v6163 = vunpack.c.l.b16 %v6088
        %v6164 = vunpack.c.l.b16 %v6089
        %v6165 = vunpack.c.h.b16 %v6089
        %v6166 = vunpack.c.l.b16 %v6090
        %v6167 = vunpack.c.l.b16 %v6091
        %v6168 = vunpack.c.h.b16 %v6091
        %v6169 = vunpack.c.l.b16 %v6092
        %v6170 = vunpack.c.l.b16 %v6093
        %v6171 = vunpack.c.h.b16 %v6093
        %v6172 = vunpack.c.l.b16 %v6094
        %v6173 = vunpack.c.l.b16 %v6095
        %v6174 = vunpack.c.h.b16 %v6095
        %v6175 = vunpack.c.l.b16 %v6096
        %v6176 = vunpack.c.l.b16 %v6097
        %v6177 = vunpack.c.h.b16 %v6097
        %v6178 = vunpack.c.l.b16 %v6098
        %v6179 = vpack.c.b16 %v6134, %v6131
        %v6180 = vpack.c.b16 %v6135, %v6132
        %v6181 = vpack.c.b16 %v6136, %v6133
        %v6182 = vpack.c.b16 %v6140, %v6137
        %v6183 = vpack.c.b16 %v6141, %v6138
        %v6184 = vpack.c.b16 %v6142, %v6139
        %v6185 = vpack.c.b16 %v6146, %v6143
        %v6186 = vpack.c.b16 %v6147, %v6144
        %v6187 = vpack.c.b16 %v6148, %v6145
        %v6188 = vpack.c.b16 %v6152, %v6149
        %v6189 = vpack.c.b16 %v6153, %v6150
        %v6190 = vpack.c.b16 %v6154, %v6151
        %v6191 = vpack.c.b16 %v6158, %v6155
        %v6192 = vpack.c.b16 %v6159, %v6156
        %v6193 = vpack.c.b16 %v6160, %v6157
        %v6194 = vpack.c.b16 %v6164, %v6161
        %v6195 = vpack.c.b16 %v6165, %v6162
        %v6196 = vpack.c.b16 %v6166, %v6163
        %v6197 = vpack.c.b16 %v6170, %v6167
        %v6198 = vpack.c.b16 %v6171, %v6168
        %v6199 = vpack.c.b16 %v6172, %v6169
        %v6200 = vpack.c.b16 %v6176, %v6173
        %v6201 = vpack.c.b16 %v6177, %v6174
        %v6202 = vpack.c.b16 %v6178, %v6175
        %6227 = vmatpush.bf16.msra.mxu0 %v6200
        %6228 = vmatpush.bf16.msra.mxu0 %v6197
        %6229 = vmatpush.bf16.msra.mxu0 %v6194
        %6230 = vmatpush.bf16.msra.mxu0 %v6191
        %6231 = vmatpush.bf16.msra.mxu0 %v6188
        %6232 = vmatpush.bf16.msra.mxu0 %v6185
        %6233 = vmatpush.bf16.msra.mxu0 %v6182
        %6234 = vmatpush.bf16.msra.mxu0 %v6179
        %6235 = vmatmul.bf16.gmra.mxu0 %v6050
        %v6236 = vpop.f32.mrf.mxu0
        %v6237 = vadd.f32 0.0, %v6236
        %v6238 = vpop.f32.mrf.mxu0
        %v6239 = vadd.f32 0.0, %v6238
        %6240 = vmatmul.bf16.gmra.mxu0 %v6051
        %v6241 = vpop.f32.mrf.mxu0
        %v6242 = vadd.f32 0.0, %v6241
        %v6243 = vpop.f32.mrf.mxu0
        %v6244 = vadd.f32 0.0, %v6243
        %6245 = vmatmul.bf16.gmra.mxu0 %v6052
        %v6246 = vpop.f32.mrf.mxu0
        %v6247 = vadd.f32 0.0, %v6246
        %v6248 = vpop.f32.mrf.mxu0
        %v6249 = vadd.f32 0.0, %v6248
        %6250 = vmatmul.bf16.gmra.mxu0 %v6053
        %v6251 = vpop.f32.mrf.mxu0
        %v6252 = vadd.f32 0.0, %v6251
        %v6253 = vpop.f32.mrf.mxu0
        %v6254 = vadd.f32 0.0, %v6253
        %6255 = vmatmul.bf16.gmra.mxu0 %v6054
        %v6256 = vpop.f32.mrf.mxu0
        %v6257 = vadd.f32 0.0, %v6256
        %v6258 = vpop.f32.mrf.mxu0
        %v6259 = vadd.f32 0.0, %v6258
        %6260 = vmatmul.bf16.gmra.mxu0 %v6055
        %v6261 = vpop.f32.mrf.mxu0
        %v6262 = vadd.f32 0.0, %v6261
        %v6263 = vpop.f32.mrf.mxu0
        %v6264 = vadd.f32 0.0, %v6263
        %6265 = vmatmul.bf16.gmra.mxu0 %v6056
        %v6266 = vpop.f32.mrf.mxu0
        %v6267 = vadd.f32 0.0, %v6266
        %v6268 = vpop.f32.mrf.mxu0
        %v6269 = vadd.f32 0.0, %v6268
        %6270 = vmatmul.bf16.gmra.mxu0 %v6057
        %v6271 = vpop.f32.mrf.mxu0
        %v6272 = vadd.f32 0.0, %v6271
        %v6273 = vpop.f32.mrf.mxu0
        %v6274 = vadd.f32 0.0, %v6273
        %6275 = vmatmul.bf16.gmra.mxu0 %v6058
        %v6276 = vpop.f32.mrf.mxu0
        %v6277 = vadd.f32 0.0, %v6276
        %v6278 = vpop.f32.mrf.mxu0
        %v6279 = vadd.f32 0.0, %v6278
        %6280 = vmatmul.bf16.gmra.mxu0 %v6059
        %v6281 = vpop.f32.mrf.mxu0
        %v6282 = vadd.f32 0.0, %v6281
        %v6283 = vpop.f32.mrf.mxu0
        %v6284 = vadd.f32 0.0, %v6283
        %6285 = vmatmul.bf16.gmra.mxu0 %v6060
        %v6286 = vpop.f32.mrf.mxu0
        %v6287 = vadd.f32 0.0, %v6286
        %v6288 = vpop.f32.mrf.mxu0
        %v6289 = vadd.f32 0.0, %v6288
        %6290 = vmatmul.bf16.gmra.mxu0 %v6061
        %v6291 = vpop.f32.mrf.mxu0
        %v6292 = vadd.f32 0.0, %v6291
        %v6293 = vpop.f32.mrf.mxu0
        %v6294 = vadd.f32 0.0, %v6293
        %6295 = vmatmul.bf16.gmra.mxu0 %v6062
        %v6296 = vpop.f32.mrf.mxu0
        %v6297 = vadd.f32 0.0, %v6296
        %v6298 = vpop.f32.mrf.mxu0
        %v6299 = vadd.f32 0.0, %v6298
        %6300 = vmatmul.bf16.gmra.mxu0 %v6063
        %v6301 = vpop.f32.mrf.mxu0
        %v6302 = vadd.f32 0.0, %v6301
        %v6303 = vpop.f32.mrf.mxu0
        %v6304 = vadd.f32 0.0, %v6303
        %6305 = vmatmul.bf16.gmra.mxu0 %v6064
        %v6306 = vpop.f32.mrf.mxu0
        %v6307 = vadd.f32 0.0, %v6306
        %v6308 = vpop.f32.mrf.mxu0
        %v6309 = vadd.f32 0.0, %v6308
        %6310 = vmatmul.bf16.gmra.mxu0 %v6065
        %v6311 = vpop.f32.mrf.mxu0
        %v6312 = vadd.f32 0.0, %v6311
        %v6313 = vpop.f32.mrf.mxu0
        %v6314 = vadd.f32 0.0, %v6313
        %6315 = vdwg.mxu0
        %6316 = vmatpush.bf16.msra.mxu0 %v6201
        %6317 = vmatpush.bf16.msra.mxu0 %v6198
        %6318 = vmatpush.bf16.msra.mxu0 %v6195
        %6319 = vmatpush.bf16.msra.mxu0 %v6192
        %6320 = vmatpush.bf16.msra.mxu0 %v6189
        %6321 = vmatpush.bf16.msra.mxu0 %v6186
        %6322 = vmatpush.bf16.msra.mxu0 %v6183
        %6323 = vmatpush.bf16.msra.mxu0 %v6180
        %6324 = vmatmul.bf16.gmra.mxu0 %v6050
        %v6325 = vpop.f32.mrf.mxu0
        %v6326 = vadd.f32 0.0, %v6325
        %v6327 = vpop.f32.mrf.mxu0
        %v6328 = vadd.f32 0.0, %v6327
        %6329 = vmatmul.bf16.gmra.mxu0 %v6051
        %v6330 = vpop.f32.mrf.mxu0
        %v6331 = vadd.f32 0.0, %v6330
        %v6332 = vpop.f32.mrf.mxu0
        %v6333 = vadd.f32 0.0, %v6332
        %6334 = vmatmul.bf16.gmra.mxu0 %v6052
        %v6335 = vpop.f32.mrf.mxu0
        %v6336 = vadd.f32 0.0, %v6335
        %v6337 = vpop.f32.mrf.mxu0
        %v6338 = vadd.f32 0.0, %v6337
        %6339 = vmatmul.bf16.gmra.mxu0 %v6053
        %v6340 = vpop.f32.mrf.mxu0
        %v6341 = vadd.f32 0.0, %v6340
        %v6342 = vpop.f32.mrf.mxu0
        %v6343 = vadd.f32 0.0, %v6342
        %6344 = vmatmul.bf16.gmra.mxu0 %v6054
        %v6345 = vpop.f32.mrf.mxu0
        %v6346 = vadd.f32 0.0, %v6345
        %v6347 = vpop.f32.mrf.mxu0
        %v6348 = vadd.f32 0.0, %v6347
        %6349 = vmatmul.bf16.gmra.mxu0 %v6055
        %v6350 = vpop.f32.mrf.mxu0
        %v6351 = vadd.f32 0.0, %v6350
        %v6352 = vpop.f32.mrf.mxu0
        %v6353 = vadd.f32 0.0, %v6352
        %6354 = vmatmul.bf16.gmra.mxu0 %v6056
        %v6355 = vpop.f32.mrf.mxu0
        %v6356 = vadd.f32 0.0, %v6355
        %v6357 = vpop.f32.mrf.mxu0
        %v6358 = vadd.f32 0.0, %v6357
        %6359 = vmatmul.bf16.gmra.mxu0 %v6057
        %v6360 = vpop.f32.mrf.mxu0
        %v6361 = vadd.f32 0.0, %v6360
        %v6362 = vpop.f32.mrf.mxu0
        %v6363 = vadd.f32 0.0, %v6362
        %6364 = vmatmul.bf16.gmra.mxu0 %v6058
        %v6365 = vpop.f32.mrf.mxu0
        %v6366 = vadd.f32 0.0, %v6365
        %v6367 = vpop.f32.mrf.mxu0
        %v6368 = vadd.f32 0.0, %v6367
        %6369 = vmatmul.bf16.gmra.mxu0 %v6059
        %v6370 = vpop.f32.mrf.mxu0
        %v6371 = vadd.f32 0.0, %v6370
        %v6372 = vpop.f32.mrf.mxu0
        %v6373 = vadd.f32 0.0, %v6372
        %6374 = vmatmul.bf16.gmra.mxu0 %v6060
        %v6375 = vpop.f32.mrf.mxu0
        %v6376 = vadd.f32 0.0, %v6375
        %v6377 = vpop.f32.mrf.mxu0
        %v6378 = vadd.f32 0.0, %v6377
        %6379 = vmatmul.bf16.gmra.mxu0 %v6061
        %v6380 = vpop.f32.mrf.mxu0
        %v6381 = vadd.f32 0.0, %v6380
        %v6382 = vpop.f32.mrf.mxu0
        %v6383 = vadd.f32 0.0, %v6382
        %6384 = vmatmul.bf16.gmra.mxu0 %v6062
        %v6385 = vpop.f32.mrf.mxu0
        %v6386 = vadd.f32 0.0, %v6385
        %v6387 = vpop.f32.mrf.mxu0
        %v6388 = vadd.f32 0.0, %v6387
        %6389 = vmatmul.bf16.gmra.mxu0 %v6063
        %v6390 = vpop.f32.mrf.mxu0
        %v6391 = vadd.f32 0.0, %v6390
        %v6392 = vpop.f32.mrf.mxu0
        %v6393 = vadd.f32 0.0, %v6392
        %6394 = vmatmul.bf16.gmra.mxu0 %v6064
        %v6395 = vpop.f32.mrf.mxu0
        %v6396 = vadd.f32 0.0, %v6395
        %v6397 = vpop.f32.mrf.mxu0
        %v6398 = vadd.f32 0.0, %v6397
        %6399 = vmatmul.bf16.gmra.mxu0 %v6065
        %v6400 = vpop.f32.mrf.mxu0
        %v6401 = vadd.f32 0.0, %v6400
        %v6402 = vpop.f32.mrf.mxu0
        %v6403 = vadd.f32 0.0, %v6402
        %6404 = vdwg.mxu0
        %6405 = vmatpush.bf16.msra.mxu0 %v6202
        %6406 = vmatpush.bf16.msra.mxu0 %v6199
        %6407 = vmatpush.bf16.msra.mxu0 %v6196
        %6408 = vmatpush.bf16.msra.mxu0 %v6193
        %6409 = vmatpush.bf16.msra.mxu0 %v6190
        %6410 = vmatpush.bf16.msra.mxu0 %v6187
        %6411 = vmatpush.bf16.msra.mxu0 %v6184
        %6412 = vmatpush.bf16.msra.mxu0 %v6181
        %6413 = vmatmul.bf16.gmra.mxu0 %v6050
        %v6414 = vpop.f32.mrf.mxu0
        %v6415 = vpop.f32.mrf.mxu0
        %6416 = vmatmul.bf16.gmra.mxu0 %v6051
        %v6417 = vpop.f32.mrf.mxu0
        %v6418 = vadd.f32 0.0, %v6417
        %v6419 = vpop.f32.mrf.mxu0
        %v6420 = vadd.f32 0.0, %v6419
        %6421 = vmatmul.bf16.gmra.mxu0 %v6052
        %v6422 = vpop.f32.mrf.mxu0
        %v6423 = vadd.f32 0.0, %v6422
        %v6424 = vpop.f32.mrf.mxu0
        %v6425 = vadd.f32 0.0, %v6424
        %6426 = vmatmul.bf16.gmra.mxu0 %v6053
        %v6427 = vpop.f32.mrf.mxu0
        %v6428 = vadd.f32 0.0, %v6427
        %v6429 = vpop.f32.mrf.mxu0
        %v6430 = vadd.f32 0.0, %v6429
        %6431 = vmatmul.bf16.gmra.mxu0 %v6054
        %v6432 = vpop.f32.mrf.mxu0
        %v6433 = vadd.f32 0.0, %v6432
        %v6434 = vpop.f32.mrf.mxu0
        %v6435 = vadd.f32 0.0, %v6434
        %6436 = vmatmul.bf16.gmra.mxu0 %v6055
        %v6437 = vpop.f32.mrf.mxu0
        %v6438 = vadd.f32 0.0, %v6437
        %v6439 = vpop.f32.mrf.mxu0
        %v6440 = vadd.f32 0.0, %v6439
        %6441 = vmatmul.bf16.gmra.mxu0 %v6056
        %v6442 = vpop.f32.mrf.mxu0
        %v6443 = vadd.f32 0.0, %v6442
        %v6444 = vpop.f32.mrf.mxu0
        %v6445 = vadd.f32 0.0, %v6444
        %6446 = vmatmul.bf16.gmra.mxu0 %v6057
        %v6447 = vpop.f32.mrf.mxu0
        %v6448 = vadd.f32 0.0, %v6447
        %v6449 = vpop.f32.mrf.mxu0
        %v6450 = vadd.f32 0.0, %v6449
        %6451 = vmatmul.bf16.gmra.mxu0 %v6058
        %v6452 = vpop.f32.mrf.mxu0
        %v6453 = vadd.f32 0.0, %v6452
        %v6454 = vpop.f32.mrf.mxu0
        %v6455 = vadd.f32 0.0, %v6454
        %6456 = vmatmul.bf16.gmra.mxu0 %v6059
        %v6457 = vpop.f32.mrf.mxu0
        %v6458 = vadd.f32 0.0, %v6457
        %v6459 = vpop.f32.mrf.mxu0
        %v6460 = vadd.f32 0.0, %v6459
        %6461 = vmatmul.bf16.gmra.mxu0 %v6060
        %v6462 = vpop.f32.mrf.mxu0
        %v6463 = vadd.f32 0.0, %v6462
        %v6464 = vpop.f32.mrf.mxu0
        %v6465 = vadd.f32 0.0, %v6464
        %6466 = vmatmul.bf16.gmra.mxu0 %v6061
        %v6467 = vpop.f32.mrf.mxu0
        %v6468 = vadd.f32 0.0, %v6467
        %v6469 = vpop.f32.mrf.mxu0
        %v6470 = vadd.f32 0.0, %v6469
        %6471 = vmatmul.bf16.gmra.mxu0 %v6062
        %v6472 = vpop.f32.mrf.mxu0
        %v6473 = vadd.f32 0.0, %v6472
        %v6474 = vpop.f32.mrf.mxu0
        %v6475 = vadd.f32 0.0, %v6474
        %6476 = vmatmul.bf16.gmra.mxu0 %v6063
        %v6477 = vpop.f32.mrf.mxu0
        %v6478 = vadd.f32 0.0, %v6477
        %v6479 = vpop.f32.mrf.mxu0
        %v6480 = vadd.f32 0.0, %v6479
        %6481 = vmatmul.bf16.gmra.mxu0 %v6064
        %v6482 = vpop.f32.mrf.mxu0
        %v6483 = vadd.f32 0.0, %v6482
        %v6484 = vpop.f32.mrf.mxu0
        %v6485 = vadd.f32 0.0, %v6484
        %6486 = vmatmul.bf16.gmra.mxu0 %v6065
        %v6487 = vpop.f32.mrf.mxu0
        %v6488 = vadd.f32 0.0, %v6487
        %v6489 = vpop.f32.mrf.mxu0
        %v6490 = vadd.f32 0.0, %v6489
        %6491 = vdwg.mxu0
        %v6522 = vrot.slane %v6237, 7
        %v6523 = vrot.slane %v6239, 7
        %v6524 = vsel %vm1442, %v6522, %v6523
        %v6525 = vrot.slane %v6242, 7
        %v6526 = vsel %vm1442, %v6523, %v6525
        %v6527 = vrot.slane %v6244, 7
        %v6528 = vsel %vm1442, %v6525, %v6527
        %v6529 = vrot.slane %v6247, 7
        %v6530 = vsel %vm1442, %v6527, %v6529
        %v6531 = vrot.slane %v6249, 7
        %v6532 = vsel %vm1442, %v6529, %v6531
        %v6533 = vrot.slane %v6252, 7
        %v6534 = vsel %vm1442, %v6531, %v6533
        %v6535 = vrot.slane %v6254, 7
        %v6536 = vsel %vm1442, %v6533, %v6535
        %v6537 = vrot.slane %v6257, 7
        %v6538 = vsel %vm1442, %v6535, %v6537
        %v6539 = vrot.slane %v6259, 7
        %v6540 = vsel %vm1442, %v6537, %v6539
        %v6541 = vrot.slane %v6262, 7
        %v6542 = vsel %vm1442, %v6539, %v6541
        %v6543 = vrot.slane %v6264, 7
        %v6544 = vsel %vm1442, %v6541, %v6543
        %v6545 = vrot.slane %v6267, 7
        %v6546 = vsel %vm1442, %v6543, %v6545
        %v6547 = vrot.slane %v6269, 7
        %v6548 = vsel %vm1442, %v6545, %v6547
        %v6549 = vrot.slane %v6272, 7
        %v6550 = vsel %vm1442, %v6547, %v6549
        %v6551 = vrot.slane %v6274, 7
        %v6552 = vsel %vm1442, %v6549, %v6551
        %v6553 = vrot.slane %v6277, 7
        %v6554 = vsel %vm1442, %v6551, %v6553
        %v6555 = vrot.slane %v6279, 7
        %v6556 = vsel %vm1442, %v6553, %v6555
        %v6557 = vrot.slane %v6282, 7
        %v6558 = vsel %vm1442, %v6555, %v6557
        %v6559 = vrot.slane %v6284, 7
        %v6560 = vsel %vm1442, %v6557, %v6559
        %v6561 = vrot.slane %v6287, 7
        %v6562 = vsel %vm1442, %v6559, %v6561
        %v6563 = vrot.slane %v6289, 7
        %v6564 = vsel %vm1442, %v6561, %v6563
        %v6565 = vrot.slane %v6292, 7
        %v6566 = vsel %vm1442, %v6563, %v6565
        %v6567 = vrot.slane %v6294, 7
        %v6568 = vsel %vm1442, %v6565, %v6567
        %v6569 = vrot.slane %v6297, 7
        %v6570 = vsel %vm1442, %v6567, %v6569
        %v6571 = vrot.slane %v6299, 7
        %v6572 = vsel %vm1442, %v6569, %v6571
        %v6573 = vrot.slane %v6302, 7
        %v6574 = vsel %vm1442, %v6571, %v6573
        %v6575 = vrot.slane %v6304, 7
        %v6576 = vsel %vm1442, %v6573, %v6575
        %v6577 = vrot.slane %v6307, 7
        %v6578 = vsel %vm1442, %v6575, %v6577
        %v6579 = vrot.slane %v6309, 7
        %v6580 = vsel %vm1442, %v6577, %v6579
        %v6611 = vsel %vm1442, 0.0, %v6522
        %v6612 = vmul.f32 %v6611, %v381
        %v6613 = vmul.f32 %v6524, %v382
        %v6614 = vmul.f32 %v6526, %v383
        %v6615 = vmul.f32 %v6528, %v384
        %v6616 = vmul.f32 %v6530, %v385
        %v6617 = vmul.f32 %v6532, %v386
        %v6618 = vmul.f32 %v6534, %v387
        %v6619 = vmul.f32 %v6536, %v388
        %v6620 = vmul.f32 %v6538, %v389
        %v6621 = vmul.f32 %v6540, %v390
        %v6622 = vmul.f32 %v6542, %v391
        %v6623 = vmul.f32 %v6544, %v392
        %v6624 = vmul.f32 %v6546, %v393
        %v6625 = vmul.f32 %v6548, %v394
        %v6626 = vmul.f32 %v6550, %v395
        %v6627 = vmul.f32 %v6552, %v396
        %v6628 = vmul.f32 %v6554, %v397
        %v6629 = vmul.f32 %v6556, %v398
        %v6630 = vmul.f32 %v6558, %v399
        %v6631 = vmul.f32 %v6560, %v400
        %v6632 = vmul.f32 %v6562, %v401
        %v6633 = vmul.f32 %v6564, %v402
        %v6634 = vmul.f32 %v6566, %v403
        %v6635 = vmul.f32 %v6568, %v404
        %v6636 = vmul.f32 %v6570, %v405
        %v6637 = vmul.f32 %v6572, %v406
        %v6638 = vmul.f32 %v6574, %v407
        %v6639 = vmul.f32 %v6576, %v408
        %v6640 = vmul.f32 %v6578, %v409
        %v6641 = vmul.f32 %v6580, %v410
        %v6642 = vadd.f32 %v6326, %v1533
        %v6643 = vadd.f32 %v6328, %v1534
        %v6644 = vadd.f32 %v6331, %v6612
        %v6645 = vadd.f32 %v6333, %v6613
        %v6646 = vadd.f32 %v6336, %v6614
        %v6647 = vadd.f32 %v6338, %v6615
        %v6648 = vadd.f32 %v6341, %v6616
        %v6649 = vadd.f32 %v6343, %v6617
        %v6650 = vadd.f32 %v6346, %v6618
        %v6651 = vadd.f32 %v6348, %v6619
        %v6652 = vadd.f32 %v6351, %v6620
        %v6653 = vadd.f32 %v6353, %v6621
        %v6654 = vadd.f32 %v6356, %v6622
        %v6655 = vadd.f32 %v6358, %v6623
        %v6656 = vadd.f32 %v6361, %v6624
        %v6657 = vadd.f32 %v6363, %v6625
        %v6658 = vadd.f32 %v6366, %v6626
        %v6659 = vadd.f32 %v6368, %v6627
        %v6660 = vadd.f32 %v6371, %v6628
        %v6661 = vadd.f32 %v6373, %v6629
        %v6662 = vadd.f32 %v6376, %v6630
        %v6663 = vadd.f32 %v6378, %v6631
        %v6664 = vadd.f32 %v6381, %v6632
        %v6665 = vadd.f32 %v6383, %v6633
        %v6666 = vadd.f32 %v6386, %v6634
        %v6667 = vadd.f32 %v6388, %v6635
        %v6668 = vadd.f32 %v6391, %v6636
        %v6669 = vadd.f32 %v6393, %v6637
        %v6670 = vadd.f32 %v6396, %v6638
        %v6671 = vadd.f32 %v6398, %v6639
        %v6672 = vadd.f32 %v6401, %v6640
        %v6673 = vadd.f32 %v6403, %v6641
        %6674 = vrot.lane.b32.xlu0 %v6237, 96
        %v6675 = vpop.permute.xlu0 %6674
        %6676 = vrot.lane.b32.xlu0 %v6239, 96
        %v6677 = vpop.permute.xlu0 %6676
        %6678 = vrot.lane.b32.xlu0 %v6242, 96
        %v6679 = vpop.permute.xlu0 %6678
        %6680 = vrot.lane.b32.xlu0 %v6244, 96
        %v6681 = vpop.permute.xlu0 %6680
        %6682 = vrot.lane.b32.xlu0 %v6247, 96
        %v6683 = vpop.permute.xlu0 %6682
        %6684 = vrot.lane.b32.xlu0 %v6249, 96
        %v6685 = vpop.permute.xlu0 %6684
        %6686 = vrot.lane.b32.xlu0 %v6252, 96
        %v6687 = vpop.permute.xlu0 %6686
        %6688 = vrot.lane.b32.xlu0 %v6254, 96
        %v6689 = vpop.permute.xlu0 %6688
        %6690 = vrot.lane.b32.xlu0 %v6257, 96
        %v6691 = vpop.permute.xlu0 %6690
        %6692 = vrot.lane.b32.xlu0 %v6259, 96
        %v6693 = vpop.permute.xlu0 %6692
        %6694 = vrot.lane.b32.xlu0 %v6262, 96
        %v6695 = vpop.permute.xlu0 %6694
        %6696 = vrot.lane.b32.xlu0 %v6264, 96
        %v6697 = vpop.permute.xlu0 %6696
        %6698 = vrot.lane.b32.xlu0 %v6267, 96
        %v6699 = vpop.permute.xlu0 %6698
        %6700 = vrot.lane.b32.xlu0 %v6269, 96
        %v6701 = vpop.permute.xlu0 %6700
        %6702 = vrot.lane.b32.xlu0 %v6272, 96
        %v6703 = vpop.permute.xlu0 %6702
        %6704 = vrot.lane.b32.xlu0 %v6274, 96
        %v6705 = vpop.permute.xlu0 %6704
        %6706 = vrot.lane.b32.xlu0 %v6277, 96
        %v6707 = vpop.permute.xlu0 %6706
        %6708 = vrot.lane.b32.xlu0 %v6279, 96
        %v6709 = vpop.permute.xlu0 %6708
        %6710 = vrot.lane.b32.xlu0 %v6282, 96
        %v6711 = vpop.permute.xlu0 %6710
        %6712 = vrot.lane.b32.xlu0 %v6284, 96
        %v6713 = vpop.permute.xlu0 %6712
        %6714 = vrot.lane.b32.xlu0 %v6287, 96
        %v6715 = vpop.permute.xlu0 %6714
        %6716 = vrot.lane.b32.xlu0 %v6289, 96
        %v6717 = vpop.permute.xlu0 %6716
        %6718 = vrot.lane.b32.xlu0 %v6292, 96
        %v6719 = vpop.permute.xlu0 %6718
        %6720 = vrot.lane.b32.xlu0 %v6294, 96
        %v6721 = vpop.permute.xlu0 %6720
        %6722 = vrot.lane.b32.xlu0 %v6297, 96
        %v6723 = vpop.permute.xlu0 %6722
        %6724 = vrot.lane.b32.xlu0 %v6299, 96
        %v6725 = vpop.permute.xlu0 %6724
        %6726 = vrot.lane.b32.xlu0 %v6302, 96
        %v6727 = vpop.permute.xlu0 %6726
        %6728 = vrot.lane.b32.xlu0 %v6304, 96
        %v6729 = vpop.permute.xlu0 %6728
        %6730 = vrot.lane.b32.xlu0 %v6307, 96
        %v6731 = vpop.permute.xlu0 %6730
        %6732 = vrot.lane.b32.xlu0 %v6309, 96
        %v6733 = vpop.permute.xlu0 %6732
        %v6764 = vadd.f32 %v6642, 0.0
        %v6765 = vadd.f32 %v6643, 0.0
        %v6766 = vadd.f32 %v6644, %v6675
        %v6767 = vadd.f32 %v6645, %v6677
        %v6768 = vadd.f32 %v6646, %v6679
        %v6769 = vadd.f32 %v6647, %v6681
        %v6770 = vadd.f32 %v6648, %v6683
        %v6771 = vadd.f32 %v6649, %v6685
        %v6772 = vadd.f32 %v6650, %v6687
        %v6773 = vadd.f32 %v6651, %v6689
        %v6774 = vadd.f32 %v6652, %v6691
        %v6775 = vadd.f32 %v6653, %v6693
        %v6776 = vadd.f32 %v6654, %v6695
        %v6777 = vadd.f32 %v6655, %v6697
        %v6778 = vadd.f32 %v6656, %v6699
        %v6779 = vadd.f32 %v6657, %v6701
        %v6780 = vadd.f32 %v6658, %v6703
        %v6781 = vadd.f32 %v6659, %v6705
        %v6782 = vadd.f32 %v6660, %v6707
        %v6783 = vadd.f32 %v6661, %v6709
        %v6784 = vadd.f32 %v6662, %v6711
        %v6785 = vadd.f32 %v6663, %v6713
        %v6786 = vadd.f32 %v6664, %v6715
        %v6787 = vadd.f32 %v6665, %v6717
        %v6788 = vadd.f32 %v6666, %v6719
        %v6789 = vadd.f32 %v6667, %v6721
        %v6790 = vadd.f32 %v6668, %v6723
        %v6791 = vadd.f32 %v6669, %v6725
        %v6792 = vadd.f32 %v6670, %v6727
        %v6793 = vadd.f32 %v6671, %v6729
        %v6794 = vadd.f32 %v6672, %v6731
        %v6795 = vadd.f32 %v6673, %v6733
        %v6797 = vrot.slane %v6237, 1
        %v6798 = vrot.slane %v6239, 1
        %v6799 = vsel %vm1720, %v6797, %v6798
        %v6800 = vrot.slane %v6242, 1
        %v6801 = vsel %vm1720, %v6798, %v6800
        %v6802 = vrot.slane %v6244, 1
        %v6803 = vsel %vm1720, %v6800, %v6802
        %v6804 = vrot.slane %v6247, 1
        %v6805 = vsel %vm1720, %v6802, %v6804
        %v6806 = vrot.slane %v6249, 1
        %v6807 = vsel %vm1720, %v6804, %v6806
        %v6808 = vrot.slane %v6252, 1
        %v6809 = vsel %vm1720, %v6806, %v6808
        %v6810 = vrot.slane %v6254, 1
        %v6811 = vsel %vm1720, %v6808, %v6810
        %v6812 = vrot.slane %v6257, 1
        %v6813 = vsel %vm1720, %v6810, %v6812
        %v6814 = vrot.slane %v6259, 1
        %v6815 = vsel %vm1720, %v6812, %v6814
        %v6816 = vrot.slane %v6262, 1
        %v6817 = vsel %vm1720, %v6814, %v6816
        %v6818 = vrot.slane %v6264, 1
        %v6819 = vsel %vm1720, %v6816, %v6818
        %v6820 = vrot.slane %v6267, 1
        %v6821 = vsel %vm1720, %v6818, %v6820
        %v6822 = vrot.slane %v6269, 1
        %v6823 = vsel %vm1720, %v6820, %v6822
        %v6824 = vrot.slane %v6272, 1
        %v6825 = vsel %vm1720, %v6822, %v6824
        %v6826 = vrot.slane %v6274, 1
        %v6827 = vsel %vm1720, %v6824, %v6826
        %v6828 = vrot.slane %v6277, 1
        %v6829 = vsel %vm1720, %v6826, %v6828
        %v6830 = vrot.slane %v6279, 1
        %v6831 = vsel %vm1720, %v6828, %v6830
        %v6832 = vrot.slane %v6282, 1
        %v6833 = vsel %vm1720, %v6830, %v6832
        %v6834 = vrot.slane %v6284, 1
        %v6835 = vsel %vm1720, %v6832, %v6834
        %v6836 = vrot.slane %v6287, 1
        %v6837 = vsel %vm1720, %v6834, %v6836
        %v6838 = vrot.slane %v6289, 1
        %v6839 = vsel %vm1720, %v6836, %v6838
        %v6840 = vrot.slane %v6292, 1
        %v6841 = vsel %vm1720, %v6838, %v6840
        %v6842 = vrot.slane %v6294, 1
        %v6843 = vsel %vm1720, %v6840, %v6842
        %v6844 = vrot.slane %v6297, 1
        %v6845 = vsel %vm1720, %v6842, %v6844
        %v6846 = vrot.slane %v6299, 1
        %v6847 = vsel %vm1720, %v6844, %v6846
        %v6848 = vrot.slane %v6302, 1
        %v6849 = vsel %vm1720, %v6846, %v6848
        %v6850 = vrot.slane %v6304, 1
        %v6851 = vsel %vm1720, %v6848, %v6850
        %v6852 = vrot.slane %v6307, 1
        %v6853 = vsel %vm1720, %v6850, %v6852
        %v6854 = vrot.slane %v6309, 1
        %v6855 = vsel %vm1720, %v6852, %v6854
        %v6856 = vrot.slane %v6312, 1
        %v6857 = vsel %vm1720, %v6854, %v6856
        %6858 = vrot.lane.b32.xlu0 %v6797, 64
        %v6859 = vpop.permute.xlu0 %6858
        %6860 = vrot.lane.b32.xlu0 %v6799, 64
        %v6861 = vpop.permute.xlu0 %6860
        %6862 = vrot.lane.b32.xlu0 %v6801, 64
        %v6863 = vpop.permute.xlu0 %6862
        %6864 = vrot.lane.b32.xlu0 %v6803, 64
        %v6865 = vpop.permute.xlu0 %6864
        %6866 = vrot.lane.b32.xlu0 %v6805, 64
        %v6867 = vpop.permute.xlu0 %6866
        %6868 = vrot.lane.b32.xlu0 %v6807, 64
        %v6869 = vpop.permute.xlu0 %6868
        %6870 = vrot.lane.b32.xlu0 %v6809, 64
        %v6871 = vpop.permute.xlu0 %6870
        %6872 = vrot.lane.b32.xlu0 %v6811, 64
        %v6873 = vpop.permute.xlu0 %6872
        %6874 = vrot.lane.b32.xlu0 %v6813, 64
        %v6875 = vpop.permute.xlu0 %6874
        %6876 = vrot.lane.b32.xlu0 %v6815, 64
        %v6877 = vpop.permute.xlu0 %6876
        %6878 = vrot.lane.b32.xlu0 %v6817, 64
        %v6879 = vpop.permute.xlu0 %6878
        %6880 = vrot.lane.b32.xlu0 %v6819, 64
        %v6881 = vpop.permute.xlu0 %6880
        %6882 = vrot.lane.b32.xlu0 %v6821, 64
        %v6883 = vpop.permute.xlu0 %6882
        %6884 = vrot.lane.b32.xlu0 %v6823, 64
        %v6885 = vpop.permute.xlu0 %6884
        %6886 = vrot.lane.b32.xlu0 %v6825, 64
        %v6887 = vpop.permute.xlu0 %6886
        %6888 = vrot.lane.b32.xlu0 %v6827, 64
        %v6889 = vpop.permute.xlu0 %6888
        %6890 = vrot.lane.b32.xlu0 %v6829, 64
        %v6891 = vpop.permute.xlu0 %6890
        %6892 = vrot.lane.b32.xlu0 %v6831, 64
        %v6893 = vpop.permute.xlu0 %6892
        %6894 = vrot.lane.b32.xlu0 %v6833, 64
        %v6895 = vpop.permute.xlu0 %6894
        %6896 = vrot.lane.b32.xlu0 %v6835, 64
        %v6897 = vpop.permute.xlu0 %6896
        %6898 = vrot.lane.b32.xlu0 %v6837, 64
        %v6899 = vpop.permute.xlu0 %6898
        %6900 = vrot.lane.b32.xlu0 %v6839, 64
        %v6901 = vpop.permute.xlu0 %6900
        %6902 = vrot.lane.b32.xlu0 %v6841, 64
        %v6903 = vpop.permute.xlu0 %6902
        %6904 = vrot.lane.b32.xlu0 %v6843, 64
        %v6905 = vpop.permute.xlu0 %6904
        %6906 = vrot.lane.b32.xlu0 %v6845, 64
        %v6907 = vpop.permute.xlu0 %6906
        %6908 = vrot.lane.b32.xlu0 %v6847, 64
        %v6909 = vpop.permute.xlu0 %6908
        %6910 = vrot.lane.b32.xlu0 %v6849, 64
        %v6911 = vpop.permute.xlu0 %6910
        %6912 = vrot.lane.b32.xlu0 %v6851, 64
        %v6913 = vpop.permute.xlu0 %6912
        %6914 = vrot.lane.b32.xlu0 %v6853, 64
        %v6915 = vpop.permute.xlu0 %6914
        %6916 = vrot.lane.b32.xlu0 %v6855, 64
        %v6917 = vpop.permute.xlu0 %6916
        %6918 = vrot.lane.b32.xlu0 %v6857, 64
        %v6919 = vpop.permute.xlu0 %6918
        %v6951 = vsel %vm1720, 0.0, %v6859
        %v6952 = vmul.f32 %v6951, %v476
        %v6953 = vmul.f32 %v6861, %v477
        %v6954 = vmul.f32 %v6863, %v478
        %v6955 = vmul.f32 %v6865, %v479
        %v6956 = vmul.f32 %v6867, %v480
        %v6957 = vmul.f32 %v6869, %v481
        %v6958 = vmul.f32 %v6871, %v482
        %v6959 = vmul.f32 %v6873, %v483
        %v6960 = vmul.f32 %v6875, %v484
        %v6961 = vmul.f32 %v6877, %v485
        %v6962 = vmul.f32 %v6879, %v486
        %v6963 = vmul.f32 %v6881, %v487
        %v6964 = vmul.f32 %v6883, %v488
        %v6965 = vmul.f32 %v6885, %v489
        %v6966 = vmul.f32 %v6887, %v490
        %v6967 = vmul.f32 %v6889, %v491
        %v6968 = vmul.f32 %v6891, %v492
        %v6969 = vmul.f32 %v6893, %v493
        %v6970 = vmul.f32 %v6895, %v494
        %v6971 = vmul.f32 %v6897, %v495
        %v6972 = vmul.f32 %v6899, %v496
        %v6973 = vmul.f32 %v6901, %v497
        %v6974 = vmul.f32 %v6903, %v498
        %v6975 = vmul.f32 %v6905, %v499
        %v6976 = vmul.f32 %v6907, %v500
        %v6977 = vmul.f32 %v6909, %v501
        %v6978 = vmul.f32 %v6911, %v502
        %v6979 = vmul.f32 %v6913, %v503
        %v6980 = vmul.f32 %v6915, %v504
        %v6981 = vmul.f32 %v6917, %v505
        %v6982 = vmul.f32 %v6919, %v506
        %v6983 = vadd.f32 %v6764, %v1876
        %v6984 = vadd.f32 %v6765, %v6952
        %v6985 = vadd.f32 %v6766, %v6953
        %v6986 = vadd.f32 %v6767, %v6954
        %v6987 = vadd.f32 %v6768, %v6955
        %v6988 = vadd.f32 %v6769, %v6956
        %v6989 = vadd.f32 %v6770, %v6957
        %v6990 = vadd.f32 %v6771, %v6958
        %v6991 = vadd.f32 %v6772, %v6959
        %v6992 = vadd.f32 %v6773, %v6960
        %v6993 = vadd.f32 %v6774, %v6961
        %v6994 = vadd.f32 %v6775, %v6962
        %v6995 = vadd.f32 %v6776, %v6963
        %v6996 = vadd.f32 %v6777, %v6964
        %v6997 = vadd.f32 %v6778, %v6965
        %v6998 = vadd.f32 %v6779, %v6966
        %v6999 = vadd.f32 %v6780, %v6967
        %v7000 = vadd.f32 %v6781, %v6968
        %v7001 = vadd.f32 %v6782, %v6969
        %v7002 = vadd.f32 %v6783, %v6970
        %v7003 = vadd.f32 %v6784, %v6971
        %v7004 = vadd.f32 %v6785, %v6972
        %v7005 = vadd.f32 %v6786, %v6973
        %v7006 = vadd.f32 %v6787, %v6974
        %v7007 = vadd.f32 %v6788, %v6975
        %v7008 = vadd.f32 %v6789, %v6976
        %v7009 = vadd.f32 %v6790, %v6977
        %v7010 = vadd.f32 %v6791, %v6978
        %v7011 = vadd.f32 %v6792, %v6979
        %v7012 = vadd.f32 %v6793, %v6980
        %v7013 = vadd.f32 %v6794, %v6981
        %v7014 = vadd.f32 %v6795, %v6982
        %v7016 = vrot.slane %v6312, 7
        %v7017 = vsel %vm1442, %v6579, %v7016
        %v7018 = vrot.slane %v6314, 7
        %v7019 = vsel %vm1442, %v7016, %v7018
        %7020 = vrot.lane.b32.xlu0 %v6522, 32
        %v7021 = vpop.permute.xlu0 %7020
        %7022 = vrot.lane.b32.xlu0 %v6524, 32
        %v7023 = vpop.permute.xlu0 %7022
        %7024 = vrot.lane.b32.xlu0 %v6526, 32
        %v7025 = vpop.permute.xlu0 %7024
        %7026 = vrot.lane.b32.xlu0 %v6528, 32
        %v7027 = vpop.permute.xlu0 %7026
        %7028 = vrot.lane.b32.xlu0 %v6530, 32
        %v7029 = vpop.permute.xlu0 %7028
        %7030 = vrot.lane.b32.xlu0 %v6532, 32
        %v7031 = vpop.permute.xlu0 %7030
        %7032 = vrot.lane.b32.xlu0 %v6534, 32
        %v7033 = vpop.permute.xlu0 %7032
        %7034 = vrot.lane.b32.xlu0 %v6536, 32
        %v7035 = vpop.permute.xlu0 %7034
        %7036 = vrot.lane.b32.xlu0 %v6538, 32
        %v7037 = vpop.permute.xlu0 %7036
        %7038 = vrot.lane.b32.xlu0 %v6540, 32
        %v7039 = vpop.permute.xlu0 %7038
        %7040 = vrot.lane.b32.xlu0 %v6542, 32
        %v7041 = vpop.permute.xlu0 %7040
        %7042 = vrot.lane.b32.xlu0 %v6544, 32
        %v7043 = vpop.permute.xlu0 %7042
        %7044 = vrot.lane.b32.xlu0 %v6546, 32
        %v7045 = vpop.permute.xlu0 %7044
        %7046 = vrot.lane.b32.xlu0 %v6548, 32
        %v7047 = vpop.permute.xlu0 %7046
        %7048 = vrot.lane.b32.xlu0 %v6550, 32
        %v7049 = vpop.permute.xlu0 %7048
        %7050 = vrot.lane.b32.xlu0 %v6552, 32
        %v7051 = vpop.permute.xlu0 %7050
        %7052 = vrot.lane.b32.xlu0 %v6554, 32
        %v7053 = vpop.permute.xlu0 %7052
        %7054 = vrot.lane.b32.xlu0 %v6556, 32
        %v7055 = vpop.permute.xlu0 %7054
        %7056 = vrot.lane.b32.xlu0 %v6558, 32
        %v7057 = vpop.permute.xlu0 %7056
        %7058 = vrot.lane.b32.xlu0 %v6560, 32
        %v7059 = vpop.permute.xlu0 %7058
        %7060 = vrot.lane.b32.xlu0 %v6562, 32
        %v7061 = vpop.permute.xlu0 %7060
        %7062 = vrot.lane.b32.xlu0 %v6564, 32
        %v7063 = vpop.permute.xlu0 %7062
        %7064 = vrot.lane.b32.xlu0 %v6566, 32
        %v7065 = vpop.permute.xlu0 %7064
        %7066 = vrot.lane.b32.xlu0 %v6568, 32
        %v7067 = vpop.permute.xlu0 %7066
        %7068 = vrot.lane.b32.xlu0 %v6570, 32
        %v7069 = vpop.permute.xlu0 %7068
        %7070 = vrot.lane.b32.xlu0 %v6572, 32
        %v7071 = vpop.permute.xlu0 %7070
        %7072 = vrot.lane.b32.xlu0 %v6574, 32
        %v7073 = vpop.permute.xlu0 %7072
        %7074 = vrot.lane.b32.xlu0 %v6576, 32
        %v7075 = vpop.permute.xlu0 %7074
        %7076 = vrot.lane.b32.xlu0 %v6578, 32
        %v7077 = vpop.permute.xlu0 %7076
        %7078 = vrot.lane.b32.xlu0 %v6580, 32
        %v7079 = vpop.permute.xlu0 %7078
        %7080 = vrot.lane.b32.xlu0 %v7017, 32
        %v7081 = vpop.permute.xlu0 %7080
        %7082 = vrot.lane.b32.xlu0 %v7019, 32
        %v7083 = vpop.permute.xlu0 %7082
        %v7116 = vsel %vm1442, 0.0, %v7021
        %v7117 = vmul.f32 %v7116, %v379
        %v7118 = vmul.f32 %v7023, %v380
        %v7119 = vmul.f32 %v7025, %v381
        %v7120 = vmul.f32 %v7027, %v382
        %v7121 = vmul.f32 %v7029, %v383
        %v7122 = vmul.f32 %v7031, %v384
        %v7123 = vmul.f32 %v7033, %v385
        %v7124 = vmul.f32 %v7035, %v386
        %v7125 = vmul.f32 %v7037, %v387
        %v7126 = vmul.f32 %v7039, %v388
        %v7127 = vmul.f32 %v7041, %v389
        %v7128 = vmul.f32 %v7043, %v390
        %v7129 = vmul.f32 %v7045, %v391
        %v7130 = vmul.f32 %v7047, %v392
        %v7131 = vmul.f32 %v7049, %v393
        %v7132 = vmul.f32 %v7051, %v394
        %v7133 = vmul.f32 %v7053, %v395
        %v7134 = vmul.f32 %v7055, %v396
        %v7135 = vmul.f32 %v7057, %v397
        %v7136 = vmul.f32 %v7059, %v398
        %v7137 = vmul.f32 %v7061, %v399
        %v7138 = vmul.f32 %v7063, %v400
        %v7139 = vmul.f32 %v7065, %v401
        %v7140 = vmul.f32 %v7067, %v402
        %v7141 = vmul.f32 %v7069, %v403
        %v7142 = vmul.f32 %v7071, %v404
        %v7143 = vmul.f32 %v7073, %v405
        %v7144 = vmul.f32 %v7075, %v406
        %v7145 = vmul.f32 %v7077, %v407
        %v7146 = vmul.f32 %v7079, %v408
        %v7147 = vmul.f32 %v7081, %v409
        %v7148 = vmul.f32 %v7083, %v410
        %v7149 = vadd.f32 %v6983, %v7117
        %v7150 = vadd.f32 %v6984, %v7118
        %v7151 = vadd.f32 %v6985, %v7119
        %v7152 = vadd.f32 %v6986, %v7120
        %v7153 = vadd.f32 %v6987, %v7121
        %v7154 = vadd.f32 %v6988, %v7122
        %v7155 = vadd.f32 %v6989, %v7123
        %v7156 = vadd.f32 %v6990, %v7124
        %v7157 = vadd.f32 %v6991, %v7125
        %v7158 = vadd.f32 %v6992, %v7126
        %v7159 = vadd.f32 %v6993, %v7127
        %v7160 = vadd.f32 %v6994, %v7128
        %v7161 = vadd.f32 %v6995, %v7129
        %v7162 = vadd.f32 %v6996, %v7130
        %v7163 = vadd.f32 %v6997, %v7131
        %v7164 = vadd.f32 %v6998, %v7132
        %v7165 = vadd.f32 %v6999, %v7133
        %v7166 = vadd.f32 %v7000, %v7134
        %v7167 = vadd.f32 %v7001, %v7135
        %v7168 = vadd.f32 %v7002, %v7136
        %v7169 = vadd.f32 %v7003, %v7137
        %v7170 = vadd.f32 %v7004, %v7138
        %v7171 = vadd.f32 %v7005, %v7139
        %v7172 = vadd.f32 %v7006, %v7140
        %v7173 = vadd.f32 %v7007, %v7141
        %v7174 = vadd.f32 %v7008, %v7142
        %v7175 = vadd.f32 %v7009, %v7143
        %v7176 = vadd.f32 %v7010, %v7144
        %v7177 = vadd.f32 %v7011, %v7145
        %v7178 = vadd.f32 %v7012, %v7146
        %v7179 = vadd.f32 %v7013, %v7147
        %v7180 = vadd.f32 %v7014, %v7148
        %v7213 = vrot.slane %v6326, 1
        %v7214 = vrot.slane %v6328, 1
        %v7215 = vsel %vm1720, %v7213, %v7214
        %v7216 = vrot.slane %v6331, 1
        %v7217 = vsel %vm1720, %v7214, %v7216
        %v7218 = vrot.slane %v6333, 1
        %v7219 = vsel %vm1720, %v7216, %v7218
        %v7220 = vrot.slane %v6336, 1
        %v7221 = vsel %vm1720, %v7218, %v7220
        %v7222 = vrot.slane %v6338, 1
        %v7223 = vsel %vm1720, %v7220, %v7222
        %v7224 = vrot.slane %v6341, 1
        %v7225 = vsel %vm1720, %v7222, %v7224
        %v7226 = vrot.slane %v6343, 1
        %v7227 = vsel %vm1720, %v7224, %v7226
        %v7228 = vrot.slane %v6346, 1
        %v7229 = vsel %vm1720, %v7226, %v7228
        %v7230 = vrot.slane %v6348, 1
        %v7231 = vsel %vm1720, %v7228, %v7230
        %v7232 = vrot.slane %v6351, 1
        %v7233 = vsel %vm1720, %v7230, %v7232
        %v7234 = vrot.slane %v6353, 1
        %v7235 = vsel %vm1720, %v7232, %v7234
        %v7236 = vrot.slane %v6356, 1
        %v7237 = vsel %vm1720, %v7234, %v7236
        %v7238 = vrot.slane %v6358, 1
        %v7239 = vsel %vm1720, %v7236, %v7238
        %v7240 = vrot.slane %v6361, 1
        %v7241 = vsel %vm1720, %v7238, %v7240
        %v7242 = vrot.slane %v6363, 1
        %v7243 = vsel %vm1720, %v7240, %v7242
        %v7244 = vrot.slane %v6366, 1
        %v7245 = vsel %vm1720, %v7242, %v7244
        %v7246 = vrot.slane %v6368, 1
        %v7247 = vsel %vm1720, %v7244, %v7246
        %v7248 = vrot.slane %v6371, 1
        %v7249 = vsel %vm1720, %v7246, %v7248
        %v7250 = vrot.slane %v6373, 1
        %v7251 = vsel %vm1720, %v7248, %v7250
        %v7252 = vrot.slane %v6376, 1
        %v7253 = vsel %vm1720, %v7250, %v7252
        %v7254 = vrot.slane %v6378, 1
        %v7255 = vsel %vm1720, %v7252, %v7254
        %v7256 = vrot.slane %v6381, 1
        %v7257 = vsel %vm1720, %v7254, %v7256
        %v7258 = vrot.slane %v6383, 1
        %v7259 = vsel %vm1720, %v7256, %v7258
        %v7260 = vrot.slane %v6386, 1
        %v7261 = vsel %vm1720, %v7258, %v7260
        %v7262 = vrot.slane %v6388, 1
        %v7263 = vsel %vm1720, %v7260, %v7262
        %v7264 = vrot.slane %v6391, 1
        %v7265 = vsel %vm1720, %v7262, %v7264
        %v7266 = vrot.slane %v6393, 1
        %v7267 = vsel %vm1720, %v7264, %v7266
        %v7268 = vrot.slane %v6396, 1
        %v7269 = vsel %vm1720, %v7266, %v7268
        %v7270 = vrot.slane %v6398, 1
        %v7271 = vsel %vm1720, %v7268, %v7270
        %v7272 = vrot.slane %v6401, 1
        %v7273 = vsel %vm1720, %v7270, %v7272
        %v7274 = vrot.slane %v6403, 1
        %v7275 = vsel %vm1720, %v7272, %v7274
        %v7308 = vsel %vm1720, %v7274, 0.0
        %v7309 = vmul.f32 %v7215, %v475
        %v7310 = vmul.f32 %v7217, %v476
        %v7311 = vmul.f32 %v7219, %v477
        %v7312 = vmul.f32 %v7221, %v478
        %v7313 = vmul.f32 %v7223, %v479
        %v7314 = vmul.f32 %v7225, %v480
        %v7315 = vmul.f32 %v7227, %v481
        %v7316 = vmul.f32 %v7229, %v482
        %v7317 = vmul.f32 %v7231, %v483
        %v7318 = vmul.f32 %v7233, %v484
        %v7319 = vmul.f32 %v7235, %v485
        %v7320 = vmul.f32 %v7237, %v486
        %v7321 = vmul.f32 %v7239, %v487
        %v7322 = vmul.f32 %v7241, %v488
        %v7323 = vmul.f32 %v7243, %v489
        %v7324 = vmul.f32 %v7245, %v490
        %v7325 = vmul.f32 %v7247, %v491
        %v7326 = vmul.f32 %v7249, %v492
        %v7327 = vmul.f32 %v7251, %v493
        %v7328 = vmul.f32 %v7253, %v494
        %v7329 = vmul.f32 %v7255, %v495
        %v7330 = vmul.f32 %v7257, %v496
        %v7331 = vmul.f32 %v7259, %v497
        %v7332 = vmul.f32 %v7261, %v498
        %v7333 = vmul.f32 %v7263, %v499
        %v7334 = vmul.f32 %v7265, %v500
        %v7335 = vmul.f32 %v7267, %v501
        %v7336 = vmul.f32 %v7269, %v502
        %v7337 = vmul.f32 %v7271, %v503
        %v7338 = vmul.f32 %v7273, %v504
        %v7339 = vmul.f32 %v7275, %v505
        %v7340 = vmul.f32 %v7308, %v506
        %7373 = vrot.lane.b32.xlu0 %v7309, 96
        %v7374 = vpop.permute.xlu0 %7373
        %7375 = vrot.lane.b32.xlu0 %v7310, 96
        %v7376 = vpop.permute.xlu0 %7375
        %7377 = vrot.lane.b32.xlu0 %v7311, 96
        %v7378 = vpop.permute.xlu0 %7377
        %7379 = vrot.lane.b32.xlu0 %v7312, 96
        %v7380 = vpop.permute.xlu0 %7379
        %7381 = vrot.lane.b32.xlu0 %v7313, 96
        %v7382 = vpop.permute.xlu0 %7381
        %7383 = vrot.lane.b32.xlu0 %v7314, 96
        %v7384 = vpop.permute.xlu0 %7383
        %7385 = vrot.lane.b32.xlu0 %v7315, 96
        %v7386 = vpop.permute.xlu0 %7385
        %7387 = vrot.lane.b32.xlu0 %v7316, 96
        %v7388 = vpop.permute.xlu0 %7387
        %7389 = vrot.lane.b32.xlu0 %v7317, 96
        %v7390 = vpop.permute.xlu0 %7389
        %7391 = vrot.lane.b32.xlu0 %v7318, 96
        %v7392 = vpop.permute.xlu0 %7391
        %7393 = vrot.lane.b32.xlu0 %v7319, 96
        %v7394 = vpop.permute.xlu0 %7393
        %7395 = vrot.lane.b32.xlu0 %v7320, 96
        %v7396 = vpop.permute.xlu0 %7395
        %7397 = vrot.lane.b32.xlu0 %v7321, 96
        %v7398 = vpop.permute.xlu0 %7397
        %7399 = vrot.lane.b32.xlu0 %v7322, 96
        %v7400 = vpop.permute.xlu0 %7399
        %7401 = vrot.lane.b32.xlu0 %v7323, 96
        %v7402 = vpop.permute.xlu0 %7401
        %7403 = vrot.lane.b32.xlu0 %v7324, 96
        %v7404 = vpop.permute.xlu0 %7403
        %7405 = vrot.lane.b32.xlu0 %v7325, 96
        %v7406 = vpop.permute.xlu0 %7405
        %7407 = vrot.lane.b32.xlu0 %v7326, 96
        %v7408 = vpop.permute.xlu0 %7407
        %7409 = vrot.lane.b32.xlu0 %v7327, 96
        %v7410 = vpop.permute.xlu0 %7409
        %7411 = vrot.lane.b32.xlu0 %v7328, 96
        %v7412 = vpop.permute.xlu0 %7411
        %7413 = vrot.lane.b32.xlu0 %v7329, 96
        %v7414 = vpop.permute.xlu0 %7413
        %7415 = vrot.lane.b32.xlu0 %v7330, 96
        %v7416 = vpop.permute.xlu0 %7415
        %7417 = vrot.lane.b32.xlu0 %v7331, 96
        %v7418 = vpop.permute.xlu0 %7417
        %7419 = vrot.lane.b32.xlu0 %v7332, 96
        %v7420 = vpop.permute.xlu0 %7419
        %7421 = vrot.lane.b32.xlu0 %v7333, 96
        %v7422 = vpop.permute.xlu0 %7421
        %7423 = vrot.lane.b32.xlu0 %v7334, 96
        %v7424 = vpop.permute.xlu0 %7423
        %7425 = vrot.lane.b32.xlu0 %v7335, 96
        %v7426 = vpop.permute.xlu0 %7425
        %7427 = vrot.lane.b32.xlu0 %v7336, 96
        %v7428 = vpop.permute.xlu0 %7427
        %7429 = vrot.lane.b32.xlu0 %v7337, 96
        %v7430 = vpop.permute.xlu0 %7429
        %7431 = vrot.lane.b32.xlu0 %v7338, 96
        %v7432 = vpop.permute.xlu0 %7431
        %7433 = vrot.lane.b32.xlu0 %v7339, 96
        %v7434 = vpop.permute.xlu0 %7433
        %7435 = vrot.lane.b32.xlu0 %v7340, 96
        %v7436 = vpop.permute.xlu0 %7435
        %v7469 = vadd.f32 %v7149, %v7374
        %v7470 = vadd.f32 %v7150, %v7376
        %v7471 = vadd.f32 %v7151, %v7378
        %v7472 = vadd.f32 %v7152, %v7380
        %v7473 = vadd.f32 %v7153, %v7382
        %v7474 = vadd.f32 %v7154, %v7384
        %v7475 = vadd.f32 %v7155, %v7386
        %v7476 = vadd.f32 %v7156, %v7388
        %v7477 = vadd.f32 %v7157, %v7390
        %v7478 = vadd.f32 %v7158, %v7392
        %v7479 = vadd.f32 %v7159, %v7394
        %v7480 = vadd.f32 %v7160, %v7396
        %v7481 = vadd.f32 %v7161, %v7398
        %v7482 = vadd.f32 %v7162, %v7400
        %v7483 = vadd.f32 %v7163, %v7402
        %v7484 = vadd.f32 %v7164, %v7404
        %v7485 = vadd.f32 %v7165, %v7406
        %v7486 = vadd.f32 %v7166, %v7408
        %v7487 = vadd.f32 %v7167, %v7410
        %v7488 = vadd.f32 %v7168, %v7412
        %v7489 = vadd.f32 %v7169, %v7414
        %v7490 = vadd.f32 %v7170, %v7416
        %v7491 = vadd.f32 %v7171, %v7418
        %v7492 = vadd.f32 %v7172, %v7420
        %v7493 = vadd.f32 %v7173, %v7422
        %v7494 = vadd.f32 %v7174, %v7424
        %v7495 = vadd.f32 %v7175, %v7426
        %v7496 = vadd.f32 %v7176, %v7428
        %v7497 = vadd.f32 %v7177, %v7430
        %v7498 = vadd.f32 %v7178, %v7432
        %v7499 = vadd.f32 %v7179, %v7434
        %v7500 = vadd.f32 %v7180, %v7436
        %v7501 = vrot.slane %v6328, 7
        %v7502 = vrot.slane %v6331, 7
        %v7503 = vsel %vm1442, %v7501, %v7502
        %v7504 = vrot.slane %v6333, 7
        %v7505 = vsel %vm1442, %v7502, %v7504
        %v7506 = vrot.slane %v6336, 7
        %v7507 = vsel %vm1442, %v7504, %v7506
        %v7508 = vrot.slane %v6338, 7
        %v7509 = vsel %vm1442, %v7506, %v7508
        %v7510 = vrot.slane %v6341, 7
        %v7511 = vsel %vm1442, %v7508, %v7510
        %v7512 = vrot.slane %v6343, 7
        %v7513 = vsel %vm1442, %v7510, %v7512
        %v7514 = vrot.slane %v6346, 7
        %v7515 = vsel %vm1442, %v7512, %v7514
        %v7516 = vrot.slane %v6348, 7
        %v7517 = vsel %vm1442, %v7514, %v7516
        %v7518 = vrot.slane %v6351, 7
        %v7519 = vsel %vm1442, %v7516, %v7518
        %v7520 = vrot.slane %v6353, 7
        %v7521 = vsel %vm1442, %v7518, %v7520
        %v7522 = vrot.slane %v6356, 7
        %v7523 = vsel %vm1442, %v7520, %v7522
        %v7524 = vrot.slane %v6358, 7
        %v7525 = vsel %vm1442, %v7522, %v7524
        %v7526 = vrot.slane %v6361, 7
        %v7527 = vsel %vm1442, %v7524, %v7526
        %v7528 = vrot.slane %v6363, 7
        %v7529 = vsel %vm1442, %v7526, %v7528
        %v7530 = vrot.slane %v6366, 7
        %v7531 = vsel %vm1442, %v7528, %v7530
        %v7532 = vrot.slane %v6368, 7
        %v7533 = vsel %vm1442, %v7530, %v7532
        %v7534 = vrot.slane %v6371, 7
        %v7535 = vsel %vm1442, %v7532, %v7534
        %v7536 = vrot.slane %v6373, 7
        %v7537 = vsel %vm1442, %v7534, %v7536
        %v7538 = vrot.slane %v6376, 7
        %v7539 = vsel %vm1442, %v7536, %v7538
        %v7540 = vrot.slane %v6378, 7
        %v7541 = vsel %vm1442, %v7538, %v7540
        %v7542 = vrot.slane %v6381, 7
        %v7543 = vsel %vm1442, %v7540, %v7542
        %v7544 = vrot.slane %v6383, 7
        %v7545 = vsel %vm1442, %v7542, %v7544
        %v7546 = vrot.slane %v6386, 7
        %v7547 = vsel %vm1442, %v7544, %v7546
        %v7548 = vrot.slane %v6388, 7
        %v7549 = vsel %vm1442, %v7546, %v7548
        %v7550 = vrot.slane %v6391, 7
        %v7551 = vsel %vm1442, %v7548, %v7550
        %v7552 = vrot.slane %v6393, 7
        %v7553 = vsel %vm1442, %v7550, %v7552
        %v7554 = vrot.slane %v6396, 7
        %v7555 = vsel %vm1442, %v7552, %v7554
        %v7556 = vrot.slane %v6398, 7
        %v7557 = vsel %vm1442, %v7554, %v7556
        %v7558 = vrot.slane %v6401, 7
        %v7559 = vsel %vm1442, %v7556, %v7558
        %v7560 = vrot.slane %v6403, 7
        %v7561 = vsel %vm1442, %v7558, %v7560
        %v7593 = vsel %vm1442, %v7560, 0.0
        %v7594 = vmul.f32 %v7503, %v379
        %v7595 = vmul.f32 %v7505, %v380
        %v7596 = vmul.f32 %v7507, %v381
        %v7597 = vmul.f32 %v7509, %v382
        %v7598 = vmul.f32 %v7511, %v383
        %v7599 = vmul.f32 %v7513, %v384
        %v7600 = vmul.f32 %v7515, %v385
        %v7601 = vmul.f32 %v7517, %v386
        %v7602 = vmul.f32 %v7519, %v387
        %v7603 = vmul.f32 %v7521, %v388
        %v7604 = vmul.f32 %v7523, %v389
        %v7605 = vmul.f32 %v7525, %v390
        %v7606 = vmul.f32 %v7527, %v391
        %v7607 = vmul.f32 %v7529, %v392
        %v7608 = vmul.f32 %v7531, %v393
        %v7609 = vmul.f32 %v7533, %v394
        %v7610 = vmul.f32 %v7535, %v395
        %v7611 = vmul.f32 %v7537, %v396
        %v7612 = vmul.f32 %v7539, %v397
        %v7613 = vmul.f32 %v7541, %v398
        %v7614 = vmul.f32 %v7543, %v399
        %v7615 = vmul.f32 %v7545, %v400
        %v7616 = vmul.f32 %v7547, %v401
        %v7617 = vmul.f32 %v7549, %v402
        %v7618 = vmul.f32 %v7551, %v403
        %v7619 = vmul.f32 %v7553, %v404
        %v7620 = vmul.f32 %v7555, %v405
        %v7621 = vmul.f32 %v7557, %v406
        %v7622 = vmul.f32 %v7559, %v407
        %v7623 = vmul.f32 %v7561, %v408
        %v7624 = vmul.f32 %v7593, %v409
        %7656 = vrot.lane.b32.xlu0 %v7594, 64
        %v7657 = vpop.permute.xlu0 %7656
        %7658 = vrot.lane.b32.xlu0 %v7595, 64
        %v7659 = vpop.permute.xlu0 %7658
        %7660 = vrot.lane.b32.xlu0 %v7596, 64
        %v7661 = vpop.permute.xlu0 %7660
        %7662 = vrot.lane.b32.xlu0 %v7597, 64
        %v7663 = vpop.permute.xlu0 %7662
        %7664 = vrot.lane.b32.xlu0 %v7598, 64
        %v7665 = vpop.permute.xlu0 %7664
        %7666 = vrot.lane.b32.xlu0 %v7599, 64
        %v7667 = vpop.permute.xlu0 %7666
        %7668 = vrot.lane.b32.xlu0 %v7600, 64
        %v7669 = vpop.permute.xlu0 %7668
        %7670 = vrot.lane.b32.xlu0 %v7601, 64
        %v7671 = vpop.permute.xlu0 %7670
        %7672 = vrot.lane.b32.xlu0 %v7602, 64
        %v7673 = vpop.permute.xlu0 %7672
        %7674 = vrot.lane.b32.xlu0 %v7603, 64
        %v7675 = vpop.permute.xlu0 %7674
        %7676 = vrot.lane.b32.xlu0 %v7604, 64
        %v7677 = vpop.permute.xlu0 %7676
        %7678 = vrot.lane.b32.xlu0 %v7605, 64
        %v7679 = vpop.permute.xlu0 %7678
        %7680 = vrot.lane.b32.xlu0 %v7606, 64
        %v7681 = vpop.permute.xlu0 %7680
        %7682 = vrot.lane.b32.xlu0 %v7607, 64
        %v7683 = vpop.permute.xlu0 %7682
        %7684 = vrot.lane.b32.xlu0 %v7608, 64
        %v7685 = vpop.permute.xlu0 %7684
        %7686 = vrot.lane.b32.xlu0 %v7609, 64
        %v7687 = vpop.permute.xlu0 %7686
        %7688 = vrot.lane.b32.xlu0 %v7610, 64
        %v7689 = vpop.permute.xlu0 %7688
        %7690 = vrot.lane.b32.xlu0 %v7611, 64
        %v7691 = vpop.permute.xlu0 %7690
        %7692 = vrot.lane.b32.xlu0 %v7612, 64
        %v7693 = vpop.permute.xlu0 %7692
        %7694 = vrot.lane.b32.xlu0 %v7613, 64
        %v7695 = vpop.permute.xlu0 %7694
        %7696 = vrot.lane.b32.xlu0 %v7614, 64
        %v7697 = vpop.permute.xlu0 %7696
        %7698 = vrot.lane.b32.xlu0 %v7615, 64
        %v7699 = vpop.permute.xlu0 %7698
        %7700 = vrot.lane.b32.xlu0 %v7616, 64
        %v7701 = vpop.permute.xlu0 %7700
        %7702 = vrot.lane.b32.xlu0 %v7617, 64
        %v7703 = vpop.permute.xlu0 %7702
        %7704 = vrot.lane.b32.xlu0 %v7618, 64
        %v7705 = vpop.permute.xlu0 %7704
        %7706 = vrot.lane.b32.xlu0 %v7619, 64
        %v7707 = vpop.permute.xlu0 %7706
        %7708 = vrot.lane.b32.xlu0 %v7620, 64
        %v7709 = vpop.permute.xlu0 %7708
        %7710 = vrot.lane.b32.xlu0 %v7621, 64
        %v7711 = vpop.permute.xlu0 %7710
        %7712 = vrot.lane.b32.xlu0 %v7622, 64
        %v7713 = vpop.permute.xlu0 %7712
        %7714 = vrot.lane.b32.xlu0 %v7623, 64
        %v7715 = vpop.permute.xlu0 %7714
        %7716 = vrot.lane.b32.xlu0 %v7624, 64
        %v7717 = vpop.permute.xlu0 %7716
        %v7749 = vadd.f32 %v7469, %v7657
        %v7750 = vadd.f32 %v7470, %v7659
        %v7751 = vadd.f32 %v7471, %v7661
        %v7752 = vadd.f32 %v7472, %v7663
        %v7753 = vadd.f32 %v7473, %v7665
        %v7754 = vadd.f32 %v7474, %v7667
        %v7755 = vadd.f32 %v7475, %v7669
        %v7756 = vadd.f32 %v7476, %v7671
        %v7757 = vadd.f32 %v7477, %v7673
        %v7758 = vadd.f32 %v7478, %v7675
        %v7759 = vadd.f32 %v7479, %v7677
        %v7760 = vadd.f32 %v7480, %v7679
        %v7761 = vadd.f32 %v7481, %v7681
        %v7762 = vadd.f32 %v7482, %v7683
        %v7763 = vadd.f32 %v7483, %v7685
        %v7764 = vadd.f32 %v7484, %v7687
        %v7765 = vadd.f32 %v7485, %v7689
        %v7766 = vadd.f32 %v7486, %v7691
        %v7767 = vadd.f32 %v7487, %v7693
        %v7768 = vadd.f32 %v7488, %v7695
        %v7769 = vadd.f32 %v7489, %v7697
        %v7770 = vadd.f32 %v7490, %v7699
        %v7771 = vadd.f32 %v7491, %v7701
        %v7772 = vadd.f32 %v7492, %v7703
        %v7773 = vadd.f32 %v7493, %v7705
        %v7774 = vadd.f32 %v7494, %v7707
        %v7775 = vadd.f32 %v7495, %v7709
        %v7776 = vadd.f32 %v7496, %v7711
        %v7777 = vadd.f32 %v7497, %v7713
        %v7778 = vadd.f32 %v7498, %v7715
        %v7779 = vadd.f32 %v7499, %v7717
        %v7780 = vadd.f32 %v7500, %v2646
        %7781 = vrot.lane.b32.xlu0 %v6331, 32
        %v7782 = vpop.permute.xlu0 %7781
        %7783 = vrot.lane.b32.xlu0 %v6333, 32
        %v7784 = vpop.permute.xlu0 %7783
        %7785 = vrot.lane.b32.xlu0 %v6336, 32
        %v7786 = vpop.permute.xlu0 %7785
        %7787 = vrot.lane.b32.xlu0 %v6338, 32
        %v7788 = vpop.permute.xlu0 %7787
        %7789 = vrot.lane.b32.xlu0 %v6341, 32
        %v7790 = vpop.permute.xlu0 %7789
        %7791 = vrot.lane.b32.xlu0 %v6343, 32
        %v7792 = vpop.permute.xlu0 %7791
        %7793 = vrot.lane.b32.xlu0 %v6346, 32
        %v7794 = vpop.permute.xlu0 %7793
        %7795 = vrot.lane.b32.xlu0 %v6348, 32
        %v7796 = vpop.permute.xlu0 %7795
        %7797 = vrot.lane.b32.xlu0 %v6351, 32
        %v7798 = vpop.permute.xlu0 %7797
        %7799 = vrot.lane.b32.xlu0 %v6353, 32
        %v7800 = vpop.permute.xlu0 %7799
        %7801 = vrot.lane.b32.xlu0 %v6356, 32
        %v7802 = vpop.permute.xlu0 %7801
        %7803 = vrot.lane.b32.xlu0 %v6358, 32
        %v7804 = vpop.permute.xlu0 %7803
        %7805 = vrot.lane.b32.xlu0 %v6361, 32
        %v7806 = vpop.permute.xlu0 %7805
        %7807 = vrot.lane.b32.xlu0 %v6363, 32
        %v7808 = vpop.permute.xlu0 %7807
        %7809 = vrot.lane.b32.xlu0 %v6366, 32
        %v7810 = vpop.permute.xlu0 %7809
        %7811 = vrot.lane.b32.xlu0 %v6368, 32
        %v7812 = vpop.permute.xlu0 %7811
        %7813 = vrot.lane.b32.xlu0 %v6371, 32
        %v7814 = vpop.permute.xlu0 %7813
        %7815 = vrot.lane.b32.xlu0 %v6373, 32
        %v7816 = vpop.permute.xlu0 %7815
        %7817 = vrot.lane.b32.xlu0 %v6376, 32
        %v7818 = vpop.permute.xlu0 %7817
        %7819 = vrot.lane.b32.xlu0 %v6378, 32
        %v7820 = vpop.permute.xlu0 %7819
        %7821 = vrot.lane.b32.xlu0 %v6381, 32
        %v7822 = vpop.permute.xlu0 %7821
        %7823 = vrot.lane.b32.xlu0 %v6383, 32
        %v7824 = vpop.permute.xlu0 %7823
        %7825 = vrot.lane.b32.xlu0 %v6386, 32
        %v7826 = vpop.permute.xlu0 %7825
        %7827 = vrot.lane.b32.xlu0 %v6388, 32
        %v7828 = vpop.permute.xlu0 %7827
        %7829 = vrot.lane.b32.xlu0 %v6391, 32
        %v7830 = vpop.permute.xlu0 %7829
        %7831 = vrot.lane.b32.xlu0 %v6393, 32
        %v7832 = vpop.permute.xlu0 %7831
        %7833 = vrot.lane.b32.xlu0 %v6396, 32
        %v7834 = vpop.permute.xlu0 %7833
        %7835 = vrot.lane.b32.xlu0 %v6398, 32
        %v7836 = vpop.permute.xlu0 %7835
        %7837 = vrot.lane.b32.xlu0 %v6401, 32
        %v7838 = vpop.permute.xlu0 %7837
        %7839 = vrot.lane.b32.xlu0 %v6403, 32
        %v7840 = vpop.permute.xlu0 %7839
        %v7871 = vadd.f32 %v7749, %v7782
        %v7872 = vadd.f32 %v7750, %v7784
        %v7873 = vadd.f32 %v7751, %v7786
        %v7874 = vadd.f32 %v7752, %v7788
        %v7875 = vadd.f32 %v7753, %v7790
        %v7876 = vadd.f32 %v7754, %v7792
        %v7877 = vadd.f32 %v7755, %v7794
        %v7878 = vadd.f32 %v7756, %v7796
        %v7879 = vadd.f32 %v7757, %v7798
        %v7880 = vadd.f32 %v7758, %v7800
        %v7881 = vadd.f32 %v7759, %v7802
        %v7882 = vadd.f32 %v7760, %v7804
        %v7883 = vadd.f32 %v7761, %v7806
        %v7884 = vadd.f32 %v7762, %v7808
        %v7885 = vadd.f32 %v7763, %v7810
        %v7886 = vadd.f32 %v7764, %v7812
        %v7887 = vadd.f32 %v7765, %v7814
        %v7888 = vadd.f32 %v7766, %v7816
        %v7889 = vadd.f32 %v7767, %v7818
        %v7890 = vadd.f32 %v7768, %v7820
        %v7891 = vadd.f32 %v7769, %v7822
        %v7892 = vadd.f32 %v7770, %v7824
        %v7893 = vadd.f32 %v7771, %v7826
        %v7894 = vadd.f32 %v7772, %v7828
        %v7895 = vadd.f32 %v7773, %v7830
        %v7896 = vadd.f32 %v7774, %v7832
        %v7897 = vadd.f32 %v7775, %v7834
        %v7898 = vadd.f32 %v7776, %v7836
        %v7899 = vadd.f32 %v7777, %v7838
        %v7900 = vadd.f32 %v7778, %v7840
        %v7901 = vadd.f32 %v7779, %v2773
        %v7902 = vadd.f32 %v7780, %v2773
        %v7933 = vrot.slane %v6418, 1
        %v7934 = vrot.slane %v6420, 1
        %v7935 = vsel %vm1720, %v7933, %v7934
        %v7936 = vrot.slane %v6423, 1
        %v7937 = vsel %vm1720, %v7934, %v7936
        %v7938 = vrot.slane %v6425, 1
        %v7939 = vsel %vm1720, %v7936, %v7938
        %v7940 = vrot.slane %v6428, 1
        %v7941 = vsel %vm1720, %v7938, %v7940
        %v7942 = vrot.slane %v6430, 1
        %v7943 = vsel %vm1720, %v7940, %v7942
        %v7944 = vrot.slane %v6433, 1
        %v7945 = vsel %vm1720, %v7942, %v7944
        %v7946 = vrot.slane %v6435, 1
        %v7947 = vsel %vm1720, %v7944, %v7946
        %v7948 = vrot.slane %v6438, 1
        %v7949 = vsel %vm1720, %v7946, %v7948
        %v7950 = vrot.slane %v6440, 1
        %v7951 = vsel %vm1720, %v7948, %v7950
        %v7952 = vrot.slane %v6443, 1
        %v7953 = vsel %vm1720, %v7950, %v7952
        %v7954 = vrot.slane %v6445, 1
        %v7955 = vsel %vm1720, %v7952, %v7954
        %v7956 = vrot.slane %v6448, 1
        %v7957 = vsel %vm1720, %v7954, %v7956
        %v7958 = vrot.slane %v6450, 1
        %v7959 = vsel %vm1720, %v7956, %v7958
        %v7960 = vrot.slane %v6453, 1
        %v7961 = vsel %vm1720, %v7958, %v7960
        %v7962 = vrot.slane %v6455, 1
        %v7963 = vsel %vm1720, %v7960, %v7962
        %v7964 = vrot.slane %v6458, 1
        %v7965 = vsel %vm1720, %v7962, %v7964
        %v7966 = vrot.slane %v6460, 1
        %v7967 = vsel %vm1720, %v7964, %v7966
        %v7968 = vrot.slane %v6463, 1
        %v7969 = vsel %vm1720, %v7966, %v7968
        %v7970 = vrot.slane %v6465, 1
        %v7971 = vsel %vm1720, %v7968, %v7970
        %v7972 = vrot.slane %v6468, 1
        %v7973 = vsel %vm1720, %v7970, %v7972
        %v7974 = vrot.slane %v6470, 1
        %v7975 = vsel %vm1720, %v7972, %v7974
        %v7976 = vrot.slane %v6473, 1
        %v7977 = vsel %vm1720, %v7974, %v7976
        %v7978 = vrot.slane %v6475, 1
        %v7979 = vsel %vm1720, %v7976, %v7978
        %v7980 = vrot.slane %v6478, 1
        %v7981 = vsel %vm1720, %v7978, %v7980
        %v7982 = vrot.slane %v6480, 1
        %v7983 = vsel %vm1720, %v7980, %v7982
        %v7984 = vrot.slane %v6483, 1
        %v7985 = vsel %vm1720, %v7982, %v7984
        %v7986 = vrot.slane %v6485, 1
        %v7987 = vsel %vm1720, %v7984, %v7986
        %v7988 = vrot.slane %v6488, 1
        %v7989 = vsel %vm1720, %v7986, %v7988
        %v7990 = vrot.slane %v6490, 1
        %v7991 = vsel %vm1720, %v7988, %v7990
        %v8022 = vsel %vm1720, %v7990, 0.0
        %v8023 = vmul.f32 %v7935, %v475
        %v8024 = vmul.f32 %v7937, %v476
        %v8025 = vmul.f32 %v7939, %v477
        %v8026 = vmul.f32 %v7941, %v478
        %v8027 = vmul.f32 %v7943, %v479
        %v8028 = vmul.f32 %v7945, %v480
        %v8029 = vmul.f32 %v7947, %v481
        %v8030 = vmul.f32 %v7949, %v482
        %v8031 = vmul.f32 %v7951, %v483
        %v8032 = vmul.f32 %v7953, %v484
        %v8033 = vmul.f32 %v7955, %v485
        %v8034 = vmul.f32 %v7957, %v486
        %v8035 = vmul.f32 %v7959, %v487
        %v8036 = vmul.f32 %v7961, %v488
        %v8037 = vmul.f32 %v7963, %v489
        %v8038 = vmul.f32 %v7965, %v490
        %v8039 = vmul.f32 %v7967, %v491
        %v8040 = vmul.f32 %v7969, %v492
        %v8041 = vmul.f32 %v7971, %v493
        %v8042 = vmul.f32 %v7973, %v494
        %v8043 = vmul.f32 %v7975, %v495
        %v8044 = vmul.f32 %v7977, %v496
        %v8045 = vmul.f32 %v7979, %v497
        %v8046 = vmul.f32 %v7981, %v498
        %v8047 = vmul.f32 %v7983, %v499
        %v8048 = vmul.f32 %v7985, %v500
        %v8049 = vmul.f32 %v7987, %v501
        %v8050 = vmul.f32 %v7989, %v502
        %v8051 = vmul.f32 %v7991, %v503
        %v8052 = vmul.f32 %v8022, %v504
        %v8053 = vadd.f32 %v7871, %v8023
        %v8054 = vadd.f32 %v7872, %v8024
        %v8055 = vadd.f32 %v7873, %v8025
        %v8056 = vadd.f32 %v7874, %v8026
        %v8057 = vadd.f32 %v7875, %v8027
        %v8058 = vadd.f32 %v7876, %v8028
        %v8059 = vadd.f32 %v7877, %v8029
        %v8060 = vadd.f32 %v7878, %v8030
        %v8061 = vadd.f32 %v7879, %v8031
        %v8062 = vadd.f32 %v7880, %v8032
        %v8063 = vadd.f32 %v7881, %v8033
        %v8064 = vadd.f32 %v7882, %v8034
        %v8065 = vadd.f32 %v7883, %v8035
        %v8066 = vadd.f32 %v7884, %v8036
        %v8067 = vadd.f32 %v7885, %v8037
        %v8068 = vadd.f32 %v7886, %v8038
        %v8069 = vadd.f32 %v7887, %v8039
        %v8070 = vadd.f32 %v7888, %v8040
        %v8071 = vadd.f32 %v7889, %v8041
        %v8072 = vadd.f32 %v7890, %v8042
        %v8073 = vadd.f32 %v7891, %v8043
        %v8074 = vadd.f32 %v7892, %v8044
        %v8075 = vadd.f32 %v7893, %v8045
        %v8076 = vadd.f32 %v7894, %v8046
        %v8077 = vadd.f32 %v7895, %v8047
        %v8078 = vadd.f32 %v7896, %v8048
        %v8079 = vadd.f32 %v7897, %v8049
        %v8080 = vadd.f32 %v7898, %v8050
        %v8081 = vadd.f32 %v7899, %v8051
        %v8082 = vadd.f32 %v7900, %v8052
        %v8083 = vadd.f32 %v7901, %v2987
        %v8084 = vadd.f32 %v7902, %v2988
        %vm8085 = vcmask 261120
        %8086 = vst.msk [vmem:[%s244 + $0x8] sm:$0xff] %vm8085, %v8053
        %8087 = vst.msk [vmem:[%s244 + $0x18] sm:$0xff] %vm8085, %v8054
        %8088 = vst.msk [vmem:[%s244 + $0x28] sm:$0xff] %vm8085, %v8055
        %8089 = vst.msk [vmem:[%s244 + $0x38] sm:$0xff] %vm8085, %v8056
        %8090 = vst.msk [vmem:[%s244 + $0x48] sm:$0xff] %vm8085, %v8057
        %8091 = vst.msk [vmem:[%s244 + $0x58] sm:$0xff] %vm8085, %v8058
        %8092 = vst.msk [vmem:[%s244 + $0x68] sm:$0xff] %vm8085, %v8059
        %8093 = vst.msk [vmem:[%s244 + $0x78] sm:$0xff] %vm8085, %v8060
        %8094 = vst.msk [vmem:[%s244 + $0x88] sm:$0xff] %vm8085, %v8061
        %8095 = vst.msk [vmem:[%s244 + $0x98] sm:$0xff] %vm8085, %v8062
        %8096 = vst.msk [vmem:[%s244 + $0xa8] sm:$0xff] %vm8085, %v8063
        %8097 = vst.msk [vmem:[%s244 + $0xb8] sm:$0xff] %vm8085, %v8064
        %8098 = vst.msk [vmem:[%s244 + $0xc8] sm:$0xff] %vm8085, %v8065
        %8099 = vst.msk [vmem:[%s244 + $0xd8] sm:$0xff] %vm8085, %v8066
        %8100 = vst.msk [vmem:[%s244 + $0xe8] sm:$0xff] %vm8085, %v8067
        %8101 = vst.msk [vmem:[%s244 + $0xf8] sm:$0xff] %vm8085, %v8068
        %8102 = vst.msk [vmem:[%s244 + $0x108] sm:$0xff] %vm8085, %v8069
        %8103 = vst.msk [vmem:[%s244 + $0x118] sm:$0xff] %vm8085, %v8070
        %8104 = vst.msk [vmem:[%s244 + $0x128] sm:$0xff] %vm8085, %v8071
        %8105 = vst.msk [vmem:[%s244 + $0x138] sm:$0xff] %vm8085, %v8072
        %8106 = vst.msk [vmem:[%s244 + $0x148] sm:$0xff] %vm8085, %v8073
        %8107 = vst.msk [vmem:[%s244 + $0x158] sm:$0xff] %vm8085, %v8074
        %8108 = vst.msk [vmem:[%s244 + $0x168] sm:$0xff] %vm8085, %v8075
        %8109 = vst.msk [vmem:[%s244 + $0x178] sm:$0xff] %vm8085, %v8076
        %8110 = vst.msk [vmem:[%s244 + $0x188] sm:$0xff] %vm8085, %v8077
        %8111 = vst.msk [vmem:[%s244 + $0x198] sm:$0xff] %vm8085, %v8078
        %8112 = vst.msk [vmem:[%s244 + $0x1a8] sm:$0xff] %vm8085, %v8079
        %8113 = vst.msk [vmem:[%s244 + $0x1b8] sm:$0xff] %vm8085, %v8080
        %8114 = vst.msk [vmem:[%s244 + $0x1c8] sm:$0xff] %vm8085, %v8081
        %8115 = vst.msk [vmem:[%s244 + $0x1d8] sm:$0xff] %vm8085, %v8082
        %8116 = vst.msk [vmem:[%s244 + $0x1e8] sm:$0xff] %vm8085, %v8083
        %8117 = vst.msk [vmem:[%s244 + $0x1f8] sm:$0xff] %vm8085, %v8084
        %v8118 = vld [vmem:[%s244] sm:$0xff]
        %v8119 = vld [vmem:[%s244 + $0x8] sm:$0xff]
        %v8120 = vld [vmem:[%s244 + $0x10] sm:$0xff]
        %v8121 = vld [vmem:[%s244 + $0x18] sm:$0xff]
        %v8122 = vld [vmem:[%s244 + $0x20] sm:$0xff]
        %v8123 = vld [vmem:[%s244 + $0x28] sm:$0xff]
        %v8124 = vld [vmem:[%s244 + $0x30] sm:$0xff]
        %v8125 = vld [vmem:[%s244 + $0x38] sm:$0xff]
        %v8126 = vld [vmem:[%s244 + $0x40] sm:$0xff]
        %v8127 = vld [vmem:[%s244 + $0x48] sm:$0xff]
        %v8128 = vld [vmem:[%s244 + $0x50] sm:$0xff]
        %v8129 = vld [vmem:[%s244 + $0x58] sm:$0xff]
        %v8130 = vld [vmem:[%s244 + $0x60] sm:$0xff]
        %v8131 = vld [vmem:[%s244 + $0x68] sm:$0xff]
        %v8132 = vld [vmem:[%s244 + $0x70] sm:$0xff]
        %v8133 = vld [vmem:[%s244 + $0x78] sm:$0xff]
        %v8134 = vld [vmem:[%s244 + $0x80] sm:$0xff]
        %v8135 = vld [vmem:[%s244 + $0x88] sm:$0xff]
        %v8136 = vld [vmem:[%s244 + $0x90] sm:$0xff]
        %v8137 = vld [vmem:[%s244 + $0x98] sm:$0xff]
        %v8138 = vld [vmem:[%s244 + $0xa0] sm:$0xff]
        %v8139 = vld [vmem:[%s244 + $0xa8] sm:$0xff]
        %v8140 = vld [vmem:[%s244 + $0xb0] sm:$0xff]
        %v8141 = vld [vmem:[%s244 + $0xb8] sm:$0xff]
        %v8142 = vld [vmem:[%s244 + $0xc0] sm:$0xff]
        %v8143 = vld [vmem:[%s244 + $0xc8] sm:$0xff]
        %v8144 = vld [vmem:[%s244 + $0xd0] sm:$0xff]
        %v8145 = vld [vmem:[%s244 + $0xd8] sm:$0xff]
        %v8146 = vld [vmem:[%s244 + $0xe0] sm:$0xff]
        %v8147 = vld [vmem:[%s244 + $0xe8] sm:$0xff]
        %v8148 = vld [vmem:[%s244 + $0xf0] sm:$0xff]
        %v8149 = vld [vmem:[%s244 + $0xf8] sm:$0xff]
        %v8150 = vld [vmem:[%s244 + $0x100] sm:$0xff]
        %v8151 = vld [vmem:[%s244 + $0x108] sm:$0xff]
        %v8152 = vld [vmem:[%s244 + $0x110] sm:$0xff]
        %v8153 = vld [vmem:[%s244 + $0x118] sm:$0xff]
        %v8154 = vld [vmem:[%s244 + $0x120] sm:$0xff]
        %v8155 = vld [vmem:[%s244 + $0x128] sm:$0xff]
        %v8156 = vld [vmem:[%s244 + $0x130] sm:$0xff]
        %v8157 = vld [vmem:[%s244 + $0x138] sm:$0xff]
        %v8158 = vld [vmem:[%s244 + $0x140] sm:$0xff]
        %v8159 = vld [vmem:[%s244 + $0x148] sm:$0xff]
        %v8160 = vld [vmem:[%s244 + $0x150] sm:$0xff]
        %v8161 = vld [vmem:[%s244 + $0x158] sm:$0xff]
        %v8162 = vld [vmem:[%s244 + $0x160] sm:$0xff]
        %v8163 = vld [vmem:[%s244 + $0x168] sm:$0xff]
        %v8164 = vld [vmem:[%s244 + $0x170] sm:$0xff]
        %v8165 = vld [vmem:[%s244 + $0x178] sm:$0xff]
        %v8166 = vld [vmem:[%s244 + $0x180] sm:$0xff]
        %v8167 = vld [vmem:[%s244 + $0x188] sm:$0xff]
        %v8168 = vld [vmem:[%s244 + $0x190] sm:$0xff]
        %v8169 = vld [vmem:[%s244 + $0x198] sm:$0xff]
        %v8170 = vld [vmem:[%s244 + $0x1a0] sm:$0xff]
        %v8171 = vld [vmem:[%s244 + $0x1a8] sm:$0xff]
        %v8172 = vld [vmem:[%s244 + $0x1b0] sm:$0xff]
        %v8173 = vld [vmem:[%s244 + $0x1b8] sm:$0xff]
        %v8174 = vld [vmem:[%s244 + $0x1c0] sm:$0xff]
        %v8175 = vld [vmem:[%s244 + $0x1c8] sm:$0xff]
        %v8176 = vld [vmem:[%s244 + $0x1d0] sm:$0xff]
        %v8177 = vld [vmem:[%s244 + $0x1d8] sm:$0xff]
        %v8178 = vld [vmem:[%s244 + $0x1e0] sm:$0xff]
        %v8179 = vld [vmem:[%s244 + $0x1e8] sm:$0xff]
        %v8180 = vld [vmem:[%s244 + $0x1f0] sm:$0xff]
        %v8181 = vld [vmem:[%s244 + $0x1f8] sm:$0xff]
        %s8182 = scalar_lea.vmem %s2, 3
        %v8183 = vld [vmem:[%s8182] ss:$4 sm:$0x3]
        %v8185 = vperm.slane %v8183, 0
        %v8186 = vperm.slane %v8183, 1
        %v8189 = vmul.f32 %v8118, %v8185
        %v8190 = vmul.f32 %v8119, %v8186
        %v8191 = vmul.f32 %v8120, %v8185
        %v8192 = vmul.f32 %v8121, %v8186
        %v8193 = vmul.f32 %v8122, %v8185
        %v8194 = vmul.f32 %v8123, %v8186
        %v8195 = vmul.f32 %v8124, %v8185
        %v8196 = vmul.f32 %v8125, %v8186
        %v8197 = vmul.f32 %v8126, %v8185
        %v8198 = vmul.f32 %v8127, %v8186
        %v8199 = vmul.f32 %v8128, %v8185
        %v8200 = vmul.f32 %v8129, %v8186
        %v8201 = vmul.f32 %v8130, %v8185
        %v8202 = vmul.f32 %v8131, %v8186
        %v8203 = vmul.f32 %v8132, %v8185
        %v8204 = vmul.f32 %v8133, %v8186
        %v8205 = vmul.f32 %v8134, %v8185
        %v8206 = vmul.f32 %v8135, %v8186
        %v8207 = vmul.f32 %v8136, %v8185
        %v8208 = vmul.f32 %v8137, %v8186
        %v8209 = vmul.f32 %v8138, %v8185
        %v8210 = vmul.f32 %v8139, %v8186
        %v8211 = vmul.f32 %v8140, %v8185
        %v8212 = vmul.f32 %v8141, %v8186
        %v8213 = vmul.f32 %v8142, %v8185
        %v8214 = vmul.f32 %v8143, %v8186
        %v8215 = vmul.f32 %v8144, %v8185
        %v8216 = vmul.f32 %v8145, %v8186
        %v8217 = vmul.f32 %v8146, %v8185
        %v8218 = vmul.f32 %v8147, %v8186
        %v8219 = vmul.f32 %v8148, %v8185
        %v8220 = vmul.f32 %v8149, %v8186
        %v8221 = vmul.f32 %v8150, %v8185
        %v8222 = vmul.f32 %v8151, %v8186
        %v8223 = vmul.f32 %v8152, %v8185
        %v8224 = vmul.f32 %v8153, %v8186
        %v8225 = vmul.f32 %v8154, %v8185
        %v8226 = vmul.f32 %v8155, %v8186
        %v8227 = vmul.f32 %v8156, %v8185
        %v8228 = vmul.f32 %v8157, %v8186
        %v8229 = vmul.f32 %v8158, %v8185
        %v8230 = vmul.f32 %v8159, %v8186
        %v8231 = vmul.f32 %v8160, %v8185
        %v8232 = vmul.f32 %v8161, %v8186
        %v8233 = vmul.f32 %v8162, %v8185
        %v8234 = vmul.f32 %v8163, %v8186
        %v8235 = vmul.f32 %v8164, %v8185
        %v8236 = vmul.f32 %v8165, %v8186
        %v8237 = vmul.f32 %v8166, %v8185
        %v8238 = vmul.f32 %v8167, %v8186
        %v8239 = vmul.f32 %v8168, %v8185
        %v8240 = vmul.f32 %v8169, %v8186
        %v8241 = vmul.f32 %v8170, %v8185
        %v8242 = vmul.f32 %v8171, %v8186
        %v8243 = vmul.f32 %v8172, %v8185
        %v8244 = vmul.f32 %v8173, %v8186
        %v8245 = vmul.f32 %v8174, %v8185
        %v8246 = vmul.f32 %v8175, %v8186
        %v8247 = vmul.f32 %v8176, %v8185
        %v8248 = vmul.f32 %v8177, %v8186
        %v8249 = vmul.f32 %v8178, %v8185
        %v8250 = vmul.f32 %v8179, %v8186
        %v8251 = vmul.f32 %v8180, %v8185
        %v8252 = vmul.f32 %v8181, %v8186
        %s8253 = scalar_lea.vmem %s3, 3
        %v8254 = vld [vmem:[%s8253] ss:$4 sm:$0x3]
        %v8256 = vperm.slane %v8254, 0
        %v8257 = vperm.slane %v8254, 1
        %v8260 = vadd.f32 %v8189, %v8256
        %v8261 = vadd.f32 %v8190, %v8257
        %v8262 = vadd.f32 %v8191, %v8256
        %v8263 = vadd.f32 %v8192, %v8257
        %v8264 = vadd.f32 %v8193, %v8256
        %v8265 = vadd.f32 %v8194, %v8257
        %v8266 = vadd.f32 %v8195, %v8256
        %v8267 = vadd.f32 %v8196, %v8257
        %v8268 = vadd.f32 %v8197, %v8256
        %v8269 = vadd.f32 %v8198, %v8257
        %v8270 = vadd.f32 %v8199, %v8256
        %v8271 = vadd.f32 %v8200, %v8257
        %v8272 = vadd.f32 %v8201, %v8256
        %v8273 = vadd.f32 %v8202, %v8257
        %v8274 = vadd.f32 %v8203, %v8256
        %v8275 = vadd.f32 %v8204, %v8257
        %v8276 = vadd.f32 %v8205, %v8256
        %v8277 = vadd.f32 %v8206, %v8257
        %v8278 = vadd.f32 %v8207, %v8256
        %v8279 = vadd.f32 %v8208, %v8257
        %v8280 = vadd.f32 %v8209, %v8256
        %v8281 = vadd.f32 %v8210, %v8257
        %v8282 = vadd.f32 %v8211, %v8256
        %v8283 = vadd.f32 %v8212, %v8257
        %v8284 = vadd.f32 %v8213, %v8256
        %v8285 = vadd.f32 %v8214, %v8257
        %v8286 = vadd.f32 %v8215, %v8256
        %v8287 = vadd.f32 %v8216, %v8257
        %v8288 = vadd.f32 %v8217, %v8256
        %v8289 = vadd.f32 %v8218, %v8257
        %v8290 = vadd.f32 %v8219, %v8256
        %v8291 = vadd.f32 %v8220, %v8257
        %v8292 = vadd.f32 %v8221, %v8256
        %v8293 = vadd.f32 %v8222, %v8257
        %v8294 = vadd.f32 %v8223, %v8256
        %v8295 = vadd.f32 %v8224, %v8257
        %v8296 = vadd.f32 %v8225, %v8256
        %v8297 = vadd.f32 %v8226, %v8257
        %v8298 = vadd.f32 %v8227, %v8256
        %v8299 = vadd.f32 %v8228, %v8257
        %v8300 = vadd.f32 %v8229, %v8256
        %v8301 = vadd.f32 %v8230, %v8257
        %v8302 = vadd.f32 %v8231, %v8256
        %v8303 = vadd.f32 %v8232, %v8257
        %v8304 = vadd.f32 %v8233, %v8256
        %v8305 = vadd.f32 %v8234, %v8257
        %v8306 = vadd.f32 %v8235, %v8256
        %v8307 = vadd.f32 %v8236, %v8257
        %v8308 = vadd.f32 %v8237, %v8256
        %v8309 = vadd.f32 %v8238, %v8257
        %v8310 = vadd.f32 %v8239, %v8256
        %v8311 = vadd.f32 %v8240, %v8257
        %v8312 = vadd.f32 %v8241, %v8256
        %v8313 = vadd.f32 %v8242, %v8257
        %v8314 = vadd.f32 %v8243, %v8256
        %v8315 = vadd.f32 %v8244, %v8257
        %v8316 = vadd.f32 %v8245, %v8256
        %v8317 = vadd.f32 %v8246, %v8257
        %v8318 = vadd.f32 %v8247, %v8256
        %v8319 = vadd.f32 %v8248, %v8257
        %v8320 = vadd.f32 %v8249, %v8256
        %v8321 = vadd.f32 %v8250, %v8257
        %v8322 = vadd.f32 %v8251, %v8256
        %v8323 = vadd.f32 %v8252, %v8257
        %v8324 = vmax.f32 %v8260, 0.0
        %v8325 = vmax.f32 %v8261, 0.0
        %v8326 = vmax.f32 %v8262, 0.0
        %v8327 = vmax.f32 %v8263, 0.0
        %v8328 = vmax.f32 %v8264, 0.0
        %v8329 = vmax.f32 %v8265, 0.0
        %v8330 = vmax.f32 %v8266, 0.0
        %v8331 = vmax.f32 %v8267, 0.0
        %v8332 = vmax.f32 %v8268, 0.0
        %v8333 = vmax.f32 %v8269, 0.0
        %v8334 = vmax.f32 %v8270, 0.0
        %v8335 = vmax.f32 %v8271, 0.0
        %v8336 = vmax.f32 %v8272, 0.0
        %v8337 = vmax.f32 %v8273, 0.0
        %v8338 = vmax.f32 %v8274, 0.0
        %v8339 = vmax.f32 %v8275, 0.0
        %v8340 = vmax.f32 %v8276, 0.0
        %v8341 = vmax.f32 %v8277, 0.0
        %v8342 = vmax.f32 %v8278, 0.0
        %v8343 = vmax.f32 %v8279, 0.0
        %v8344 = vmax.f32 %v8280, 0.0
        %v8345 = vmax.f32 %v8281, 0.0
        %v8346 = vmax.f32 %v8282, 0.0
        %v8347 = vmax.f32 %v8283, 0.0
        %v8348 = vmax.f32 %v8284, 0.0
        %v8349 = vmax.f32 %v8285, 0.0
        %v8350 = vmax.f32 %v8286, 0.0
        %v8351 = vmax.f32 %v8287, 0.0
        %v8352 = vmax.f32 %v8288, 0.0
        %v8353 = vmax.f32 %v8289, 0.0
        %v8354 = vmax.f32 %v8290, 0.0
        %v8355 = vmax.f32 %v8291, 0.0
        %v8356 = vmax.f32 %v8292, 0.0
        %v8357 = vmax.f32 %v8293, 0.0
        %v8358 = vmax.f32 %v8294, 0.0
        %v8359 = vmax.f32 %v8295, 0.0
        %v8360 = vmax.f32 %v8296, 0.0
        %v8361 = vmax.f32 %v8297, 0.0
        %v8362 = vmax.f32 %v8298, 0.0
        %v8363 = vmax.f32 %v8299, 0.0
        %v8364 = vmax.f32 %v8300, 0.0
        %v8365 = vmax.f32 %v8301, 0.0
        %v8366 = vmax.f32 %v8302, 0.0
        %v8367 = vmax.f32 %v8303, 0.0
        %v8368 = vmax.f32 %v8304, 0.0
        %v8369 = vmax.f32 %v8305, 0.0
        %v8370 = vmax.f32 %v8306, 0.0
        %v8371 = vmax.f32 %v8307, 0.0
        %v8372 = vmax.f32 %v8308, 0.0
        %v8373 = vmax.f32 %v8309, 0.0
        %v8374 = vmax.f32 %v8310, 0.0
        %v8375 = vmax.f32 %v8311, 0.0
        %v8376 = vmax.f32 %v8312, 0.0
        %v8377 = vmax.f32 %v8313, 0.0
        %v8378 = vmax.f32 %v8314, 0.0
        %v8379 = vmax.f32 %v8315, 0.0
        %v8380 = vmax.f32 %v8316, 0.0
        %v8381 = vmax.f32 %v8317, 0.0
        %v8382 = vmax.f32 %v8318, 0.0
        %v8383 = vmax.f32 %v8319, 0.0
        %v8384 = vmax.f32 %v8320, 0.0
        %v8385 = vmax.f32 %v8321, 0.0
        %v8386 = vmax.f32 %v8322, 0.0
        %v8387 = vmax.f32 %v8323, 0.0
        %v8388 = vpack.c.bf16 %v8326, %v8324
        %v8389 = vpack.c.bf16 %v8327, %v8325
        %v8390 = vpack.c.bf16 %v8330, %v8328
        %v8391 = vpack.c.bf16 %v8331, %v8329
        %v8392 = vpack.c.bf16 %v8334, %v8332
        %v8393 = vpack.c.bf16 %v8335, %v8333
        %v8394 = vpack.c.bf16 %v8338, %v8336
        %v8395 = vpack.c.bf16 %v8339, %v8337
        %v8396 = vpack.c.bf16 %v8342, %v8340
        %v8397 = vpack.c.bf16 %v8343, %v8341
        %v8398 = vpack.c.bf16 %v8346, %v8344
        %v8399 = vpack.c.bf16 %v8347, %v8345
        %v8400 = vpack.c.bf16 %v8350, %v8348
        %v8401 = vpack.c.bf16 %v8351, %v8349
        %v8402 = vpack.c.bf16 %v8354, %v8352
        %v8403 = vpack.c.bf16 %v8355, %v8353
        %v8404 = vpack.c.bf16 %v8358, %v8356
        %v8405 = vpack.c.bf16 %v8359, %v8357
        %v8406 = vpack.c.bf16 %v8362, %v8360
        %v8407 = vpack.c.bf16 %v8363, %v8361
        %v8408 = vpack.c.bf16 %v8366, %v8364
        %v8409 = vpack.c.bf16 %v8367, %v8365
        %v8410 = vpack.c.bf16 %v8370, %v8368
        %v8411 = vpack.c.bf16 %v8371, %v8369
        %v8412 = vpack.c.bf16 %v8374, %v8372
        %v8413 = vpack.c.bf16 %v8375, %v8373
        %v8414 = vpack.c.bf16 %v8378, %v8376
        %v8415 = vpack.c.bf16 %v8379, %v8377
        %v8416 = vpack.c.bf16 %v8382, %v8380
        %v8417 = vpack.c.bf16 %v8383, %v8381
        %v8418 = vpack.c.bf16 %v8386, %v8384
        %v8419 = vpack.c.bf16 %v8387, %v8385
        %s8420 = scalar_lea.vmem %s1, 384
        %v8421 = vld [vmem:[%s8420] sm:$0xf]
        %v8422 = vld [vmem:[%s8420 + $0x4] sm:$0xf]
        %v8423 = vld [vmem:[%s8420 + $0x8] sm:$0xf]
        %v8424 = vld [vmem:[%s8420 + $0xc] sm:$0xf]
        %v8425 = vld [vmem:[%s8420 + $0x10] sm:$0xf]
        %v8426 = vld [vmem:[%s8420 + $0x14] sm:$0xf]
        %v8427 = vld [vmem:[%s8420 + $0x18] sm:$0xf]
        %v8428 = vld [vmem:[%s8420 + $0x1c] sm:$0xf]
        %v8429 = vld [vmem:[%s8420 + $0x20] sm:$0xf]
        %v8430 = vld [vmem:[%s8420 + $0x24] sm:$0xf]
        %v8431 = vld [vmem:[%s8420 + $0x28] sm:$0xf]
        %v8432 = vld [vmem:[%s8420 + $0x2c] sm:$0xf]
        %v8433 = vld [vmem:[%s8420 + $0x30] sm:$0xf]
        %v8434 = vld [vmem:[%s8420 + $0x34] sm:$0xf]
        %v8435 = vld [vmem:[%s8420 + $0x38] sm:$0xf]
        %v8436 = vld [vmem:[%s8420 + $0x3c] sm:$0xf]
        %v8437 = vld [vmem:[%s8420 + $0x40] sm:$0xf]
        %v8438 = vld [vmem:[%s8420 + $0x44] sm:$0xf]
        %v8439 = vld [vmem:[%s8420 + $0x48] sm:$0xf]
        %v8440 = vld [vmem:[%s8420 + $0x4c] sm:$0xf]
        %v8441 = vld [vmem:[%s8420 + $0x50] sm:$0xf]
        %v8442 = vld [vmem:[%s8420 + $0x54] sm:$0xf]
        %v8443 = vld [vmem:[%s8420 + $0x58] sm:$0xf]
        %v8444 = vld [vmem:[%s8420 + $0x5c] sm:$0xf]
        %v8445 = vld [vmem:[%s8420 + $0x60] sm:$0xf]
        %v8446 = vld [vmem:[%s8420 + $0x64] sm:$0xf]
        %v8447 = vld [vmem:[%s8420 + $0x68] sm:$0xf]
        %v8448 = vld [vmem:[%s8420 + $0x6c] sm:$0xf]
        %v8449 = vld [vmem:[%s8420 + $0x70] sm:$0xf]
        %v8450 = vld [vmem:[%s8420 + $0x74] sm:$0xf]
        %v8451 = vld [vmem:[%s8420 + $0x78] sm:$0xf]
        %v8452 = vld [vmem:[%s8420 + $0x7c] sm:$0xf]
        %v8453 = vld [vmem:[%s5 + $0x3] sm:$0x1]
        %v8454 = vperm.slane %v8453, 0
        %v8487 = vunpack.c.l.b16 %v8421
        %v8488 = vunpack.c.l.b16 %v8422
        %v8489 = vunpack.c.l.b16 %v8423
        %v8490 = vunpack.c.l.b16 %v8424
        %v8491 = vunpack.c.l.b16 %v8425
        %v8492 = vunpack.c.l.b16 %v8426
        %v8493 = vunpack.c.l.b16 %v8427
        %v8494 = vunpack.c.l.b16 %v8428
        %v8495 = vunpack.c.l.b16 %v8429
        %v8496 = vunpack.c.l.b16 %v8430
        %v8497 = vunpack.c.l.b16 %v8431
        %v8498 = vunpack.c.l.b16 %v8432
        %v8499 = vunpack.c.l.b16 %v8433
        %v8500 = vunpack.c.l.b16 %v8434
        %v8501 = vunpack.c.l.b16 %v8435
        %v8502 = vunpack.c.l.b16 %v8436
        %v8503 = vunpack.c.l.b16 %v8437
        %v8504 = vunpack.c.l.b16 %v8438
        %v8505 = vunpack.c.l.b16 %v8439
        %v8506 = vunpack.c.l.b16 %v8440
        %v8507 = vunpack.c.l.b16 %v8441
        %v8508 = vunpack.c.l.b16 %v8442
        %v8509 = vunpack.c.l.b16 %v8443
        %v8510 = vunpack.c.l.b16 %v8444
        %v8511 = vunpack.c.l.b16 %v8445
        %v8512 = vunpack.c.l.b16 %v8446
        %v8513 = vunpack.c.l.b16 %v8447
        %v8514 = vunpack.c.l.b16 %v8448
        %v8515 = vunpack.c.l.b16 %v8449
        %v8516 = vunpack.c.l.b16 %v8450
        %v8517 = vunpack.c.l.b16 %v8451
        %v8518 = vunpack.c.l.b16 %v8452
        %v8519 = vpack.c.b16 %v8488, %v8487
        %v8520 = vpack.c.b16 %v8490, %v8489
        %v8521 = vpack.c.b16 %v8492, %v8491
        %v8522 = vpack.c.b16 %v8494, %v8493
        %v8523 = vpack.c.b16 %v8496, %v8495
        %v8524 = vpack.c.b16 %v8498, %v8497
        %v8525 = vpack.c.b16 %v8500, %v8499
        %v8526 = vpack.c.b16 %v8502, %v8501
        %v8527 = vpack.c.b16 %v8504, %v8503
        %v8528 = vpack.c.b16 %v8506, %v8505
        %v8529 = vpack.c.b16 %v8508, %v8507
        %v8530 = vpack.c.b16 %v8510, %v8509
        %v8531 = vpack.c.b16 %v8512, %v8511
        %v8532 = vpack.c.b16 %v8514, %v8513
        %v8533 = vpack.c.b16 %v8516, %v8515
        %v8534 = vpack.c.b16 %v8518, %v8517
        %8551 = vmatpush.bf16.msra.mxu0 %v8526
        %8552 = vmatpush.bf16.msra.mxu0 %v8525
        %8553 = vmatpush.bf16.msra.mxu0 %v8524
        %8554 = vmatpush.bf16.msra.mxu0 %v8523
        %8555 = vmatpush.bf16.msra.mxu0 %v8522
        %8556 = vmatpush.bf16.msra.mxu0 %v8521
        %8557 = vmatpush.bf16.msra.mxu0 %v8520
        %8558 = vmatpush.bf16.msra.mxu0 %v8519
        %8559 = vmatmul.bf16.gmra.mxu0 %v8388
        %v8560 = vpop.f32.mrf.mxu0
        %v8561 = vadd.f32 %v8454, %v8560
        %v8562 = vpop.f32.mrf.mxu0
        %v8563 = vadd.f32 %v8454, %v8562
        %8564 = vmatmul.bf16.gmra.mxu0 %v8390
        %v8565 = vpop.f32.mrf.mxu0
        %v8566 = vadd.f32 %v8454, %v8565
        %v8567 = vpop.f32.mrf.mxu0
        %v8568 = vadd.f32 %v8454, %v8567
        %8569 = vmatmul.bf16.gmra.mxu0 %v8392
        %v8570 = vpop.f32.mrf.mxu0
        %v8571 = vadd.f32 %v8454, %v8570
        %v8572 = vpop.f32.mrf.mxu0
        %v8573 = vadd.f32 %v8454, %v8572
        %8574 = vmatmul.bf16.gmra.mxu0 %v8394
        %v8575 = vpop.f32.mrf.mxu0
        %v8576 = vadd.f32 %v8454, %v8575
        %v8577 = vpop.f32.mrf.mxu0
        %v8578 = vadd.f32 %v8454, %v8577
        %8579 = vmatmul.bf16.gmra.mxu0 %v8396
        %v8580 = vpop.f32.mrf.mxu0
        %v8581 = vadd.f32 %v8454, %v8580
        %v8582 = vpop.f32.mrf.mxu0
        %v8583 = vadd.f32 %v8454, %v8582
        %8584 = vmatmul.bf16.gmra.mxu0 %v8398
        %v8585 = vpop.f32.mrf.mxu0
        %v8586 = vadd.f32 %v8454, %v8585
        %v8587 = vpop.f32.mrf.mxu0
        %v8588 = vadd.f32 %v8454, %v8587
        %8589 = vmatmul.bf16.gmra.mxu0 %v8400
        %v8590 = vpop.f32.mrf.mxu0
        %v8591 = vadd.f32 %v8454, %v8590
        %v8592 = vpop.f32.mrf.mxu0
        %v8593 = vadd.f32 %v8454, %v8592
        %8594 = vmatmul.bf16.gmra.mxu0 %v8402
        %v8595 = vpop.f32.mrf.mxu0
        %v8596 = vadd.f32 %v8454, %v8595
        %v8597 = vpop.f32.mrf.mxu0
        %v8598 = vadd.f32 %v8454, %v8597
        %8599 = vmatmul.bf16.gmra.mxu0 %v8404
        %v8600 = vpop.f32.mrf.mxu0
        %v8601 = vadd.f32 %v8454, %v8600
        %v8602 = vpop.f32.mrf.mxu0
        %v8603 = vadd.f32 %v8454, %v8602
        %8604 = vmatmul.bf16.gmra.mxu0 %v8406
        %v8605 = vpop.f32.mrf.mxu0
        %v8606 = vadd.f32 %v8454, %v8605
        %v8607 = vpop.f32.mrf.mxu0
        %v8608 = vadd.f32 %v8454, %v8607
        %8609 = vmatmul.bf16.gmra.mxu0 %v8408
        %v8610 = vpop.f32.mrf.mxu0
        %v8611 = vadd.f32 %v8454, %v8610
        %v8612 = vpop.f32.mrf.mxu0
        %v8613 = vadd.f32 %v8454, %v8612
        %8614 = vmatmul.bf16.gmra.mxu0 %v8410
        %v8615 = vpop.f32.mrf.mxu0
        %v8616 = vadd.f32 %v8454, %v8615
        %v8617 = vpop.f32.mrf.mxu0
        %v8618 = vadd.f32 %v8454, %v8617
        %8619 = vmatmul.bf16.gmra.mxu0 %v8412
        %v8620 = vpop.f32.mrf.mxu0
        %v8621 = vadd.f32 %v8454, %v8620
        %v8622 = vpop.f32.mrf.mxu0
        %v8623 = vadd.f32 %v8454, %v8622
        %8624 = vmatmul.bf16.gmra.mxu0 %v8414
        %v8625 = vpop.f32.mrf.mxu0
        %v8626 = vadd.f32 %v8454, %v8625
        %v8627 = vpop.f32.mrf.mxu0
        %v8628 = vadd.f32 %v8454, %v8627
        %8629 = vmatmul.bf16.gmra.mxu0 %v8416
        %v8630 = vpop.f32.mrf.mxu0
        %v8631 = vadd.f32 %v8454, %v8630
        %v8632 = vpop.f32.mrf.mxu0
        %v8633 = vadd.f32 %v8454, %v8632
        %8634 = vmatmul.bf16.gmra.mxu0 %v8418
        %v8635 = vpop.f32.mrf.mxu0
        %v8636 = vadd.f32 %v8454, %v8635
        %v8637 = vpop.f32.mrf.mxu0
        %v8638 = vadd.f32 %v8454, %v8637
        %8639 = vdwg.mxu0
        %8640 = vmatpush.bf16.msra.mxu0 %v8534
        %8641 = vmatpush.bf16.msra.mxu0 %v8533
        %8642 = vmatpush.bf16.msra.mxu0 %v8532
        %8643 = vmatpush.bf16.msra.mxu0 %v8531
        %8644 = vmatpush.bf16.msra.mxu0 %v8530
        %8645 = vmatpush.bf16.msra.mxu0 %v8529
        %8646 = vmatpush.bf16.msra.mxu0 %v8528
        %8647 = vmatpush.bf16.msra.mxu0 %v8527
        %8648 = vmatmul.bf16.gmra.mxu0 %v8389
        %v8649 = vpop.f32.mrf.mxu0
        %v8650 = vadd.f32 %v8561, %v8649
        %v8651 = vpop.f32.mrf.mxu0
        %v8652 = vadd.f32 %v8563, %v8651
        %8653 = vmatmul.bf16.gmra.mxu0 %v8391
        %v8654 = vpop.f32.mrf.mxu0
        %v8655 = vadd.f32 %v8566, %v8654
        %v8656 = vpop.f32.mrf.mxu0
        %v8657 = vadd.f32 %v8568, %v8656
        %8658 = vmatmul.bf16.gmra.mxu0 %v8393
        %v8659 = vpop.f32.mrf.mxu0
        %v8660 = vadd.f32 %v8571, %v8659
        %v8661 = vpop.f32.mrf.mxu0
        %v8662 = vadd.f32 %v8573, %v8661
        %8663 = vmatmul.bf16.gmra.mxu0 %v8395
        %v8664 = vpop.f32.mrf.mxu0
        %v8665 = vadd.f32 %v8576, %v8664
        %v8666 = vpop.f32.mrf.mxu0
        %v8667 = vadd.f32 %v8578, %v8666
        %8668 = vmatmul.bf16.gmra.mxu0 %v8397
        %v8669 = vpop.f32.mrf.mxu0
        %v8670 = vadd.f32 %v8581, %v8669
        %v8671 = vpop.f32.mrf.mxu0
        %v8672 = vadd.f32 %v8583, %v8671
        %8673 = vmatmul.bf16.gmra.mxu0 %v8399
        %v8674 = vpop.f32.mrf.mxu0
        %v8675 = vadd.f32 %v8586, %v8674
        %v8676 = vpop.f32.mrf.mxu0
        %v8677 = vadd.f32 %v8588, %v8676
        %8678 = vmatmul.bf16.gmra.mxu0 %v8401
        %v8679 = vpop.f32.mrf.mxu0
        %v8680 = vadd.f32 %v8591, %v8679
        %v8681 = vpop.f32.mrf.mxu0
        %v8682 = vadd.f32 %v8593, %v8681
        %8683 = vmatmul.bf16.gmra.mxu0 %v8403
        %v8684 = vpop.f32.mrf.mxu0
        %v8685 = vadd.f32 %v8596, %v8684
        %v8686 = vpop.f32.mrf.mxu0
        %v8687 = vadd.f32 %v8598, %v8686
        %8688 = vmatmul.bf16.gmra.mxu0 %v8405
        %v8689 = vpop.f32.mrf.mxu0
        %v8690 = vadd.f32 %v8601, %v8689
        %v8691 = vpop.f32.mrf.mxu0
        %v8692 = vadd.f32 %v8603, %v8691
        %8693 = vmatmul.bf16.gmra.mxu0 %v8407
        %v8694 = vpop.f32.mrf.mxu0
        %v8695 = vadd.f32 %v8606, %v8694
        %v8696 = vpop.f32.mrf.mxu0
        %v8697 = vadd.f32 %v8608, %v8696
        %8698 = vmatmul.bf16.gmra.mxu0 %v8409
        %v8699 = vpop.f32.mrf.mxu0
        %v8700 = vadd.f32 %v8611, %v8699
        %v8701 = vpop.f32.mrf.mxu0
        %v8702 = vadd.f32 %v8613, %v8701
        %8703 = vmatmul.bf16.gmra.mxu0 %v8411
        %v8704 = vpop.f32.mrf.mxu0
        %v8705 = vadd.f32 %v8616, %v8704
        %v8706 = vpop.f32.mrf.mxu0
        %v8707 = vadd.f32 %v8618, %v8706
        %8708 = vmatmul.bf16.gmra.mxu0 %v8413
        %v8709 = vpop.f32.mrf.mxu0
        %v8710 = vadd.f32 %v8621, %v8709
        %v8711 = vpop.f32.mrf.mxu0
        %v8712 = vadd.f32 %v8623, %v8711
        %8713 = vmatmul.bf16.gmra.mxu0 %v8415
        %v8714 = vpop.f32.mrf.mxu0
        %v8715 = vadd.f32 %v8626, %v8714
        %v8716 = vpop.f32.mrf.mxu0
        %v8717 = vadd.f32 %v8628, %v8716
        %8718 = vmatmul.bf16.gmra.mxu0 %v8417
        %v8719 = vpop.f32.mrf.mxu0
        %v8720 = vadd.f32 %v8631, %v8719
        %v8721 = vpop.f32.mrf.mxu0
        %v8722 = vadd.f32 %v8633, %v8721
        %8723 = vmatmul.bf16.gmra.mxu0 %v8419
        %v8724 = vpop.f32.mrf.mxu0
        %v8725 = vadd.f32 %v8636, %v8724
        %v8726 = vpop.f32.mrf.mxu0
        %v8727 = vadd.f32 %v8638, %v8726
        %8728 = vdwg.mxu0
        %v8729 = vmax.f32 %v8650, 0.0
        %v8730 = vmax.f32 %v8652, 0.0
        %v8731 = vmax.f32 %v8655, 0.0
        %v8732 = vmax.f32 %v8657, 0.0
        %v8733 = vmax.f32 %v8660, 0.0
        %v8734 = vmax.f32 %v8662, 0.0
        %v8735 = vmax.f32 %v8665, 0.0
        %v8736 = vmax.f32 %v8667, 0.0
        %v8737 = vmax.f32 %v8670, 0.0
        %v8738 = vmax.f32 %v8672, 0.0
        %v8739 = vmax.f32 %v8675, 0.0
        %v8740 = vmax.f32 %v8677, 0.0
        %v8741 = vmax.f32 %v8680, 0.0
        %v8742 = vmax.f32 %v8682, 0.0
        %v8743 = vmax.f32 %v8685, 0.0
        %v8744 = vmax.f32 %v8687, 0.0
        %v8745 = vmax.f32 %v8690, 0.0
        %v8746 = vmax.f32 %v8692, 0.0
        %v8747 = vmax.f32 %v8695, 0.0
        %v8748 = vmax.f32 %v8697, 0.0
        %v8749 = vmax.f32 %v8700, 0.0
        %v8750 = vmax.f32 %v8702, 0.0
        %v8751 = vmax.f32 %v8705, 0.0
        %v8752 = vmax.f32 %v8707, 0.0
        %v8753 = vmax.f32 %v8710, 0.0
        %v8754 = vmax.f32 %v8712, 0.0
        %v8755 = vmax.f32 %v8715, 0.0
        %v8756 = vmax.f32 %v8717, 0.0
        %v8757 = vmax.f32 %v8720, 0.0
        %v8758 = vmax.f32 %v8722, 0.0
        %v8759 = vmax.f32 %v8725, 0.0
        %v8760 = vmax.f32 %v8727, 0.0
        %v8761 = vpack.c.bf16 %v8730, %v8729
        %v8762 = vpack.c.bf16 %v8732, %v8731
        %v8763 = vpack.c.bf16 %v8734, %v8733
        %v8764 = vpack.c.bf16 %v8736, %v8735
        %v8765 = vpack.c.bf16 %v8738, %v8737
        %v8766 = vpack.c.bf16 %v8740, %v8739
        %v8767 = vpack.c.bf16 %v8742, %v8741
        %v8768 = vpack.c.bf16 %v8744, %v8743
        %v8769 = vpack.c.bf16 %v8746, %v8745
        %v8770 = vpack.c.bf16 %v8748, %v8747
        %v8771 = vpack.c.bf16 %v8750, %v8749
        %v8772 = vpack.c.bf16 %v8752, %v8751
        %v8773 = vpack.c.bf16 %v8754, %v8753
        %v8774 = vpack.c.bf16 %v8756, %v8755
        %v8775 = vpack.c.bf16 %v8758, %v8757
        %v8776 = vpack.c.bf16 %v8760, %v8759
        %s8777 = scalar_lea.vmem %s4, 576
        %v8778 = vld [vmem:[%s8777] sm:$0xff]
        %v8779 = vld [vmem:[%s8777 + $0x8] sm:$0xf]
        %v8780 = vld [vmem:[%s8777 + $0xc] sm:$0xff]
        %v8781 = vld [vmem:[%s8777 + $0x14] sm:$0xf]
        %v8782 = vld [vmem:[%s8777 + $0x18] sm:$0xff]
        %v8783 = vld [vmem:[%s8777 + $0x20] sm:$0xf]
        %v8784 = vld [vmem:[%s8777 + $0x24] sm:$0xff]
        %v8785 = vld [vmem:[%s8777 + $0x2c] sm:$0xf]
        %v8786 = vld [vmem:[%s8777 + $0x30] sm:$0xff]
        %v8787 = vld [vmem:[%s8777 + $0x38] sm:$0xf]
        %v8788 = vld [vmem:[%s8777 + $0x3c] sm:$0xff]
        %v8789 = vld [vmem:[%s8777 + $0x44] sm:$0xf]
        %v8790 = vld [vmem:[%s8777 + $0x48] sm:$0xff]
        %v8791 = vld [vmem:[%s8777 + $0x50] sm:$0xf]
        %v8792 = vld [vmem:[%s8777 + $0x54] sm:$0xff]
        %v8793 = vld [vmem:[%s8777 + $0x5c] sm:$0xf]
        %v8794 = vld [vmem:[%s8777 + $0x60] sm:$0xff]
        %v8795 = vld [vmem:[%s8777 + $0x68] sm:$0xf]
        %v8796 = vld [vmem:[%s8777 + $0x6c] sm:$0xff]
        %v8797 = vld [vmem:[%s8777 + $0x74] sm:$0xf]
        %v8798 = vld [vmem:[%s8777 + $0x78] sm:$0xff]
        %v8799 = vld [vmem:[%s8777 + $0x80] sm:$0xf]
        %v8800 = vld [vmem:[%s8777 + $0x84] sm:$0xff]
        %v8801 = vld [vmem:[%s8777 + $0x8c] sm:$0xf]
        %v8802 = vld [vmem:[%s8777 + $0x90] sm:$0xff]
        %v8803 = vld [vmem:[%s8777 + $0x98] sm:$0xf]
        %v8804 = vld [vmem:[%s8777 + $0x9c] sm:$0xff]
        %v8805 = vld [vmem:[%s8777 + $0xa4] sm:$0xf]
        %v8806 = vld [vmem:[%s8777 + $0xa8] sm:$0xff]
        %v8807 = vld [vmem:[%s8777 + $0xb0] sm:$0xf]
        %v8808 = vld [vmem:[%s8777 + $0xb4] sm:$0xff]
        %v8809 = vld [vmem:[%s8777 + $0xbc] sm:$0xf]
        %v8842 = vunpack.c.l.b16 %v8778
        %v8843 = vunpack.c.h.b16 %v8778
        %v8844 = vunpack.c.l.b16 %v8779
        %v8845 = vunpack.c.l.b16 %v8780
        %v8846 = vunpack.c.h.b16 %v8780
        %v8847 = vunpack.c.l.b16 %v8781
        %v8848 = vunpack.c.l.b16 %v8782
        %v8849 = vunpack.c.h.b16 %v8782
        %v8850 = vunpack.c.l.b16 %v8783
        %v8851 = vunpack.c.l.b16 %v8784
        %v8852 = vunpack.c.h.b16 %v8784
        %v8853 = vunpack.c.l.b16 %v8785
        %v8854 = vunpack.c.l.b16 %v8786
        %v8855 = vunpack.c.h.b16 %v8786
        %v8856 = vunpack.c.l.b16 %v8787
        %v8857 = vunpack.c.l.b16 %v8788
        %v8858 = vunpack.c.h.b16 %v8788
        %v8859 = vunpack.c.l.b16 %v8789
        %v8860 = vunpack.c.l.b16 %v8790
        %v8861 = vunpack.c.h.b16 %v8790
        %v8862 = vunpack.c.l.b16 %v8791
        %v8863 = vunpack.c.l.b16 %v8792
        %v8864 = vunpack.c.h.b16 %v8792
        %v8865 = vunpack.c.l.b16 %v8793
        %v8866 = vunpack.c.l.b16 %v8794
        %v8867 = vunpack.c.h.b16 %v8794
        %v8868 = vunpack.c.l.b16 %v8795
        %v8869 = vunpack.c.l.b16 %v8796
        %v8870 = vunpack.c.h.b16 %v8796
        %v8871 = vunpack.c.l.b16 %v8797
        %v8872 = vunpack.c.l.b16 %v8798
        %v8873 = vunpack.c.h.b16 %v8798
        %v8874 = vunpack.c.l.b16 %v8799
        %v8875 = vunpack.c.l.b16 %v8800
        %v8876 = vunpack.c.h.b16 %v8800
        %v8877 = vunpack.c.l.b16 %v8801
        %v8878 = vunpack.c.l.b16 %v8802
        %v8879 = vunpack.c.h.b16 %v8802
        %v8880 = vunpack.c.l.b16 %v8803
        %v8881 = vunpack.c.l.b16 %v8804
        %v8882 = vunpack.c.h.b16 %v8804
        %v8883 = vunpack.c.l.b16 %v8805
        %v8884 = vunpack.c.l.b16 %v8806
        %v8885 = vunpack.c.h.b16 %v8806
        %v8886 = vunpack.c.l.b16 %v8807
        %v8887 = vunpack.c.l.b16 %v8808
        %v8888 = vunpack.c.h.b16 %v8808
        %v8889 = vunpack.c.l.b16 %v8809
        %v8890 = vpack.c.b16 %v8845, %v8842
        %v8891 = vpack.c.b16 %v8846, %v8843
        %v8892 = vpack.c.b16 %v8847, %v8844
        %v8893 = vpack.c.b16 %v8851, %v8848
        %v8894 = vpack.c.b16 %v8852, %v8849
        %v8895 = vpack.c.b16 %v8853, %v8850
        %v8896 = vpack.c.b16 %v8857, %v8854
        %v8897 = vpack.c.b16 %v8858, %v8855
        %v8898 = vpack.c.b16 %v8859, %v8856
        %v8899 = vpack.c.b16 %v8863, %v8860
        %v8900 = vpack.c.b16 %v8864, %v8861
        %v8901 = vpack.c.b16 %v8865, %v8862
        %v8902 = vpack.c.b16 %v8869, %v8866
        %v8903 = vpack.c.b16 %v8870, %v8867
        %v8904 = vpack.c.b16 %v8871, %v8868
        %v8905 = vpack.c.b16 %v8875, %v8872
        %v8906 = vpack.c.b16 %v8876, %v8873
        %v8907 = vpack.c.b16 %v8877, %v8874
        %v8908 = vpack.c.b16 %v8881, %v8878
        %v8909 = vpack.c.b16 %v8882, %v8879
        %v8910 = vpack.c.b16 %v8883, %v8880
        %v8911 = vpack.c.b16 %v8887, %v8884
        %v8912 = vpack.c.b16 %v8888, %v8885
        %v8913 = vpack.c.b16 %v8889, %v8886
        %8938 = vmatpush.bf16.msra.mxu0 %v8911
        %8939 = vmatpush.bf16.msra.mxu0 %v8908
        %8940 = vmatpush.bf16.msra.mxu0 %v8905
        %8941 = vmatpush.bf16.msra.mxu0 %v8902
        %8942 = vmatpush.bf16.msra.mxu0 %v8899
        %8943 = vmatpush.bf16.msra.mxu0 %v8896
        %8944 = vmatpush.bf16.msra.mxu0 %v8893
        %8945 = vmatpush.bf16.msra.mxu0 %v8890
        %8946 = vmatmul.bf16.gmra.mxu0 %v8761
        %v8947 = vpop.f32.mrf.mxu0
        %v8948 = vadd.f32 0.0, %v8947
        %v8949 = vpop.f32.mrf.mxu0
        %v8950 = vadd.f32 0.0, %v8949
        %8951 = vmatmul.bf16.gmra.mxu0 %v8762
        %v8952 = vpop.f32.mrf.mxu0
        %v8953 = vadd.f32 0.0, %v8952
        %v8954 = vpop.f32.mrf.mxu0
        %v8955 = vadd.f32 0.0, %v8954
        %8956 = vmatmul.bf16.gmra.mxu0 %v8763
        %v8957 = vpop.f32.mrf.mxu0
        %v8958 = vadd.f32 0.0, %v8957
        %v8959 = vpop.f32.mrf.mxu0
        %v8960 = vadd.f32 0.0, %v8959
        %8961 = vmatmul.bf16.gmra.mxu0 %v8764
        %v8962 = vpop.f32.mrf.mxu0
        %v8963 = vadd.f32 0.0, %v8962
        %v8964 = vpop.f32.mrf.mxu0
        %v8965 = vadd.f32 0.0, %v8964
        %8966 = vmatmul.bf16.gmra.mxu0 %v8765
        %v8967 = vpop.f32.mrf.mxu0
        %v8968 = vadd.f32 0.0, %v8967
        %v8969 = vpop.f32.mrf.mxu0
        %v8970 = vadd.f32 0.0, %v8969
        %8971 = vmatmul.bf16.gmra.mxu0 %v8766
        %v8972 = vpop.f32.mrf.mxu0
        %v8973 = vadd.f32 0.0, %v8972
        %v8974 = vpop.f32.mrf.mxu0
        %v8975 = vadd.f32 0.0, %v8974
        %8976 = vmatmul.bf16.gmra.mxu0 %v8767
        %v8977 = vpop.f32.mrf.mxu0
        %v8978 = vadd.f32 0.0, %v8977
        %v8979 = vpop.f32.mrf.mxu0
        %v8980 = vadd.f32 0.0, %v8979
        %8981 = vmatmul.bf16.gmra.mxu0 %v8768
        %v8982 = vpop.f32.mrf.mxu0
        %v8983 = vadd.f32 0.0, %v8982
        %v8984 = vpop.f32.mrf.mxu0
        %v8985 = vadd.f32 0.0, %v8984
        %8986 = vmatmul.bf16.gmra.mxu0 %v8769
        %v8987 = vpop.f32.mrf.mxu0
        %v8988 = vadd.f32 0.0, %v8987
        %v8989 = vpop.f32.mrf.mxu0
        %v8990 = vadd.f32 0.0, %v8989
        %8991 = vmatmul.bf16.gmra.mxu0 %v8770
        %v8992 = vpop.f32.mrf.mxu0
        %v8993 = vadd.f32 0.0, %v8992
        %v8994 = vpop.f32.mrf.mxu0
        %v8995 = vadd.f32 0.0, %v8994
        %8996 = vmatmul.bf16.gmra.mxu0 %v8771
        %v8997 = vpop.f32.mrf.mxu0
        %v8998 = vadd.f32 0.0, %v8997
        %v8999 = vpop.f32.mrf.mxu0
        %v9000 = vadd.f32 0.0, %v8999
        %9001 = vmatmul.bf16.gmra.mxu0 %v8772
        %v9002 = vpop.f32.mrf.mxu0
        %v9003 = vadd.f32 0.0, %v9002
        %v9004 = vpop.f32.mrf.mxu0
        %v9005 = vadd.f32 0.0, %v9004
        %9006 = vmatmul.bf16.gmra.mxu0 %v8773
        %v9007 = vpop.f32.mrf.mxu0
        %v9008 = vadd.f32 0.0, %v9007
        %v9009 = vpop.f32.mrf.mxu0
        %v9010 = vadd.f32 0.0, %v9009
        %9011 = vmatmul.bf16.gmra.mxu0 %v8774
        %v9012 = vpop.f32.mrf.mxu0
        %v9013 = vadd.f32 0.0, %v9012
        %v9014 = vpop.f32.mrf.mxu0
        %v9015 = vadd.f32 0.0, %v9014
        %9016 = vmatmul.bf16.gmra.mxu0 %v8775
        %v9017 = vpop.f32.mrf.mxu0
        %v9018 = vadd.f32 0.0, %v9017
        %v9019 = vpop.f32.mrf.mxu0
        %v9020 = vadd.f32 0.0, %v9019
        %9021 = vmatmul.bf16.gmra.mxu0 %v8776
        %v9022 = vpop.f32.mrf.mxu0
        %v9023 = vadd.f32 0.0, %v9022
        %v9024 = vpop.f32.mrf.mxu0
        %v9025 = vadd.f32 0.0, %v9024
        %9026 = vdwg.mxu0
        %9027 = vmatpush.bf16.msra.mxu0 %v8912
        %9028 = vmatpush.bf16.msra.mxu0 %v8909
        %9029 = vmatpush.bf16.msra.mxu0 %v8906
        %9030 = vmatpush.bf16.msra.mxu0 %v8903
        %9031 = vmatpush.bf16.msra.mxu0 %v8900
        %9032 = vmatpush.bf16.msra.mxu0 %v8897
        %9033 = vmatpush.bf16.msra.mxu0 %v8894
        %9034 = vmatpush.bf16.msra.mxu0 %v8891
        %9035 = vmatmul.bf16.gmra.mxu0 %v8761
        %v9036 = vpop.f32.mrf.mxu0
        %v9037 = vadd.f32 0.0, %v9036
        %v9038 = vpop.f32.mrf.mxu0
        %v9039 = vadd.f32 0.0, %v9038
        %9040 = vmatmul.bf16.gmra.mxu0 %v8762
        %v9041 = vpop.f32.mrf.mxu0
        %v9042 = vadd.f32 0.0, %v9041
        %v9043 = vpop.f32.mrf.mxu0
        %v9044 = vadd.f32 0.0, %v9043
        %9045 = vmatmul.bf16.gmra.mxu0 %v8763
        %v9046 = vpop.f32.mrf.mxu0
        %v9047 = vadd.f32 0.0, %v9046
        %v9048 = vpop.f32.mrf.mxu0
        %v9049 = vadd.f32 0.0, %v9048
        %9050 = vmatmul.bf16.gmra.mxu0 %v8764
        %v9051 = vpop.f32.mrf.mxu0
        %v9052 = vadd.f32 0.0, %v9051
        %v9053 = vpop.f32.mrf.mxu0
        %v9054 = vadd.f32 0.0, %v9053
        %9055 = vmatmul.bf16.gmra.mxu0 %v8765
        %v9056 = vpop.f32.mrf.mxu0
        %v9057 = vadd.f32 0.0, %v9056
        %v9058 = vpop.f32.mrf.mxu0
        %v9059 = vadd.f32 0.0, %v9058
        %9060 = vmatmul.bf16.gmra.mxu0 %v8766
        %v9061 = vpop.f32.mrf.mxu0
        %v9062 = vadd.f32 0.0, %v9061
        %v9063 = vpop.f32.mrf.mxu0
        %v9064 = vadd.f32 0.0, %v9063
        %9065 = vmatmul.bf16.gmra.mxu0 %v8767
        %v9066 = vpop.f32.mrf.mxu0
        %v9067 = vadd.f32 0.0, %v9066
        %v9068 = vpop.f32.mrf.mxu0
        %v9069 = vadd.f32 0.0, %v9068
        %9070 = vmatmul.bf16.gmra.mxu0 %v8768
        %v9071 = vpop.f32.mrf.mxu0
        %v9072 = vadd.f32 0.0, %v9071
        %v9073 = vpop.f32.mrf.mxu0
        %v9074 = vadd.f32 0.0, %v9073
        %9075 = vmatmul.bf16.gmra.mxu0 %v8769
        %v9076 = vpop.f32.mrf.mxu0
        %v9077 = vadd.f32 0.0, %v9076
        %v9078 = vpop.f32.mrf.mxu0
        %v9079 = vadd.f32 0.0, %v9078
        %9080 = vmatmul.bf16.gmra.mxu0 %v8770
        %v9081 = vpop.f32.mrf.mxu0
        %v9082 = vadd.f32 0.0, %v9081
        %v9083 = vpop.f32.mrf.mxu0
        %v9084 = vadd.f32 0.0, %v9083
        %9085 = vmatmul.bf16.gmra.mxu0 %v8771
        %v9086 = vpop.f32.mrf.mxu0
        %v9087 = vadd.f32 0.0, %v9086
        %v9088 = vpop.f32.mrf.mxu0
        %v9089 = vadd.f32 0.0, %v9088
        %9090 = vmatmul.bf16.gmra.mxu0 %v8772
        %v9091 = vpop.f32.mrf.mxu0
        %v9092 = vadd.f32 0.0, %v9091
        %v9093 = vpop.f32.mrf.mxu0
        %v9094 = vadd.f32 0.0, %v9093
        %9095 = vmatmul.bf16.gmra.mxu0 %v8773
        %v9096 = vpop.f32.mrf.mxu0
        %v9097 = vadd.f32 0.0, %v9096
        %v9098 = vpop.f32.mrf.mxu0
        %v9099 = vadd.f32 0.0, %v9098
        %9100 = vmatmul.bf16.gmra.mxu0 %v8774
        %v9101 = vpop.f32.mrf.mxu0
        %v9102 = vadd.f32 0.0, %v9101
        %v9103 = vpop.f32.mrf.mxu0
        %v9104 = vadd.f32 0.0, %v9103
        %9105 = vmatmul.bf16.gmra.mxu0 %v8775
        %v9106 = vpop.f32.mrf.mxu0
        %v9107 = vadd.f32 0.0, %v9106
        %v9108 = vpop.f32.mrf.mxu0
        %v9109 = vadd.f32 0.0, %v9108
        %9110 = vmatmul.bf16.gmra.mxu0 %v8776
        %v9111 = vpop.f32.mrf.mxu0
        %v9112 = vadd.f32 0.0, %v9111
        %v9113 = vpop.f32.mrf.mxu0
        %v9114 = vadd.f32 0.0, %v9113
        %9115 = vdwg.mxu0
        %9116 = vmatpush.bf16.msra.mxu0 %v8913
        %9117 = vmatpush.bf16.msra.mxu0 %v8910
        %9118 = vmatpush.bf16.msra.mxu0 %v8907
        %9119 = vmatpush.bf16.msra.mxu0 %v8904
        %9120 = vmatpush.bf16.msra.mxu0 %v8901
        %9121 = vmatpush.bf16.msra.mxu0 %v8898
        %9122 = vmatpush.bf16.msra.mxu0 %v8895
        %9123 = vmatpush.bf16.msra.mxu0 %v8892
        %9124 = vmatmul.bf16.gmra.mxu0 %v8761
        %v9125 = vpop.f32.mrf.mxu0
        %v9126 = vpop.f32.mrf.mxu0
        %9127 = vmatmul.bf16.gmra.mxu0 %v8762
        %v9128 = vpop.f32.mrf.mxu0
        %v9129 = vadd.f32 0.0, %v9128
        %v9130 = vpop.f32.mrf.mxu0
        %v9131 = vadd.f32 0.0, %v9130
        %9132 = vmatmul.bf16.gmra.mxu0 %v8763
        %v9133 = vpop.f32.mrf.mxu0
        %v9134 = vadd.f32 0.0, %v9133
        %v9135 = vpop.f32.mrf.mxu0
        %v9136 = vadd.f32 0.0, %v9135
        %9137 = vmatmul.bf16.gmra.mxu0 %v8764
        %v9138 = vpop.f32.mrf.mxu0
        %v9139 = vadd.f32 0.0, %v9138
        %v9140 = vpop.f32.mrf.mxu0
        %v9141 = vadd.f32 0.0, %v9140
        %9142 = vmatmul.bf16.gmra.mxu0 %v8765
        %v9143 = vpop.f32.mrf.mxu0
        %v9144 = vadd.f32 0.0, %v9143
        %v9145 = vpop.f32.mrf.mxu0
        %v9146 = vadd.f32 0.0, %v9145
        %9147 = vmatmul.bf16.gmra.mxu0 %v8766
        %v9148 = vpop.f32.mrf.mxu0
        %v9149 = vadd.f32 0.0, %v9148
        %v9150 = vpop.f32.mrf.mxu0
        %v9151 = vadd.f32 0.0, %v9150
        %9152 = vmatmul.bf16.gmra.mxu0 %v8767
        %v9153 = vpop.f32.mrf.mxu0
        %v9154 = vadd.f32 0.0, %v9153
        %v9155 = vpop.f32.mrf.mxu0
        %v9156 = vadd.f32 0.0, %v9155
        %9157 = vmatmul.bf16.gmra.mxu0 %v8768
        %v9158 = vpop.f32.mrf.mxu0
        %v9159 = vadd.f32 0.0, %v9158
        %v9160 = vpop.f32.mrf.mxu0
        %v9161 = vadd.f32 0.0, %v9160
        %9162 = vmatmul.bf16.gmra.mxu0 %v8769
        %v9163 = vpop.f32.mrf.mxu0
        %v9164 = vadd.f32 0.0, %v9163
        %v9165 = vpop.f32.mrf.mxu0
        %v9166 = vadd.f32 0.0, %v9165
        %9167 = vmatmul.bf16.gmra.mxu0 %v8770
        %v9168 = vpop.f32.mrf.mxu0
        %v9169 = vadd.f32 0.0, %v9168
        %v9170 = vpop.f32.mrf.mxu0
        %v9171 = vadd.f32 0.0, %v9170
        %9172 = vmatmul.bf16.gmra.mxu0 %v8771
        %v9173 = vpop.f32.mrf.mxu0
        %v9174 = vadd.f32 0.0, %v9173
        %v9175 = vpop.f32.mrf.mxu0
        %v9176 = vadd.f32 0.0, %v9175
        %9177 = vmatmul.bf16.gmra.mxu0 %v8772
        %v9178 = vpop.f32.mrf.mxu0
        %v9179 = vadd.f32 0.0, %v9178
        %v9180 = vpop.f32.mrf.mxu0
        %v9181 = vadd.f32 0.0, %v9180
        %9182 = vmatmul.bf16.gmra.mxu0 %v8773
        %v9183 = vpop.f32.mrf.mxu0
        %v9184 = vadd.f32 0.0, %v9183
        %v9185 = vpop.f32.mrf.mxu0
        %v9186 = vadd.f32 0.0, %v9185
        %9187 = vmatmul.bf16.gmra.mxu0 %v8774
        %v9188 = vpop.f32.mrf.mxu0
        %v9189 = vadd.f32 0.0, %v9188
        %v9190 = vpop.f32.mrf.mxu0
        %v9191 = vadd.f32 0.0, %v9190
        %9192 = vmatmul.bf16.gmra.mxu0 %v8775
        %v9193 = vpop.f32.mrf.mxu0
        %v9194 = vadd.f32 0.0, %v9193
        %v9195 = vpop.f32.mrf.mxu0
        %v9196 = vadd.f32 0.0, %v9195
        %9197 = vmatmul.bf16.gmra.mxu0 %v8776
        %v9198 = vpop.f32.mrf.mxu0
        %v9199 = vadd.f32 0.0, %v9198
        %v9200 = vpop.f32.mrf.mxu0
        %v9201 = vadd.f32 0.0, %v9200
        %9202 = vdwg.mxu0
        %v9233 = vrot.slane %v8948, 7
        %v9234 = vrot.slane %v8950, 7
        %v9235 = vsel %vm1442, %v9233, %v9234
        %v9236 = vrot.slane %v8953, 7
        %v9237 = vsel %vm1442, %v9234, %v9236
        %v9238 = vrot.slane %v8955, 7
        %v9239 = vsel %vm1442, %v9236, %v9238
        %v9240 = vrot.slane %v8958, 7
        %v9241 = vsel %vm1442, %v9238, %v9240
        %v9242 = vrot.slane %v8960, 7
        %v9243 = vsel %vm1442, %v9240, %v9242
        %v9244 = vrot.slane %v8963, 7
        %v9245 = vsel %vm1442, %v9242, %v9244
        %v9246 = vrot.slane %v8965, 7
        %v9247 = vsel %vm1442, %v9244, %v9246
        %v9248 = vrot.slane %v8968, 7
        %v9249 = vsel %vm1442, %v9246, %v9248
        %v9250 = vrot.slane %v8970, 7
        %v9251 = vsel %vm1442, %v9248, %v9250
        %v9252 = vrot.slane %v8973, 7
        %v9253 = vsel %vm1442, %v9250, %v9252
        %v9254 = vrot.slane %v8975, 7
        %v9255 = vsel %vm1442, %v9252, %v9254
        %v9256 = vrot.slane %v8978, 7
        %v9257 = vsel %vm1442, %v9254, %v9256
        %v9258 = vrot.slane %v8980, 7
        %v9259 = vsel %vm1442, %v9256, %v9258
        %v9260 = vrot.slane %v8983, 7
        %v9261 = vsel %vm1442, %v9258, %v9260
        %v9262 = vrot.slane %v8985, 7
        %v9263 = vsel %vm1442, %v9260, %v9262
        %v9264 = vrot.slane %v8988, 7
        %v9265 = vsel %vm1442, %v9262, %v9264
        %v9266 = vrot.slane %v8990, 7
        %v9267 = vsel %vm1442, %v9264, %v9266
        %v9268 = vrot.slane %v8993, 7
        %v9269 = vsel %vm1442, %v9266, %v9268
        %v9270 = vrot.slane %v8995, 7
        %v9271 = vsel %vm1442, %v9268, %v9270
        %v9272 = vrot.slane %v8998, 7
        %v9273 = vsel %vm1442, %v9270, %v9272
        %v9274 = vrot.slane %v9000, 7
        %v9275 = vsel %vm1442, %v9272, %v9274
        %v9276 = vrot.slane %v9003, 7
        %v9277 = vsel %vm1442, %v9274, %v9276
        %v9278 = vrot.slane %v9005, 7
        %v9279 = vsel %vm1442, %v9276, %v9278
        %v9280 = vrot.slane %v9008, 7
        %v9281 = vsel %vm1442, %v9278, %v9280
        %v9282 = vrot.slane %v9010, 7
        %v9283 = vsel %vm1442, %v9280, %v9282
        %v9284 = vrot.slane %v9013, 7
        %v9285 = vsel %vm1442, %v9282, %v9284
        %v9286 = vrot.slane %v9015, 7
        %v9287 = vsel %vm1442, %v9284, %v9286
        %v9288 = vrot.slane %v9018, 7
        %v9289 = vsel %vm1442, %v9286, %v9288
        %v9290 = vrot.slane %v9020, 7
        %v9291 = vsel %vm1442, %v9288, %v9290
        %v9322 = vsel %vm1442, 0.0, %v9233
        %v9323 = vmul.f32 %v9322, %v381
        %v9324 = vmul.f32 %v9235, %v382
        %v9325 = vmul.f32 %v9237, %v383
        %v9326 = vmul.f32 %v9239, %v384
        %v9327 = vmul.f32 %v9241, %v385
        %v9328 = vmul.f32 %v9243, %v386
        %v9329 = vmul.f32 %v9245, %v387
        %v9330 = vmul.f32 %v9247, %v388
        %v9331 = vmul.f32 %v9249, %v389
        %v9332 = vmul.f32 %v9251, %v390
        %v9333 = vmul.f32 %v9253, %v391
        %v9334 = vmul.f32 %v9255, %v392
        %v9335 = vmul.f32 %v9257, %v393
        %v9336 = vmul.f32 %v9259, %v394
        %v9337 = vmul.f32 %v9261, %v395
        %v9338 = vmul.f32 %v9263, %v396
        %v9339 = vmul.f32 %v9265, %v397
        %v9340 = vmul.f32 %v9267, %v398
        %v9341 = vmul.f32 %v9269, %v399
        %v9342 = vmul.f32 %v9271, %v400
        %v9343 = vmul.f32 %v9273, %v401
        %v9344 = vmul.f32 %v9275, %v402
        %v9345 = vmul.f32 %v9277, %v403
        %v9346 = vmul.f32 %v9279, %v404
        %v9347 = vmul.f32 %v9281, %v405
        %v9348 = vmul.f32 %v9283, %v406
        %v9349 = vmul.f32 %v9285, %v407
        %v9350 = vmul.f32 %v9287, %v408
        %v9351 = vmul.f32 %v9289, %v409
        %v9352 = vmul.f32 %v9291, %v410
        %v9353 = vadd.f32 %v9037, %v1533
        %v9354 = vadd.f32 %v9039, %v1534
        %v9355 = vadd.f32 %v9042, %v9323
        %v9356 = vadd.f32 %v9044, %v9324
        %v9357 = vadd.f32 %v9047, %v9325
        %v9358 = vadd.f32 %v9049, %v9326
        %v9359 = vadd.f32 %v9052, %v9327
        %v9360 = vadd.f32 %v9054, %v9328
        %v9361 = vadd.f32 %v9057, %v9329
        %v9362 = vadd.f32 %v9059, %v9330
        %v9363 = vadd.f32 %v9062, %v9331
        %v9364 = vadd.f32 %v9064, %v9332
        %v9365 = vadd.f32 %v9067, %v9333
        %v9366 = vadd.f32 %v9069, %v9334
        %v9367 = vadd.f32 %v9072, %v9335
        %v9368 = vadd.f32 %v9074, %v9336
        %v9369 = vadd.f32 %v9077, %v9337
        %v9370 = vadd.f32 %v9079, %v9338
        %v9371 = vadd.f32 %v9082, %v9339
        %v9372 = vadd.f32 %v9084, %v9340
        %v9373 = vadd.f32 %v9087, %v9341
        %v9374 = vadd.f32 %v9089, %v9342
        %v9375 = vadd.f32 %v9092, %v9343
        %v9376 = vadd.f32 %v9094, %v9344
        %v9377 = vadd.f32 %v9097, %v9345
        %v9378 = vadd.f32 %v9099, %v9346
        %v9379 = vadd.f32 %v9102, %v9347
        %v9380 = vadd.f32 %v9104, %v9348
        %v9381 = vadd.f32 %v9107, %v9349
        %v9382 = vadd.f32 %v9109, %v9350
        %v9383 = vadd.f32 %v9112, %v9351
        %v9384 = vadd.f32 %v9114, %v9352
        %9385 = vrot.lane.b32.xlu0 %v8948, 96
        %v9386 = vpop.permute.xlu0 %9385
        %9387 = vrot.lane.b32.xlu0 %v8950, 96
        %v9388 = vpop.permute.xlu0 %9387
        %9389 = vrot.lane.b32.xlu0 %v8953, 96
        %v9390 = vpop.permute.xlu0 %9389
        %9391 = vrot.lane.b32.xlu0 %v8955, 96
        %v9392 = vpop.permute.xlu0 %9391
        %9393 = vrot.lane.b32.xlu0 %v8958, 96
        %v9394 = vpop.permute.xlu0 %9393
        %9395 = vrot.lane.b32.xlu0 %v8960, 96
        %v9396 = vpop.permute.xlu0 %9395
        %9397 = vrot.lane.b32.xlu0 %v8963, 96
        %v9398 = vpop.permute.xlu0 %9397
        %9399 = vrot.lane.b32.xlu0 %v8965, 96
        %v9400 = vpop.permute.xlu0 %9399
        %9401 = vrot.lane.b32.xlu0 %v8968, 96
        %v9402 = vpop.permute.xlu0 %9401
        %9403 = vrot.lane.b32.xlu0 %v8970, 96
        %v9404 = vpop.permute.xlu0 %9403
        %9405 = vrot.lane.b32.xlu0 %v8973, 96
        %v9406 = vpop.permute.xlu0 %9405
        %9407 = vrot.lane.b32.xlu0 %v8975, 96
        %v9408 = vpop.permute.xlu0 %9407
        %9409 = vrot.lane.b32.xlu0 %v8978, 96
        %v9410 = vpop.permute.xlu0 %9409
        %9411 = vrot.lane.b32.xlu0 %v8980, 96
        %v9412 = vpop.permute.xlu0 %9411
        %9413 = vrot.lane.b32.xlu0 %v8983, 96
        %v9414 = vpop.permute.xlu0 %9413
        %9415 = vrot.lane.b32.xlu0 %v8985, 96
        %v9416 = vpop.permute.xlu0 %9415
        %9417 = vrot.lane.b32.xlu0 %v8988, 96
        %v9418 = vpop.permute.xlu0 %9417
        %9419 = vrot.lane.b32.xlu0 %v8990, 96
        %v9420 = vpop.permute.xlu0 %9419
        %9421 = vrot.lane.b32.xlu0 %v8993, 96
        %v9422 = vpop.permute.xlu0 %9421
        %9423 = vrot.lane.b32.xlu0 %v8995, 96
        %v9424 = vpop.permute.xlu0 %9423
        %9425 = vrot.lane.b32.xlu0 %v8998, 96
        %v9426 = vpop.permute.xlu0 %9425
        %9427 = vrot.lane.b32.xlu0 %v9000, 96
        %v9428 = vpop.permute.xlu0 %9427
        %9429 = vrot.lane.b32.xlu0 %v9003, 96
        %v9430 = vpop.permute.xlu0 %9429
        %9431 = vrot.lane.b32.xlu0 %v9005, 96
        %v9432 = vpop.permute.xlu0 %9431
        %9433 = vrot.lane.b32.xlu0 %v9008, 96
        %v9434 = vpop.permute.xlu0 %9433
        %9435 = vrot.lane.b32.xlu0 %v9010, 96
        %v9436 = vpop.permute.xlu0 %9435
        %9437 = vrot.lane.b32.xlu0 %v9013, 96
        %v9438 = vpop.permute.xlu0 %9437
        %9439 = vrot.lane.b32.xlu0 %v9015, 96
        %v9440 = vpop.permute.xlu0 %9439
        %9441 = vrot.lane.b32.xlu0 %v9018, 96
        %v9442 = vpop.permute.xlu0 %9441
        %9443 = vrot.lane.b32.xlu0 %v9020, 96
        %v9444 = vpop.permute.xlu0 %9443
        %v9475 = vadd.f32 %v9353, 0.0
        %v9476 = vadd.f32 %v9354, 0.0
        %v9477 = vadd.f32 %v9355, %v9386
        %v9478 = vadd.f32 %v9356, %v9388
        %v9479 = vadd.f32 %v9357, %v9390
        %v9480 = vadd.f32 %v9358, %v9392
        %v9481 = vadd.f32 %v9359, %v9394
        %v9482 = vadd.f32 %v9360, %v9396
        %v9483 = vadd.f32 %v9361, %v9398
        %v9484 = vadd.f32 %v9362, %v9400
        %v9485 = vadd.f32 %v9363, %v9402
        %v9486 = vadd.f32 %v9364, %v9404
        %v9487 = vadd.f32 %v9365, %v9406
        %v9488 = vadd.f32 %v9366, %v9408
        %v9489 = vadd.f32 %v9367, %v9410
        %v9490 = vadd.f32 %v9368, %v9412
        %v9491 = vadd.f32 %v9369, %v9414
        %v9492 = vadd.f32 %v9370, %v9416
        %v9493 = vadd.f32 %v9371, %v9418
        %v9494 = vadd.f32 %v9372, %v9420
        %v9495 = vadd.f32 %v9373, %v9422
        %v9496 = vadd.f32 %v9374, %v9424
        %v9497 = vadd.f32 %v9375, %v9426
        %v9498 = vadd.f32 %v9376, %v9428
        %v9499 = vadd.f32 %v9377, %v9430
        %v9500 = vadd.f32 %v9378, %v9432
        %v9501 = vadd.f32 %v9379, %v9434
        %v9502 = vadd.f32 %v9380, %v9436
        %v9503 = vadd.f32 %v9381, %v9438
        %v9504 = vadd.f32 %v9382, %v9440
        %v9505 = vadd.f32 %v9383, %v9442
        %v9506 = vadd.f32 %v9384, %v9444
        %v9508 = vrot.slane %v8948, 1
        %v9509 = vrot.slane %v8950, 1
        %v9510 = vsel %vm1720, %v9508, %v9509
        %v9511 = vrot.slane %v8953, 1
        %v9512 = vsel %vm1720, %v9509, %v9511
        %v9513 = vrot.slane %v8955, 1
        %v9514 = vsel %vm1720, %v9511, %v9513
        %v9515 = vrot.slane %v8958, 1
        %v9516 = vsel %vm1720, %v9513, %v9515
        %v9517 = vrot.slane %v8960, 1
        %v9518 = vsel %vm1720, %v9515, %v9517
        %v9519 = vrot.slane %v8963, 1
        %v9520 = vsel %vm1720, %v9517, %v9519
        %v9521 = vrot.slane %v8965, 1
        %v9522 = vsel %vm1720, %v9519, %v9521
        %v9523 = vrot.slane %v8968, 1
        %v9524 = vsel %vm1720, %v9521, %v9523
        %v9525 = vrot.slane %v8970, 1
        %v9526 = vsel %vm1720, %v9523, %v9525
        %v9527 = vrot.slane %v8973, 1
        %v9528 = vsel %vm1720, %v9525, %v9527
        %v9529 = vrot.slane %v8975, 1
        %v9530 = vsel %vm1720, %v9527, %v9529
        %v9531 = vrot.slane %v8978, 1
        %v9532 = vsel %vm1720, %v9529, %v9531
        %v9533 = vrot.slane %v8980, 1
        %v9534 = vsel %vm1720, %v9531, %v9533
        %v9535 = vrot.slane %v8983, 1
        %v9536 = vsel %vm1720, %v9533, %v9535
        %v9537 = vrot.slane %v8985, 1
        %v9538 = vsel %vm1720, %v9535, %v9537
        %v9539 = vrot.slane %v8988, 1
        %v9540 = vsel %vm1720, %v9537, %v9539
        %v9541 = vrot.slane %v8990, 1
        %v9542 = vsel %vm1720, %v9539, %v9541
        %v9543 = vrot.slane %v8993, 1
        %v9544 = vsel %vm1720, %v9541, %v9543
        %v9545 = vrot.slane %v8995, 1
        %v9546 = vsel %vm1720, %v9543, %v9545
        %v9547 = vrot.slane %v8998, 1
        %v9548 = vsel %vm1720, %v9545, %v9547
        %v9549 = vrot.slane %v9000, 1
        %v9550 = vsel %vm1720, %v9547, %v9549
        %v9551 = vrot.slane %v9003, 1
        %v9552 = vsel %vm1720, %v9549, %v9551
        %v9553 = vrot.slane %v9005, 1
        %v9554 = vsel %vm1720, %v9551, %v9553
        %v9555 = vrot.slane %v9008, 1
        %v9556 = vsel %vm1720, %v9553, %v9555
        %v9557 = vrot.slane %v9010, 1
        %v9558 = vsel %vm1720, %v9555, %v9557
        %v9559 = vrot.slane %v9013, 1
        %v9560 = vsel %vm1720, %v9557, %v9559
        %v9561 = vrot.slane %v9015, 1
        %v9562 = vsel %vm1720, %v9559, %v9561
        %v9563 = vrot.slane %v9018, 1
        %v9564 = vsel %vm1720, %v9561, %v9563
        %v9565 = vrot.slane %v9020, 1
        %v9566 = vsel %vm1720, %v9563, %v9565
        %v9567 = vrot.slane %v9023, 1
        %v9568 = vsel %vm1720, %v9565, %v9567
        %9569 = vrot.lane.b32.xlu0 %v9508, 64
        %v9570 = vpop.permute.xlu0 %9569
        %9571 = vrot.lane.b32.xlu0 %v9510, 64
        %v9572 = vpop.permute.xlu0 %9571
        %9573 = vrot.lane.b32.xlu0 %v9512, 64
        %v9574 = vpop.permute.xlu0 %9573
        %9575 = vrot.lane.b32.xlu0 %v9514, 64
        %v9576 = vpop.permute.xlu0 %9575
        %9577 = vrot.lane.b32.xlu0 %v9516, 64
        %v9578 = vpop.permute.xlu0 %9577
        %9579 = vrot.lane.b32.xlu0 %v9518, 64
        %v9580 = vpop.permute.xlu0 %9579
        %9581 = vrot.lane.b32.xlu0 %v9520, 64
        %v9582 = vpop.permute.xlu0 %9581
        %9583 = vrot.lane.b32.xlu0 %v9522, 64
        %v9584 = vpop.permute.xlu0 %9583
        %9585 = vrot.lane.b32.xlu0 %v9524, 64
        %v9586 = vpop.permute.xlu0 %9585
        %9587 = vrot.lane.b32.xlu0 %v9526, 64
        %v9588 = vpop.permute.xlu0 %9587
        %9589 = vrot.lane.b32.xlu0 %v9528, 64
        %v9590 = vpop.permute.xlu0 %9589
        %9591 = vrot.lane.b32.xlu0 %v9530, 64
        %v9592 = vpop.permute.xlu0 %9591
        %9593 = vrot.lane.b32.xlu0 %v9532, 64
        %v9594 = vpop.permute.xlu0 %9593
        %9595 = vrot.lane.b32.xlu0 %v9534, 64
        %v9596 = vpop.permute.xlu0 %9595
        %9597 = vrot.lane.b32.xlu0 %v9536, 64
        %v9598 = vpop.permute.xlu0 %9597
        %9599 = vrot.lane.b32.xlu0 %v9538, 64
        %v9600 = vpop.permute.xlu0 %9599
        %9601 = vrot.lane.b32.xlu0 %v9540, 64
        %v9602 = vpop.permute.xlu0 %9601
        %9603 = vrot.lane.b32.xlu0 %v9542, 64
        %v9604 = vpop.permute.xlu0 %9603
        %9605 = vrot.lane.b32.xlu0 %v9544, 64
        %v9606 = vpop.permute.xlu0 %9605
        %9607 = vrot.lane.b32.xlu0 %v9546, 64
        %v9608 = vpop.permute.xlu0 %9607
        %9609 = vrot.lane.b32.xlu0 %v9548, 64
        %v9610 = vpop.permute.xlu0 %9609
        %9611 = vrot.lane.b32.xlu0 %v9550, 64
        %v9612 = vpop.permute.xlu0 %9611
        %9613 = vrot.lane.b32.xlu0 %v9552, 64
        %v9614 = vpop.permute.xlu0 %9613
        %9615 = vrot.lane.b32.xlu0 %v9554, 64
        %v9616 = vpop.permute.xlu0 %9615
        %9617 = vrot.lane.b32.xlu0 %v9556, 64
        %v9618 = vpop.permute.xlu0 %9617
        %9619 = vrot.lane.b32.xlu0 %v9558, 64
        %v9620 = vpop.permute.xlu0 %9619
        %9621 = vrot.lane.b32.xlu0 %v9560, 64
        %v9622 = vpop.permute.xlu0 %9621
        %9623 = vrot.lane.b32.xlu0 %v9562, 64
        %v9624 = vpop.permute.xlu0 %9623
        %9625 = vrot.lane.b32.xlu0 %v9564, 64
        %v9626 = vpop.permute.xlu0 %9625
        %9627 = vrot.lane.b32.xlu0 %v9566, 64
        %v9628 = vpop.permute.xlu0 %9627
        %9629 = vrot.lane.b32.xlu0 %v9568, 64
        %v9630 = vpop.permute.xlu0 %9629
        %v9662 = vsel %vm1720, 0.0, %v9570
        %v9663 = vmul.f32 %v9662, %v476
        %v9664 = vmul.f32 %v9572, %v477
        %v9665 = vmul.f32 %v9574, %v478
        %v9666 = vmul.f32 %v9576, %v479
        %v9667 = vmul.f32 %v9578, %v480
        %v9668 = vmul.f32 %v9580, %v481
        %v9669 = vmul.f32 %v9582, %v482
        %v9670 = vmul.f32 %v9584, %v483
        %v9671 = vmul.f32 %v9586, %v484
        %v9672 = vmul.f32 %v9588, %v485
        %v9673 = vmul.f32 %v9590, %v486
        %v9674 = vmul.f32 %v9592, %v487
        %v9675 = vmul.f32 %v9594, %v488
        %v9676 = vmul.f32 %v9596, %v489
        %v9677 = vmul.f32 %v9598, %v490
        %v9678 = vmul.f32 %v9600, %v491
        %v9679 = vmul.f32 %v9602, %v492
        %v9680 = vmul.f32 %v9604, %v493
        %v9681 = vmul.f32 %v9606, %v494
        %v9682 = vmul.f32 %v9608, %v495
        %v9683 = vmul.f32 %v9610, %v496
        %v9684 = vmul.f32 %v9612, %v497
        %v9685 = vmul.f32 %v9614, %v498
        %v9686 = vmul.f32 %v9616, %v499
        %v9687 = vmul.f32 %v9618, %v500
        %v9688 = vmul.f32 %v9620, %v501
        %v9689 = vmul.f32 %v9622, %v502
        %v9690 = vmul.f32 %v9624, %v503
        %v9691 = vmul.f32 %v9626, %v504
        %v9692 = vmul.f32 %v9628, %v505
        %v9693 = vmul.f32 %v9630, %v506
        %v9694 = vadd.f32 %v9475, %v1876
        %v9695 = vadd.f32 %v9476, %v9663
        %v9696 = vadd.f32 %v9477, %v9664
        %v9697 = vadd.f32 %v9478, %v9665
        %v9698 = vadd.f32 %v9479, %v9666
        %v9699 = vadd.f32 %v9480, %v9667
        %v9700 = vadd.f32 %v9481, %v9668
        %v9701 = vadd.f32 %v9482, %v9669
        %v9702 = vadd.f32 %v9483, %v9670
        %v9703 = vadd.f32 %v9484, %v9671
        %v9704 = vadd.f32 %v9485, %v9672
        %v9705 = vadd.f32 %v9486, %v9673
        %v9706 = vadd.f32 %v9487, %v9674
        %v9707 = vadd.f32 %v9488, %v9675
        %v9708 = vadd.f32 %v9489, %v9676
        %v9709 = vadd.f32 %v9490, %v9677
        %v9710 = vadd.f32 %v9491, %v9678
        %v9711 = vadd.f32 %v9492, %v9679
        %v9712 = vadd.f32 %v9493, %v9680
        %v9713 = vadd.f32 %v9494, %v9681
        %v9714 = vadd.f32 %v9495, %v9682
        %v9715 = vadd.f32 %v9496, %v9683
        %v9716 = vadd.f32 %v9497, %v9684
        %v9717 = vadd.f32 %v9498, %v9685
        %v9718 = vadd.f32 %v9499, %v9686
        %v9719 = vadd.f32 %v9500, %v9687
        %v9720 = vadd.f32 %v9501, %v9688
        %v9721 = vadd.f32 %v9502, %v9689
        %v9722 = vadd.f32 %v9503, %v9690
        %v9723 = vadd.f32 %v9504, %v9691
        %v9724 = vadd.f32 %v9505, %v9692
        %v9725 = vadd.f32 %v9506, %v9693
        %v9727 = vrot.slane %v9023, 7
        %v9728 = vsel %vm1442, %v9290, %v9727
        %v9729 = vrot.slane %v9025, 7
        %v9730 = vsel %vm1442, %v9727, %v9729
        %9731 = vrot.lane.b32.xlu0 %v9233, 32
        %v9732 = vpop.permute.xlu0 %9731
        %9733 = vrot.lane.b32.xlu0 %v9235, 32
        %v9734 = vpop.permute.xlu0 %9733
        %9735 = vrot.lane.b32.xlu0 %v9237, 32
        %v9736 = vpop.permute.xlu0 %9735
        %9737 = vrot.lane.b32.xlu0 %v9239, 32
        %v9738 = vpop.permute.xlu0 %9737
        %9739 = vrot.lane.b32.xlu0 %v9241, 32
        %v9740 = vpop.permute.xlu0 %9739
        %9741 = vrot.lane.b32.xlu0 %v9243, 32
        %v9742 = vpop.permute.xlu0 %9741
        %9743 = vrot.lane.b32.xlu0 %v9245, 32
        %v9744 = vpop.permute.xlu0 %9743
        %9745 = vrot.lane.b32.xlu0 %v9247, 32
        %v9746 = vpop.permute.xlu0 %9745
        %9747 = vrot.lane.b32.xlu0 %v9249, 32
        %v9748 = vpop.permute.xlu0 %9747
        %9749 = vrot.lane.b32.xlu0 %v9251, 32
        %v9750 = vpop.permute.xlu0 %9749
        %9751 = vrot.lane.b32.xlu0 %v9253, 32
        %v9752 = vpop.permute.xlu0 %9751
        %9753 = vrot.lane.b32.xlu0 %v9255, 32
        %v9754 = vpop.permute.xlu0 %9753
        %9755 = vrot.lane.b32.xlu0 %v9257, 32
        %v9756 = vpop.permute.xlu0 %9755
        %9757 = vrot.lane.b32.xlu0 %v9259, 32
        %v9758 = vpop.permute.xlu0 %9757
        %9759 = vrot.lane.b32.xlu0 %v9261, 32
        %v9760 = vpop.permute.xlu0 %9759
        %9761 = vrot.lane.b32.xlu0 %v9263, 32
        %v9762 = vpop.permute.xlu0 %9761
        %9763 = vrot.lane.b32.xlu0 %v9265, 32
        %v9764 = vpop.permute.xlu0 %9763
        %9765 = vrot.lane.b32.xlu0 %v9267, 32
        %v9766 = vpop.permute.xlu0 %9765
        %9767 = vrot.lane.b32.xlu0 %v9269, 32
        %v9768 = vpop.permute.xlu0 %9767
        %9769 = vrot.lane.b32.xlu0 %v9271, 32
        %v9770 = vpop.permute.xlu0 %9769
        %9771 = vrot.lane.b32.xlu0 %v9273, 32
        %v9772 = vpop.permute.xlu0 %9771
        %9773 = vrot.lane.b32.xlu0 %v9275, 32
        %v9774 = vpop.permute.xlu0 %9773
        %9775 = vrot.lane.b32.xlu0 %v9277, 32
        %v9776 = vpop.permute.xlu0 %9775
        %9777 = vrot.lane.b32.xlu0 %v9279, 32
        %v9778 = vpop.permute.xlu0 %9777
        %9779 = vrot.lane.b32.xlu0 %v9281, 32
        %v9780 = vpop.permute.xlu0 %9779
        %9781 = vrot.lane.b32.xlu0 %v9283, 32
        %v9782 = vpop.permute.xlu0 %9781
        %9783 = vrot.lane.b32.xlu0 %v9285, 32
        %v9784 = vpop.permute.xlu0 %9783
        %9785 = vrot.lane.b32.xlu0 %v9287, 32
        %v9786 = vpop.permute.xlu0 %9785
        %9787 = vrot.lane.b32.xlu0 %v9289, 32
        %v9788 = vpop.permute.xlu0 %9787
        %9789 = vrot.lane.b32.xlu0 %v9291, 32
        %v9790 = vpop.permute.xlu0 %9789
        %9791 = vrot.lane.b32.xlu0 %v9728, 32
        %v9792 = vpop.permute.xlu0 %9791
        %9793 = vrot.lane.b32.xlu0 %v9730, 32
        %v9794 = vpop.permute.xlu0 %9793
        %v9827 = vsel %vm1442, 0.0, %v9732
        %v9828 = vmul.f32 %v9827, %v379
        %v9829 = vmul.f32 %v9734, %v380
        %v9830 = vmul.f32 %v9736, %v381
        %v9831 = vmul.f32 %v9738, %v382
        %v9832 = vmul.f32 %v9740, %v383
        %v9833 = vmul.f32 %v9742, %v384
        %v9834 = vmul.f32 %v9744, %v385
        %v9835 = vmul.f32 %v9746, %v386
        %v9836 = vmul.f32 %v9748, %v387
        %v9837 = vmul.f32 %v9750, %v388
        %v9838 = vmul.f32 %v9752, %v389
        %v9839 = vmul.f32 %v9754, %v390
        %v9840 = vmul.f32 %v9756, %v391
        %v9841 = vmul.f32 %v9758, %v392
        %v9842 = vmul.f32 %v9760, %v393
        %v9843 = vmul.f32 %v9762, %v394
        %v9844 = vmul.f32 %v9764, %v395
        %v9845 = vmul.f32 %v9766, %v396
        %v9846 = vmul.f32 %v9768, %v397
        %v9847 = vmul.f32 %v9770, %v398
        %v9848 = vmul.f32 %v9772, %v399
        %v9849 = vmul.f32 %v9774, %v400
        %v9850 = vmul.f32 %v9776, %v401
        %v9851 = vmul.f32 %v9778, %v402
        %v9852 = vmul.f32 %v9780, %v403
        %v9853 = vmul.f32 %v9782, %v404
        %v9854 = vmul.f32 %v9784, %v405
        %v9855 = vmul.f32 %v9786, %v406
        %v9856 = vmul.f32 %v9788, %v407
        %v9857 = vmul.f32 %v9790, %v408
        %v9858 = vmul.f32 %v9792, %v409
        %v9859 = vmul.f32 %v9794, %v410
        %v9860 = vadd.f32 %v9694, %v9828
        %v9861 = vadd.f32 %v9695, %v9829
        %v9862 = vadd.f32 %v9696, %v9830
        %v9863 = vadd.f32 %v9697, %v9831
        %v9864 = vadd.f32 %v9698, %v9832
        %v9865 = vadd.f32 %v9699, %v9833
        %v9866 = vadd.f32 %v9700, %v9834
        %v9867 = vadd.f32 %v9701, %v9835
        %v9868 = vadd.f32 %v9702, %v9836
        %v9869 = vadd.f32 %v9703, %v9837
        %v9870 = vadd.f32 %v9704, %v9838
        %v9871 = vadd.f32 %v9705, %v9839
        %v9872 = vadd.f32 %v9706, %v9840
        %v9873 = vadd.f32 %v9707, %v9841
        %v9874 = vadd.f32 %v9708, %v9842
        %v9875 = vadd.f32 %v9709, %v9843
        %v9876 = vadd.f32 %v9710, %v9844
        %v9877 = vadd.f32 %v9711, %v9845
        %v9878 = vadd.f32 %v9712, %v9846
        %v9879 = vadd.f32 %v9713, %v9847
        %v9880 = vadd.f32 %v9714, %v9848
        %v9881 = vadd.f32 %v9715, %v9849
        %v9882 = vadd.f32 %v9716, %v9850
        %v9883 = vadd.f32 %v9717, %v9851
        %v9884 = vadd.f32 %v9718, %v9852
        %v9885 = vadd.f32 %v9719, %v9853
        %v9886 = vadd.f32 %v9720, %v9854
        %v9887 = vadd.f32 %v9721, %v9855
        %v9888 = vadd.f32 %v9722, %v9856
        %v9889 = vadd.f32 %v9723, %v9857
        %v9890 = vadd.f32 %v9724, %v9858
        %v9891 = vadd.f32 %v9725, %v9859
        %v9924 = vrot.slane %v9037, 1
        %v9925 = vrot.slane %v9039, 1
        %v9926 = vsel %vm1720, %v9924, %v9925
        %v9927 = vrot.slane %v9042, 1
        %v9928 = vsel %vm1720, %v9925, %v9927
        %v9929 = vrot.slane %v9044, 1
        %v9930 = vsel %vm1720, %v9927, %v9929
        %v9931 = vrot.slane %v9047, 1
        %v9932 = vsel %vm1720, %v9929, %v9931
        %v9933 = vrot.slane %v9049, 1
        %v9934 = vsel %vm1720, %v9931, %v9933
        %v9935 = vrot.slane %v9052, 1
        %v9936 = vsel %vm1720, %v9933, %v9935
        %v9937 = vrot.slane %v9054, 1
        %v9938 = vsel %vm1720, %v9935, %v9937
        %v9939 = vrot.slane %v9057, 1
        %v9940 = vsel %vm1720, %v9937, %v9939
        %v9941 = vrot.slane %v9059, 1
        %v9942 = vsel %vm1720, %v9939, %v9941
        %v9943 = vrot.slane %v9062, 1
        %v9944 = vsel %vm1720, %v9941, %v9943
        %v9945 = vrot.slane %v9064, 1
        %v9946 = vsel %vm1720, %v9943, %v9945
        %v9947 = vrot.slane %v9067, 1
        %v9948 = vsel %vm1720, %v9945, %v9947
        %v9949 = vrot.slane %v9069, 1
        %v9950 = vsel %vm1720, %v9947, %v9949
        %v9951 = vrot.slane %v9072, 1
        %v9952 = vsel %vm1720, %v9949, %v9951
        %v9953 = vrot.slane %v9074, 1
        %v9954 = vsel %vm1720, %v9951, %v9953
        %v9955 = vrot.slane %v9077, 1
        %v9956 = vsel %vm1720, %v9953, %v9955
        %v9957 = vrot.slane %v9079, 1
        %v9958 = vsel %vm1720, %v9955, %v9957
        %v9959 = vrot.slane %v9082, 1
        %v9960 = vsel %vm1720, %v9957, %v9959
        %v9961 = vrot.slane %v9084, 1
        %v9962 = vsel %vm1720, %v9959, %v9961
        %v9963 = vrot.slane %v9087, 1
        %v9964 = vsel %vm1720, %v9961, %v9963
        %v9965 = vrot.slane %v9089, 1
        %v9966 = vsel %vm1720, %v9963, %v9965
        %v9967 = vrot.slane %v9092, 1
        %v9968 = vsel %vm1720, %v9965, %v9967
        %v9969 = vrot.slane %v9094, 1
        %v9970 = vsel %vm1720, %v9967, %v9969
        %v9971 = vrot.slane %v9097, 1
        %v9972 = vsel %vm1720, %v9969, %v9971
        %v9973 = vrot.slane %v9099, 1
        %v9974 = vsel %vm1720, %v9971, %v9973
        %v9975 = vrot.slane %v9102, 1
        %v9976 = vsel %vm1720, %v9973, %v9975
        %v9977 = vrot.slane %v9104, 1
        %v9978 = vsel %vm1720, %v9975, %v9977
        %v9979 = vrot.slane %v9107, 1
        %v9980 = vsel %vm1720, %v9977, %v9979
        %v9981 = vrot.slane %v9109, 1
        %v9982 = vsel %vm1720, %v9979, %v9981
        %v9983 = vrot.slane %v9112, 1
        %v9984 = vsel %vm1720, %v9981, %v9983
        %v9985 = vrot.slane %v9114, 1
        %v9986 = vsel %vm1720, %v9983, %v9985
        %v10019 = vsel %vm1720, %v9985, 0.0
        %v10020 = vmul.f32 %v9926, %v475
        %v10021 = vmul.f32 %v9928, %v476
        %v10022 = vmul.f32 %v9930, %v477
        %v10023 = vmul.f32 %v9932, %v478
        %v10024 = vmul.f32 %v9934, %v479
        %v10025 = vmul.f32 %v9936, %v480
        %v10026 = vmul.f32 %v9938, %v481
        %v10027 = vmul.f32 %v9940, %v482
        %v10028 = vmul.f32 %v9942, %v483
        %v10029 = vmul.f32 %v9944, %v484
        %v10030 = vmul.f32 %v9946, %v485
        %v10031 = vmul.f32 %v9948, %v486
        %v10032 = vmul.f32 %v9950, %v487
        %v10033 = vmul.f32 %v9952, %v488
        %v10034 = vmul.f32 %v9954, %v489
        %v10035 = vmul.f32 %v9956, %v490
        %v10036 = vmul.f32 %v9958, %v491
        %v10037 = vmul.f32 %v9960, %v492
        %v10038 = vmul.f32 %v9962, %v493
        %v10039 = vmul.f32 %v9964, %v494
        %v10040 = vmul.f32 %v9966, %v495
        %v10041 = vmul.f32 %v9968, %v496
        %v10042 = vmul.f32 %v9970, %v497
        %v10043 = vmul.f32 %v9972, %v498
        %v10044 = vmul.f32 %v9974, %v499
        %v10045 = vmul.f32 %v9976, %v500
        %v10046 = vmul.f32 %v9978, %v501
        %v10047 = vmul.f32 %v9980, %v502
        %v10048 = vmul.f32 %v9982, %v503
        %v10049 = vmul.f32 %v9984, %v504
        %v10050 = vmul.f32 %v9986, %v505
        %v10051 = vmul.f32 %v10019, %v506
        %10084 = vrot.lane.b32.xlu0 %v10020, 96
        %v10085 = vpop.permute.xlu0 %10084
        %10086 = vrot.lane.b32.xlu0 %v10021, 96
        %v10087 = vpop.permute.xlu0 %10086
        %10088 = vrot.lane.b32.xlu0 %v10022, 96
        %v10089 = vpop.permute.xlu0 %10088
        %10090 = vrot.lane.b32.xlu0 %v10023, 96
        %v10091 = vpop.permute.xlu0 %10090
        %10092 = vrot.lane.b32.xlu0 %v10024, 96
        %v10093 = vpop.permute.xlu0 %10092
        %10094 = vrot.lane.b32.xlu0 %v10025, 96
        %v10095 = vpop.permute.xlu0 %10094
        %10096 = vrot.lane.b32.xlu0 %v10026, 96
        %v10097 = vpop.permute.xlu0 %10096
        %10098 = vrot.lane.b32.xlu0 %v10027, 96
        %v10099 = vpop.permute.xlu0 %10098
        %10100 = vrot.lane.b32.xlu0 %v10028, 96
        %v10101 = vpop.permute.xlu0 %10100
        %10102 = vrot.lane.b32.xlu0 %v10029, 96
        %v10103 = vpop.permute.xlu0 %10102
        %10104 = vrot.lane.b32.xlu0 %v10030, 96
        %v10105 = vpop.permute.xlu0 %10104
        %10106 = vrot.lane.b32.xlu0 %v10031, 96
        %v10107 = vpop.permute.xlu0 %10106
        %10108 = vrot.lane.b32.xlu0 %v10032, 96
        %v10109 = vpop.permute.xlu0 %10108
        %10110 = vrot.lane.b32.xlu0 %v10033, 96
        %v10111 = vpop.permute.xlu0 %10110
        %10112 = vrot.lane.b32.xlu0 %v10034, 96
        %v10113 = vpop.permute.xlu0 %10112
        %10114 = vrot.lane.b32.xlu0 %v10035, 96
        %v10115 = vpop.permute.xlu0 %10114
        %10116 = vrot.lane.b32.xlu0 %v10036, 96
        %v10117 = vpop.permute.xlu0 %10116
        %10118 = vrot.lane.b32.xlu0 %v10037, 96
        %v10119 = vpop.permute.xlu0 %10118
        %10120 = vrot.lane.b32.xlu0 %v10038, 96
        %v10121 = vpop.permute.xlu0 %10120
        %10122 = vrot.lane.b32.xlu0 %v10039, 96
        %v10123 = vpop.permute.xlu0 %10122
        %10124 = vrot.lane.b32.xlu0 %v10040, 96
        %v10125 = vpop.permute.xlu0 %10124
        %10126 = vrot.lane.b32.xlu0 %v10041, 96
        %v10127 = vpop.permute.xlu0 %10126
        %10128 = vrot.lane.b32.xlu0 %v10042, 96
        %v10129 = vpop.permute.xlu0 %10128
        %10130 = vrot.lane.b32.xlu0 %v10043, 96
        %v10131 = vpop.permute.xlu0 %10130
        %10132 = vrot.lane.b32.xlu0 %v10044, 96
        %v10133 = vpop.permute.xlu0 %10132
        %10134 = vrot.lane.b32.xlu0 %v10045, 96
        %v10135 = vpop.permute.xlu0 %10134
        %10136 = vrot.lane.b32.xlu0 %v10046, 96
        %v10137 = vpop.permute.xlu0 %10136
        %10138 = vrot.lane.b32.xlu0 %v10047, 96
        %v10139 = vpop.permute.xlu0 %10138
        %10140 = vrot.lane.b32.xlu0 %v10048, 96
        %v10141 = vpop.permute.xlu0 %10140
        %10142 = vrot.lane.b32.xlu0 %v10049, 96
        %v10143 = vpop.permute.xlu0 %10142
        %10144 = vrot.lane.b32.xlu0 %v10050, 96
        %v10145 = vpop.permute.xlu0 %10144
        %10146 = vrot.lane.b32.xlu0 %v10051, 96
        %v10147 = vpop.permute.xlu0 %10146
        %v10180 = vadd.f32 %v9860, %v10085
        %v10181 = vadd.f32 %v9861, %v10087
        %v10182 = vadd.f32 %v9862, %v10089
        %v10183 = vadd.f32 %v9863, %v10091
        %v10184 = vadd.f32 %v9864, %v10093
        %v10185 = vadd.f32 %v9865, %v10095
        %v10186 = vadd.f32 %v9866, %v10097
        %v10187 = vadd.f32 %v9867, %v10099
        %v10188 = vadd.f32 %v9868, %v10101
        %v10189 = vadd.f32 %v9869, %v10103
        %v10190 = vadd.f32 %v9870, %v10105
        %v10191 = vadd.f32 %v9871, %v10107
        %v10192 = vadd.f32 %v9872, %v10109
        %v10193 = vadd.f32 %v9873, %v10111
        %v10194 = vadd.f32 %v9874, %v10113
        %v10195 = vadd.f32 %v9875, %v10115
        %v10196 = vadd.f32 %v9876, %v10117
        %v10197 = vadd.f32 %v9877, %v10119
        %v10198 = vadd.f32 %v9878, %v10121
        %v10199 = vadd.f32 %v9879, %v10123
        %v10200 = vadd.f32 %v9880, %v10125
        %v10201 = vadd.f32 %v9881, %v10127
        %v10202 = vadd.f32 %v9882, %v10129
        %v10203 = vadd.f32 %v9883, %v10131
        %v10204 = vadd.f32 %v9884, %v10133
        %v10205 = vadd.f32 %v9885, %v10135
        %v10206 = vadd.f32 %v9886, %v10137
        %v10207 = vadd.f32 %v9887, %v10139
        %v10208 = vadd.f32 %v9888, %v10141
        %v10209 = vadd.f32 %v9889, %v10143
        %v10210 = vadd.f32 %v9890, %v10145
        %v10211 = vadd.f32 %v9891, %v10147
        %v10212 = vrot.slane %v9039, 7
        %v10213 = vrot.slane %v9042, 7
        %v10214 = vsel %vm1442, %v10212, %v10213
        %v10215 = vrot.slane %v9044, 7
        %v10216 = vsel %vm1442, %v10213, %v10215
        %v10217 = vrot.slane %v9047, 7
        %v10218 = vsel %vm1442, %v10215, %v10217
        %v10219 = vrot.slane %v9049, 7
        %v10220 = vsel %vm1442, %v10217, %v10219
        %v10221 = vrot.slane %v9052, 7
        %v10222 = vsel %vm1442, %v10219, %v10221
        %v10223 = vrot.slane %v9054, 7
        %v10224 = vsel %vm1442, %v10221, %v10223
        %v10225 = vrot.slane %v9057, 7
        %v10226 = vsel %vm1442, %v10223, %v10225
        %v10227 = vrot.slane %v9059, 7
        %v10228 = vsel %vm1442, %v10225, %v10227
        %v10229 = vrot.slane %v9062, 7
        %v10230 = vsel %vm1442, %v10227, %v10229
        %v10231 = vrot.slane %v9064, 7
        %v10232 = vsel %vm1442, %v10229, %v10231
        %v10233 = vrot.slane %v9067, 7
        %v10234 = vsel %vm1442, %v10231, %v10233
        %v10235 = vrot.slane %v9069, 7
        %v10236 = vsel %vm1442, %v10233, %v10235
        %v10237 = vrot.slane %v9072, 7
        %v10238 = vsel %vm1442, %v10235, %v10237
        %v10239 = vrot.slane %v9074, 7
        %v10240 = vsel %vm1442, %v10237, %v10239
        %v10241 = vrot.slane %v9077, 7
        %v10242 = vsel %vm1442, %v10239, %v10241
        %v10243 = vrot.slane %v9079, 7
        %v10244 = vsel %vm1442, %v10241, %v10243
        %v10245 = vrot.slane %v9082, 7
        %v10246 = vsel %vm1442, %v10243, %v10245
        %v10247 = vrot.slane %v9084, 7
        %v10248 = vsel %vm1442, %v10245, %v10247
        %v10249 = vrot.slane %v9087, 7
        %v10250 = vsel %vm1442, %v10247, %v10249
        %v10251 = vrot.slane %v9089, 7
        %v10252 = vsel %vm1442, %v10249, %v10251
        %v10253 = vrot.slane %v9092, 7
        %v10254 = vsel %vm1442, %v10251, %v10253
        %v10255 = vrot.slane %v9094, 7
        %v10256 = vsel %vm1442, %v10253, %v10255
        %v10257 = vrot.slane %v9097, 7
        %v10258 = vsel %vm1442, %v10255, %v10257
        %v10259 = vrot.slane %v9099, 7
        %v10260 = vsel %vm1442, %v10257, %v10259
        %v10261 = vrot.slane %v9102, 7
        %v10262 = vsel %vm1442, %v10259, %v10261
        %v10263 = vrot.slane %v9104, 7
        %v10264 = vsel %vm1442, %v10261, %v10263
        %v10265 = vrot.slane %v9107, 7
        %v10266 = vsel %vm1442, %v10263, %v10265
        %v10267 = vrot.slane %v9109, 7
        %v10268 = vsel %vm1442, %v10265, %v10267
        %v10269 = vrot.slane %v9112, 7
        %v10270 = vsel %vm1442, %v10267, %v10269
        %v10271 = vrot.slane %v9114, 7
        %v10272 = vsel %vm1442, %v10269, %v10271
        %v10304 = vsel %vm1442, %v10271, 0.0
        %v10305 = vmul.f32 %v10214, %v379
        %v10306 = vmul.f32 %v10216, %v380
        %v10307 = vmul.f32 %v10218, %v381
        %v10308 = vmul.f32 %v10220, %v382
        %v10309 = vmul.f32 %v10222, %v383
        %v10310 = vmul.f32 %v10224, %v384
        %v10311 = vmul.f32 %v10226, %v385
        %v10312 = vmul.f32 %v10228, %v386
        %v10313 = vmul.f32 %v10230, %v387
        %v10314 = vmul.f32 %v10232, %v388
        %v10315 = vmul.f32 %v10234, %v389
        %v10316 = vmul.f32 %v10236, %v390
        %v10317 = vmul.f32 %v10238, %v391
        %v10318 = vmul.f32 %v10240, %v392
        %v10319 = vmul.f32 %v10242, %v393
        %v10320 = vmul.f32 %v10244, %v394
        %v10321 = vmul.f32 %v10246, %v395
        %v10322 = vmul.f32 %v10248, %v396
        %v10323 = vmul.f32 %v10250, %v397
        %v10324 = vmul.f32 %v10252, %v398
        %v10325 = vmul.f32 %v10254, %v399
        %v10326 = vmul.f32 %v10256, %v400
        %v10327 = vmul.f32 %v10258, %v401
        %v10328 = vmul.f32 %v10260, %v402
        %v10329 = vmul.f32 %v10262, %v403
        %v10330 = vmul.f32 %v10264, %v404
        %v10331 = vmul.f32 %v10266, %v405
        %v10332 = vmul.f32 %v10268, %v406
        %v10333 = vmul.f32 %v10270, %v407
        %v10334 = vmul.f32 %v10272, %v408
        %v10335 = vmul.f32 %v10304, %v409
        %10367 = vrot.lane.b32.xlu0 %v10305, 64
        %v10368 = vpop.permute.xlu0 %10367
        %10369 = vrot.lane.b32.xlu0 %v10306, 64
        %v10370 = vpop.permute.xlu0 %10369
        %10371 = vrot.lane.b32.xlu0 %v10307, 64
        %v10372 = vpop.permute.xlu0 %10371
        %10373 = vrot.lane.b32.xlu0 %v10308, 64
        %v10374 = vpop.permute.xlu0 %10373
        %10375 = vrot.lane.b32.xlu0 %v10309, 64
        %v10376 = vpop.permute.xlu0 %10375
        %10377 = vrot.lane.b32.xlu0 %v10310, 64
        %v10378 = vpop.permute.xlu0 %10377
        %10379 = vrot.lane.b32.xlu0 %v10311, 64
        %v10380 = vpop.permute.xlu0 %10379
        %10381 = vrot.lane.b32.xlu0 %v10312, 64
        %v10382 = vpop.permute.xlu0 %10381
        %10383 = vrot.lane.b32.xlu0 %v10313, 64
        %v10384 = vpop.permute.xlu0 %10383
        %10385 = vrot.lane.b32.xlu0 %v10314, 64
        %v10386 = vpop.permute.xlu0 %10385
        %10387 = vrot.lane.b32.xlu0 %v10315, 64
        %v10388 = vpop.permute.xlu0 %10387
        %10389 = vrot.lane.b32.xlu0 %v10316, 64
        %v10390 = vpop.permute.xlu0 %10389
        %10391 = vrot.lane.b32.xlu0 %v10317, 64
        %v10392 = vpop.permute.xlu0 %10391
        %10393 = vrot.lane.b32.xlu0 %v10318, 64
        %v10394 = vpop.permute.xlu0 %10393
        %10395 = vrot.lane.b32.xlu0 %v10319, 64
        %v10396 = vpop.permute.xlu0 %10395
        %10397 = vrot.lane.b32.xlu0 %v10320, 64
        %v10398 = vpop.permute.xlu0 %10397
        %10399 = vrot.lane.b32.xlu0 %v10321, 64
        %v10400 = vpop.permute.xlu0 %10399
        %10401 = vrot.lane.b32.xlu0 %v10322, 64
        %v10402 = vpop.permute.xlu0 %10401
        %10403 = vrot.lane.b32.xlu0 %v10323, 64
        %v10404 = vpop.permute.xlu0 %10403
        %10405 = vrot.lane.b32.xlu0 %v10324, 64
        %v10406 = vpop.permute.xlu0 %10405
        %10407 = vrot.lane.b32.xlu0 %v10325, 64
        %v10408 = vpop.permute.xlu0 %10407
        %10409 = vrot.lane.b32.xlu0 %v10326, 64
        %v10410 = vpop.permute.xlu0 %10409
        %10411 = vrot.lane.b32.xlu0 %v10327, 64
        %v10412 = vpop.permute.xlu0 %10411
        %10413 = vrot.lane.b32.xlu0 %v10328, 64
        %v10414 = vpop.permute.xlu0 %10413
        %10415 = vrot.lane.b32.xlu0 %v10329, 64
        %v10416 = vpop.permute.xlu0 %10415
        %10417 = vrot.lane.b32.xlu0 %v10330, 64
        %v10418 = vpop.permute.xlu0 %10417
        %10419 = vrot.lane.b32.xlu0 %v10331, 64
        %v10420 = vpop.permute.xlu0 %10419
        %10421 = vrot.lane.b32.xlu0 %v10332, 64
        %v10422 = vpop.permute.xlu0 %10421
        %10423 = vrot.lane.b32.xlu0 %v10333, 64
        %v10424 = vpop.permute.xlu0 %10423
        %10425 = vrot.lane.b32.xlu0 %v10334, 64
        %v10426 = vpop.permute.xlu0 %10425
        %10427 = vrot.lane.b32.xlu0 %v10335, 64
        %v10428 = vpop.permute.xlu0 %10427
        %v10460 = vadd.f32 %v10180, %v10368
        %v10461 = vadd.f32 %v10181, %v10370
        %v10462 = vadd.f32 %v10182, %v10372
        %v10463 = vadd.f32 %v10183, %v10374
        %v10464 = vadd.f32 %v10184, %v10376
        %v10465 = vadd.f32 %v10185, %v10378
        %v10466 = vadd.f32 %v10186, %v10380
        %v10467 = vadd.f32 %v10187, %v10382
        %v10468 = vadd.f32 %v10188, %v10384
        %v10469 = vadd.f32 %v10189, %v10386
        %v10470 = vadd.f32 %v10190, %v10388
        %v10471 = vadd.f32 %v10191, %v10390
        %v10472 = vadd.f32 %v10192, %v10392
        %v10473 = vadd.f32 %v10193, %v10394
        %v10474 = vadd.f32 %v10194, %v10396
        %v10475 = vadd.f32 %v10195, %v10398
        %v10476 = vadd.f32 %v10196, %v10400
        %v10477 = vadd.f32 %v10197, %v10402
        %v10478 = vadd.f32 %v10198, %v10404
        %v10479 = vadd.f32 %v10199, %v10406
        %v10480 = vadd.f32 %v10200, %v10408
        %v10481 = vadd.f32 %v10201, %v10410
        %v10482 = vadd.f32 %v10202, %v10412
        %v10483 = vadd.f32 %v10203, %v10414
        %v10484 = vadd.f32 %v10204, %v10416
        %v10485 = vadd.f32 %v10205, %v10418
        %v10486 = vadd.f32 %v10206, %v10420
        %v10487 = vadd.f32 %v10207, %v10422
        %v10488 = vadd.f32 %v10208, %v10424
        %v10489 = vadd.f32 %v10209, %v10426
        %v10490 = vadd.f32 %v10210, %v10428
        %v10491 = vadd.f32 %v10211, %v2646
        %10492 = vrot.lane.b32.xlu0 %v9042, 32
        %v10493 = vpop.permute.xlu0 %10492
        %10494 = vrot.lane.b32.xlu0 %v9044, 32
        %v10495 = vpop.permute.xlu0 %10494
        %10496 = vrot.lane.b32.xlu0 %v9047, 32
        %v10497 = vpop.permute.xlu0 %10496
        %10498 = vrot.lane.b32.xlu0 %v9049, 32
        %v10499 = vpop.permute.xlu0 %10498
        %10500 = vrot.lane.b32.xlu0 %v9052, 32
        %v10501 = vpop.permute.xlu0 %10500
        %10502 = vrot.lane.b32.xlu0 %v9054, 32
        %v10503 = vpop.permute.xlu0 %10502
        %10504 = vrot.lane.b32.xlu0 %v9057, 32
        %v10505 = vpop.permute.xlu0 %10504
        %10506 = vrot.lane.b32.xlu0 %v9059, 32
        %v10507 = vpop.permute.xlu0 %10506
        %10508 = vrot.lane.b32.xlu0 %v9062, 32
        %v10509 = vpop.permute.xlu0 %10508
        %10510 = vrot.lane.b32.xlu0 %v9064, 32
        %v10511 = vpop.permute.xlu0 %10510
        %10512 = vrot.lane.b32.xlu0 %v9067, 32
        %v10513 = vpop.permute.xlu0 %10512
        %10514 = vrot.lane.b32.xlu0 %v9069, 32
        %v10515 = vpop.permute.xlu0 %10514
        %10516 = vrot.lane.b32.xlu0 %v9072, 32
        %v10517 = vpop.permute.xlu0 %10516
        %10518 = vrot.lane.b32.xlu0 %v9074, 32
        %v10519 = vpop.permute.xlu0 %10518
        %10520 = vrot.lane.b32.xlu0 %v9077, 32
        %v10521 = vpop.permute.xlu0 %10520
        %10522 = vrot.lane.b32.xlu0 %v9079, 32
        %v10523 = vpop.permute.xlu0 %10522
        %10524 = vrot.lane.b32.xlu0 %v9082, 32
        %v10525 = vpop.permute.xlu0 %10524
        %10526 = vrot.lane.b32.xlu0 %v9084, 32
        %v10527 = vpop.permute.xlu0 %10526
        %10528 = vrot.lane.b32.xlu0 %v9087, 32
        %v10529 = vpop.permute.xlu0 %10528
        %10530 = vrot.lane.b32.xlu0 %v9089, 32
        %v10531 = vpop.permute.xlu0 %10530
        %10532 = vrot.lane.b32.xlu0 %v9092, 32
        %v10533 = vpop.permute.xlu0 %10532
        %10534 = vrot.lane.b32.xlu0 %v9094, 32
        %v10535 = vpop.permute.xlu0 %10534
        %10536 = vrot.lane.b32.xlu0 %v9097, 32
        %v10537 = vpop.permute.xlu0 %10536
        %10538 = vrot.lane.b32.xlu0 %v9099, 32
        %v10539 = vpop.permute.xlu0 %10538
        %10540 = vrot.lane.b32.xlu0 %v9102, 32
        %v10541 = vpop.permute.xlu0 %10540
        %10542 = vrot.lane.b32.xlu0 %v9104, 32
        %v10543 = vpop.permute.xlu0 %10542
        %10544 = vrot.lane.b32.xlu0 %v9107, 32
        %v10545 = vpop.permute.xlu0 %10544
        %10546 = vrot.lane.b32.xlu0 %v9109, 32
        %v10547 = vpop.permute.xlu0 %10546
        %10548 = vrot.lane.b32.xlu0 %v9112, 32
        %v10549 = vpop.permute.xlu0 %10548
        %10550 = vrot.lane.b32.xlu0 %v9114, 32
        %v10551 = vpop.permute.xlu0 %10550
        %v10582 = vadd.f32 %v10460, %v10493
        %v10583 = vadd.f32 %v10461, %v10495
        %v10584 = vadd.f32 %v10462, %v10497
        %v10585 = vadd.f32 %v10463, %v10499
        %v10586 = vadd.f32 %v10464, %v10501
        %v10587 = vadd.f32 %v10465, %v10503
        %v10588 = vadd.f32 %v10466, %v10505
        %v10589 = vadd.f32 %v10467, %v10507
        %v10590 = vadd.f32 %v10468, %v10509
        %v10591 = vadd.f32 %v10469, %v10511
        %v10592 = vadd.f32 %v10470, %v10513
        %v10593 = vadd.f32 %v10471, %v10515
        %v10594 = vadd.f32 %v10472, %v10517
        %v10595 = vadd.f32 %v10473, %v10519
        %v10596 = vadd.f32 %v10474, %v10521
        %v10597 = vadd.f32 %v10475, %v10523
        %v10598 = vadd.f32 %v10476, %v10525
        %v10599 = vadd.f32 %v10477, %v10527
        %v10600 = vadd.f32 %v10478, %v10529
        %v10601 = vadd.f32 %v10479, %v10531
        %v10602 = vadd.f32 %v10480, %v10533
        %v10603 = vadd.f32 %v10481, %v10535
        %v10604 = vadd.f32 %v10482, %v10537
        %v10605 = vadd.f32 %v10483, %v10539
        %v10606 = vadd.f32 %v10484, %v10541
        %v10607 = vadd.f32 %v10485, %v10543
        %v10608 = vadd.f32 %v10486, %v10545
        %v10609 = vadd.f32 %v10487, %v10547
        %v10610 = vadd.f32 %v10488, %v10549
        %v10611 = vadd.f32 %v10489, %v10551
        %v10612 = vadd.f32 %v10490, %v2773
        %v10613 = vadd.f32 %v10491, %v2773
        %v10644 = vrot.slane %v9129, 1
        %v10645 = vrot.slane %v9131, 1
        %v10646 = vsel %vm1720, %v10644, %v10645
        %v10647 = vrot.slane %v9134, 1
        %v10648 = vsel %vm1720, %v10645, %v10647
        %v10649 = vrot.slane %v9136, 1
        %v10650 = vsel %vm1720, %v10647, %v10649
        %v10651 = vrot.slane %v9139, 1
        %v10652 = vsel %vm1720, %v10649, %v10651
        %v10653 = vrot.slane %v9141, 1
        %v10654 = vsel %vm1720, %v10651, %v10653
        %v10655 = vrot.slane %v9144, 1
        %v10656 = vsel %vm1720, %v10653, %v10655
        %v10657 = vrot.slane %v9146, 1
        %v10658 = vsel %vm1720, %v10655, %v10657
        %v10659 = vrot.slane %v9149, 1
        %v10660 = vsel %vm1720, %v10657, %v10659
        %v10661 = vrot.slane %v9151, 1
        %v10662 = vsel %vm1720, %v10659, %v10661
        %v10663 = vrot.slane %v9154, 1
        %v10664 = vsel %vm1720, %v10661, %v10663
        %v10665 = vrot.slane %v9156, 1
        %v10666 = vsel %vm1720, %v10663, %v10665
        %v10667 = vrot.slane %v9159, 1
        %v10668 = vsel %vm1720, %v10665, %v10667
        %v10669 = vrot.slane %v9161, 1
        %v10670 = vsel %vm1720, %v10667, %v10669
        %v10671 = vrot.slane %v9164, 1
        %v10672 = vsel %vm1720, %v10669, %v10671
        %v10673 = vrot.slane %v9166, 1
        %v10674 = vsel %vm1720, %v10671, %v10673
        %v10675 = vrot.slane %v9169, 1
        %v10676 = vsel %vm1720, %v10673, %v10675
        %v10677 = vrot.slane %v9171, 1
        %v10678 = vsel %vm1720, %v10675, %v10677
        %v10679 = vrot.slane %v9174, 1
        %v10680 = vsel %vm1720, %v10677, %v10679
        %v10681 = vrot.slane %v9176, 1
        %v10682 = vsel %vm1720, %v10679, %v10681
        %v10683 = vrot.slane %v9179, 1
        %v10684 = vsel %vm1720, %v10681, %v10683
        %v10685 = vrot.slane %v9181, 1
        %v10686 = vsel %vm1720, %v10683, %v10685
        %v10687 = vrot.slane %v9184, 1
        %v10688 = vsel %vm1720, %v10685, %v10687
        %v10689 = vrot.slane %v9186, 1
        %v10690 = vsel %vm1720, %v10687, %v10689
        %v10691 = vrot.slane %v9189, 1
        %v10692 = vsel %vm1720, %v10689, %v10691
        %v10693 = vrot.slane %v9191, 1
        %v10694 = vsel %vm1720, %v10691, %v10693
        %v10695 = vrot.slane %v9194, 1
        %v10696 = vsel %vm1720, %v10693, %v10695
        %v10697 = vrot.slane %v9196, 1
        %v10698 = vsel %vm1720, %v10695, %v10697
        %v10699 = vrot.slane %v9199, 1
        %v10700 = vsel %vm1720, %v10697, %v10699
        %v10701 = vrot.slane %v9201, 1
        %v10702 = vsel %vm1720, %v10699, %v10701
        %v10733 = vsel %vm1720, %v10701, 0.0
        %v10734 = vmul.f32 %v10646, %v475
        %v10735 = vmul.f32 %v10648, %v476
        %v10736 = vmul.f32 %v10650, %v477
        %v10737 = vmul.f32 %v10652, %v478
        %v10738 = vmul.f32 %v10654, %v479
        %v10739 = vmul.f32 %v10656, %v480
        %v10740 = vmul.f32 %v10658, %v481
        %v10741 = vmul.f32 %v10660, %v482
        %v10742 = vmul.f32 %v10662, %v483
        %v10743 = vmul.f32 %v10664, %v484
        %v10744 = vmul.f32 %v10666, %v485
        %v10745 = vmul.f32 %v10668, %v486
        %v10746 = vmul.f32 %v10670, %v487
        %v10747 = vmul.f32 %v10672, %v488
        %v10748 = vmul.f32 %v10674, %v489
        %v10749 = vmul.f32 %v10676, %v490
        %v10750 = vmul.f32 %v10678, %v491
        %v10751 = vmul.f32 %v10680, %v492
        %v10752 = vmul.f32 %v10682, %v493
        %v10753 = vmul.f32 %v10684, %v494
        %v10754 = vmul.f32 %v10686, %v495
        %v10755 = vmul.f32 %v10688, %v496
        %v10756 = vmul.f32 %v10690, %v497
        %v10757 = vmul.f32 %v10692, %v498
        %v10758 = vmul.f32 %v10694, %v499
        %v10759 = vmul.f32 %v10696, %v500
        %v10760 = vmul.f32 %v10698, %v501
        %v10761 = vmul.f32 %v10700, %v502
        %v10762 = vmul.f32 %v10702, %v503
        %v10763 = vmul.f32 %v10733, %v504
        %v10764 = vadd.f32 %v10582, %v10734
        %v10765 = vadd.f32 %v10583, %v10735
        %v10766 = vadd.f32 %v10584, %v10736
        %v10767 = vadd.f32 %v10585, %v10737
        %v10768 = vadd.f32 %v10586, %v10738
        %v10769 = vadd.f32 %v10587, %v10739
        %v10770 = vadd.f32 %v10588, %v10740
        %v10771 = vadd.f32 %v10589, %v10741
        %v10772 = vadd.f32 %v10590, %v10742
        %v10773 = vadd.f32 %v10591, %v10743
        %v10774 = vadd.f32 %v10592, %v10744
        %v10775 = vadd.f32 %v10593, %v10745
        %v10776 = vadd.f32 %v10594, %v10746
        %v10777 = vadd.f32 %v10595, %v10747
        %v10778 = vadd.f32 %v10596, %v10748
        %v10779 = vadd.f32 %v10597, %v10749
        %v10780 = vadd.f32 %v10598, %v10750
        %v10781 = vadd.f32 %v10599, %v10751
        %v10782 = vadd.f32 %v10600, %v10752
        %v10783 = vadd.f32 %v10601, %v10753
        %v10784 = vadd.f32 %v10602, %v10754
        %v10785 = vadd.f32 %v10603, %v10755
        %v10786 = vadd.f32 %v10604, %v10756
        %v10787 = vadd.f32 %v10605, %v10757
        %v10788 = vadd.f32 %v10606, %v10758
        %v10789 = vadd.f32 %v10607, %v10759
        %v10790 = vadd.f32 %v10608, %v10760
        %v10791 = vadd.f32 %v10609, %v10761
        %v10792 = vadd.f32 %v10610, %v10762
        %v10793 = vadd.f32 %v10611, %v10763
        %v10794 = vadd.f32 %v10612, %v2987
        %v10795 = vadd.f32 %v10613, %v2988
        %10828 = vrot.lane.b32.xlu0 %v10764, 32
        %v10829 = vpop.permute.xlu0 %10828
        %10830 = vrot.lane.b32.xlu0 %v10765, 32
        %v10831 = vpop.permute.xlu0 %10830
        %10832 = vrot.lane.b32.xlu0 %v10766, 32
        %v10833 = vpop.permute.xlu0 %10832
        %10834 = vrot.lane.b32.xlu0 %v10767, 32
        %v10835 = vpop.permute.xlu0 %10834
        %10836 = vrot.lane.b32.xlu0 %v10768, 32
        %v10837 = vpop.permute.xlu0 %10836
        %10838 = vrot.lane.b32.xlu0 %v10769, 32
        %v10839 = vpop.permute.xlu0 %10838
        %10840 = vrot.lane.b32.xlu0 %v10770, 32
        %v10841 = vpop.permute.xlu0 %10840
        %10842 = vrot.lane.b32.xlu0 %v10771, 32
        %v10843 = vpop.permute.xlu0 %10842
        %10844 = vrot.lane.b32.xlu0 %v10772, 32
        %v10845 = vpop.permute.xlu0 %10844
        %10846 = vrot.lane.b32.xlu0 %v10773, 32
        %v10847 = vpop.permute.xlu0 %10846
        %10848 = vrot.lane.b32.xlu0 %v10774, 32
        %v10849 = vpop.permute.xlu0 %10848
        %10850 = vrot.lane.b32.xlu0 %v10775, 32
        %v10851 = vpop.permute.xlu0 %10850
        %10852 = vrot.lane.b32.xlu0 %v10776, 32
        %v10853 = vpop.permute.xlu0 %10852
        %10854 = vrot.lane.b32.xlu0 %v10777, 32
        %v10855 = vpop.permute.xlu0 %10854
        %10856 = vrot.lane.b32.xlu0 %v10778, 32
        %v10857 = vpop.permute.xlu0 %10856
        %10858 = vrot.lane.b32.xlu0 %v10779, 32
        %v10859 = vpop.permute.xlu0 %10858
        %10860 = vrot.lane.b32.xlu0 %v10780, 32
        %v10861 = vpop.permute.xlu0 %10860
        %10862 = vrot.lane.b32.xlu0 %v10781, 32
        %v10863 = vpop.permute.xlu0 %10862
        %10864 = vrot.lane.b32.xlu0 %v10782, 32
        %v10865 = vpop.permute.xlu0 %10864
        %10866 = vrot.lane.b32.xlu0 %v10783, 32
        %v10867 = vpop.permute.xlu0 %10866
        %10868 = vrot.lane.b32.xlu0 %v10784, 32
        %v10869 = vpop.permute.xlu0 %10868
        %10870 = vrot.lane.b32.xlu0 %v10785, 32
        %v10871 = vpop.permute.xlu0 %10870
        %10872 = vrot.lane.b32.xlu0 %v10786, 32
        %v10873 = vpop.permute.xlu0 %10872
        %10874 = vrot.lane.b32.xlu0 %v10787, 32
        %v10875 = vpop.permute.xlu0 %10874
        %10876 = vrot.lane.b32.xlu0 %v10788, 32
        %v10877 = vpop.permute.xlu0 %10876
        %10878 = vrot.lane.b32.xlu0 %v10789, 32
        %v10879 = vpop.permute.xlu0 %10878
        %10880 = vrot.lane.b32.xlu0 %v10790, 32
        %v10881 = vpop.permute.xlu0 %10880
        %10882 = vrot.lane.b32.xlu0 %v10791, 32
        %v10883 = vpop.permute.xlu0 %10882
        %10884 = vrot.lane.b32.xlu0 %v10792, 32
        %v10885 = vpop.permute.xlu0 %10884
        %10886 = vrot.lane.b32.xlu0 %v10793, 32
        %v10887 = vpop.permute.xlu0 %10886
        %10888 = vrot.lane.b32.xlu0 %v10794, 32
        %v10889 = vpop.permute.xlu0 %10888
        %10890 = vrot.lane.b32.xlu0 %v10795, 32
        %v10891 = vpop.permute.xlu0 %10890
        %vm10924 = vcmask 523520
        %10925 = vst.msk [vmem:[%s244 + $0x8] sm:$0xff] %vm10924, %v10829
        %10926 = vst.msk [vmem:[%s244 + $0x18] sm:$0xff] %vm10924, %v10831
        %10927 = vst.msk [vmem:[%s244 + $0x28] sm:$0xff] %vm10924, %v10833
        %10928 = vst.msk [vmem:[%s244 + $0x38] sm:$0xff] %vm10924, %v10835
        %10929 = vst.msk [vmem:[%s244 + $0x48] sm:$0xff] %vm10924, %v10837
        %10930 = vst.msk [vmem:[%s244 + $0x58] sm:$0xff] %vm10924, %v10839
        %10931 = vst.msk [vmem:[%s244 + $0x68] sm:$0xff] %vm10924, %v10841
        %10932 = vst.msk [vmem:[%s244 + $0x78] sm:$0xff] %vm10924, %v10843
        %10933 = vst.msk [vmem:[%s244 + $0x88] sm:$0xff] %vm10924, %v10845
        %10934 = vst.msk [vmem:[%s244 + $0x98] sm:$0xff] %vm10924, %v10847
        %10935 = vst.msk [vmem:[%s244 + $0xa8] sm:$0xff] %vm10924, %v10849
        %10936 = vst.msk [vmem:[%s244 + $0xb8] sm:$0xff] %vm10924, %v10851
        %10937 = vst.msk [vmem:[%s244 + $0xc8] sm:$0xff] %vm10924, %v10853
        %10938 = vst.msk [vmem:[%s244 + $0xd8] sm:$0xff] %vm10924, %v10855
        %10939 = vst.msk [vmem:[%s244 + $0xe8] sm:$0xff] %vm10924, %v10857
        %10940 = vst.msk [vmem:[%s244 + $0xf8] sm:$0xff] %vm10924, %v10859
        %10941 = vst.msk [vmem:[%s244 + $0x108] sm:$0xff] %vm10924, %v10861
        %10942 = vst.msk [vmem:[%s244 + $0x118] sm:$0xff] %vm10924, %v10863
        %10943 = vst.msk [vmem:[%s244 + $0x128] sm:$0xff] %vm10924, %v10865
        %10944 = vst.msk [vmem:[%s244 + $0x138] sm:$0xff] %vm10924, %v10867
        %10945 = vst.msk [vmem:[%s244 + $0x148] sm:$0xff] %vm10924, %v10869
        %10946 = vst.msk [vmem:[%s244 + $0x158] sm:$0xff] %vm10924, %v10871
        %10947 = vst.msk [vmem:[%s244 + $0x168] sm:$0xff] %vm10924, %v10873
        %10948 = vst.msk [vmem:[%s244 + $0x178] sm:$0xff] %vm10924, %v10875
        %10949 = vst.msk [vmem:[%s244 + $0x188] sm:$0xff] %vm10924, %v10877
        %10950 = vst.msk [vmem:[%s244 + $0x198] sm:$0xff] %vm10924, %v10879
        %10951 = vst.msk [vmem:[%s244 + $0x1a8] sm:$0xff] %vm10924, %v10881
        %10952 = vst.msk [vmem:[%s244 + $0x1b8] sm:$0xff] %vm10924, %v10883
        %10953 = vst.msk [vmem:[%s244 + $0x1c8] sm:$0xff] %vm10924, %v10885
        %10954 = vst.msk [vmem:[%s244 + $0x1d8] sm:$0xff] %vm10924, %v10887
        %10955 = vst.msk [vmem:[%s244 + $0x1e8] sm:$0xff] %vm10924, %v10889
        %10956 = vst.msk [vmem:[%s244 + $0x1f8] sm:$0xff] %vm10924, %v10891
        %s10957 = sand.u32 %s159, 1
        %s10958 = scalar_lea.sflag [#allocation3], %s10957
        %s10959 = sand.u32 %s159, 1
        %s10960 = smul.addr %s10959, 512
        %s10961 = scalar_lea.vmem [#allocation2], %s10960
        // Predicated region
        $region45: #{tpu_custom_call.1} parent=43 // pred_check
          %p10962 = pneg %p169
        $region46: #{tpu_custom_call.1} parent=43 // pred_check_branch
          %10964 = sbr.rel (%p10962) target = $region48
        $region47: #{tpu_custom_call.1} parent=43 // pred_region
          %10966 = vsyncadd %s10958, 0
          %s10967 = smul.addr %s20, 64
          %s10968 = smul.addr %s10967, 8
          %s10969 = scalar_lea.hbm %s6, %s10968
          %s10970 = sshll.u32 %s10961, 4
          %s10971 = int_to_ptr.vmem [resolvable:$true] %s10970
          %s10972 = sshll.u32 %s10969, 4
          %s10973 = int_to_ptr.hbm [resolvable:$true] %s10972
          %10978 = dma.vmem_to_hbm [thread:$0]  %s10971, 8192, %s10973, %s10958, 256, 256, 16
        $region48: #{tpu_custom_call.1} parent=43 // pred_fallthru
          _
      $region44: #{tpu_custom_call.1} parent=5 // pred_fallthru
        _
      %p10979 = scmp.le.s32.totalorder 2, %s15
      // Predicated region
      $region49: #{tpu_custom_call.1} parent=5 // pred_check
        %p10980 = pneg %p10979
      $region50: #{tpu_custom_call.1} parent=5 // pred_check_branch
        %10982 = sbr.rel (%p10980) target = $region52
      $region51: #{tpu_custom_call.1} parent=5 // pred_region
        %s10983 = ssub.s32 %s15, 2
        // Predicated region
        $region53: #{tpu_custom_call.1} parent=51 // pred_check
          %p10984 = pneg %p175
        $region54: #{tpu_custom_call.1} parent=51 // pred_check_branch
          %10986 = sbr.rel (%p10984) target = $region56
        $region55: #{tpu_custom_call.1} parent=51 // pred_region
          %s10987 = sand.u32 %s160, 1
          %s10988 = scalar_lea.sflag [#allocation3], %s10987
          %s10989 = sand.u32 %s160, 1
          %s10990 = smul.addr %s10989, 512
          %s10991 = scalar_lea.vmem [#allocation2], %s10990
          %10993 = dma.done %s10988, 8192
        $region56: #{tpu_custom_call.1} parent=51 // pred_fallthru
          _
      $region52: #{tpu_custom_call.1} parent=5 // pred_fallthru
        _
    $region6: #{tpu_custom_call.1} parent=1 // loop_footer
      %s19 = sadd.s32 1, %s15
    $region7: #{tpu_custom_call.1} parent=1 // loop_footer_branch
      %14 = sbr.rel target = $region3
    $region8: #{tpu_custom_call.1} parent=1 // loop_exit
      _
    %10994 = vsyncpa [#allocation3], 1
    %s10995 = scalar_lea.sflag [#allocation3], 1
    %10996 = vsyncpa %s10995, 1

</llo_original>
